<compile_context>
chip_gen: v6e
topology: v6e:2x2x1
jax: 0.10.0
libtpu: 0.0.40
codegen_flags: <defaults>
</compile_context>

<pallas_src>
import functools

import jax
import jax.numpy as jnp
import numpy as np
from jax.experimental import pallas as pl
from jax.experimental.pallas import tpu as pltpu


# ----------------------------------------------------------------------------
# Fused BiLSTM-stack + Linear + PReLU kernel (single invocation, no grid)
# ----------------------------------------------------------------------------
def _bilstm_stack_kernel(*refs, hidden, num_layers, seq_len, batch):
    H = hidden
    T = seq_len
    B = batch                    # padded batch (multiple of 8)
    nw = 6 * num_layers

    x_ref = refs[0]                                  # (T*B, H)
    layer_refs = refs[1:1 + nw]                      # per layer: wih_f, whh_f, b_f, wih_r, whh_r, b_r
    w_lin_ref, b_lin_ref, a_ref = refs[1 + nw:4 + nw]
    out_ref = refs[4 + nw]                           # (T*B, H)
    slab0_f, slab0_b, slab1_f, slab1_b, gx_ref = refs[5 + nw:10 + nw]

    cur_f, cur_b = slab0_f, slab0_b

    for layer in range(num_layers):
        if layer % 2 == 0:
            cur_f, cur_b = slab0_f, slab0_b
            prev_f, prev_b = slab1_f, slab1_b
        else:
            cur_f, cur_b = slab1_f, slab1_b
            prev_f, prev_b = slab0_f, slab0_b

        # TODO(synk): inter-layer dropout (p=0.1) omitted — eval-mode semantics.
        for d in range(2):       # d=0 forward, d=1 backward
            wih_ref, whh_ref, b_ref = layer_refs[6 * layer + 3 * d:
                                                 6 * layer + 3 * d + 3]
            wih = wih_ref[...]

            # --- Input projection for all T*B rows as a single GEMM -------
            if layer == 0:
                gx = jnp.dot(x_ref[...], wih,
                             preferred_element_type=jnp.float32)
            else:
                # input is [fwd | bwd] of previous layer; contract each half
                # against the matching half of Wih (avoids a concatenate).
                gx = (jnp.dot(prev_f[...], wih[:H, :],
                              preferred_element_type=jnp.float32)
                      + jnp.dot(prev_b[...], wih[H:, :],
                                preferred_element_type=jnp.float32))
            gx_ref[...] = gx + b_ref[...]            # (T*B, 4H), bias folded in

            whh = whh_ref[...]                       # (H, 4H), resident
            dst = cur_f if d == 0 else cur_b

            # --- Serial recurrence: only h @ Whh per step ------------------
            def step(t, carry, d=d, whh=whh, dst=dst):
                h, c = carry
                tt = t if d == 0 else T - 1 - t
                row = pl.multiple_of(tt * B, B)      # sublane-aligned offset
                gates = gx_ref[pl.ds(row, B), :] + jnp.dot(
                    h, whh, preferred_element_type=jnp.float32)
                # PyTorch gate order: i, f, g, o
                i = jax.nn.sigmoid(gates[:, 0:H])
                f = jax.nn.sigmoid(gates[:, H:2 * H])
                g = jnp.tanh(gates[:, 2 * H:3 * H])
                o = jax.nn.sigmoid(gates[:, 3 * H:4 * H])
                c_new = f * c + i * g
                h_new = o * jnp.tanh(c_new)
                dst[pl.ds(row, B), :] = h_new
                return (h_new, c_new)

            init = (jnp.zeros((B, H), jnp.float32),
                    jnp.zeros((B, H), jnp.float32))
            jax.lax.fori_loop(0, T, step, init, unroll=True)

    # --- Output projection: Linear(2H -> H) + PReLU, one GEMM over T*B rows
    w = w_lin_ref[...]                               # (2H, H)
    y = (jnp.dot(cur_f[...], w[:H, :], preferred_element_type=jnp.float32)
         + jnp.dot(cur_b[...], w[H:, :], preferred_element_type=jnp.float32)
         + b_lin_ref[...])
    a = a_ref[0, 0]
    out_ref[...] = jnp.where(y > 0.0, y, a * y).astype(out_ref.dtype)


# ----------------------------------------------------------------------------
# Wrapper: pad batch to 8 sublanes, flatten to (T*B, H), one pallas_call
# ----------------------------------------------------------------------------
def bilstm_forward(protein_bth, params, hidden, num_layers):
    # protein_bth: (B, T, hidden) [batch_first, like PyTorch]
    B, T, _ = protein_bth.shape
    B_pad = ((B + 7) // 8) * 8
    x = protein_bth.astype(jnp.float32)
    if B_pad != B:
        x = jnp.pad(x, ((0, B_pad - B), (0, 0), (0, 0)))
    # time-major, flattened rows: row index = t * B_pad + b
    x = jnp.transpose(x, (1, 0, 2)).reshape(T * B_pad, hidden)

    inputs = [x]
    for layer in range(num_layers):
        p = params["lstm"][layer]
        inputs += [p["wih_f"], p["whh_f"], p["b_f"],
                   p["wih_r"], p["whh_r"], p["b_r"]]
    inputs += [params["w_lin"], params["b_lin"], params["prelu_a"]]
    n_in = len(inputs)

    kernel = functools.partial(_bilstm_stack_kernel, hidden=hidden,
                               num_layers=num_layers, seq_len=T, batch=B_pad)

    out = pl.pallas_call(
        kernel,
        out_shape=jax.ShapeDtypeStruct((T * B_pad, hidden), jnp.float32),
        in_specs=[pl.BlockSpec(memory_space=pltpu.MemorySpace.VMEM)
                  for _ in range(n_in)],
        out_specs=pl.BlockSpec(memory_space=pltpu.MemorySpace.VMEM),
        scratch_shapes=[
            pltpu.VMEM((T * B_pad, hidden), jnp.float32),      # slab 0, fwd
            pltpu.VMEM((T * B_pad, hidden), jnp.float32),      # slab 0, bwd
            pltpu.VMEM((T * B_pad, hidden), jnp.float32),      # slab 1, fwd
            pltpu.VMEM((T * B_pad, hidden), jnp.float32),      # slab 1, bwd
            pltpu.VMEM((T * B_pad, 4 * hidden), jnp.float32),  # x-projection
        ],
    )(*inputs)

    out = jnp.transpose(out.reshape(T, B_pad, hidden), (1, 0, 2))[:B]
    return out                                        # (B, T, hidden)


# ----------------------------------------------------------------------------
# Parameter init (deterministic, PyTorch-like uniform(-1/sqrt(H), 1/sqrt(H)))
# ----------------------------------------------------------------------------
def init_params(key, hidden, num_layers):
    bound = 1.0 / np.sqrt(hidden)
    params = {"lstm": []}
    for layer in range(num_layers):
        in_dim = hidden if layer == 0 else 2 * hidden
        layer_p = {}
        for d in ("f", "r"):
            key, k1, k2, k3, k4 = jax.random.split(key, 5)
            wih = jax.random.uniform(k1, (4 * hidden, in_dim), jnp.float32,
                                     -bound, bound)
            whh = jax.random.uniform(k2, (4 * hidden, hidden), jnp.float32,
                                     -bound, bound)
            bih = jax.random.uniform(k3, (4 * hidden,), jnp.float32,
                                     -bound, bound)
            bhh = jax.random.uniform(k4, (4 * hidden,), jnp.float32,
                                     -bound, bound)
            layer_p[f"wih_{d}"] = wih.T                      # (in_dim, 4H)
            layer_p[f"whh_{d}"] = whh.T                      # (H, 4H)
            layer_p[f"b_{d}"] = (bih + bhh)[None, :]         # (1, 4H)
        params["lstm"].append(layer_p)

    key, k1, k2 = jax.random.split(key, 3)
    lin_bound = 1.0 / np.sqrt(2 * hidden)
    w_lin = jax.random.uniform(k1, (hidden, 2 * hidden), jnp.float32,
                               -lin_bound, lin_bound)
    b_lin = jax.random.uniform(k2, (hidden,), jnp.float32,
                               -lin_bound, lin_bound)
    params["w_lin"] = w_lin.T                # (2H, H)
    params["b_lin"] = b_lin[None, :]         # (1, H)
    params["prelu_a"] = jnp.full((1, 1), 0.25, jnp.float32)
    return params


# ----------------------------------------------------------------------------
# Pure-JAX reference (same math) for a correctness check
# ----------------------------------------------------------------------------
def _ref_lstm_dir(x_tbh, wih_t, whh_t, b, hidden):
    T, B, _ = x_tbh.shape

    def step(carry, xt):
        h, c = carry
        gates = xt @ wih_t + h @ whh_t + b
        i = jax.nn.sigmoid(gates[:, :hidden])
        f = jax.nn.sigmoid(gates[:, hidden:2 * hidden])
        g = jnp.tanh(gates[:, 2 * hidden:3 * hidden])
        o = jax.nn.sigmoid(gates[:, 3 * hidden:])
        c = f * c + i * g
        h = o * jnp.tanh(c)
        return (h, c), h

    init = (jnp.zeros((B, hidden), jnp.float32),
            jnp.zeros((B, hidden), jnp.float32))
    _, ys = jax.lax.scan(step, init, x_tbh)
    return ys


def bilstm_reference(protein_bth, params, hidden, num_layers):
    x = jnp.transpose(protein_bth, (1, 0, 2)).astype(jnp.float32)
    for layer in range(num_layers):
        p = params["lstm"][layer]
        fwd = _ref_lstm_dir(x, p["wih_f"], p["whh_f"], p["b_f"], hidden)
        bwd = _ref_lstm_dir(x[::-1], p["wih_r"], p["whh_r"], p["b_r"],
                            hidden)[::-1]
        x = jnp.concatenate([fwd, bwd], axis=-1)
    y = x @ params["w_lin"] + params["b_lin"]
    a = params["prelu_a"][0, 0]
    y = jnp.where(y > 0, y, a * y)
    return jnp.transpose(y, (1, 0, 2))


# ----------------------------------------------------------------------------
if __name__ == "__main__":
    hidden = 32
    num_layers = 2
    B, T = 2, 8

    key = jax.random.PRNGKey(0)
    key, pkey, xkey = jax.random.split(key, 3)
    params = init_params(pkey, hidden, num_layers)
    protein = jax.random.normal(xkey, (B, T, hidden), jnp.float32)

    fwd = jax.jit(functools.partial(bilstm_forward, hidden=hidden,
                                    num_layers=num_layers))
    out = fwd(protein, params)
    out = jax.block_until_ready(out)

    ref = bilstm_reference(protein, params, hidden, num_layers)
    assert out.shape == (B, T, hidden), out.shape
    np.testing.assert_allclose(np.asarray(out), np.asarray(ref),
                               rtol=1e-4, atol=1e-4)

    print("KERNEL_OK")
</pallas_src>

<mosaic_0001>
module attributes {stable_mosaic.version = 11 : i64} {
  func.func @_bilstm_stack_kernel(%arg0: memref<64x32xf32, #tpu.memory_space<vmem>>, %arg1: memref<32x128xf32, #tpu.memory_space<vmem>>, %arg2: memref<32x128xf32, #tpu.memory_space<vmem>>, %arg3: memref<1x128xf32, #tpu.memory_space<vmem>>, %arg4: memref<32x128xf32, #tpu.memory_space<vmem>>, %arg5: memref<32x128xf32, #tpu.memory_space<vmem>>, %arg6: memref<1x128xf32, #tpu.memory_space<vmem>>, %arg7: memref<64x128xf32, #tpu.memory_space<vmem>>, %arg8: memref<32x128xf32, #tpu.memory_space<vmem>>, %arg9: memref<1x128xf32, #tpu.memory_space<vmem>>, %arg10: memref<64x128xf32, #tpu.memory_space<vmem>>, %arg11: memref<32x128xf32, #tpu.memory_space<vmem>>, %arg12: memref<1x128xf32, #tpu.memory_space<vmem>>, %arg13: memref<64x32xf32, #tpu.memory_space<vmem>>, %arg14: memref<1x32xf32, #tpu.memory_space<vmem>>, %arg15: memref<1x1xf32, #tpu.memory_space<vmem>>, %arg16: memref<64x32xf32, #tpu.memory_space<vmem>>, %arg17: memref<64x32xf32, #tpu.memory_space<vmem>>, %arg18: memref<64x32xf32, #tpu.memory_space<vmem>>, %arg19: memref<64x32xf32, #tpu.memory_space<vmem>>, %arg20: memref<64x32xf32, #tpu.memory_space<vmem>>, %arg21: memref<64x128xf32, #tpu.memory_space<vmem>>) attributes {dimension_semantics = [], scalar_prefetch = 0 : i64, scratch_operands = 5 : i64, tpu.core_type = #tpu.core_type<tc>} {
    %c0 = arith.constant 0 : index
    %c0_0 = arith.constant 0 : index
    %0 = vector.load %arg1[%c0, %c0_0] : memref<32x128xf32, #tpu.memory_space<vmem>>, vector<32x128xf32>
    %c0_1 = arith.constant 0 : index
    %c0_2 = arith.constant 0 : index
    %1 = vector.load %arg0[%c0_1, %c0_2] : memref<64x32xf32, #tpu.memory_space<vmem>>, vector<64x32xf32>
    %cst = arith.constant dense<0.000000e+00> : vector<64x128xf32>
    %2 = tpu.matmul %1, %0, %cst {dimension_numbers = #tpu.dot_dimension_numbers<[1], [0], [0], [1], [0, 0, 1, 1], [], []>} : vector<64x32xf32>, vector<32x128xf32>, vector<64x128xf32> -> vector<64x128xf32>
    %c0_3 = arith.constant 0 : index
    %c0_4 = arith.constant 0 : index
    %3 = vector.load %arg3[%c0_3, %c0_4] : memref<1x128xf32, #tpu.memory_space<vmem>>, vector<1x128xf32>
    %4 = vector.broadcast %3 : vector<1x128xf32> to vector<64x128xf32>
    %5 = arith.addf %2, %4 : vector<64x128xf32>
    %c0_5 = arith.constant 0 : index
    %c0_6 = arith.constant 0 : index
    %6 = vector.load %arg21[%c0_5, %c0_6] : memref<64x128xf32, #tpu.memory_space<vmem>>, vector<64x128xf32>
    tpu.vector_store %arg21[%c0_5, %c0_6], %5 {strides = array<i32>} : memref<64x128xf32, #tpu.memory_space<vmem>>, vector<64x128xf32>,
    %c0_7 = arith.constant 0 : index
    %c0_8 = arith.constant 0 : index
    %7 = vector.load %arg2[%c0_7, %c0_8] : memref<32x128xf32, #tpu.memory_space<vmem>>, vector<32x128xf32>
    %cst_9 = arith.constant 0.000000e+00 : f32
    %8 = vector.broadcast %cst_9 : f32 to vector<8x32xf32>
    %cst_10 = arith.constant 0.000000e+00 : f32
    %9 = vector.broadcast %cst_10 : f32 to vector<8x32xf32>
    %c0_i32 = arith.constant 0 : i32
    %c8_i32 = arith.constant 8 : i32
    %10 = arith.muli %c0_i32, %c8_i32 : i32
    %11 = tpu.assume_multiple %10, 8 : i32
    %12 = arith.index_cast %11 : i32 to index
    %c0_11 = arith.constant 0 : index
    %13 = vector.load %arg21[%12, %c0_11] : memref<64x128xf32, #tpu.memory_space<vmem>>, vector<8x128xf32>
    %cst_12 = arith.constant dense<0.000000e+00> : vector<8x128xf32>
    %14 = tpu.matmul %8, %7, %cst_12 {dimension_numbers = #tpu.dot_dimension_numbers<[1], [0], [0], [1], [0, 0, 1, 1], [], []>} : vector<8x32xf32>, vector<32x128xf32>, vector<8x128xf32> -> vector<8x128xf32>
    %15 = arith.addf %13, %14 : vector<8x128xf32>
    %16 = vector.extract_strided_slice %15 {offsets = [0, 0], sizes = [8, 32], strides = [1, 1]} : vector<8x128xf32> to vector<8x32xf32>
    %17 = arith.negf %16 : vector<8x32xf32>
    %18 = math.exp %17 : vector<8x32xf32>
    %cst_13 = arith.constant 1.000000e+00 : f32
    %19 = vector.broadcast %cst_13 : f32 to vector<8x32xf32>
    %20 = arith.addf %19, %18 : vector<8x32xf32>
    %21 = arith.divf %19, %20 : vector<8x32xf32>
    %22 = vector.extract_strided_slice %15 {offsets = [0, 32], sizes = [8, 32], strides = [1, 1]} : vector<8x128xf32> to vector<8x32xf32>
    %23 = arith.negf %22 : vector<8x32xf32>
    %24 = math.exp %23 : vector<8x32xf32>
    %cst_14 = arith.constant 1.000000e+00 : f32
    %25 = vector.broadcast %cst_14 : f32 to vector<8x32xf32>
    %26 = arith.addf %25, %24 : vector<8x32xf32>
    %27 = arith.divf %25, %26 : vector<8x32xf32>
    %28 = vector.extract_strided_slice %15 {offsets = [0, 64], sizes = [8, 32], strides = [1, 1]} : vector<8x128xf32> to vector<8x32xf32>
    %29 = math.tanh %28 : vector<8x32xf32>
    %30 = vector.extract_strided_slice %15 {offsets = [0, 96], sizes = [8, 32], strides = [1, 1]} : vector<8x128xf32> to vector<8x32xf32>
    %31 = arith.negf %30 : vector<8x32xf32>
    %32 = math.exp %31 : vector<8x32xf32>
    %cst_15 = arith.constant 1.000000e+00 : f32
    %33 = vector.broadcast %cst_15 : f32 to vector<8x32xf32>
    %34 = arith.addf %33, %32 : vector<8x32xf32>
    %35 = arith.divf %33, %34 : vector<8x32xf32>
    %36 = arith.mulf %27, %9 : vector<8x32xf32>
    %37 = arith.mulf %21, %29 : vector<8x32xf32>
    %38 = arith.addf %36, %37 : vector<8x32xf32>
    %39 = math.tanh %38 : vector<8x32xf32>
    %40 = arith.mulf %35, %39 : vector<8x32xf32>
    %41 = arith.index_cast %11 : i32 to index
    %c0_16 = arith.constant 0 : index
    %42 = vector.load %arg17[%41, %c0_16] : memref<64x32xf32, #tpu.memory_space<vmem>>, vector<8x32xf32>
    tpu.vector_store %arg17[%41, %c0_16], %40 {strides = array<i32>} : memref<64x32xf32, #tpu.memory_space<vmem>>, vector<8x32xf32>,
    %c1_i32 = arith.constant 1 : i32
    %c8_i32_17 = arith.constant 8 : i32
    %43 = arith.muli %c1_i32, %c8_i32_17 : i32
    %44 = tpu.assume_multiple %43, 8 : i32
    %45 = arith.index_cast %44 : i32 to index
    %c0_18 = arith.constant 0 : index
    %46 = vector.load %arg21[%45, %c0_18] : memref<64x128xf32, #tpu.memory_space<vmem>>, vector<8x128xf32>
    %cst_19 = arith.constant dense<0.000000e+00> : vector<8x128xf32>
    %47 = tpu.matmul %40, %7, %cst_19 {dimension_numbers = #tpu.dot_dimension_numbers<[1], [0], [0], [1], [0, 0, 1, 1], [], []>} : vector<8x32xf32>, vector<32x128xf32>, vector<8x128xf32> -> vector<8x128xf32>
    %48 = arith.addf %46, %47 : vector<8x128xf32>
    %49 = vector.extract_strided_slice %48 {offsets = [0, 0], sizes = [8, 32], strides = [1, 1]} : vector<8x128xf32> to vector<8x32xf32>
    %50 = arith.negf %49 : vector<8x32xf32>
    %51 = math.exp %50 : vector<8x32xf32>
    %cst_20 = arith.constant 1.000000e+00 : f32
    %52 = vector.broadcast %cst_20 : f32 to vector<8x32xf32>
    %53 = arith.addf %52, %51 : vector<8x32xf32>
    %54 = arith.divf %52, %53 : vector<8x32xf32>
    %55 = vector.extract_strided_slice %48 {offsets = [0, 32], sizes = [8, 32], strides = [1, 1]} : vector<8x128xf32> to vector<8x32xf32>
    %56 = arith.negf %55 : vector<8x32xf32>
    %57 = math.exp %56 : vector<8x32xf32>
    %cst_21 = arith.constant 1.000000e+00 : f32
    %58 = vector.broadcast %cst_21 : f32 to vector<8x32xf32>
    %59 = arith.addf %58, %57 : vector<8x32xf32>
    %60 = arith.divf %58, %59 : vector<8x32xf32>
    %61 = vector.extract_strided_slice %48 {offsets = [0, 64], sizes = [8, 32], strides = [1, 1]} : vector<8x128xf32> to vector<8x32xf32>
    %62 = math.tanh %61 : vector<8x32xf32>
    %63 = vector.extract_strided_slice %48 {offsets = [0, 96], sizes = [8, 32], strides = [1, 1]} : vector<8x128xf32> to vector<8x32xf32>
    %64 = arith.negf %63 : vector<8x32xf32>
    %65 = math.exp %64 : vector<8x32xf32>
    %cst_22 = arith.constant 1.000000e+00 : f32
    %66 = vector.broadcast %cst_22 : f32 to vector<8x32xf32>
    %67 = arith.addf %66, %65 : vector<8x32xf32>
    %68 = arith.divf %66, %67 : vector<8x32xf32>
    %69 = arith.mulf %60, %38 : vector<8x32xf32>
    %70 = arith.mulf %54, %62 : vector<8x32xf32>
    %71 = arith.addf %69, %70 : vector<8x32xf32>
    %72 = math.tanh %71 : vector<8x32xf32>
    %73 = arith.mulf %68, %72 : vector<8x32xf32>
    %74 = arith.index_cast %44 : i32 to index
    %c0_23 = arith.constant 0 : index
    %75 = vector.load %arg17[%74, %c0_23] : memref<64x32xf32, #tpu.memory_space<vmem>>, vector<8x32xf32>
    tpu.vector_store %arg17[%74, %c0_23], %73 {strides = array<i32>} : memref<64x32xf32, #tpu.memory_space<vmem>>, vector<8x32xf32>,
    %c2_i32 = arith.constant 2 : i32
    %c8_i32_24 = arith.constant 8 : i32
    %76 = arith.muli %c2_i32, %c8_i32_24 : i32
    %77 = tpu.assume_multiple %76, 8 : i32
    %78 = arith.index_cast %77 : i32 to index
    %c0_25 = arith.constant 0 : index
    %79 = vector.load %arg21[%78, %c0_25] : memref<64x128xf32, #tpu.memory_space<vmem>>, vector<8x128xf32>
    %cst_26 = arith.constant dense<0.000000e+00> : vector<8x128xf32>
    %80 = tpu.matmul %73, %7, %cst_26 {dimension_numbers = #tpu.dot_dimension_numbers<[1], [0], [0], [1], [0, 0, 1, 1], [], []>} : vector<8x32xf32>, vector<32x128xf32>, vector<8x128xf32> -> vector<8x128xf32>
    %81 = arith.addf %79, %80 : vector<8x128xf32>
    %82 = vector.extract_strided_slice %81 {offsets = [0, 0], sizes = [8, 32], strides = [1, 1]} : vector<8x128xf32> to vector<8x32xf32>
    %83 = arith.negf %82 : vector<8x32xf32>
    %84 = math.exp %83 : vector<8x32xf32>
    %cst_27 = arith.constant 1.000000e+00 : f32
    %85 = vector.broadcast %cst_27 : f32 to vector<8x32xf32>
    %86 = arith.addf %85, %84 : vector<8x32xf32>
    %87 = arith.divf %85, %86 : vector<8x32xf32>
    %88 = vector.extract_strided_slice %81 {offsets = [0, 32], sizes = [8, 32], strides = [1, 1]} : vector<8x128xf32> to vector<8x32xf32>
    %89 = arith.negf %88 : vector<8x32xf32>
    %90 = math.exp %89 : vector<8x32xf32>
    %cst_28 = arith.constant 1.000000e+00 : f32
    %91 = vector.broadcast %cst_28 : f32 to vector<8x32xf32>
    %92 = arith.addf %91, %90 : vector<8x32xf32>
    %93 = arith.divf %91, %92 : vector<8x32xf32>
    %94 = vector.extract_strided_slice %81 {offsets = [0, 64], sizes = [8, 32], strides = [1, 1]} : vector<8x128xf32> to vector<8x32xf32>
    %95 = math.tanh %94 : vector<8x32xf32>
    %96 = vector.extract_strided_slice %81 {offsets = [0, 96], sizes = [8, 32], strides = [1, 1]} : vector<8x128xf32> to vector<8x32xf32>
    %97 = arith.negf %96 : vector<8x32xf32>
    %98 = math.exp %97 : vector<8x32xf32>
    %cst_29 = arith.constant 1.000000e+00 : f32
    %99 = vector.broadcast %cst_29 : f32 to vector<8x32xf32>
    %100 = arith.addf %99, %98 : vector<8x32xf32>
    %101 = arith.divf %99, %100 : vector<8x32xf32>
    %102 = arith.mulf %93, %71 : vector<8x32xf32>
    %103 = arith.mulf %87, %95 : vector<8x32xf32>
    %104 = arith.addf %102, %103 : vector<8x32xf32>
    %105 = math.tanh %104 : vector<8x32xf32>
    %106 = arith.mulf %101, %105 : vector<8x32xf32>
    %107 = arith.index_cast %77 : i32 to index
    %c0_30 = arith.constant 0 : index
    %108 = vector.load %arg17[%107, %c0_30] : memref<64x32xf32, #tpu.memory_space<vmem>>, vector<8x32xf32>
    tpu.vector_store %arg17[%107, %c0_30], %106 {strides = array<i32>} : memref<64x32xf32, #tpu.memory_space<vmem>>, vector<8x32xf32>,
    %c3_i32 = arith.constant 3 : i32
    %c8_i32_31 = arith.constant 8 : i32
    %109 = arith.muli %c3_i32, %c8_i32_31 : i32
    %110 = tpu.assume_multiple %109, 8 : i32
    %111 = arith.index_cast %110 : i32 to index
    %c0_32 = arith.constant 0 : index
    %112 = vector.load %arg21[%111, %c0_32] : memref<64x128xf32, #tpu.memory_space<vmem>>, vector<8x128xf32>
    %cst_33 = arith.constant dense<0.000000e+00> : vector<8x128xf32>
    %113 = tpu.matmul %106, %7, %cst_33 {dimension_numbers = #tpu.dot_dimension_numbers<[1], [0], [0], [1], [0, 0, 1, 1], [], []>} : vector<8x32xf32>, vector<32x128xf32>, vector<8x128xf32> -> vector<8x128xf32>
    %114 = arith.addf %112, %113 : vector<8x128xf32>
    %115 = vector.extract_strided_slice %114 {offsets = [0, 0], sizes = [8, 32], strides = [1, 1]} : vector<8x128xf32> to vector<8x32xf32>
    %116 = arith.negf %115 : vector<8x32xf32>
    %117 = math.exp %116 : vector<8x32xf32>
    %cst_34 = arith.constant 1.000000e+00 : f32
    %118 = vector.broadcast %cst_34 : f32 to vector<8x32xf32>
    %119 = arith.addf %118, %117 : vector<8x32xf32>
    %120 = arith.divf %118, %119 : vector<8x32xf32>
    %121 = vector.extract_strided_slice %114 {offsets = [0, 32], sizes = [8, 32], strides = [1, 1]} : vector<8x128xf32> to vector<8x32xf32>
    %122 = arith.negf %121 : vector<8x32xf32>
    %123 = math.exp %122 : vector<8x32xf32>
    %cst_35 = arith.constant 1.000000e+00 : f32
    %124 = vector.broadcast %cst_35 : f32 to vector<8x32xf32>
    %125 = arith.addf %124, %123 : vector<8x32xf32>
    %126 = arith.divf %124, %125 : vector<8x32xf32>
    %127 = vector.extract_strided_slice %114 {offsets = [0, 64], sizes = [8, 32], strides = [1, 1]} : vector<8x128xf32> to vector<8x32xf32>
    %128 = math.tanh %127 : vector<8x32xf32>
    %129 = vector.extract_strided_slice %114 {offsets = [0, 96], sizes = [8, 32], strides = [1, 1]} : vector<8x128xf32> to vector<8x32xf32>
    %130 = arith.negf %129 : vector<8x32xf32>
    %131 = math.exp %130 : vector<8x32xf32>
    %cst_36 = arith.constant 1.000000e+00 : f32
    %132 = vector.broadcast %cst_36 : f32 to vector<8x32xf32>
    %133 = arith.addf %132, %131 : vector<8x32xf32>
    %134 = arith.divf %132, %133 : vector<8x32xf32>
    %135 = arith.mulf %126, %104 : vector<8x32xf32>
    %136 = arith.mulf %120, %128 : vector<8x32xf32>
    %137 = arith.addf %135, %136 : vector<8x32xf32>
    %138 = math.tanh %137 : vector<8x32xf32>
    %139 = arith.mulf %134, %138 : vector<8x32xf32>
    %140 = arith.index_cast %110 : i32 to index
    %c0_37 = arith.constant 0 : index
    %141 = vector.load %arg17[%140, %c0_37] : memref<64x32xf32, #tpu.memory_space<vmem>>, vector<8x32xf32>
    tpu.vector_store %arg17[%140, %c0_37], %139 {strides = array<i32>} : memref<64x32xf32, #tpu.memory_space<vmem>>, vector<8x32xf32>,
    %c4_i32 = arith.constant 4 : i32
    %c8_i32_38 = arith.constant 8 : i32
    %142 = arith.muli %c4_i32, %c8_i32_38 : i32
    %143 = tpu.assume_multiple %142, 8 : i32
    %144 = arith.index_cast %143 : i32 to index
    %c0_39 = arith.constant 0 : index
    %145 = vector.load %arg21[%144, %c0_39] : memref<64x128xf32, #tpu.memory_space<vmem>>, vector<8x128xf32>
    %cst_40 = arith.constant dense<0.000000e+00> : vector<8x128xf32>
    %146 = tpu.matmul %139, %7, %cst_40 {dimension_numbers = #tpu.dot_dimension_numbers<[1], [0], [0], [1], [0, 0, 1, 1], [], []>} : vector<8x32xf32>, vector<32x128xf32>, vector<8x128xf32> -> vector<8x128xf32>
    %147 = arith.addf %145, %146 : vector<8x128xf32>
    %148 = vector.extract_strided_slice %147 {offsets = [0, 0], sizes = [8, 32], strides = [1, 1]} : vector<8x128xf32> to vector<8x32xf32>
    %149 = arith.negf %148 : vector<8x32xf32>
    %150 = math.exp %149 : vector<8x32xf32>
    %cst_41 = arith.constant 1.000000e+00 : f32
    %151 = vector.broadcast %cst_41 : f32 to vector<8x32xf32>
    %152 = arith.addf %151, %150 : vector<8x32xf32>
    %153 = arith.divf %151, %152 : vector<8x32xf32>
    %154 = vector.extract_strided_slice %147 {offsets = [0, 32], sizes = [8, 32], strides = [1, 1]} : vector<8x128xf32> to vector<8x32xf32>
    %155 = arith.negf %154 : vector<8x32xf32>
    %156 = math.exp %155 : vector<8x32xf32>
    %cst_42 = arith.constant 1.000000e+00 : f32
    %157 = vector.broadcast %cst_42 : f32 to vector<8x32xf32>
    %158 = arith.addf %157, %156 : vector<8x32xf32>
    %159 = arith.divf %157, %158 : vector<8x32xf32>
    %160 = vector.extract_strided_slice %147 {offsets = [0, 64], sizes = [8, 32], strides = [1, 1]} : vector<8x128xf32> to vector<8x32xf32>
    %161 = math.tanh %160 : vector<8x32xf32>
    %162 = vector.extract_strided_slice %147 {offsets = [0, 96], sizes = [8, 32], strides = [1, 1]} : vector<8x128xf32> to vector<8x32xf32>
    %163 = arith.negf %162 : vector<8x32xf32>
    %164 = math.exp %163 : vector<8x32xf32>
    %cst_43 = arith.constant 1.000000e+00 : f32
    %165 = vector.broadcast %cst_43 : f32 to vector<8x32xf32>
    %166 = arith.addf %165, %164 : vector<8x32xf32>
    %167 = arith.divf %165, %166 : vector<8x32xf32>
    %168 = arith.mulf %159, %137 : vector<8x32xf32>
    %169 = arith.mulf %153, %161 : vector<8x32xf32>
    %170 = arith.addf %168, %169 : vector<8x32xf32>
    %171 = math.tanh %170 : vector<8x32xf32>
    %172 = arith.mulf %167, %171 : vector<8x32xf32>
    %173 = arith.index_cast %143 : i32 to index
    %c0_44 = arith.constant 0 : index
    %174 = vector.load %arg17[%173, %c0_44] : memref<64x32xf32, #tpu.memory_space<vmem>>, vector<8x32xf32>
    tpu.vector_store %arg17[%173, %c0_44], %172 {strides = array<i32>} : memref<64x32xf32, #tpu.memory_space<vmem>>, vector<8x32xf32>,
    %c5_i32 = arith.constant 5 : i32
    %c8_i32_45 = arith.constant 8 : i32
    %175 = arith.muli %c5_i32, %c8_i32_45 : i32
    %176 = tpu.assume_multiple %175, 8 : i32
    %177 = arith.index_cast %176 : i32 to index
    %c0_46 = arith.constant 0 : index
    %178 = vector.load %arg21[%177, %c0_46] : memref<64x128xf32, #tpu.memory_space<vmem>>, vector<8x128xf32>
    %cst_47 = arith.constant dense<0.000000e+00> : vector<8x128xf32>
    %179 = tpu.matmul %172, %7, %cst_47 {dimension_numbers = #tpu.dot_dimension_numbers<[1], [0], [0], [1], [0, 0, 1, 1], [], []>} : vector<8x32xf32>, vector<32x128xf32>, vector<8x128xf32> -> vector<8x128xf32>
    %180 = arith.addf %178, %179 : vector<8x128xf32>
    %181 = vector.extract_strided_slice %180 {offsets = [0, 0], sizes = [8, 32], strides = [1, 1]} : vector<8x128xf32> to vector<8x32xf32>
    %182 = arith.negf %181 : vector<8x32xf32>
    %183 = math.exp %182 : vector<8x32xf32>
    %cst_48 = arith.constant 1.000000e+00 : f32
    %184 = vector.broadcast %cst_48 : f32 to vector<8x32xf32>
    %185 = arith.addf %184, %183 : vector<8x32xf32>
    %186 = arith.divf %184, %185 : vector<8x32xf32>
    %187 = vector.extract_strided_slice %180 {offsets = [0, 32], sizes = [8, 32], strides = [1, 1]} : vector<8x128xf32> to vector<8x32xf32>
    %188 = arith.negf %187 : vector<8x32xf32>
    %189 = math.exp %188 : vector<8x32xf32>
    %cst_49 = arith.constant 1.000000e+00 : f32
    %190 = vector.broadcast %cst_49 : f32 to vector<8x32xf32>
    %191 = arith.addf %190, %189 : vector<8x32xf32>
    %192 = arith.divf %190, %191 : vector<8x32xf32>
    %193 = vector.extract_strided_slice %180 {offsets = [0, 64], sizes = [8, 32], strides = [1, 1]} : vector<8x128xf32> to vector<8x32xf32>
    %194 = math.tanh %193 : vector<8x32xf32>
    %195 = vector.extract_strided_slice %180 {offsets = [0, 96], sizes = [8, 32], strides = [1, 1]} : vector<8x128xf32> to vector<8x32xf32>
    %196 = arith.negf %195 : vector<8x32xf32>
    %197 = math.exp %196 : vector<8x32xf32>
    %cst_50 = arith.constant 1.000000e+00 : f32
    %198 = vector.broadcast %cst_50 : f32 to vector<8x32xf32>
    %199 = arith.addf %198, %197 : vector<8x32xf32>
    %200 = arith.divf %198, %199 : vector<8x32xf32>
    %201 = arith.mulf %192, %170 : vector<8x32xf32>
    %202 = arith.mulf %186, %194 : vector<8x32xf32>
    %203 = arith.addf %201, %202 : vector<8x32xf32>
    %204 = math.tanh %203 : vector<8x32xf32>
    %205 = arith.mulf %200, %204 : vector<8x32xf32>
    %206 = arith.index_cast %176 : i32 to index
    %c0_51 = arith.constant 0 : index
    %207 = vector.load %arg17[%206, %c0_51] : memref<64x32xf32, #tpu.memory_space<vmem>>, vector<8x32xf32>
    tpu.vector_store %arg17[%206, %c0_51], %205 {strides = array<i32>} : memref<64x32xf32, #tpu.memory_space<vmem>>, vector<8x32xf32>,
    %c6_i32 = arith.constant 6 : i32
    %c8_i32_52 = arith.constant 8 : i32
    %208 = arith.muli %c6_i32, %c8_i32_52 : i32
    %209 = tpu.assume_multiple %208, 8 : i32
    %210 = arith.index_cast %209 : i32 to index
    %c0_53 = arith.constant 0 : index
    %211 = vector.load %arg21[%210, %c0_53] : memref<64x128xf32, #tpu.memory_space<vmem>>, vector<8x128xf32>
    %cst_54 = arith.constant dense<0.000000e+00> : vector<8x128xf32>
    %212 = tpu.matmul %205, %7, %cst_54 {dimension_numbers = #tpu.dot_dimension_numbers<[1], [0], [0], [1], [0, 0, 1, 1], [], []>} : vector<8x32xf32>, vector<32x128xf32>, vector<8x128xf32> -> vector<8x128xf32>
    %213 = arith.addf %211, %212 : vector<8x128xf32>
    %214 = vector.extract_strided_slice %213 {offsets = [0, 0], sizes = [8, 32], strides = [1, 1]} : vector<8x128xf32> to vector<8x32xf32>
    %215 = arith.negf %214 : vector<8x32xf32>
    %216 = math.exp %215 : vector<8x32xf32>
    %cst_55 = arith.constant 1.000000e+00 : f32
    %217 = vector.broadcast %cst_55 : f32 to vector<8x32xf32>
    %218 = arith.addf %217, %216 : vector<8x32xf32>
    %219 = arith.divf %217, %218 : vector<8x32xf32>
    %220 = vector.extract_strided_slice %213 {offsets = [0, 32], sizes = [8, 32], strides = [1, 1]} : vector<8x128xf32> to vector<8x32xf32>
    %221 = arith.negf %220 : vector<8x32xf32>
    %222 = math.exp %221 : vector<8x32xf32>
    %cst_56 = arith.constant 1.000000e+00 : f32
    %223 = vector.broadcast %cst_56 : f32 to vector<8x32xf32>
    %224 = arith.addf %223, %222 : vector<8x32xf32>
    %225 = arith.divf %223, %224 : vector<8x32xf32>
    %226 = vector.extract_strided_slice %213 {offsets = [0, 64], sizes = [8, 32], strides = [1, 1]} : vector<8x128xf32> to vector<8x32xf32>
    %227 = math.tanh %226 : vector<8x32xf32>
    %228 = vector.extract_strided_slice %213 {offsets = [0, 96], sizes = [8, 32], strides = [1, 1]} : vector<8x128xf32> to vector<8x32xf32>
    %229 = arith.negf %228 : vector<8x32xf32>
    %230 = math.exp %229 : vector<8x32xf32>
    %cst_57 = arith.constant 1.000000e+00 : f32
    %231 = vector.broadcast %cst_57 : f32 to vector<8x32xf32>
    %232 = arith.addf %231, %230 : vector<8x32xf32>
    %233 = arith.divf %231, %232 : vector<8x32xf32>
    %234 = arith.mulf %225, %203 : vector<8x32xf32>
    %235 = arith.mulf %219, %227 : vector<8x32xf32>
    %236 = arith.addf %234, %235 : vector<8x32xf32>
    %237 = math.tanh %236 : vector<8x32xf32>
    %238 = arith.mulf %233, %237 : vector<8x32xf32>
    %239 = arith.index_cast %209 : i32 to index
    %c0_58 = arith.constant 0 : index
    %240 = vector.load %arg17[%239, %c0_58] : memref<64x32xf32, #tpu.memory_space<vmem>>, vector<8x32xf32>
    tpu.vector_store %arg17[%239, %c0_58], %238 {strides = array<i32>} : memref<64x32xf32, #tpu.memory_space<vmem>>, vector<8x32xf32>,
    %c7_i32 = arith.constant 7 : i32
    %c8_i32_59 = arith.constant 8 : i32
    %241 = arith.muli %c7_i32, %c8_i32_59 : i32
    %242 = tpu.assume_multiple %241, 8 : i32
    %243 = arith.index_cast %242 : i32 to index
    %c0_60 = arith.constant 0 : index
    %244 = vector.load %arg21[%243, %c0_60] : memref<64x128xf32, #tpu.memory_space<vmem>>, vector<8x128xf32>
    %cst_61 = arith.constant dense<0.000000e+00> : vector<8x128xf32>
    %245 = tpu.matmul %238, %7, %cst_61 {dimension_numbers = #tpu.dot_dimension_numbers<[1], [0], [0], [1], [0, 0, 1, 1], [], []>} : vector<8x32xf32>, vector<32x128xf32>, vector<8x128xf32> -> vector<8x128xf32>
    %246 = arith.addf %244, %245 : vector<8x128xf32>
    %247 = vector.extract_strided_slice %246 {offsets = [0, 0], sizes = [8, 32], strides = [1, 1]} : vector<8x128xf32> to vector<8x32xf32>
    %248 = arith.negf %247 : vector<8x32xf32>
    %249 = math.exp %248 : vector<8x32xf32>
    %cst_62 = arith.constant 1.000000e+00 : f32
    %250 = vector.broadcast %cst_62 : f32 to vector<8x32xf32>
    %251 = arith.addf %250, %249 : vector<8x32xf32>
    %252 = arith.divf %250, %251 : vector<8x32xf32>
    %253 = vector.extract_strided_slice %246 {offsets = [0, 32], sizes = [8, 32], strides = [1, 1]} : vector<8x128xf32> to vector<8x32xf32>
    %254 = arith.negf %253 : vector<8x32xf32>
    %255 = math.exp %254 : vector<8x32xf32>
    %cst_63 = arith.constant 1.000000e+00 : f32
    %256 = vector.broadcast %cst_63 : f32 to vector<8x32xf32>
    %257 = arith.addf %256, %255 : vector<8x32xf32>
    %258 = arith.divf %256, %257 : vector<8x32xf32>
    %259 = vector.extract_strided_slice %246 {offsets = [0, 64], sizes = [8, 32], strides = [1, 1]} : vector<8x128xf32> to vector<8x32xf32>
    %260 = math.tanh %259 : vector<8x32xf32>
    %261 = vector.extract_strided_slice %246 {offsets = [0, 96], sizes = [8, 32], strides = [1, 1]} : vector<8x128xf32> to vector<8x32xf32>
    %262 = arith.negf %261 : vector<8x32xf32>
    %263 = math.exp %262 : vector<8x32xf32>
    %cst_64 = arith.constant 1.000000e+00 : f32
    %264 = vector.broadcast %cst_64 : f32 to vector<8x32xf32>
    %265 = arith.addf %264, %263 : vector<8x32xf32>
    %266 = arith.divf %264, %265 : vector<8x32xf32>
    %267 = arith.mulf %258, %236 : vector<8x32xf32>
    %268 = arith.mulf %252, %260 : vector<8x32xf32>
    %269 = arith.addf %267, %268 : vector<8x32xf32>
    %270 = math.tanh %269 : vector<8x32xf32>
    %271 = arith.mulf %266, %270 : vector<8x32xf32>
    %272 = arith.index_cast %242 : i32 to index
    %c0_65 = arith.constant 0 : index
    %273 = vector.load %arg17[%272, %c0_65] : memref<64x32xf32, #tpu.memory_space<vmem>>, vector<8x32xf32>
    tpu.vector_store %arg17[%272, %c0_65], %271 {strides = array<i32>} : memref<64x32xf32, #tpu.memory_space<vmem>>, vector<8x32xf32>,
    %c8_i32_66 = arith.constant 8 : i32
    %c0_67 = arith.constant 0 : index
    %c0_68 = arith.constant 0 : index
    %274 = vector.load %arg4[%c0_67, %c0_68] : memref<32x128xf32, #tpu.memory_space<vmem>>, vector<32x128xf32>
    %c0_69 = arith.constant 0 : index
    %c0_70 = arith.constant 0 : index
    %275 = vector.load %arg0[%c0_69, %c0_70] : memref<64x32xf32, #tpu.memory_space<vmem>>, vector<64x32xf32>
    %cst_71 = arith.constant dense<0.000000e+00> : vector<64x128xf32>
    %276 = tpu.matmul %275, %274, %cst_71 {dimension_numbers = #tpu.dot_dimension_numbers<[1], [0], [0], [1], [0, 0, 1, 1], [], []>} : vector<64x32xf32>, vector<32x128xf32>, vector<64x128xf32> -> vector<64x128xf32>
    %c0_72 = arith.constant 0 : index
    %c0_73 = arith.constant 0 : index
    %277 = vector.load %arg6[%c0_72, %c0_73] : memref<1x128xf32, #tpu.memory_space<vmem>>, vector<1x128xf32>
    %278 = vector.broadcast %277 : vector<1x128xf32> to vector<64x128xf32>
    %279 = arith.addf %276, %278 : vector<64x128xf32>
    %c0_74 = arith.constant 0 : index
    %c0_75 = arith.constant 0 : index
    %280 = vector.load %arg21[%c0_74, %c0_75] : memref<64x128xf32, #tpu.memory_space<vmem>>, vector<64x128xf32>
    tpu.vector_store %arg21[%c0_74, %c0_75], %279 {strides = array<i32>} : memref<64x128xf32, #tpu.memory_space<vmem>>, vector<64x128xf32>,
    %c0_76 = arith.constant 0 : index
    %c0_77 = arith.constant 0 : index
    %281 = vector.load %arg5[%c0_76, %c0_77] : memref<32x128xf32, #tpu.memory_space<vmem>>, vector<32x128xf32>
    %cst_78 = arith.constant 0.000000e+00 : f32
    %282 = vector.broadcast %cst_78 : f32 to vector<8x32xf32>
    %cst_79 = arith.constant 0.000000e+00 : f32
    %283 = vector.broadcast %cst_79 : f32 to vector<8x32xf32>
    %c0_i32_80 = arith.constant 0 : i32
    %c7_i32_81 = arith.constant 7 : i32
    %284 = arith.subi %c7_i32_81, %c0_i32_80 : i32
    %c8_i32_82 = arith.constant 8 : i32
    %285 = arith.muli %284, %c8_i32_82 : i32
    %286 = tpu.assume_multiple %285, 8 : i32
    %287 = arith.index_cast %286 : i32 to index
    %c0_83 = arith.constant 0 : index
    %288 = vector.load %arg21[%287, %c0_83] : memref<64x128xf32, #tpu.memory_space<vmem>>, vector<8x128xf32>
    %cst_84 = arith.constant dense<0.000000e+00> : vector<8x128xf32>
    %289 = tpu.matmul %282, %281, %cst_84 {dimension_numbers = #tpu.dot_dimension_numbers<[1], [0], [0], [1], [0, 0, 1, 1], [], []>} : vector<8x32xf32>, vector<32x128xf32>, vector<8x128xf32> -> vector<8x128xf32>
    %290 = arith.addf %288, %289 : vector<8x128xf32>
    %291 = vector.extract_strided_slice %290 {offsets = [0, 0], sizes = [8, 32], strides = [1, 1]} : vector<8x128xf32> to vector<8x32xf32>
    %292 = arith.negf %291 : vector<8x32xf32>
    %293 = math.exp %292 : vector<8x32xf32>
    %cst_85 = arith.constant 1.000000e+00 : f32
    %294 = vector.broadcast %cst_85 : f32 to vector<8x32xf32>
    %295 = arith.addf %294, %293 : vector<8x32xf32>
    %296 = arith.divf %294, %295 : vector<8x32xf32>
    %297 = vector.extract_strided_slice %290 {offsets = [0, 32], sizes = [8, 32], strides = [1, 1]} : vector<8x128xf32> to vector<8x32xf32>
    %298 = arith.negf %297 : vector<8x32xf32>
    %299 = math.exp %298 : vector<8x32xf32>
    %cst_86 = arith.constant 1.000000e+00 : f32
    %300 = vector.broadcast %cst_86 : f32 to vector<8x32xf32>
    %301 = arith.addf %300, %299 : vector<8x32xf32>
    %302 = arith.divf %300, %301 : vector<8x32xf32>
    %303 = vector.extract_strided_slice %290 {offsets = [0, 64], sizes = [8, 32], strides = [1, 1]} : vector<8x128xf32> to vector<8x32xf32>
    %304 = math.tanh %303 : vector<8x32xf32>
    %305 = vector.extract_strided_slice %290 {offsets = [0, 96], sizes = [8, 32], strides = [1, 1]} : vector<8x128xf32> to vector<8x32xf32>
    %306 = arith.negf %305 : vector<8x32xf32>
    %307 = math.exp %306 : vector<8x32xf32>
    %cst_87 = arith.constant 1.000000e+00 : f32
    %308 = vector.broadcast %cst_87 : f32 to vector<8x32xf32>
    %309 = arith.addf %308, %307 : vector<8x32xf32>
    %310 = arith.divf %308, %309 : vector<8x32xf32>
    %311 = arith.mulf %302, %283 : vector<8x32xf32>
    %312 = arith.mulf %296, %304 : vector<8x32xf32>
    %313 = arith.addf %311, %312 : vector<8x32xf32>
    %314 = math.tanh %313 : vector<8x32xf32>
    %315 = arith.mulf %310, %314 : vector<8x32xf32>
    %316 = arith.index_cast %286 : i32 to index
    %c0_88 = arith.constant 0 : index
    %317 = vector.load %arg18[%316, %c0_88] : memref<64x32xf32, #tpu.memory_space<vmem>>, vector<8x32xf32>
    tpu.vector_store %arg18[%316, %c0_88], %315 {strides = array<i32>} : memref<64x32xf32, #tpu.memory_space<vmem>>, vector<8x32xf32>,
    %c1_i32_89 = arith.constant 1 : i32
    %c7_i32_90 = arith.constant 7 : i32
    %318 = arith.subi %c7_i32_90, %c1_i32_89 : i32
    %c8_i32_91 = arith.constant 8 : i32
    %319 = arith.muli %318, %c8_i32_91 : i32
    %320 = tpu.assume_multiple %319, 8 : i32
    %321 = arith.index_cast %320 : i32 to index
    %c0_92 = arith.constant 0 : index
    %322 = vector.load %arg21[%321, %c0_92] : memref<64x128xf32, #tpu.memory_space<vmem>>, vector<8x128xf32>
    %cst_93 = arith.constant dense<0.000000e+00> : vector<8x128xf32>
    %323 = tpu.matmul %315, %281, %cst_93 {dimension_numbers = #tpu.dot_dimension_numbers<[1], [0], [0], [1], [0, 0, 1, 1], [], []>} : vector<8x32xf32>, vector<32x128xf32>, vector<8x128xf32> -> vector<8x128xf32>
    %324 = arith.addf %322, %323 : vector<8x128xf32>
    %325 = vector.extract_strided_slice %324 {offsets = [0, 0], sizes = [8, 32], strides = [1, 1]} : vector<8x128xf32> to vector<8x32xf32>
    %326 = arith.negf %325 : vector<8x32xf32>
    %327 = math.exp %326 : vector<8x32xf32>
    %cst_94 = arith.constant 1.000000e+00 : f32
    %328 = vector.broadcast %cst_94 : f32 to vector<8x32xf32>
    %329 = arith.addf %328, %327 : vector<8x32xf32>
    %330 = arith.divf %328, %329 : vector<8x32xf32>
    %331 = vector.extract_strided_slice %324 {offsets = [0, 32], sizes = [8, 32], strides = [1, 1]} : vector<8x128xf32> to vector<8x32xf32>
    %332 = arith.negf %331 : vector<8x32xf32>
    %333 = math.exp %332 : vector<8x32xf32>
    %cst_95 = arith.constant 1.000000e+00 : f32
    %334 = vector.broadcast %cst_95 : f32 to vector<8x32xf32>
    %335 = arith.addf %334, %333 : vector<8x32xf32>
    %336 = arith.divf %334, %335 : vector<8x32xf32>
    %337 = vector.extract_strided_slice %324 {offsets = [0, 64], sizes = [8, 32], strides = [1, 1]} : vector<8x128xf32> to vector<8x32xf32>
    %338 = math.tanh %337 : vector<8x32xf32>
    %339 = vector.extract_strided_slice %324 {offsets = [0, 96], sizes = [8, 32], strides = [1, 1]} : vector<8x128xf32> to vector<8x32xf32>
    %340 = arith.negf %339 : vector<8x32xf32>
    %341 = math.exp %340 : vector<8x32xf32>
    %cst_96 = arith.constant 1.000000e+00 : f32
    %342 = vector.broadcast %cst_96 : f32 to vector<8x32xf32>
    %343 = arith.addf %342, %341 : vector<8x32xf32>
    %344 = arith.divf %342, %343 : vector<8x32xf32>
    %345 = arith.mulf %336, %313 : vector<8x32xf32>
    %346 = arith.mulf %330, %338 : vector<8x32xf32>
    %347 = arith.addf %345, %346 : vector<8x32xf32>
    %348 = math.tanh %347 : vector<8x32xf32>
    %349 = arith.mulf %344, %348 : vector<8x32xf32>
    %350 = arith.index_cast %320 : i32 to index
    %c0_97 = arith.constant 0 : index
    %351 = vector.load %arg18[%350, %c0_97] : memref<64x32xf32, #tpu.memory_space<vmem>>, vector<8x32xf32>
    tpu.vector_store %arg18[%350, %c0_97], %349 {strides = array<i32>} : memref<64x32xf32, #tpu.memory_space<vmem>>, vector<8x32xf32>,
    %c2_i32_98 = arith.constant 2 : i32
    %c7_i32_99 = arith.constant 7 : i32
    %352 = arith.subi %c7_i32_99, %c2_i32_98 : i32
    %c8_i32_100 = arith.constant 8 : i32
    %353 = arith.muli %352, %c8_i32_100 : i32
    %354 = tpu.assume_multiple %353, 8 : i32
    %355 = arith.index_cast %354 : i32 to index
    %c0_101 = arith.constant 0 : index
    %356 = vector.load %arg21[%355, %c0_101] : memref<64x128xf32, #tpu.memory_space<vmem>>, vector<8x128xf32>
    %cst_102 = arith.constant dense<0.000000e+00> : vector<8x128xf32>
    %357 = tpu.matmul %349, %281, %cst_102 {dimension_numbers = #tpu.dot_dimension_numbers<[1], [0], [0], [1], [0, 0, 1, 1], [], []>} : vector<8x32xf32>, vector<32x128xf32>, vector<8x128xf32> -> vector<8x128xf32>
    %358 = arith.addf %356, %357 : vector<8x128xf32>
    %359 = vector.extract_strided_slice %358 {offsets = [0, 0], sizes = [8, 32], strides = [1, 1]} : vector<8x128xf32> to vector<8x32xf32>
    %360 = arith.negf %359 : vector<8x32xf32>
    %361 = math.exp %360 : vector<8x32xf32>
    %cst_103 = arith.constant 1.000000e+00 : f32
    %362 = vector.broadcast %cst_103 : f32 to vector<8x32xf32>
    %363 = arith.addf %362, %361 : vector<8x32xf32>
    %364 = arith.divf %362, %363 : vector<8x32xf32>
    %365 = vector.extract_strided_slice %358 {offsets = [0, 32], sizes = [8, 32], strides = [1, 1]} : vector<8x128xf32> to vector<8x32xf32>
    %366 = arith.negf %365 : vector<8x32xf32>
    %367 = math.exp %366 : vector<8x32xf32>
    %cst_104 = arith.constant 1.000000e+00 : f32
    %368 = vector.broadcast %cst_104 : f32 to vector<8x32xf32>
    %369 = arith.addf %368, %367 : vector<8x32xf32>
    %370 = arith.divf %368, %369 : vector<8x32xf32>
    %371 = vector.extract_strided_slice %358 {offsets = [0, 64], sizes = [8, 32], strides = [1, 1]} : vector<8x128xf32> to vector<8x32xf32>
    %372 = math.tanh %371 : vector<8x32xf32>
    %373 = vector.extract_strided_slice %358 {offsets = [0, 96], sizes = [8, 32], strides = [1, 1]} : vector<8x128xf32> to vector<8x32xf32>
    %374 = arith.negf %373 : vector<8x32xf32>
    %375 = math.exp %374 : vector<8x32xf32>
    %cst_105 = arith.constant 1.000000e+00 : f32
    %376 = vector.broadcast %cst_105 : f32 to vector<8x32xf32>
    %377 = arith.addf %376, %375 : vector<8x32xf32>
    %378 = arith.divf %376, %377 : vector<8x32xf32>
    %379 = arith.mulf %370, %347 : vector<8x32xf32>
    %380 = arith.mulf %364, %372 : vector<8x32xf32>
    %381 = arith.addf %379, %380 : vector<8x32xf32>
    %382 = math.tanh %381 : vector<8x32xf32>
    %383 = arith.mulf %378, %382 : vector<8x32xf32>
    %384 = arith.index_cast %354 : i32 to index
    %c0_106 = arith.constant 0 : index
    %385 = vector.load %arg18[%384, %c0_106] : memref<64x32xf32, #tpu.memory_space<vmem>>, vector<8x32xf32>
    tpu.vector_store %arg18[%384, %c0_106], %383 {strides = array<i32>} : memref<64x32xf32, #tpu.memory_space<vmem>>, vector<8x32xf32>,
    %c3_i32_107 = arith.constant 3 : i32
    %c7_i32_108 = arith.constant 7 : i32
    %386 = arith.subi %c7_i32_108, %c3_i32_107 : i32
    %c8_i32_109 = arith.constant 8 : i32
    %387 = arith.muli %386, %c8_i32_109 : i32
    %388 = tpu.assume_multiple %387, 8 : i32
    %389 = arith.index_cast %388 : i32 to index
    %c0_110 = arith.constant 0 : index
    %390 = vector.load %arg21[%389, %c0_110] : memref<64x128xf32, #tpu.memory_space<vmem>>, vector<8x128xf32>
    %cst_111 = arith.constant dense<0.000000e+00> : vector<8x128xf32>
    %391 = tpu.matmul %383, %281, %cst_111 {dimension_numbers = #tpu.dot_dimension_numbers<[1], [0], [0], [1], [0, 0, 1, 1], [], []>} : vector<8x32xf32>, vector<32x128xf32>, vector<8x128xf32> -> vector<8x128xf32>
    %392 = arith.addf %390, %391 : vector<8x128xf32>
    %393 = vector.extract_strided_slice %392 {offsets = [0, 0], sizes = [8, 32], strides = [1, 1]} : vector<8x128xf32> to vector<8x32xf32>
    %394 = arith.negf %393 : vector<8x32xf32>
    %395 = math.exp %394 : vector<8x32xf32>
    %cst_112 = arith.constant 1.000000e+00 : f32
    %396 = vector.broadcast %cst_112 : f32 to vector<8x32xf32>
    %397 = arith.addf %396, %395 : vector<8x32xf32>
    %398 = arith.divf %396, %397 : vector<8x32xf32>
    %399 = vector.extract_strided_slice %392 {offsets = [0, 32], sizes = [8, 32], strides = [1, 1]} : vector<8x128xf32> to vector<8x32xf32>
    %400 = arith.negf %399 : vector<8x32xf32>
    %401 = math.exp %400 : vector<8x32xf32>
    %cst_113 = arith.constant 1.000000e+00 : f32
    %402 = vector.broadcast %cst_113 : f32 to vector<8x32xf32>
    %403 = arith.addf %402, %401 : vector<8x32xf32>
    %404 = arith.divf %402, %403 : vector<8x32xf32>
    %405 = vector.extract_strided_slice %392 {offsets = [0, 64], sizes = [8, 32], strides = [1, 1]} : vector<8x128xf32> to vector<8x32xf32>
    %406 = math.tanh %405 : vector<8x32xf32>
    %407 = vector.extract_strided_slice %392 {offsets = [0, 96], sizes = [8, 32], strides = [1, 1]} : vector<8x128xf32> to vector<8x32xf32>
    %408 = arith.negf %407 : vector<8x32xf32>
    %409 = math.exp %408 : vector<8x32xf32>
    %cst_114 = arith.constant 1.000000e+00 : f32
    %410 = vector.broadcast %cst_114 : f32 to vector<8x32xf32>
    %411 = arith.addf %410, %409 : vector<8x32xf32>
    %412 = arith.divf %410, %411 : vector<8x32xf32>
    %413 = arith.mulf %404, %381 : vector<8x32xf32>
    %414 = arith.mulf %398, %406 : vector<8x32xf32>
    %415 = arith.addf %413, %414 : vector<8x32xf32>
    %416 = math.tanh %415 : vector<8x32xf32>
    %417 = arith.mulf %412, %416 : vector<8x32xf32>
    %418 = arith.index_cast %388 : i32 to index
    %c0_115 = arith.constant 0 : index
    %419 = vector.load %arg18[%418, %c0_115] : memref<64x32xf32, #tpu.memory_space<vmem>>, vector<8x32xf32>
    tpu.vector_store %arg18[%418, %c0_115], %417 {strides = array<i32>} : memref<64x32xf32, #tpu.memory_space<vmem>>, vector<8x32xf32>,
    %c4_i32_116 = arith.constant 4 : i32
    %c7_i32_117 = arith.constant 7 : i32
    %420 = arith.subi %c7_i32_117, %c4_i32_116 : i32
    %c8_i32_118 = arith.constant 8 : i32
    %421 = arith.muli %420, %c8_i32_118 : i32
    %422 = tpu.assume_multiple %421, 8 : i32
    %423 = arith.index_cast %422 : i32 to index
    %c0_119 = arith.constant 0 : index
    %424 = vector.load %arg21[%423, %c0_119] : memref<64x128xf32, #tpu.memory_space<vmem>>, vector<8x128xf32>
    %cst_120 = arith.constant dense<0.000000e+00> : vector<8x128xf32>
    %425 = tpu.matmul %417, %281, %cst_120 {dimension_numbers = #tpu.dot_dimension_numbers<[1], [0], [0], [1], [0, 0, 1, 1], [], []>} : vector<8x32xf32>, vector<32x128xf32>, vector<8x128xf32> -> vector<8x128xf32>
    %426 = arith.addf %424, %425 : vector<8x128xf32>
    %427 = vector.extract_strided_slice %426 {offsets = [0, 0], sizes = [8, 32], strides = [1, 1]} : vector<8x128xf32> to vector<8x32xf32>
    %428 = arith.negf %427 : vector<8x32xf32>
    %429 = math.exp %428 : vector<8x32xf32>
    %cst_121 = arith.constant 1.000000e+00 : f32
    %430 = vector.broadcast %cst_121 : f32 to vector<8x32xf32>
    %431 = arith.addf %430, %429 : vector<8x32xf32>
    %432 = arith.divf %430, %431 : vector<8x32xf32>
    %433 = vector.extract_strided_slice %426 {offsets = [0, 32], sizes = [8, 32], strides = [1, 1]} : vector<8x128xf32> to vector<8x32xf32>
    %434 = arith.negf %433 : vector<8x32xf32>
    %435 = math.exp %434 : vector<8x32xf32>
    %cst_122 = arith.constant 1.000000e+00 : f32
    %436 = vector.broadcast %cst_122 : f32 to vector<8x32xf32>
    %437 = arith.addf %436, %435 : vector<8x32xf32>
    %438 = arith.divf %436, %437 : vector<8x32xf32>
    %439 = vector.extract_strided_slice %426 {offsets = [0, 64], sizes = [8, 32], strides = [1, 1]} : vector<8x128xf32> to vector<8x32xf32>
    %440 = math.tanh %439 : vector<8x32xf32>
    %441 = vector.extract_strided_slice %426 {offsets = [0, 96], sizes = [8, 32], strides = [1, 1]} : vector<8x128xf32> to vector<8x32xf32>
    %442 = arith.negf %441 : vector<8x32xf32>
    %443 = math.exp %442 : vector<8x32xf32>
    %cst_123 = arith.constant 1.000000e+00 : f32
    %444 = vector.broadcast %cst_123 : f32 to vector<8x32xf32>
    %445 = arith.addf %444, %443 : vector<8x32xf32>
    %446 = arith.divf %444, %445 : vector<8x32xf32>
    %447 = arith.mulf %438, %415 : vector<8x32xf32>
    %448 = arith.mulf %432, %440 : vector<8x32xf32>
    %449 = arith.addf %447, %448 : vector<8x32xf32>
    %450 = math.tanh %449 : vector<8x32xf32>
    %451 = arith.mulf %446, %450 : vector<8x32xf32>
    %452 = arith.index_cast %422 : i32 to index
    %c0_124 = arith.constant 0 : index
    %453 = vector.load %arg18[%452, %c0_124] : memref<64x32xf32, #tpu.memory_space<vmem>>, vector<8x32xf32>
    tpu.vector_store %arg18[%452, %c0_124], %451 {strides = array<i32>} : memref<64x32xf32, #tpu.memory_space<vmem>>, vector<8x32xf32>,
    %c5_i32_125 = arith.constant 5 : i32
    %c7_i32_126 = arith.constant 7 : i32
    %454 = arith.subi %c7_i32_126, %c5_i32_125 : i32
    %c8_i32_127 = arith.constant 8 : i32
    %455 = arith.muli %454, %c8_i32_127 : i32
    %456 = tpu.assume_multiple %455, 8 : i32
    %457 = arith.index_cast %456 : i32 to index
    %c0_128 = arith.constant 0 : index
    %458 = vector.load %arg21[%457, %c0_128] : memref<64x128xf32, #tpu.memory_space<vmem>>, vector<8x128xf32>
    %cst_129 = arith.constant dense<0.000000e+00> : vector<8x128xf32>
    %459 = tpu.matmul %451, %281, %cst_129 {dimension_numbers = #tpu.dot_dimension_numbers<[1], [0], [0], [1], [0, 0, 1, 1], [], []>} : vector<8x32xf32>, vector<32x128xf32>, vector<8x128xf32> -> vector<8x128xf32>
    %460 = arith.addf %458, %459 : vector<8x128xf32>
    %461 = vector.extract_strided_slice %460 {offsets = [0, 0], sizes = [8, 32], strides = [1, 1]} : vector<8x128xf32> to vector<8x32xf32>
    %462 = arith.negf %461 : vector<8x32xf32>
    %463 = math.exp %462 : vector<8x32xf32>
    %cst_130 = arith.constant 1.000000e+00 : f32
    %464 = vector.broadcast %cst_130 : f32 to vector<8x32xf32>
    %465 = arith.addf %464, %463 : vector<8x32xf32>
    %466 = arith.divf %464, %465 : vector<8x32xf32>
    %467 = vector.extract_strided_slice %460 {offsets = [0, 32], sizes = [8, 32], strides = [1, 1]} : vector<8x128xf32> to vector<8x32xf32>
    %468 = arith.negf %467 : vector<8x32xf32>
    %469 = math.exp %468 : vector<8x32xf32>
    %cst_131 = arith.constant 1.000000e+00 : f32
    %470 = vector.broadcast %cst_131 : f32 to vector<8x32xf32>
    %471 = arith.addf %470, %469 : vector<8x32xf32>
    %472 = arith.divf %470, %471 : vector<8x32xf32>
    %473 = vector.extract_strided_slice %460 {offsets = [0, 64], sizes = [8, 32], strides = [1, 1]} : vector<8x128xf32> to vector<8x32xf32>
    %474 = math.tanh %473 : vector<8x32xf32>
    %475 = vector.extract_strided_slice %460 {offsets = [0, 96], sizes = [8, 32], strides = [1, 1]} : vector<8x128xf32> to vector<8x32xf32>
    %476 = arith.negf %475 : vector<8x32xf32>
    %477 = math.exp %476 : vector<8x32xf32>
    %cst_132 = arith.constant 1.000000e+00 : f32
    %478 = vector.broadcast %cst_132 : f32 to vector<8x32xf32>
    %479 = arith.addf %478, %477 : vector<8x32xf32>
    %480 = arith.divf %478, %479 : vector<8x32xf32>
    %481 = arith.mulf %472, %449 : vector<8x32xf32>
    %482 = arith.mulf %466, %474 : vector<8x32xf32>
    %483 = arith.addf %481, %482 : vector<8x32xf32>
    %484 = math.tanh %483 : vector<8x32xf32>
    %485 = arith.mulf %480, %484 : vector<8x32xf32>
    %486 = arith.index_cast %456 : i32 to index
    %c0_133 = arith.constant 0 : index
    %487 = vector.load %arg18[%486, %c0_133] : memref<64x32xf32, #tpu.memory_space<vmem>>, vector<8x32xf32>
    tpu.vector_store %arg18[%486, %c0_133], %485 {strides = array<i32>} : memref<64x32xf32, #tpu.memory_space<vmem>>, vector<8x32xf32>,
    %c6_i32_134 = arith.constant 6 : i32
    %c7_i32_135 = arith.constant 7 : i32
    %488 = arith.subi %c7_i32_135, %c6_i32_134 : i32
    %c8_i32_136 = arith.constant 8 : i32
    %489 = arith.muli %488, %c8_i32_136 : i32
    %490 = tpu.assume_multiple %489, 8 : i32
    %491 = arith.index_cast %490 : i32 to index
    %c0_137 = arith.constant 0 : index
    %492 = vector.load %arg21[%491, %c0_137] : memref<64x128xf32, #tpu.memory_space<vmem>>, vector<8x128xf32>
    %cst_138 = arith.constant dense<0.000000e+00> : vector<8x128xf32>
    %493 = tpu.matmul %485, %281, %cst_138 {dimension_numbers = #tpu.dot_dimension_numbers<[1], [0], [0], [1], [0, 0, 1, 1], [], []>} : vector<8x32xf32>, vector<32x128xf32>, vector<8x128xf32> -> vector<8x128xf32>
    %494 = arith.addf %492, %493 : vector<8x128xf32>
    %495 = vector.extract_strided_slice %494 {offsets = [0, 0], sizes = [8, 32], strides = [1, 1]} : vector<8x128xf32> to vector<8x32xf32>
    %496 = arith.negf %495 : vector<8x32xf32>
    %497 = math.exp %496 : vector<8x32xf32>
    %cst_139 = arith.constant 1.000000e+00 : f32
    %498 = vector.broadcast %cst_139 : f32 to vector<8x32xf32>
    %499 = arith.addf %498, %497 : vector<8x32xf32>
    %500 = arith.divf %498, %499 : vector<8x32xf32>
    %501 = vector.extract_strided_slice %494 {offsets = [0, 32], sizes = [8, 32], strides = [1, 1]} : vector<8x128xf32> to vector<8x32xf32>
    %502 = arith.negf %501 : vector<8x32xf32>
    %503 = math.exp %502 : vector<8x32xf32>
    %cst_140 = arith.constant 1.000000e+00 : f32
    %504 = vector.broadcast %cst_140 : f32 to vector<8x32xf32>
    %505 = arith.addf %504, %503 : vector<8x32xf32>
    %506 = arith.divf %504, %505 : vector<8x32xf32>
    %507 = vector.extract_strided_slice %494 {offsets = [0, 64], sizes = [8, 32], strides = [1, 1]} : vector<8x128xf32> to vector<8x32xf32>
    %508 = math.tanh %507 : vector<8x32xf32>
    %509 = vector.extract_strided_slice %494 {offsets = [0, 96], sizes = [8, 32], strides = [1, 1]} : vector<8x128xf32> to vector<8x32xf32>
    %510 = arith.negf %509 : vector<8x32xf32>
    %511 = math.exp %510 : vector<8x32xf32>
    %cst_141 = arith.constant 1.000000e+00 : f32
    %512 = vector.broadcast %cst_141 : f32 to vector<8x32xf32>
    %513 = arith.addf %512, %511 : vector<8x32xf32>
    %514 = arith.divf %512, %513 : vector<8x32xf32>
    %515 = arith.mulf %506, %483 : vector<8x32xf32>
    %516 = arith.mulf %500, %508 : vector<8x32xf32>
    %517 = arith.addf %515, %516 : vector<8x32xf32>
    %518 = math.tanh %517 : vector<8x32xf32>
    %519 = arith.mulf %514, %518 : vector<8x32xf32>
    %520 = arith.index_cast %490 : i32 to index
    %c0_142 = arith.constant 0 : index
    %521 = vector.load %arg18[%520, %c0_142] : memref<64x32xf32, #tpu.memory_space<vmem>>, vector<8x32xf32>
    tpu.vector_store %arg18[%520, %c0_142], %519 {strides = array<i32>} : memref<64x32xf32, #tpu.memory_space<vmem>>, vector<8x32xf32>,
    %c7_i32_143 = arith.constant 7 : i32
    %c7_i32_144 = arith.constant 7 : i32
    %522 = arith.subi %c7_i32_144, %c7_i32_143 : i32
    %c8_i32_145 = arith.constant 8 : i32
    %523 = arith.muli %522, %c8_i32_145 : i32
    %524 = tpu.assume_multiple %523, 8 : i32
    %525 = arith.index_cast %524 : i32 to index
    %c0_146 = arith.constant 0 : index
    %526 = vector.load %arg21[%525, %c0_146] : memref<64x128xf32, #tpu.memory_space<vmem>>, vector<8x128xf32>
    %cst_147 = arith.constant dense<0.000000e+00> : vector<8x128xf32>
    %527 = tpu.matmul %519, %281, %cst_147 {dimension_numbers = #tpu.dot_dimension_numbers<[1], [0], [0], [1], [0, 0, 1, 1], [], []>} : vector<8x32xf32>, vector<32x128xf32>, vector<8x128xf32> -> vector<8x128xf32>
    %528 = arith.addf %526, %527 : vector<8x128xf32>
    %529 = vector.extract_strided_slice %528 {offsets = [0, 0], sizes = [8, 32], strides = [1, 1]} : vector<8x128xf32> to vector<8x32xf32>
    %530 = arith.negf %529 : vector<8x32xf32>
    %531 = math.exp %530 : vector<8x32xf32>
    %cst_148 = arith.constant 1.000000e+00 : f32
    %532 = vector.broadcast %cst_148 : f32 to vector<8x32xf32>
    %533 = arith.addf %532, %531 : vector<8x32xf32>
    %534 = arith.divf %532, %533 : vector<8x32xf32>
    %535 = vector.extract_strided_slice %528 {offsets = [0, 32], sizes = [8, 32], strides = [1, 1]} : vector<8x128xf32> to vector<8x32xf32>
    %536 = arith.negf %535 : vector<8x32xf32>
    %537 = math.exp %536 : vector<8x32xf32>
    %cst_149 = arith.constant 1.000000e+00 : f32
    %538 = vector.broadcast %cst_149 : f32 to vector<8x32xf32>
    %539 = arith.addf %538, %537 : vector<8x32xf32>
    %540 = arith.divf %538, %539 : vector<8x32xf32>
    %541 = vector.extract_strided_slice %528 {offsets = [0, 64], sizes = [8, 32], strides = [1, 1]} : vector<8x128xf32> to vector<8x32xf32>
    %542 = math.tanh %541 : vector<8x32xf32>
    %543 = vector.extract_strided_slice %528 {offsets = [0, 96], sizes = [8, 32], strides = [1, 1]} : vector<8x128xf32> to vector<8x32xf32>
    %544 = arith.negf %543 : vector<8x32xf32>
    %545 = math.exp %544 : vector<8x32xf32>
    %cst_150 = arith.constant 1.000000e+00 : f32
    %546 = vector.broadcast %cst_150 : f32 to vector<8x32xf32>
    %547 = arith.addf %546, %545 : vector<8x32xf32>
    %548 = arith.divf %546, %547 : vector<8x32xf32>
    %549 = arith.mulf %540, %517 : vector<8x32xf32>
    %550 = arith.mulf %534, %542 : vector<8x32xf32>
    %551 = arith.addf %549, %550 : vector<8x32xf32>
    %552 = math.tanh %551 : vector<8x32xf32>
    %553 = arith.mulf %548, %552 : vector<8x32xf32>
    %554 = arith.index_cast %524 : i32 to index
    %c0_151 = arith.constant 0 : index
    %555 = vector.load %arg18[%554, %c0_151] : memref<64x32xf32, #tpu.memory_space<vmem>>, vector<8x32xf32>
    tpu.vector_store %arg18[%554, %c0_151], %553 {strides = array<i32>} : memref<64x32xf32, #tpu.memory_space<vmem>>, vector<8x32xf32>,
    %c8_i32_152 = arith.constant 8 : i32
    %c0_153 = arith.constant 0 : index
    %c0_154 = arith.constant 0 : index
    %556 = vector.load %arg7[%c0_153, %c0_154] : memref<64x128xf32, #tpu.memory_space<vmem>>, vector<64x128xf32>
    %c0_155 = arith.constant 0 : index
    %c0_156 = arith.constant 0 : index
    %557 = vector.load %arg17[%c0_155, %c0_156] : memref<64x32xf32, #tpu.memory_space<vmem>>, vector<64x32xf32>
    %558 = vector.extract_strided_slice %556 {offsets = [0, 0], sizes = [32, 128], strides = [1, 1]} : vector<64x128xf32> to vector<32x128xf32>
    %cst_157 = arith.constant dense<0.000000e+00> : vector<64x128xf32>
    %559 = tpu.matmul %557, %558, %cst_157 {dimension_numbers = #tpu.dot_dimension_numbers<[1], [0], [0], [1], [0, 0, 1, 1], [], []>} : vector<64x32xf32>, vector<32x128xf32>, vector<64x128xf32> -> vector<64x128xf32>
    %c0_158 = arith.constant 0 : index
    %c0_159 = arith.constant 0 : index
    %560 = vector.load %arg18[%c0_158, %c0_159] : memref<64x32xf32, #tpu.memory_space<vmem>>, vector<64x32xf32>
    %561 = vector.extract_strided_slice %556 {offsets = [32, 0], sizes = [32, 128], strides = [1, 1]} : vector<64x128xf32> to vector<32x128xf32>
    %cst_160 = arith.constant dense<0.000000e+00> : vector<64x128xf32>
    %562 = tpu.matmul %560, %561, %cst_160 {dimension_numbers = #tpu.dot_dimension_numbers<[1], [0], [0], [1], [0, 0, 1, 1], [], []>} : vector<64x32xf32>, vector<32x128xf32>, vector<64x128xf32> -> vector<64x128xf32>
    %563 = arith.addf %559, %562 : vector<64x128xf32>
    %c0_161 = arith.constant 0 : index
    %c0_162 = arith.constant 0 : index
    %564 = vector.load %arg9[%c0_161, %c0_162] : memref<1x128xf32, #tpu.memory_space<vmem>>, vector<1x128xf32>
    %565 = vector.broadcast %564 : vector<1x128xf32> to vector<64x128xf32>
    %566 = arith.addf %563, %565 : vector<64x128xf32>
    %c0_163 = arith.constant 0 : index
    %c0_164 = arith.constant 0 : index
    %567 = vector.load %arg21[%c0_163, %c0_164] : memref<64x128xf32, #tpu.memory_space<vmem>>, vector<64x128xf32>
    tpu.vector_store %arg21[%c0_163, %c0_164], %566 {strides = array<i32>} : memref<64x128xf32, #tpu.memory_space<vmem>>, vector<64x128xf32>,
    %c0_165 = arith.constant 0 : index
    %c0_166 = arith.constant 0 : index
    %568 = vector.load %arg8[%c0_165, %c0_166] : memref<32x128xf32, #tpu.memory_space<vmem>>, vector<32x128xf32>
    %cst_167 = arith.constant 0.000000e+00 : f32
    %569 = vector.broadcast %cst_167 : f32 to vector<8x32xf32>
    %cst_168 = arith.constant 0.000000e+00 : f32
    %570 = vector.broadcast %cst_168 : f32 to vector<8x32xf32>
    %c0_i32_169 = arith.constant 0 : i32
    %c8_i32_170 = arith.constant 8 : i32
    %571 = arith.muli %c0_i32_169, %c8_i32_170 : i32
    %572 = tpu.assume_multiple %571, 8 : i32
    %573 = arith.index_cast %572 : i32 to index
    %c0_171 = arith.constant 0 : index
    %574 = vector.load %arg21[%573, %c0_171] : memref<64x128xf32, #tpu.memory_space<vmem>>, vector<8x128xf32>
    %cst_172 = arith.constant dense<0.000000e+00> : vector<8x128xf32>
    %575 = tpu.matmul %569, %568, %cst_172 {dimension_numbers = #tpu.dot_dimension_numbers<[1], [0], [0], [1], [0, 0, 1, 1], [], []>} : vector<8x32xf32>, vector<32x128xf32>, vector<8x128xf32> -> vector<8x128xf32>
    %576 = arith.addf %574, %575 : vector<8x128xf32>
    %577 = vector.extract_strided_slice %576 {offsets = [0, 0], sizes = [8, 32], strides = [1, 1]} : vector<8x128xf32> to vector<8x32xf32>
    %578 = arith.negf %577 : vector<8x32xf32>
    %579 = math.exp %578 : vector<8x32xf32>
    %cst_173 = arith.constant 1.000000e+00 : f32
    %580 = vector.broadcast %cst_173 : f32 to vector<8x32xf32>
    %581 = arith.addf %580, %579 : vector<8x32xf32>
    %582 = arith.divf %580, %581 : vector<8x32xf32>
    %583 = vector.extract_strided_slice %576 {offsets = [0, 32], sizes = [8, 32], strides = [1, 1]} : vector<8x128xf32> to vector<8x32xf32>
    %584 = arith.negf %583 : vector<8x32xf32>
    %585 = math.exp %584 : vector<8x32xf32>
    %cst_174 = arith.constant 1.000000e+00 : f32
    %586 = vector.broadcast %cst_174 : f32 to vector<8x32xf32>
    %587 = arith.addf %586, %585 : vector<8x32xf32>
    %588 = arith.divf %586, %587 : vector<8x32xf32>
    %589 = vector.extract_strided_slice %576 {offsets = [0, 64], sizes = [8, 32], strides = [1, 1]} : vector<8x128xf32> to vector<8x32xf32>
    %590 = math.tanh %589 : vector<8x32xf32>
    %591 = vector.extract_strided_slice %576 {offsets = [0, 96], sizes = [8, 32], strides = [1, 1]} : vector<8x128xf32> to vector<8x32xf32>
    %592 = arith.negf %591 : vector<8x32xf32>
    %593 = math.exp %592 : vector<8x32xf32>
    %cst_175 = arith.constant 1.000000e+00 : f32
    %594 = vector.broadcast %cst_175 : f32 to vector<8x32xf32>
    %595 = arith.addf %594, %593 : vector<8x32xf32>
    %596 = arith.divf %594, %595 : vector<8x32xf32>
    %597 = arith.mulf %588, %570 : vector<8x32xf32>
    %598 = arith.mulf %582, %590 : vector<8x32xf32>
    %599 = arith.addf %597, %598 : vector<8x32xf32>
    %600 = math.tanh %599 : vector<8x32xf32>
    %601 = arith.mulf %596, %600 : vector<8x32xf32>
    %602 = arith.index_cast %572 : i32 to index
    %c0_176 = arith.constant 0 : index
    %603 = vector.load %arg19[%602, %c0_176] : memref<64x32xf32, #tpu.memory_space<vmem>>, vector<8x32xf32>
    tpu.vector_store %arg19[%602, %c0_176], %601 {strides = array<i32>} : memref<64x32xf32, #tpu.memory_space<vmem>>, vector<8x32xf32>,
    %c1_i32_177 = arith.constant 1 : i32
    %c8_i32_178 = arith.constant 8 : i32
    %604 = arith.muli %c1_i32_177, %c8_i32_178 : i32
    %605 = tpu.assume_multiple %604, 8 : i32
    %606 = arith.index_cast %605 : i32 to index
    %c0_179 = arith.constant 0 : index
    %607 = vector.load %arg21[%606, %c0_179] : memref<64x128xf32, #tpu.memory_space<vmem>>, vector<8x128xf32>
    %cst_180 = arith.constant dense<0.000000e+00> : vector<8x128xf32>
    %608 = tpu.matmul %601, %568, %cst_180 {dimension_numbers = #tpu.dot_dimension_numbers<[1], [0], [0], [1], [0, 0, 1, 1], [], []>} : vector<8x32xf32>, vector<32x128xf32>, vector<8x128xf32> -> vector<8x128xf32>
    %609 = arith.addf %607, %608 : vector<8x128xf32>
    %610 = vector.extract_strided_slice %609 {offsets = [0, 0], sizes = [8, 32], strides = [1, 1]} : vector<8x128xf32> to vector<8x32xf32>
    %611 = arith.negf %610 : vector<8x32xf32>
    %612 = math.exp %611 : vector<8x32xf32>
    %cst_181 = arith.constant 1.000000e+00 : f32
    %613 = vector.broadcast %cst_181 : f32 to vector<8x32xf32>
    %614 = arith.addf %613, %612 : vector<8x32xf32>
    %615 = arith.divf %613, %614 : vector<8x32xf32>
    %616 = vector.extract_strided_slice %609 {offsets = [0, 32], sizes = [8, 32], strides = [1, 1]} : vector<8x128xf32> to vector<8x32xf32>
    %617 = arith.negf %616 : vector<8x32xf32>
    %618 = math.exp %617 : vector<8x32xf32>
    %cst_182 = arith.constant 1.000000e+00 : f32
    %619 = vector.broadcast %cst_182 : f32 to vector<8x32xf32>
    %620 = arith.addf %619, %618 : vector<8x32xf32>
    %621 = arith.divf %619, %620 : vector<8x32xf32>
    %622 = vector.extract_strided_slice %609 {offsets = [0, 64], sizes = [8, 32], strides = [1, 1]} : vector<8x128xf32> to vector<8x32xf32>
    %623 = math.tanh %622 : vector<8x32xf32>
    %624 = vector.extract_strided_slice %609 {offsets = [0, 96], sizes = [8, 32], strides = [1, 1]} : vector<8x128xf32> to vector<8x32xf32>
    %625 = arith.negf %624 : vector<8x32xf32>
    %626 = math.exp %625 : vector<8x32xf32>
    %cst_183 = arith.constant 1.000000e+00 : f32
    %627 = vector.broadcast %cst_183 : f32 to vector<8x32xf32>
    %628 = arith.addf %627, %626 : vector<8x32xf32>
    %629 = arith.divf %627, %628 : vector<8x32xf32>
    %630 = arith.mulf %621, %599 : vector<8x32xf32>
    %631 = arith.mulf %615, %623 : vector<8x32xf32>
    %632 = arith.addf %630, %631 : vector<8x32xf32>
    %633 = math.tanh %632 : vector<8x32xf32>
    %634 = arith.mulf %629, %633 : vector<8x32xf32>
    %635 = arith.index_cast %605 : i32 to index
    %c0_184 = arith.constant 0 : index
    %636 = vector.load %arg19[%635, %c0_184] : memref<64x32xf32, #tpu.memory_space<vmem>>, vector<8x32xf32>
    tpu.vector_store %arg19[%635, %c0_184], %634 {strides = array<i32>} : memref<64x32xf32, #tpu.memory_space<vmem>>, vector<8x32xf32>,
    %c2_i32_185 = arith.constant 2 : i32
    %c8_i32_186 = arith.constant 8 : i32
    %637 = arith.muli %c2_i32_185, %c8_i32_186 : i32
    %638 = tpu.assume_multiple %637, 8 : i32
    %639 = arith.index_cast %638 : i32 to index
    %c0_187 = arith.constant 0 : index
    %640 = vector.load %arg21[%639, %c0_187] : memref<64x128xf32, #tpu.memory_space<vmem>>, vector<8x128xf32>
    %cst_188 = arith.constant dense<0.000000e+00> : vector<8x128xf32>
    %641 = tpu.matmul %634, %568, %cst_188 {dimension_numbers = #tpu.dot_dimension_numbers<[1], [0], [0], [1], [0, 0, 1, 1], [], []>} : vector<8x32xf32>, vector<32x128xf32>, vector<8x128xf32> -> vector<8x128xf32>
    %642 = arith.addf %640, %641 : vector<8x128xf32>
    %643 = vector.extract_strided_slice %642 {offsets = [0, 0], sizes = [8, 32], strides = [1, 1]} : vector<8x128xf32> to vector<8x32xf32>
    %644 = arith.negf %643 : vector<8x32xf32>
    %645 = math.exp %644 : vector<8x32xf32>
    %cst_189 = arith.constant 1.000000e+00 : f32
    %646 = vector.broadcast %cst_189 : f32 to vector<8x32xf32>
    %647 = arith.addf %646, %645 : vector<8x32xf32>
    %648 = arith.divf %646, %647 : vector<8x32xf32>
    %649 = vector.extract_strided_slice %642 {offsets = [0, 32], sizes = [8, 32], strides = [1, 1]} : vector<8x128xf32> to vector<8x32xf32>
    %650 = arith.negf %649 : vector<8x32xf32>
    %651 = math.exp %650 : vector<8x32xf32>
    %cst_190 = arith.constant 1.000000e+00 : f32
    %652 = vector.broadcast %cst_190 : f32 to vector<8x32xf32>
    %653 = arith.addf %652, %651 : vector<8x32xf32>
    %654 = arith.divf %652, %653 : vector<8x32xf32>
    %655 = vector.extract_strided_slice %642 {offsets = [0, 64], sizes = [8, 32], strides = [1, 1]} : vector<8x128xf32> to vector<8x32xf32>
    %656 = math.tanh %655 : vector<8x32xf32>
    %657 = vector.extract_strided_slice %642 {offsets = [0, 96], sizes = [8, 32], strides = [1, 1]} : vector<8x128xf32> to vector<8x32xf32>
    %658 = arith.negf %657 : vector<8x32xf32>
    %659 = math.exp %658 : vector<8x32xf32>
    %cst_191 = arith.constant 1.000000e+00 : f32
    %660 = vector.broadcast %cst_191 : f32 to vector<8x32xf32>
    %661 = arith.addf %660, %659 : vector<8x32xf32>
    %662 = arith.divf %660, %661 : vector<8x32xf32>
    %663 = arith.mulf %654, %632 : vector<8x32xf32>
    %664 = arith.mulf %648, %656 : vector<8x32xf32>
    %665 = arith.addf %663, %664 : vector<8x32xf32>
    %666 = math.tanh %665 : vector<8x32xf32>
    %667 = arith.mulf %662, %666 : vector<8x32xf32>
    %668 = arith.index_cast %638 : i32 to index
    %c0_192 = arith.constant 0 : index
    %669 = vector.load %arg19[%668, %c0_192] : memref<64x32xf32, #tpu.memory_space<vmem>>, vector<8x32xf32>
    tpu.vector_store %arg19[%668, %c0_192], %667 {strides = array<i32>} : memref<64x32xf32, #tpu.memory_space<vmem>>, vector<8x32xf32>,
    %c3_i32_193 = arith.constant 3 : i32
    %c8_i32_194 = arith.constant 8 : i32
    %670 = arith.muli %c3_i32_193, %c8_i32_194 : i32
    %671 = tpu.assume_multiple %670, 8 : i32
    %672 = arith.index_cast %671 : i32 to index
    %c0_195 = arith.constant 0 : index
    %673 = vector.load %arg21[%672, %c0_195] : memref<64x128xf32, #tpu.memory_space<vmem>>, vector<8x128xf32>
    %cst_196 = arith.constant dense<0.000000e+00> : vector<8x128xf32>
    %674 = tpu.matmul %667, %568, %cst_196 {dimension_numbers = #tpu.dot_dimension_numbers<[1], [0], [0], [1], [0, 0, 1, 1], [], []>} : vector<8x32xf32>, vector<32x128xf32>, vector<8x128xf32> -> vector<8x128xf32>
    %675 = arith.addf %673, %674 : vector<8x128xf32>
    %676 = vector.extract_strided_slice %675 {offsets = [0, 0], sizes = [8, 32], strides = [1, 1]} : vector<8x128xf32> to vector<8x32xf32>
    %677 = arith.negf %676 : vector<8x32xf32>
    %678 = math.exp %677 : vector<8x32xf32>
    %cst_197 = arith.constant 1.000000e+00 : f32
    %679 = vector.broadcast %cst_197 : f32 to vector<8x32xf32>
    %680 = arith.addf %679, %678 : vector<8x32xf32>
    %681 = arith.divf %679, %680 : vector<8x32xf32>
    %682 = vector.extract_strided_slice %675 {offsets = [0, 32], sizes = [8, 32], strides = [1, 1]} : vector<8x128xf32> to vector<8x32xf32>
    %683 = arith.negf %682 : vector<8x32xf32>
    %684 = math.exp %683 : vector<8x32xf32>
    %cst_198 = arith.constant 1.000000e+00 : f32
    %685 = vector.broadcast %cst_198 : f32 to vector<8x32xf32>
    %686 = arith.addf %685, %684 : vector<8x32xf32>
    %687 = arith.divf %685, %686 : vector<8x32xf32>
    %688 = vector.extract_strided_slice %675 {offsets = [0, 64], sizes = [8, 32], strides = [1, 1]} : vector<8x128xf32> to vector<8x32xf32>
    %689 = math.tanh %688 : vector<8x32xf32>
    %690 = vector.extract_strided_slice %675 {offsets = [0, 96], sizes = [8, 32], strides = [1, 1]} : vector<8x128xf32> to vector<8x32xf32>
    %691 = arith.negf %690 : vector<8x32xf32>
    %692 = math.exp %691 : vector<8x32xf32>
    %cst_199 = arith.constant 1.000000e+00 : f32
    %693 = vector.broadcast %cst_199 : f32 to vector<8x32xf32>
    %694 = arith.addf %693, %692 : vector<8x32xf32>
    %695 = arith.divf %693, %694 : vector<8x32xf32>
    %696 = arith.mulf %687, %665 : vector<8x32xf32>
    %697 = arith.mulf %681, %689 : vector<8x32xf32>
    %698 = arith.addf %696, %697 : vector<8x32xf32>
    %699 = math.tanh %698 : vector<8x32xf32>
    %700 = arith.mulf %695, %699 : vector<8x32xf32>
    %701 = arith.index_cast %671 : i32 to index
    %c0_200 = arith.constant 0 : index
    %702 = vector.load %arg19[%701, %c0_200] : memref<64x32xf32, #tpu.memory_space<vmem>>, vector<8x32xf32>
    tpu.vector_store %arg19[%701, %c0_200], %700 {strides = array<i32>} : memref<64x32xf32, #tpu.memory_space<vmem>>, vector<8x32xf32>,
    %c4_i32_201 = arith.constant 4 : i32
    %c8_i32_202 = arith.constant 8 : i32
    %703 = arith.muli %c4_i32_201, %c8_i32_202 : i32
    %704 = tpu.assume_multiple %703, 8 : i32
    %705 = arith.index_cast %704 : i32 to index
    %c0_203 = arith.constant 0 : index
    %706 = vector.load %arg21[%705, %c0_203] : memref<64x128xf32, #tpu.memory_space<vmem>>, vector<8x128xf32>
    %cst_204 = arith.constant dense<0.000000e+00> : vector<8x128xf32>
    %707 = tpu.matmul %700, %568, %cst_204 {dimension_numbers = #tpu.dot_dimension_numbers<[1], [0], [0], [1], [0, 0, 1, 1], [], []>} : vector<8x32xf32>, vector<32x128xf32>, vector<8x128xf32> -> vector<8x128xf32>
    %708 = arith.addf %706, %707 : vector<8x128xf32>
    %709 = vector.extract_strided_slice %708 {offsets = [0, 0], sizes = [8, 32], strides = [1, 1]} : vector<8x128xf32> to vector<8x32xf32>
    %710 = arith.negf %709 : vector<8x32xf32>
    %711 = math.exp %710 : vector<8x32xf32>
    %cst_205 = arith.constant 1.000000e+00 : f32
    %712 = vector.broadcast %cst_205 : f32 to vector<8x32xf32>
    %713 = arith.addf %712, %711 : vector<8x32xf32>
    %714 = arith.divf %712, %713 : vector<8x32xf32>
    %715 = vector.extract_strided_slice %708 {offsets = [0, 32], sizes = [8, 32], strides = [1, 1]} : vector<8x128xf32> to vector<8x32xf32>
    %716 = arith.negf %715 : vector<8x32xf32>
    %717 = math.exp %716 : vector<8x32xf32>
    %cst_206 = arith.constant 1.000000e+00 : f32
    %718 = vector.broadcast %cst_206 : f32 to vector<8x32xf32>
    %719 = arith.addf %718, %717 : vector<8x32xf32>
    %720 = arith.divf %718, %719 : vector<8x32xf32>
    %721 = vector.extract_strided_slice %708 {offsets = [0, 64], sizes = [8, 32], strides = [1, 1]} : vector<8x128xf32> to vector<8x32xf32>
    %722 = math.tanh %721 : vector<8x32xf32>
    %723 = vector.extract_strided_slice %708 {offsets = [0, 96], sizes = [8, 32], strides = [1, 1]} : vector<8x128xf32> to vector<8x32xf32>
    %724 = arith.negf %723 : vector<8x32xf32>
    %725 = math.exp %724 : vector<8x32xf32>
    %cst_207 = arith.constant 1.000000e+00 : f32
    %726 = vector.broadcast %cst_207 : f32 to vector<8x32xf32>
    %727 = arith.addf %726, %725 : vector<8x32xf32>
    %728 = arith.divf %726, %727 : vector<8x32xf32>
    %729 = arith.mulf %720, %698 : vector<8x32xf32>
    %730 = arith.mulf %714, %722 : vector<8x32xf32>
    %731 = arith.addf %729, %730 : vector<8x32xf32>
    %732 = math.tanh %731 : vector<8x32xf32>
    %733 = arith.mulf %728, %732 : vector<8x32xf32>
    %734 = arith.index_cast %704 : i32 to index
    %c0_208 = arith.constant 0 : index
    %735 = vector.load %arg19[%734, %c0_208] : memref<64x32xf32, #tpu.memory_space<vmem>>, vector<8x32xf32>
    tpu.vector_store %arg19[%734, %c0_208], %733 {strides = array<i32>} : memref<64x32xf32, #tpu.memory_space<vmem>>, vector<8x32xf32>,
    %c5_i32_209 = arith.constant 5 : i32
    %c8_i32_210 = arith.constant 8 : i32
    %736 = arith.muli %c5_i32_209, %c8_i32_210 : i32
    %737 = tpu.assume_multiple %736, 8 : i32
    %738 = arith.index_cast %737 : i32 to index
    %c0_211 = arith.constant 0 : index
    %739 = vector.load %arg21[%738, %c0_211] : memref<64x128xf32, #tpu.memory_space<vmem>>, vector<8x128xf32>
    %cst_212 = arith.constant dense<0.000000e+00> : vector<8x128xf32>
    %740 = tpu.matmul %733, %568, %cst_212 {dimension_numbers = #tpu.dot_dimension_numbers<[1], [0], [0], [1], [0, 0, 1, 1], [], []>} : vector<8x32xf32>, vector<32x128xf32>, vector<8x128xf32> -> vector<8x128xf32>
    %741 = arith.addf %739, %740 : vector<8x128xf32>
    %742 = vector.extract_strided_slice %741 {offsets = [0, 0], sizes = [8, 32], strides = [1, 1]} : vector<8x128xf32> to vector<8x32xf32>
    %743 = arith.negf %742 : vector<8x32xf32>
    %744 = math.exp %743 : vector<8x32xf32>
    %cst_213 = arith.constant 1.000000e+00 : f32
    %745 = vector.broadcast %cst_213 : f32 to vector<8x32xf32>
    %746 = arith.addf %745, %744 : vector<8x32xf32>
    %747 = arith.divf %745, %746 : vector<8x32xf32>
    %748 = vector.extract_strided_slice %741 {offsets = [0, 32], sizes = [8, 32], strides = [1, 1]} : vector<8x128xf32> to vector<8x32xf32>
    %749 = arith.negf %748 : vector<8x32xf32>
    %750 = math.exp %749 : vector<8x32xf32>
    %cst_214 = arith.constant 1.000000e+00 : f32
    %751 = vector.broadcast %cst_214 : f32 to vector<8x32xf32>
    %752 = arith.addf %751, %750 : vector<8x32xf32>
    %753 = arith.divf %751, %752 : vector<8x32xf32>
    %754 = vector.extract_strided_slice %741 {offsets = [0, 64], sizes = [8, 32], strides = [1, 1]} : vector<8x128xf32> to vector<8x32xf32>
    %755 = math.tanh %754 : vector<8x32xf32>
    %756 = vector.extract_strided_slice %741 {offsets = [0, 96], sizes = [8, 32], strides = [1, 1]} : vector<8x128xf32> to vector<8x32xf32>
    %757 = arith.negf %756 : vector<8x32xf32>
    %758 = math.exp %757 : vector<8x32xf32>
    %cst_215 = arith.constant 1.000000e+00 : f32
    %759 = vector.broadcast %cst_215 : f32 to vector<8x32xf32>
    %760 = arith.addf %759, %758 : vector<8x32xf32>
    %761 = arith.divf %759, %760 : vector<8x32xf32>
    %762 = arith.mulf %753, %731 : vector<8x32xf32>
    %763 = arith.mulf %747, %755 : vector<8x32xf32>
    %764 = arith.addf %762, %763 : vector<8x32xf32>
    %765 = math.tanh %764 : vector<8x32xf32>
    %766 = arith.mulf %761, %765 : vector<8x32xf32>
    %767 = arith.index_cast %737 : i32 to index
    %c0_216 = arith.constant 0 : index
    %768 = vector.load %arg19[%767, %c0_216] : memref<64x32xf32, #tpu.memory_space<vmem>>, vector<8x32xf32>
    tpu.vector_store %arg19[%767, %c0_216], %766 {strides = array<i32>} : memref<64x32xf32, #tpu.memory_space<vmem>>, vector<8x32xf32>,
    %c6_i32_217 = arith.constant 6 : i32
    %c8_i32_218 = arith.constant 8 : i32
    %769 = arith.muli %c6_i32_217, %c8_i32_218 : i32
    %770 = tpu.assume_multiple %769, 8 : i32
    %771 = arith.index_cast %770 : i32 to index
    %c0_219 = arith.constant 0 : index
    %772 = vector.load %arg21[%771, %c0_219] : memref<64x128xf32, #tpu.memory_space<vmem>>, vector<8x128xf32>
    %cst_220 = arith.constant dense<0.000000e+00> : vector<8x128xf32>
    %773 = tpu.matmul %766, %568, %cst_220 {dimension_numbers = #tpu.dot_dimension_numbers<[1], [0], [0], [1], [0, 0, 1, 1], [], []>} : vector<8x32xf32>, vector<32x128xf32>, vector<8x128xf32> -> vector<8x128xf32>
    %774 = arith.addf %772, %773 : vector<8x128xf32>
    %775 = vector.extract_strided_slice %774 {offsets = [0, 0], sizes = [8, 32], strides = [1, 1]} : vector<8x128xf32> to vector<8x32xf32>
    %776 = arith.negf %775 : vector<8x32xf32>
    %777 = math.exp %776 : vector<8x32xf32>
    %cst_221 = arith.constant 1.000000e+00 : f32
    %778 = vector.broadcast %cst_221 : f32 to vector<8x32xf32>
    %779 = arith.addf %778, %777 : vector<8x32xf32>
    %780 = arith.divf %778, %779 : vector<8x32xf32>
    %781 = vector.extract_strided_slice %774 {offsets = [0, 32], sizes = [8, 32], strides = [1, 1]} : vector<8x128xf32> to vector<8x32xf32>
    %782 = arith.negf %781 : vector<8x32xf32>
    %783 = math.exp %782 : vector<8x32xf32>
    %cst_222 = arith.constant 1.000000e+00 : f32
    %784 = vector.broadcast %cst_222 : f32 to vector<8x32xf32>
    %785 = arith.addf %784, %783 : vector<8x32xf32>
    %786 = arith.divf %784, %785 : vector<8x32xf32>
    %787 = vector.extract_strided_slice %774 {offsets = [0, 64], sizes = [8, 32], strides = [1, 1]} : vector<8x128xf32> to vector<8x32xf32>
    %788 = math.tanh %787 : vector<8x32xf32>
    %789 = vector.extract_strided_slice %774 {offsets = [0, 96], sizes = [8, 32], strides = [1, 1]} : vector<8x128xf32> to vector<8x32xf32>
    %790 = arith.negf %789 : vector<8x32xf32>
    %791 = math.exp %790 : vector<8x32xf32>
    %cst_223 = arith.constant 1.000000e+00 : f32
    %792 = vector.broadcast %cst_223 : f32 to vector<8x32xf32>
    %793 = arith.addf %792, %791 : vector<8x32xf32>
    %794 = arith.divf %792, %793 : vector<8x32xf32>
    %795 = arith.mulf %786, %764 : vector<8x32xf32>
    %796 = arith.mulf %780, %788 : vector<8x32xf32>
    %797 = arith.addf %795, %796 : vector<8x32xf32>
    %798 = math.tanh %797 : vector<8x32xf32>
    %799 = arith.mulf %794, %798 : vector<8x32xf32>
    %800 = arith.index_cast %770 : i32 to index
    %c0_224 = arith.constant 0 : index
    %801 = vector.load %arg19[%800, %c0_224] : memref<64x32xf32, #tpu.memory_space<vmem>>, vector<8x32xf32>
    tpu.vector_store %arg19[%800, %c0_224], %799 {strides = array<i32>} : memref<64x32xf32, #tpu.memory_space<vmem>>, vector<8x32xf32>,
    %c7_i32_225 = arith.constant 7 : i32
    %c8_i32_226 = arith.constant 8 : i32
    %802 = arith.muli %c7_i32_225, %c8_i32_226 : i32
    %803 = tpu.assume_multiple %802, 8 : i32
    %804 = arith.index_cast %803 : i32 to index
    %c0_227 = arith.constant 0 : index
    %805 = vector.load %arg21[%804, %c0_227] : memref<64x128xf32, #tpu.memory_space<vmem>>, vector<8x128xf32>
    %cst_228 = arith.constant dense<0.000000e+00> : vector<8x128xf32>
    %806 = tpu.matmul %799, %568, %cst_228 {dimension_numbers = #tpu.dot_dimension_numbers<[1], [0], [0], [1], [0, 0, 1, 1], [], []>} : vector<8x32xf32>, vector<32x128xf32>, vector<8x128xf32> -> vector<8x128xf32>
    %807 = arith.addf %805, %806 : vector<8x128xf32>
    %808 = vector.extract_strided_slice %807 {offsets = [0, 0], sizes = [8, 32], strides = [1, 1]} : vector<8x128xf32> to vector<8x32xf32>
    %809 = arith.negf %808 : vector<8x32xf32>
    %810 = math.exp %809 : vector<8x32xf32>
    %cst_229 = arith.constant 1.000000e+00 : f32
    %811 = vector.broadcast %cst_229 : f32 to vector<8x32xf32>
    %812 = arith.addf %811, %810 : vector<8x32xf32>
    %813 = arith.divf %811, %812 : vector<8x32xf32>
    %814 = vector.extract_strided_slice %807 {offsets = [0, 32], sizes = [8, 32], strides = [1, 1]} : vector<8x128xf32> to vector<8x32xf32>
    %815 = arith.negf %814 : vector<8x32xf32>
    %816 = math.exp %815 : vector<8x32xf32>
    %cst_230 = arith.constant 1.000000e+00 : f32
    %817 = vector.broadcast %cst_230 : f32 to vector<8x32xf32>
    %818 = arith.addf %817, %816 : vector<8x32xf32>
    %819 = arith.divf %817, %818 : vector<8x32xf32>
    %820 = vector.extract_strided_slice %807 {offsets = [0, 64], sizes = [8, 32], strides = [1, 1]} : vector<8x128xf32> to vector<8x32xf32>
    %821 = math.tanh %820 : vector<8x32xf32>
    %822 = vector.extract_strided_slice %807 {offsets = [0, 96], sizes = [8, 32], strides = [1, 1]} : vector<8x128xf32> to vector<8x32xf32>
    %823 = arith.negf %822 : vector<8x32xf32>
    %824 = math.exp %823 : vector<8x32xf32>
    %cst_231 = arith.constant 1.000000e+00 : f32
    %825 = vector.broadcast %cst_231 : f32 to vector<8x32xf32>
    %826 = arith.addf %825, %824 : vector<8x32xf32>
    %827 = arith.divf %825, %826 : vector<8x32xf32>
    %828 = arith.mulf %819, %797 : vector<8x32xf32>
    %829 = arith.mulf %813, %821 : vector<8x32xf32>
    %830 = arith.addf %828, %829 : vector<8x32xf32>
    %831 = math.tanh %830 : vector<8x32xf32>
    %832 = arith.mulf %827, %831 : vector<8x32xf32>
    %833 = arith.index_cast %803 : i32 to index
    %c0_232 = arith.constant 0 : index
    %834 = vector.load %arg19[%833, %c0_232] : memref<64x32xf32, #tpu.memory_space<vmem>>, vector<8x32xf32>
    tpu.vector_store %arg19[%833, %c0_232], %832 {strides = array<i32>} : memref<64x32xf32, #tpu.memory_space<vmem>>, vector<8x32xf32>,
    %c8_i32_233 = arith.constant 8 : i32
    %c0_234 = arith.constant 0 : index
    %c0_235 = arith.constant 0 : index
    %835 = vector.load %arg10[%c0_234, %c0_235] : memref<64x128xf32, #tpu.memory_space<vmem>>, vector<64x128xf32>
    %c0_236 = arith.constant 0 : index
    %c0_237 = arith.constant 0 : index
    %836 = vector.load %arg17[%c0_236, %c0_237] : memref<64x32xf32, #tpu.memory_space<vmem>>, vector<64x32xf32>
    %837 = vector.extract_strided_slice %835 {offsets = [0, 0], sizes = [32, 128], strides = [1, 1]} : vector<64x128xf32> to vector<32x128xf32>
    %cst_238 = arith.constant dense<0.000000e+00> : vector<64x128xf32>
    %838 = tpu.matmul %836, %837, %cst_238 {dimension_numbers = #tpu.dot_dimension_numbers<[1], [0], [0], [1], [0, 0, 1, 1], [], []>} : vector<64x32xf32>, vector<32x128xf32>, vector<64x128xf32> -> vector<64x128xf32>
    %c0_239 = arith.constant 0 : index
    %c0_240 = arith.constant 0 : index
    %839 = vector.load %arg18[%c0_239, %c0_240] : memref<64x32xf32, #tpu.memory_space<vmem>>, vector<64x32xf32>
    %840 = vector.extract_strided_slice %835 {offsets = [32, 0], sizes = [32, 128], strides = [1, 1]} : vector<64x128xf32> to vector<32x128xf32>
    %cst_241 = arith.constant dense<0.000000e+00> : vector<64x128xf32>
    %841 = tpu.matmul %839, %840, %cst_241 {dimension_numbers = #tpu.dot_dimension_numbers<[1], [0], [0], [1], [0, 0, 1, 1], [], []>} : vector<64x32xf32>, vector<32x128xf32>, vector<64x128xf32> -> vector<64x128xf32>
    %842 = arith.addf %838, %841 : vector<64x128xf32>
    %c0_242 = arith.constant 0 : index
    %c0_243 = arith.constant 0 : index
    %843 = vector.load %arg12[%c0_242, %c0_243] : memref<1x128xf32, #tpu.memory_space<vmem>>, vector<1x128xf32>
    %844 = vector.broadcast %843 : vector<1x128xf32> to vector<64x128xf32>
    %845 = arith.addf %842, %844 : vector<64x128xf32>
    %c0_244 = arith.constant 0 : index
    %c0_245 = arith.constant 0 : index
    %846 = vector.load %arg21[%c0_244, %c0_245] : memref<64x128xf32, #tpu.memory_space<vmem>>, vector<64x128xf32>
    tpu.vector_store %arg21[%c0_244, %c0_245], %845 {strides = array<i32>} : memref<64x128xf32, #tpu.memory_space<vmem>>, vector<64x128xf32>,
    %c0_246 = arith.constant 0 : index
    %c0_247 = arith.constant 0 : index
    %847 = vector.load %arg11[%c0_246, %c0_247] : memref<32x128xf32, #tpu.memory_space<vmem>>, vector<32x128xf32>
    %cst_248 = arith.constant 0.000000e+00 : f32
    %848 = vector.broadcast %cst_248 : f32 to vector<8x32xf32>
    %cst_249 = arith.constant 0.000000e+00 : f32
    %849 = vector.broadcast %cst_249 : f32 to vector<8x32xf32>
    %c0_i32_250 = arith.constant 0 : i32
    %c7_i32_251 = arith.constant 7 : i32
    %850 = arith.subi %c7_i32_251, %c0_i32_250 : i32
    %c8_i32_252 = arith.constant 8 : i32
    %851 = arith.muli %850, %c8_i32_252 : i32
    %852 = tpu.assume_multiple %851, 8 : i32
    %853 = arith.index_cast %852 : i32 to index
    %c0_253 = arith.constant 0 : index
    %854 = vector.load %arg21[%853, %c0_253] : memref<64x128xf32, #tpu.memory_space<vmem>>, vector<8x128xf32>
    %cst_254 = arith.constant dense<0.000000e+00> : vector<8x128xf32>
    %855 = tpu.matmul %848, %847, %cst_254 {dimension_numbers = #tpu.dot_dimension_numbers<[1], [0], [0], [1], [0, 0, 1, 1], [], []>} : vector<8x32xf32>, vector<32x128xf32>, vector<8x128xf32> -> vector<8x128xf32>
    %856 = arith.addf %854, %855 : vector<8x128xf32>
    %857 = vector.extract_strided_slice %856 {offsets = [0, 0], sizes = [8, 32], strides = [1, 1]} : vector<8x128xf32> to vector<8x32xf32>
    %858 = arith.negf %857 : vector<8x32xf32>
    %859 = math.exp %858 : vector<8x32xf32>
    %cst_255 = arith.constant 1.000000e+00 : f32
    %860 = vector.broadcast %cst_255 : f32 to vector<8x32xf32>
    %861 = arith.addf %860, %859 : vector<8x32xf32>
    %862 = arith.divf %860, %861 : vector<8x32xf32>
    %863 = vector.extract_strided_slice %856 {offsets = [0, 32], sizes = [8, 32], strides = [1, 1]} : vector<8x128xf32> to vector<8x32xf32>
    %864 = arith.negf %863 : vector<8x32xf32>
    %865 = math.exp %864 : vector<8x32xf32>
    %cst_256 = arith.constant 1.000000e+00 : f32
    %866 = vector.broadcast %cst_256 : f32 to vector<8x32xf32>
    %867 = arith.addf %866, %865 : vector<8x32xf32>
    %868 = arith.divf %866, %867 : vector<8x32xf32>
    %869 = vector.extract_strided_slice %856 {offsets = [0, 64], sizes = [8, 32], strides = [1, 1]} : vector<8x128xf32> to vector<8x32xf32>
    %870 = math.tanh %869 : vector<8x32xf32>
    %871 = vector.extract_strided_slice %856 {offsets = [0, 96], sizes = [8, 32], strides = [1, 1]} : vector<8x128xf32> to vector<8x32xf32>
    %872 = arith.negf %871 : vector<8x32xf32>
    %873 = math.exp %872 : vector<8x32xf32>
    %cst_257 = arith.constant 1.000000e+00 : f32
    %874 = vector.broadcast %cst_257 : f32 to vector<8x32xf32>
    %875 = arith.addf %874, %873 : vector<8x32xf32>
    %876 = arith.divf %874, %875 : vector<8x32xf32>
    %877 = arith.mulf %868, %849 : vector<8x32xf32>
    %878 = arith.mulf %862, %870 : vector<8x32xf32>
    %879 = arith.addf %877, %878 : vector<8x32xf32>
    %880 = math.tanh %879 : vector<8x32xf32>
    %881 = arith.mulf %876, %880 : vector<8x32xf32>
    %882 = arith.index_cast %852 : i32 to index
    %c0_258 = arith.constant 0 : index
    %883 = vector.load %arg20[%882, %c0_258] : memref<64x32xf32, #tpu.memory_space<vmem>>, vector<8x32xf32>
    tpu.vector_store %arg20[%882, %c0_258], %881 {strides = array<i32>} : memref<64x32xf32, #tpu.memory_space<vmem>>, vector<8x32xf32>,
    %c1_i32_259 = arith.constant 1 : i32
    %c7_i32_260 = arith.constant 7 : i32
    %884 = arith.subi %c7_i32_260, %c1_i32_259 : i32
    %c8_i32_261 = arith.constant 8 : i32
    %885 = arith.muli %884, %c8_i32_261 : i32
    %886 = tpu.assume_multiple %885, 8 : i32
    %887 = arith.index_cast %886 : i32 to index
    %c0_262 = arith.constant 0 : index
    %888 = vector.load %arg21[%887, %c0_262] : memref<64x128xf32, #tpu.memory_space<vmem>>, vector<8x128xf32>
    %cst_263 = arith.constant dense<0.000000e+00> : vector<8x128xf32>
    %889 = tpu.matmul %881, %847, %cst_263 {dimension_numbers = #tpu.dot_dimension_numbers<[1], [0], [0], [1], [0, 0, 1, 1], [], []>} : vector<8x32xf32>, vector<32x128xf32>, vector<8x128xf32> -> vector<8x128xf32>
    %890 = arith.addf %888, %889 : vector<8x128xf32>
    %891 = vector.extract_strided_slice %890 {offsets = [0, 0], sizes = [8, 32], strides = [1, 1]} : vector<8x128xf32> to vector<8x32xf32>
    %892 = arith.negf %891 : vector<8x32xf32>
    %893 = math.exp %892 : vector<8x32xf32>
    %cst_264 = arith.constant 1.000000e+00 : f32
    %894 = vector.broadcast %cst_264 : f32 to vector<8x32xf32>
    %895 = arith.addf %894, %893 : vector<8x32xf32>
    %896 = arith.divf %894, %895 : vector<8x32xf32>
    %897 = vector.extract_strided_slice %890 {offsets = [0, 32], sizes = [8, 32], strides = [1, 1]} : vector<8x128xf32> to vector<8x32xf32>
    %898 = arith.negf %897 : vector<8x32xf32>
    %899 = math.exp %898 : vector<8x32xf32>
    %cst_265 = arith.constant 1.000000e+00 : f32
    %900 = vector.broadcast %cst_265 : f32 to vector<8x32xf32>
    %901 = arith.addf %900, %899 : vector<8x32xf32>
    %902 = arith.divf %900, %901 : vector<8x32xf32>
    %903 = vector.extract_strided_slice %890 {offsets = [0, 64], sizes = [8, 32], strides = [1, 1]} : vector<8x128xf32> to vector<8x32xf32>
    %904 = math.tanh %903 : vector<8x32xf32>
    %905 = vector.extract_strided_slice %890 {offsets = [0, 96], sizes = [8, 32], strides = [1, 1]} : vector<8x128xf32> to vector<8x32xf32>
    %906 = arith.negf %905 : vector<8x32xf32>
    %907 = math.exp %906 : vector<8x32xf32>
    %cst_266 = arith.constant 1.000000e+00 : f32
    %908 = vector.broadcast %cst_266 : f32 to vector<8x32xf32>
    %909 = arith.addf %908, %907 : vector<8x32xf32>
    %910 = arith.divf %908, %909 : vector<8x32xf32>
    %911 = arith.mulf %902, %879 : vector<8x32xf32>
    %912 = arith.mulf %896, %904 : vector<8x32xf32>
    %913 = arith.addf %911, %912 : vector<8x32xf32>
    %914 = math.tanh %913 : vector<8x32xf32>
    %915 = arith.mulf %910, %914 : vector<8x32xf32>
    %916 = arith.index_cast %886 : i32 to index
    %c0_267 = arith.constant 0 : index
    %917 = vector.load %arg20[%916, %c0_267] : memref<64x32xf32, #tpu.memory_space<vmem>>, vector<8x32xf32>
    tpu.vector_store %arg20[%916, %c0_267], %915 {strides = array<i32>} : memref<64x32xf32, #tpu.memory_space<vmem>>, vector<8x32xf32>,
    %c2_i32_268 = arith.constant 2 : i32
    %c7_i32_269 = arith.constant 7 : i32
    %918 = arith.subi %c7_i32_269, %c2_i32_268 : i32
    %c8_i32_270 = arith.constant 8 : i32
    %919 = arith.muli %918, %c8_i32_270 : i32
    %920 = tpu.assume_multiple %919, 8 : i32
    %921 = arith.index_cast %920 : i32 to index
    %c0_271 = arith.constant 0 : index
    %922 = vector.load %arg21[%921, %c0_271] : memref<64x128xf32, #tpu.memory_space<vmem>>, vector<8x128xf32>
    %cst_272 = arith.constant dense<0.000000e+00> : vector<8x128xf32>
    %923 = tpu.matmul %915, %847, %cst_272 {dimension_numbers = #tpu.dot_dimension_numbers<[1], [0], [0], [1], [0, 0, 1, 1], [], []>} : vector<8x32xf32>, vector<32x128xf32>, vector<8x128xf32> -> vector<8x128xf32>
    %924 = arith.addf %922, %923 : vector<8x128xf32>
    %925 = vector.extract_strided_slice %924 {offsets = [0, 0], sizes = [8, 32], strides = [1, 1]} : vector<8x128xf32> to vector<8x32xf32>
    %926 = arith.negf %925 : vector<8x32xf32>
    %927 = math.exp %926 : vector<8x32xf32>
    %cst_273 = arith.constant 1.000000e+00 : f32
    %928 = vector.broadcast %cst_273 : f32 to vector<8x32xf32>
    %929 = arith.addf %928, %927 : vector<8x32xf32>
    %930 = arith.divf %928, %929 : vector<8x32xf32>
    %931 = vector.extract_strided_slice %924 {offsets = [0, 32], sizes = [8, 32], strides = [1, 1]} : vector<8x128xf32> to vector<8x32xf32>
    %932 = arith.negf %931 : vector<8x32xf32>
    %933 = math.exp %932 : vector<8x32xf32>
    %cst_274 = arith.constant 1.000000e+00 : f32
    %934 = vector.broadcast %cst_274 : f32 to vector<8x32xf32>
    %935 = arith.addf %934, %933 : vector<8x32xf32>
    %936 = arith.divf %934, %935 : vector<8x32xf32>
    %937 = vector.extract_strided_slice %924 {offsets = [0, 64], sizes = [8, 32], strides = [1, 1]} : vector<8x128xf32> to vector<8x32xf32>
    %938 = math.tanh %937 : vector<8x32xf32>
    %939 = vector.extract_strided_slice %924 {offsets = [0, 96], sizes = [8, 32], strides = [1, 1]} : vector<8x128xf32> to vector<8x32xf32>
    %940 = arith.negf %939 : vector<8x32xf32>
    %941 = math.exp %940 : vector<8x32xf32>
    %cst_275 = arith.constant 1.000000e+00 : f32
    %942 = vector.broadcast %cst_275 : f32 to vector<8x32xf32>
    %943 = arith.addf %942, %941 : vector<8x32xf32>
    %944 = arith.divf %942, %943 : vector<8x32xf32>
    %945 = arith.mulf %936, %913 : vector<8x32xf32>
    %946 = arith.mulf %930, %938 : vector<8x32xf32>
    %947 = arith.addf %945, %946 : vector<8x32xf32>
    %948 = math.tanh %947 : vector<8x32xf32>
    %949 = arith.mulf %944, %948 : vector<8x32xf32>
    %950 = arith.index_cast %920 : i32 to index
    %c0_276 = arith.constant 0 : index
    %951 = vector.load %arg20[%950, %c0_276] : memref<64x32xf32, #tpu.memory_space<vmem>>, vector<8x32xf32>
    tpu.vector_store %arg20[%950, %c0_276], %949 {strides = array<i32>} : memref<64x32xf32, #tpu.memory_space<vmem>>, vector<8x32xf32>,
    %c3_i32_277 = arith.constant 3 : i32
    %c7_i32_278 = arith.constant 7 : i32
    %952 = arith.subi %c7_i32_278, %c3_i32_277 : i32
    %c8_i32_279 = arith.constant 8 : i32
    %953 = arith.muli %952, %c8_i32_279 : i32
    %954 = tpu.assume_multiple %953, 8 : i32
    %955 = arith.index_cast %954 : i32 to index
    %c0_280 = arith.constant 0 : index
    %956 = vector.load %arg21[%955, %c0_280] : memref<64x128xf32, #tpu.memory_space<vmem>>, vector<8x128xf32>
    %cst_281 = arith.constant dense<0.000000e+00> : vector<8x128xf32>
    %957 = tpu.matmul %949, %847, %cst_281 {dimension_numbers = #tpu.dot_dimension_numbers<[1], [0], [0], [1], [0, 0, 1, 1], [], []>} : vector<8x32xf32>, vector<32x128xf32>, vector<8x128xf32> -> vector<8x128xf32>
    %958 = arith.addf %956, %957 : vector<8x128xf32>
    %959 = vector.extract_strided_slice %958 {offsets = [0, 0], sizes = [8, 32], strides = [1, 1]} : vector<8x128xf32> to vector<8x32xf32>
    %960 = arith.negf %959 : vector<8x32xf32>
    %961 = math.exp %960 : vector<8x32xf32>
    %cst_282 = arith.constant 1.000000e+00 : f32
    %962 = vector.broadcast %cst_282 : f32 to vector<8x32xf32>
    %963 = arith.addf %962, %961 : vector<8x32xf32>
    %964 = arith.divf %962, %963 : vector<8x32xf32>
    %965 = vector.extract_strided_slice %958 {offsets = [0, 32], sizes = [8, 32], strides = [1, 1]} : vector<8x128xf32> to vector<8x32xf32>
    %966 = arith.negf %965 : vector<8x32xf32>
    %967 = math.exp %966 : vector<8x32xf32>
    %cst_283 = arith.constant 1.000000e+00 : f32
    %968 = vector.broadcast %cst_283 : f32 to vector<8x32xf32>
    %969 = arith.addf %968, %967 : vector<8x32xf32>
    %970 = arith.divf %968, %969 : vector<8x32xf32>
    %971 = vector.extract_strided_slice %958 {offsets = [0, 64], sizes = [8, 32], strides = [1, 1]} : vector<8x128xf32> to vector<8x32xf32>
    %972 = math.tanh %971 : vector<8x32xf32>
    %973 = vector.extract_strided_slice %958 {offsets = [0, 96], sizes = [8, 32], strides = [1, 1]} : vector<8x128xf32> to vector<8x32xf32>
    %974 = arith.negf %973 : vector<8x32xf32>
    %975 = math.exp %974 : vector<8x32xf32>
    %cst_284 = arith.constant 1.000000e+00 : f32
    %976 = vector.broadcast %cst_284 : f32 to vector<8x32xf32>
    %977 = arith.addf %976, %975 : vector<8x32xf32>
    %978 = arith.divf %976, %977 : vector<8x32xf32>
    %979 = arith.mulf %970, %947 : vector<8x32xf32>
    %980 = arith.mulf %964, %972 : vector<8x32xf32>
    %981 = arith.addf %979, %980 : vector<8x32xf32>
    %982 = math.tanh %981 : vector<8x32xf32>
    %983 = arith.mulf %978, %982 : vector<8x32xf32>
    %984 = arith.index_cast %954 : i32 to index
    %c0_285 = arith.constant 0 : index
    %985 = vector.load %arg20[%984, %c0_285] : memref<64x32xf32, #tpu.memory_space<vmem>>, vector<8x32xf32>
    tpu.vector_store %arg20[%984, %c0_285], %983 {strides = array<i32>} : memref<64x32xf32, #tpu.memory_space<vmem>>, vector<8x32xf32>,
    %c4_i32_286 = arith.constant 4 : i32
    %c7_i32_287 = arith.constant 7 : i32
    %986 = arith.subi %c7_i32_287, %c4_i32_286 : i32
    %c8_i32_288 = arith.constant 8 : i32
    %987 = arith.muli %986, %c8_i32_288 : i32
    %988 = tpu.assume_multiple %987, 8 : i32
    %989 = arith.index_cast %988 : i32 to index
    %c0_289 = arith.constant 0 : index
    %990 = vector.load %arg21[%989, %c0_289] : memref<64x128xf32, #tpu.memory_space<vmem>>, vector<8x128xf32>
    %cst_290 = arith.constant dense<0.000000e+00> : vector<8x128xf32>
    %991 = tpu.matmul %983, %847, %cst_290 {dimension_numbers = #tpu.dot_dimension_numbers<[1], [0], [0], [1], [0, 0, 1, 1], [], []>} : vector<8x32xf32>, vector<32x128xf32>, vector<8x128xf32> -> vector<8x128xf32>
    %992 = arith.addf %990, %991 : vector<8x128xf32>
    %993 = vector.extract_strided_slice %992 {offsets = [0, 0], sizes = [8, 32], strides = [1, 1]} : vector<8x128xf32> to vector<8x32xf32>
    %994 = arith.negf %993 : vector<8x32xf32>
    %995 = math.exp %994 : vector<8x32xf32>
    %cst_291 = arith.constant 1.000000e+00 : f32
    %996 = vector.broadcast %cst_291 : f32 to vector<8x32xf32>
    %997 = arith.addf %996, %995 : vector<8x32xf32>
    %998 = arith.divf %996, %997 : vector<8x32xf32>
    %999 = vector.extract_strided_slice %992 {offsets = [0, 32], sizes = [8, 32], strides = [1, 1]} : vector<8x128xf32> to vector<8x32xf32>
    %1000 = arith.negf %999 : vector<8x32xf32>
    %1001 = math.exp %1000 : vector<8x32xf32>
    %cst_292 = arith.constant 1.000000e+00 : f32
    %1002 = vector.broadcast %cst_292 : f32 to vector<8x32xf32>
    %1003 = arith.addf %1002, %1001 : vector<8x32xf32>
    %1004 = arith.divf %1002, %1003 : vector<8x32xf32>
    %1005 = vector.extract_strided_slice %992 {offsets = [0, 64], sizes = [8, 32], strides = [1, 1]} : vector<8x128xf32> to vector<8x32xf32>
    %1006 = math.tanh %1005 : vector<8x32xf32>
    %1007 = vector.extract_strided_slice %992 {offsets = [0, 96], sizes = [8, 32], strides = [1, 1]} : vector<8x128xf32> to vector<8x32xf32>
    %1008 = arith.negf %1007 : vector<8x32xf32>
    %1009 = math.exp %1008 : vector<8x32xf32>
    %cst_293 = arith.constant 1.000000e+00 : f32
    %1010 = vector.broadcast %cst_293 : f32 to vector<8x32xf32>
    %1011 = arith.addf %1010, %1009 : vector<8x32xf32>
    %1012 = arith.divf %1010, %1011 : vector<8x32xf32>
    %1013 = arith.mulf %1004, %981 : vector<8x32xf32>
    %1014 = arith.mulf %998, %1006 : vector<8x32xf32>
    %1015 = arith.addf %1013, %1014 : vector<8x32xf32>
    %1016 = math.tanh %1015 : vector<8x32xf32>
    %1017 = arith.mulf %1012, %1016 : vector<8x32xf32>
    %1018 = arith.index_cast %988 : i32 to index
    %c0_294 = arith.constant 0 : index
    %1019 = vector.load %arg20[%1018, %c0_294] : memref<64x32xf32, #tpu.memory_space<vmem>>, vector<8x32xf32>
    tpu.vector_store %arg20[%1018, %c0_294], %1017 {strides = array<i32>} : memref<64x32xf32, #tpu.memory_space<vmem>>, vector<8x32xf32>,
    %c5_i32_295 = arith.constant 5 : i32
    %c7_i32_296 = arith.constant 7 : i32
    %1020 = arith.subi %c7_i32_296, %c5_i32_295 : i32
    %c8_i32_297 = arith.constant 8 : i32
    %1021 = arith.muli %1020, %c8_i32_297 : i32
    %1022 = tpu.assume_multiple %1021, 8 : i32
    %1023 = arith.index_cast %1022 : i32 to index
    %c0_298 = arith.constant 0 : index
    %1024 = vector.load %arg21[%1023, %c0_298] : memref<64x128xf32, #tpu.memory_space<vmem>>, vector<8x128xf32>
    %cst_299 = arith.constant dense<0.000000e+00> : vector<8x128xf32>
    %1025 = tpu.matmul %1017, %847, %cst_299 {dimension_numbers = #tpu.dot_dimension_numbers<[1], [0], [0], [1], [0, 0, 1, 1], [], []>} : vector<8x32xf32>, vector<32x128xf32>, vector<8x128xf32> -> vector<8x128xf32>
    %1026 = arith.addf %1024, %1025 : vector<8x128xf32>
    %1027 = vector.extract_strided_slice %1026 {offsets = [0, 0], sizes = [8, 32], strides = [1, 1]} : vector<8x128xf32> to vector<8x32xf32>
    %1028 = arith.negf %1027 : vector<8x32xf32>
    %1029 = math.exp %1028 : vector<8x32xf32>
    %cst_300 = arith.constant 1.000000e+00 : f32
    %1030 = vector.broadcast %cst_300 : f32 to vector<8x32xf32>
    %1031 = arith.addf %1030, %1029 : vector<8x32xf32>
    %1032 = arith.divf %1030, %1031 : vector<8x32xf32>
    %1033 = vector.extract_strided_slice %1026 {offsets = [0, 32], sizes = [8, 32], strides = [1, 1]} : vector<8x128xf32> to vector<8x32xf32>
    %1034 = arith.negf %1033 : vector<8x32xf32>
    %1035 = math.exp %1034 : vector<8x32xf32>
    %cst_301 = arith.constant 1.000000e+00 : f32
    %1036 = vector.broadcast %cst_301 : f32 to vector<8x32xf32>
    %1037 = arith.addf %1036, %1035 : vector<8x32xf32>
    %1038 = arith.divf %1036, %1037 : vector<8x32xf32>
    %1039 = vector.extract_strided_slice %1026 {offsets = [0, 64], sizes = [8, 32], strides = [1, 1]} : vector<8x128xf32> to vector<8x32xf32>
    %1040 = math.tanh %1039 : vector<8x32xf32>
    %1041 = vector.extract_strided_slice %1026 {offsets = [0, 96], sizes = [8, 32], strides = [1, 1]} : vector<8x128xf32> to vector<8x32xf32>
    %1042 = arith.negf %1041 : vector<8x32xf32>
    %1043 = math.exp %1042 : vector<8x32xf32>
    %cst_302 = arith.constant 1.000000e+00 : f32
    %1044 = vector.broadcast %cst_302 : f32 to vector<8x32xf32>
    %1045 = arith.addf %1044, %1043 : vector<8x32xf32>
    %1046 = arith.divf %1044, %1045 : vector<8x32xf32>
    %1047 = arith.mulf %1038, %1015 : vector<8x32xf32>
    %1048 = arith.mulf %1032, %1040 : vector<8x32xf32>
    %1049 = arith.addf %1047, %1048 : vector<8x32xf32>
    %1050 = math.tanh %1049 : vector<8x32xf32>
    %1051 = arith.mulf %1046, %1050 : vector<8x32xf32>
    %1052 = arith.index_cast %1022 : i32 to index
    %c0_303 = arith.constant 0 : index
    %1053 = vector.load %arg20[%1052, %c0_303] : memref<64x32xf32, #tpu.memory_space<vmem>>, vector<8x32xf32>
    tpu.vector_store %arg20[%1052, %c0_303], %1051 {strides = array<i32>} : memref<64x32xf32, #tpu.memory_space<vmem>>, vector<8x32xf32>,
    %c6_i32_304 = arith.constant 6 : i32
    %c7_i32_305 = arith.constant 7 : i32
    %1054 = arith.subi %c7_i32_305, %c6_i32_304 : i32
    %c8_i32_306 = arith.constant 8 : i32
    %1055 = arith.muli %1054, %c8_i32_306 : i32
    %1056 = tpu.assume_multiple %1055, 8 : i32
    %1057 = arith.index_cast %1056 : i32 to index
    %c0_307 = arith.constant 0 : index
    %1058 = vector.load %arg21[%1057, %c0_307] : memref<64x128xf32, #tpu.memory_space<vmem>>, vector<8x128xf32>
    %cst_308 = arith.constant dense<0.000000e+00> : vector<8x128xf32>
    %1059 = tpu.matmul %1051, %847, %cst_308 {dimension_numbers = #tpu.dot_dimension_numbers<[1], [0], [0], [1], [0, 0, 1, 1], [], []>} : vector<8x32xf32>, vector<32x128xf32>, vector<8x128xf32> -> vector<8x128xf32>
    %1060 = arith.addf %1058, %1059 : vector<8x128xf32>
    %1061 = vector.extract_strided_slice %1060 {offsets = [0, 0], sizes = [8, 32], strides = [1, 1]} : vector<8x128xf32> to vector<8x32xf32>
    %1062 = arith.negf %1061 : vector<8x32xf32>
    %1063 = math.exp %1062 : vector<8x32xf32>
    %cst_309 = arith.constant 1.000000e+00 : f32
    %1064 = vector.broadcast %cst_309 : f32 to vector<8x32xf32>
    %1065 = arith.addf %1064, %1063 : vector<8x32xf32>
    %1066 = arith.divf %1064, %1065 : vector<8x32xf32>
    %1067 = vector.extract_strided_slice %1060 {offsets = [0, 32], sizes = [8, 32], strides = [1, 1]} : vector<8x128xf32> to vector<8x32xf32>
    %1068 = arith.negf %1067 : vector<8x32xf32>
    %1069 = math.exp %1068 : vector<8x32xf32>
    %cst_310 = arith.constant 1.000000e+00 : f32
    %1070 = vector.broadcast %cst_310 : f32 to vector<8x32xf32>
    %1071 = arith.addf %1070, %1069 : vector<8x32xf32>
    %1072 = arith.divf %1070, %1071 : vector<8x32xf32>
    %1073 = vector.extract_strided_slice %1060 {offsets = [0, 64], sizes = [8, 32], strides = [1, 1]} : vector<8x128xf32> to vector<8x32xf32>
    %1074 = math.tanh %1073 : vector<8x32xf32>
    %1075 = vector.extract_strided_slice %1060 {offsets = [0, 96], sizes = [8, 32], strides = [1, 1]} : vector<8x128xf32> to vector<8x32xf32>
    %1076 = arith.negf %1075 : vector<8x32xf32>
    %1077 = math.exp %1076 : vector<8x32xf32>
    %cst_311 = arith.constant 1.000000e+00 : f32
    %1078 = vector.broadcast %cst_311 : f32 to vector<8x32xf32>
    %1079 = arith.addf %1078, %1077 : vector<8x32xf32>
    %1080 = arith.divf %1078, %1079 : vector<8x32xf32>
    %1081 = arith.mulf %1072, %1049 : vector<8x32xf32>
    %1082 = arith.mulf %1066, %1074 : vector<8x32xf32>
    %1083 = arith.addf %1081, %1082 : vector<8x32xf32>
    %1084 = math.tanh %1083 : vector<8x32xf32>
    %1085 = arith.mulf %1080, %1084 : vector<8x32xf32>
    %1086 = arith.index_cast %1056 : i32 to index
    %c0_312 = arith.constant 0 : index
    %1087 = vector.load %arg20[%1086, %c0_312] : memref<64x32xf32, #tpu.memory_space<vmem>>, vector<8x32xf32>
    tpu.vector_store %arg20[%1086, %c0_312], %1085 {strides = array<i32>} : memref<64x32xf32, #tpu.memory_space<vmem>>, vector<8x32xf32>,
    %c7_i32_313 = arith.constant 7 : i32
    %c7_i32_314 = arith.constant 7 : i32
    %1088 = arith.subi %c7_i32_314, %c7_i32_313 : i32
    %c8_i32_315 = arith.constant 8 : i32
    %1089 = arith.muli %1088, %c8_i32_315 : i32
    %1090 = tpu.assume_multiple %1089, 8 : i32
    %1091 = arith.index_cast %1090 : i32 to index
    %c0_316 = arith.constant 0 : index
    %1092 = vector.load %arg21[%1091, %c0_316] : memref<64x128xf32, #tpu.memory_space<vmem>>, vector<8x128xf32>
    %cst_317 = arith.constant dense<0.000000e+00> : vector<8x128xf32>
    %1093 = tpu.matmul %1085, %847, %cst_317 {dimension_numbers = #tpu.dot_dimension_numbers<[1], [0], [0], [1], [0, 0, 1, 1], [], []>} : vector<8x32xf32>, vector<32x128xf32>, vector<8x128xf32> -> vector<8x128xf32>
    %1094 = arith.addf %1092, %1093 : vector<8x128xf32>
    %1095 = vector.extract_strided_slice %1094 {offsets = [0, 0], sizes = [8, 32], strides = [1, 1]} : vector<8x128xf32> to vector<8x32xf32>
    %1096 = arith.negf %1095 : vector<8x32xf32>
    %1097 = math.exp %1096 : vector<8x32xf32>
    %cst_318 = arith.constant 1.000000e+00 : f32
    %1098 = vector.broadcast %cst_318 : f32 to vector<8x32xf32>
    %1099 = arith.addf %1098, %1097 : vector<8x32xf32>
    %1100 = arith.divf %1098, %1099 : vector<8x32xf32>
    %1101 = vector.extract_strided_slice %1094 {offsets = [0, 32], sizes = [8, 32], strides = [1, 1]} : vector<8x128xf32> to vector<8x32xf32>
    %1102 = arith.negf %1101 : vector<8x32xf32>
    %1103 = math.exp %1102 : vector<8x32xf32>
    %cst_319 = arith.constant 1.000000e+00 : f32
    %1104 = vector.broadcast %cst_319 : f32 to vector<8x32xf32>
    %1105 = arith.addf %1104, %1103 : vector<8x32xf32>
    %1106 = arith.divf %1104, %1105 : vector<8x32xf32>
    %1107 = vector.extract_strided_slice %1094 {offsets = [0, 64], sizes = [8, 32], strides = [1, 1]} : vector<8x128xf32> to vector<8x32xf32>
    %1108 = math.tanh %1107 : vector<8x32xf32>
    %1109 = vector.extract_strided_slice %1094 {offsets = [0, 96], sizes = [8, 32], strides = [1, 1]} : vector<8x128xf32> to vector<8x32xf32>
    %1110 = arith.negf %1109 : vector<8x32xf32>
    %1111 = math.exp %1110 : vector<8x32xf32>
    %cst_320 = arith.constant 1.000000e+00 : f32
    %1112 = vector.broadcast %cst_320 : f32 to vector<8x32xf32>
    %1113 = arith.addf %1112, %1111 : vector<8x32xf32>
    %1114 = arith.divf %1112, %1113 : vector<8x32xf32>
    %1115 = arith.mulf %1106, %1083 : vector<8x32xf32>
    %1116 = arith.mulf %1100, %1108 : vector<8x32xf32>
    %1117 = arith.addf %1115, %1116 : vector<8x32xf32>
    %1118 = math.tanh %1117 : vector<8x32xf32>
    %1119 = arith.mulf %1114, %1118 : vector<8x32xf32>
    %1120 = arith.index_cast %1090 : i32 to index
    %c0_321 = arith.constant 0 : index
    %1121 = vector.load %arg20[%1120, %c0_321] : memref<64x32xf32, #tpu.memory_space<vmem>>, vector<8x32xf32>
    tpu.vector_store %arg20[%1120, %c0_321], %1119 {strides = array<i32>} : memref<64x32xf32, #tpu.memory_space<vmem>>, vector<8x32xf32>,
    %c8_i32_322 = arith.constant 8 : i32
    %c0_323 = arith.constant 0 : index
    %c0_324 = arith.constant 0 : index
    %1122 = vector.load %arg13[%c0_323, %c0_324] : memref<64x32xf32, #tpu.memory_space<vmem>>, vector<64x32xf32>
    %c0_325 = arith.constant 0 : index
    %c0_326 = arith.constant 0 : index
    %1123 = vector.load %arg19[%c0_325, %c0_326] : memref<64x32xf32, #tpu.memory_space<vmem>>, vector<64x32xf32>
    %1124 = vector.extract_strided_slice %1122 {offsets = [0, 0], sizes = [32, 32], strides = [1, 1]} : vector<64x32xf32> to vector<32x32xf32>
    %cst_327 = arith.constant dense<0.000000e+00> : vector<64x32xf32>
    %1125 = tpu.matmul %1123, %1124, %cst_327 {dimension_numbers = #tpu.dot_dimension_numbers<[1], [0], [0], [1], [0, 0, 1, 1], [], []>} : vector<64x32xf32>, vector<32x32xf32>, vector<64x32xf32> -> vector<64x32xf32>
    %c0_328 = arith.constant 0 : index
    %c0_329 = arith.constant 0 : index
    %1126 = vector.load %arg20[%c0_328, %c0_329] : memref<64x32xf32, #tpu.memory_space<vmem>>, vector<64x32xf32>
    %1127 = vector.extract_strided_slice %1122 {offsets = [32, 0], sizes = [32, 32], strides = [1, 1]} : vector<64x32xf32> to vector<32x32xf32>
    %cst_330 = arith.constant dense<0.000000e+00> : vector<64x32xf32>
    %1128 = tpu.matmul %1126, %1127, %cst_330 {dimension_numbers = #tpu.dot_dimension_numbers<[1], [0], [0], [1], [0, 0, 1, 1], [], []>} : vector<64x32xf32>, vector<32x32xf32>, vector<64x32xf32> -> vector<64x32xf32>
    %1129 = arith.addf %1125, %1128 : vector<64x32xf32>
    %c0_331 = arith.constant 0 : index
    %c0_332 = arith.constant 0 : index
    %1130 = vector.load %arg14[%c0_331, %c0_332] : memref<1x32xf32, #tpu.memory_space<vmem>>, vector<1x32xf32>
    %1131 = vector.broadcast %1130 : vector<1x32xf32> to vector<64x32xf32>
    %1132 = arith.addf %1129, %1131 : vector<64x32xf32>
    %c0_333 = arith.constant 0 : index
    %c0_334 = arith.constant 0 : index
    %1133 = vector.load %arg15[%c0_333, %c0_334] : memref<1x1xf32, #tpu.memory_space<vmem>>, vector<1x1xf32>
    %1134 = vector.extract %1133[0, 0] : f32 from vector<1x1xf32>
    %cst_335 = arith.constant 0.000000e+00 : f32
    %1135 = vector.broadcast %cst_335 : f32 to vector<64x32xf32>
    %1136 = arith.cmpf ogt, %1132, %1135 : vector<64x32xf32>
    %1137 = vector.broadcast %1134 : f32 to vector<64x32xf32>
    %1138 = arith.mulf %1137, %1132 : vector<64x32xf32>
    %1139 = arith.select %1136, %1132, %1138 : vector<64x32xi1>, vector<64x32xf32>
    %c0_336 = arith.constant 0 : index
    %c0_337 = arith.constant 0 : index
    %1140 = vector.load %arg16[%c0_336, %c0_337] : memref<64x32xf32, #tpu.memory_space<vmem>>, vector<64x32xf32>
    tpu.vector_store %arg16[%c0_336, %c0_337], %1139 {strides = array<i32>} : memref<64x32xf32, #tpu.memory_space<vmem>>, vector<64x32xf32>,
    return
  }
}

</mosaic_0001>

<llo_original>
// kernel: bilstm_forward.1
$region0: #{bilstm_forward.1}
  #allocation0 [shape = 'u32[]', space=smem, size = 0x4, offset = 0x4, fixed_abs, tag = 'smem constant byte address 0x4 - core index']
  #allocation1 [shape = 'u32[144,128]{1,0:T(1,128)}', space=vmem, size = 0x12000, scoped, tag = 'internal scratch']
  #allocation2 [shape = 'f32[64,32]{1,0:T(8,128)}', space=vmem, size = 0x8000, scoped, tag = 'scratch operand']
  #allocation3 [shape = 'f32[64,32]{1,0:T(8,128)}', space=vmem, size = 0x8000, scoped, tag = 'scratch operand']
  #allocation4 [shape = 'f32[64,32]{1,0:T(8,128)}', space=vmem, size = 0x8000, scoped, tag = 'scratch operand']
  #allocation5 [shape = 'f32[64,32]{1,0:T(8,128)}', space=vmem, size = 0x8000, scoped, tag = 'scratch operand']
  #allocation6 [shape = 'f32[64,128]{1,0:T(8,128)}', space=vmem, size = 0x8000, scoped, tag = 'scratch operand']
  #allocation7 [shape = 'f32[1,1]{1,0:T(1,128)S(1)}', space=vmem, size = 0x200, scoped, tag = 'scoped memory for bilstm_forward.1']
  %s0 = inlined_call_operand.vmem [shape: f32[64,32], index: 0, kind: input, shape index: {}]
  %s1 = inlined_call_operand.vmem [shape: f32[32,128], index: 1, kind: input, shape index: {}]
  %s2 = inlined_call_operand.vmem [shape: f32[32,128], index: 2, kind: input, shape index: {}]
  %s3 = inlined_call_operand.vmem [shape: f32[1,128], index: 3, kind: input, shape index: {}]
  %s4 = inlined_call_operand.vmem [shape: f32[32,128], index: 4, kind: input, shape index: {}]
  %s5 = inlined_call_operand.vmem [shape: f32[32,128], index: 5, kind: input, shape index: {}]
  %s6 = inlined_call_operand.vmem [shape: f32[1,128], index: 6, kind: input, shape index: {}]
  %s7 = inlined_call_operand.vmem [shape: f32[64,128], index: 7, kind: input, shape index: {}]
  %s8 = inlined_call_operand.vmem [shape: f32[32,128], index: 8, kind: input, shape index: {}]
  %s9 = inlined_call_operand.hbm [shape: f32[1,128], index: 9, kind: input, shape index: {}]
  %s10 = inlined_call_operand.vmem [shape: f32[64,128], index: 10, kind: input, shape index: {}]
  %s11 = inlined_call_operand.hbm [shape: f32[32,128], index: 11, kind: input, shape index: {}]
  %s12 = inlined_call_operand.hbm [shape: f32[1,128], index: 12, kind: input, shape index: {}]
  %s13 = inlined_call_operand.vmem [shape: f32[64,32], index: 13, kind: input, shape index: {}]
  %s14 = inlined_call_operand.hbm [shape: f32[1,32], index: 14, kind: input, shape index: {}]
  %s15 = inlined_call_operand.<no memory space> [shape: f32[1,1], index: 15, kind: input, shape index: {}]
  %s16 = inlined_call_operand.vmem [shape: f32[64,32], index: 16, kind: output, shape index: {}]
  %s17 = sld [smem:[#allocation0]]
  $region90: #{bilstm_forward.1} parent=0
    _
  %s19 = ssub.s32 1, %s17
  %s20 = scalar_select 0, %s19, %s17
  %v21 = vstv %s15
  %22 = vst [vmem:[#allocation7] sm:$0x1] %v21
  $region1: #{bilstm_forward.1} parent=0
    #allocation8 [shape = 'u8[512]{0}', space=vmem, size = 0x400, scoped, tag = 'input window, operand 9, single buffered']
    #allocation9 [shape = 's32[1]{0}', space=sflag, size = 0x4, scoped, tag = 'scoped memory for bilstm_forward.1']
    #allocation10 [shape = 'u8[16384]{0}', space=vmem, size = 0x4000, scoped, tag = 'input window, operand 11, single buffered']
    #allocation11 [shape = 's32[1]{0}', space=sflag, size = 0x4, scoped, tag = 'scoped memory for bilstm_forward.1']
    #allocation12 [shape = 'u8[512]{0}', space=vmem, size = 0x400, scoped, tag = 'input window, operand 12, single buffered']
    #allocation13 [shape = 'u8[512]{0}', space=vmem, size = 0x400, scoped, tag = 'input window, operand 14, single buffered']
    #allocation14 [shape = 's32[1]{0}', space=sflag, size = 0x4, scoped, tag = 'scoped memory for bilstm_forward.1']
    %23 = vsyncpa [#allocation9], 0
    %24 = vsyncpa [#allocation11], 0
    %25 = vsyncpa [#allocation14], 0
    // Predicated region
    $region2: #{bilstm_forward.1} parent=1 // pred_check
      _
    $region3: #{bilstm_forward.1} parent=1 // pred_check_branch
      %27 = sbr.rel (0) target = $region5
    $region4: #{bilstm_forward.1} parent=1 // pred_region
      _
    $region5: #{bilstm_forward.1} parent=1 // pred_fallthru
      _
    // Predicated region
    $region6: #{bilstm_forward.1} parent=1 // pred_check
      _
    $region7: #{bilstm_forward.1} parent=1 // pred_check_branch
      %29 = sbr.rel (0) target = $region9
    $region8: #{bilstm_forward.1} parent=1 // pred_region
      _
    $region9: #{bilstm_forward.1} parent=1 // pred_fallthru
      _
    // Predicated region
    $region10: #{bilstm_forward.1} parent=1 // pred_check
      _
    $region11: #{bilstm_forward.1} parent=1 // pred_check_branch
      %31 = sbr.rel (0) target = $region13
    $region12: #{bilstm_forward.1} parent=1 // pred_region
      _
    $region13: #{bilstm_forward.1} parent=1 // pred_fallthru
      _
    // Predicated region
    $region14: #{bilstm_forward.1} parent=1 // pred_check
      _
    $region15: #{bilstm_forward.1} parent=1 // pred_check_branch
      %33 = sbr.rel (0) target = $region17
    $region16: #{bilstm_forward.1} parent=1 // pred_region
      _
    $region17: #{bilstm_forward.1} parent=1 // pred_fallthru
      _
    // Predicated region
    $region18: #{bilstm_forward.1} parent=1 // pred_check
      _
    $region19: #{bilstm_forward.1} parent=1 // pred_check_branch
      %35 = sbr.rel (0) target = $region21
    $region20: #{bilstm_forward.1} parent=1 // pred_region
      _
    $region21: #{bilstm_forward.1} parent=1 // pred_fallthru
      _
    // Predicated region
    $region22: #{bilstm_forward.1} parent=1 // pred_check
      _
    $region23: #{bilstm_forward.1} parent=1 // pred_check_branch
      %37 = sbr.rel (0) target = $region25
    $region24: #{bilstm_forward.1} parent=1 // pred_region
      _
    $region25: #{bilstm_forward.1} parent=1 // pred_fallthru
      _
    // Predicated region
    $region26: #{bilstm_forward.1} parent=1 // pred_check
      _
    $region27: #{bilstm_forward.1} parent=1 // pred_check_branch
      %39 = sbr.rel (0) target = $region29
    $region28: #{bilstm_forward.1} parent=1 // pred_region
      _
    $region29: #{bilstm_forward.1} parent=1 // pred_fallthru
      _
    // Predicated region
    $region30: #{bilstm_forward.1} parent=1 // pred_check
      _
    $region31: #{bilstm_forward.1} parent=1 // pred_check_branch
      %41 = sbr.rel (0) target = $region33
    $region32: #{bilstm_forward.1} parent=1 // pred_region
      _
    $region33: #{bilstm_forward.1} parent=1 // pred_fallthru
      _
    // Predicated region
    $region34: #{bilstm_forward.1} parent=1 // pred_check
      _
    $region35: #{bilstm_forward.1} parent=1 // pred_check_branch
      %43 = sbr.rel (0) target = $region37
    $region36: #{bilstm_forward.1} parent=1 // pred_region
      _
    $region37: #{bilstm_forward.1} parent=1 // pred_fallthru
      _
    // Predicated region
    $region38: #{bilstm_forward.1} parent=1 // pred_check
      _
    $region39: #{bilstm_forward.1} parent=1 // pred_check_branch
      %45 = sbr.rel (0) target = $region41
    $region40: #{bilstm_forward.1} parent=1 // pred_region
      %s47 = ssub.s32 16, 16
      %48 = vsyncadd [#allocation9], %s47
      %s50 = sshll.u32 [#allocation8], 4
      %s51 = int_to_ptr.vmem [resolvable:$true] %s50
      %53 = dma.hbm_to_vmem [thread:$0]  %s9, 16, %s51, [#allocation9]
    $region41: #{bilstm_forward.1} parent=1 // pred_fallthru
      _
    // Predicated region
    $region42: #{bilstm_forward.1} parent=1 // pred_check
      _
    $region43: #{bilstm_forward.1} parent=1 // pred_check_branch
      %55 = sbr.rel (0) target = $region45
    $region44: #{bilstm_forward.1} parent=1 // pred_region
      _
    $region45: #{bilstm_forward.1} parent=1 // pred_fallthru
      _
    // Predicated region
    $region46: #{bilstm_forward.1} parent=1 // pred_check
      _
    $region47: #{bilstm_forward.1} parent=1 // pred_check_branch
      %57 = sbr.rel (0) target = $region49
    $region48: #{bilstm_forward.1} parent=1 // pred_region
      %s59 = ssub.s32 512, 512
      %60 = vsyncadd [#allocation11], %s59
      %s61 = sshll.u32 [#allocation10], 4
      %s62 = int_to_ptr.vmem [resolvable:$true] %s61
      %67 = dma.hbm_to_vmem [thread:$0]  %s11, 512, %s62, [#allocation11], 128, 128, 8
    $region49: #{bilstm_forward.1} parent=1 // pred_fallthru
      _
    // Predicated region
    $region50: #{bilstm_forward.1} parent=1 // pred_check
      _
    $region51: #{bilstm_forward.1} parent=1 // pred_check_branch
      %69 = sbr.rel (0) target = $region53
    $region52: #{bilstm_forward.1} parent=1 // pred_region
      %s71 = ssub.s32 16, 16
      %72 = vsyncadd [#allocation11], %s71
      %s74 = sshll.u32 [#allocation12], 4
      %s75 = int_to_ptr.vmem [resolvable:$true] %s74
      %77 = dma.hbm_to_vmem [thread:$0]  %s12, 16, %s75, [#allocation11]
    $region53: #{bilstm_forward.1} parent=1 // pred_fallthru
      _
    // Predicated region
    $region54: #{bilstm_forward.1} parent=1 // pred_check
      _
    $region55: #{bilstm_forward.1} parent=1 // pred_check_branch
      %79 = sbr.rel (0) target = $region57
    $region56: #{bilstm_forward.1} parent=1 // pred_region
      _
    $region57: #{bilstm_forward.1} parent=1 // pred_fallthru
      _
    // Predicated region
    $region58: #{bilstm_forward.1} parent=1 // pred_check
      _
    $region59: #{bilstm_forward.1} parent=1 // pred_check_branch
      %81 = sbr.rel (0) target = $region61
    $region60: #{bilstm_forward.1} parent=1 // pred_region
      %s83 = ssub.s32 16, 16
      %84 = vsyncadd [#allocation14], %s83
      %s86 = sshll.u32 [#allocation13], 4
      %s87 = int_to_ptr.vmem [resolvable:$true] %s86
      %89 = dma.hbm_to_vmem [thread:$0]  %s14, 16, %s87, [#allocation14]
    $region61: #{bilstm_forward.1} parent=1 // pred_fallthru
      _
    // Predicated region
    $region62: #{bilstm_forward.1} parent=1 // pred_check
      _
    $region63: #{bilstm_forward.1} parent=1 // pred_check_branch
      %91 = sbr.rel (0) target = $region65
    $region64: #{bilstm_forward.1} parent=1 // pred_region
      _
    $region65: #{bilstm_forward.1} parent=1 // pred_fallthru
      _
    // Predicated region
    $region66: #{bilstm_forward.1} parent=1 // pred_check
      _
    $region67: #{bilstm_forward.1} parent=1 // pred_check_branch
      %93 = sbr.rel (0) target = $region69
    $region68: #{bilstm_forward.1} parent=1 // pred_region
      %94 = dma.done [#allocation9], 16
    $region69: #{bilstm_forward.1} parent=1 // pred_fallthru
      _
    // Predicated region
    $region70: #{bilstm_forward.1} parent=1 // pred_check
      _
    $region71: #{bilstm_forward.1} parent=1 // pred_check_branch
      %96 = sbr.rel (0) target = $region73
    $region72: #{bilstm_forward.1} parent=1 // pred_region
      %97 = dma.done [#allocation11], 512
    $region73: #{bilstm_forward.1} parent=1 // pred_fallthru
      _
    // Predicated region
    $region74: #{bilstm_forward.1} parent=1 // pred_check
      _
    $region75: #{bilstm_forward.1} parent=1 // pred_check_branch
      %99 = sbr.rel (0) target = $region77
    $region76: #{bilstm_forward.1} parent=1 // pred_region
      %100 = dma.done [#allocation11], 16
    $region77: #{bilstm_forward.1} parent=1 // pred_fallthru
      _
    // Predicated region
    $region78: #{bilstm_forward.1} parent=1 // pred_check
      _
    $region79: #{bilstm_forward.1} parent=1 // pred_check_branch
      %102 = sbr.rel (0) target = $region81
    $region80: #{bilstm_forward.1} parent=1 // pred_region
      %103 = dma.done [#allocation14], 16
    $region81: #{bilstm_forward.1} parent=1 // pred_fallthru
      _
    %v104 = vld [vmem:[%s1] sm:$0xff]
    %v105 = vld [vmem:[%s1 + $0x8] sm:$0xff]
    %v106 = vld [vmem:[%s1 + $0x10] sm:$0xff]
    %v107 = vld [vmem:[%s1 + $0x18] sm:$0xff]
    %v108 = vld [vmem:[%s0] sm:$0xff]
    %v109 = vld [vmem:[%s0 + $0x8] sm:$0xff]
    %v110 = vld [vmem:[%s0 + $0x10] sm:$0xff]
    %v111 = vld [vmem:[%s0 + $0x18] sm:$0xff]
    %v112 = vld [vmem:[%s0 + $0x20] sm:$0xff]
    %v113 = vld [vmem:[%s0 + $0x28] sm:$0xff]
    %v114 = vld [vmem:[%s0 + $0x30] sm:$0xff]
    %v115 = vld [vmem:[%s0 + $0x38] sm:$0xff]
    %v116 = vld [vmem:[%s3] sm:$0x1]
    %v118 = vlaneseq
    %v119 = vshrl.u32 %v118, 7
    %v120 = vsub.s32 0, %v119
    %v121 = vrot.slane %v116, %v120
    %vm123 = vcmask 261120
    %v125 = vsel %vm123, %v108, 0
    %v128 = vsel %vm123, %v109, 0
    %v131 = vsel %vm123, %v110, 0
    %v134 = vsel %vm123, %v111, 0
    %v137 = vsel %vm123, %v112, 0
    %v140 = vsel %vm123, %v113, 0
    %v143 = vsel %vm123, %v114, 0
    %v146 = vsel %vm123, %v115, 0
    %148 = vmatprep.subr.mxu0 0.0
    %149 = vmatpush1.msra.mxu0 0.0
    %150 = vmatprep.subr.mxu0 0.0
    %151 = vmatpush1.msra.mxu0 0.0
    %152 = vmatprep.subr.mxu0 0.0
    %153 = vmatpush1.msra.mxu0 0.0
    %154 = vmatprep.subr.mxu0 0.0
    %155 = vmatpush1.msra.mxu0 0.0
    %156 = vmatprep.subr.mxu0 0.0
    %157 = vmatpush1.msra.mxu0 0.0
    %158 = vmatprep.subr.mxu0 0.0
    %159 = vmatpush1.msra.mxu0 0.0
    %160 = vmatprep.subr.mxu0 0.0
    %161 = vmatpush1.msra.mxu0 0.0
    %162 = vmatprep.subr.mxu0 0.0
    %163 = vmatpush1.msra.mxu0 0.0
    %164 = vmatprep.subr.mxu0 0.0
    %165 = vmatpush1.msra.mxu0 0.0
    %166 = vmatprep.subr.mxu0 0.0
    %167 = vmatpush1.msra.mxu0 0.0
    %168 = vmatprep.subr.mxu0 0.0
    %169 = vmatpush1.msra.mxu0 0.0
    %170 = vmatprep.subr.mxu0 0.0
    %171 = vmatpush1.msra.mxu0 0.0
    %172 = vmatprep.subr.mxu0 0.0
    %173 = vmatpush1.msra.mxu0 %v107
    %174 = vmatprep.subr.mxu0 0.0
    %175 = vmatpush1.msra.mxu0 %v106
    %176 = vmatprep.subr.mxu0 0.0
    %177 = vmatpush1.msra.mxu0 %v105
    %178 = vmatprep.subr.mxu0 0.0
    %179 = vmatpush1.msra.mxu0 %v104
    %180 = vmatprep.subr.mxu0 0.0
    %181 = vmatpush2.msra.mxu0 0.0
    %182 = vmatprep.subr.mxu0 0.0
    %183 = vmatpush2.msra.mxu0 0.0
    %184 = vmatprep.subr.mxu0 0.0
    %185 = vmatpush2.msra.mxu0 0.0
    %186 = vmatprep.subr.mxu0 0.0
    %187 = vmatpush2.msra.mxu0 0.0
    %188 = vmatprep.subr.mxu0 0.0
    %189 = vmatpush2.msra.mxu0 0.0
    %190 = vmatprep.subr.mxu0 0.0
    %191 = vmatpush2.msra.mxu0 0.0
    %192 = vmatprep.subr.mxu0 0.0
    %193 = vmatpush2.msra.mxu0 0.0
    %194 = vmatprep.subr.mxu0 0.0
    %195 = vmatpush2.msra.mxu0 0.0
    %196 = vmatprep.subr.mxu0 0.0
    %197 = vmatpush2.msra.mxu0 0.0
    %198 = vmatprep.subr.mxu0 0.0
    %199 = vmatpush2.msra.mxu0 0.0
    %200 = vmatprep.subr.mxu0 0.0
    %201 = vmatpush2.msra.mxu0 0.0
    %202 = vmatprep.subr.mxu0 0.0
    %203 = vmatpush2.msra.mxu0 0.0
    %204 = vmatprep.subr.mxu0 0.0
    %205 = vmatpush2.msra.mxu0 0.0
    %206 = vmatprep.subr.mxu0 0.0
    %207 = vmatpush2.msra.mxu0 0.0
    %208 = vmatprep.subr.mxu0 0.0
    %209 = vmatpush2.msra.mxu0 0.0
    %210 = vmatprep.subr.mxu0 0.0
    %211 = vmatpush2.msra.mxu0 0.0
    %212 = vmatprep.mubr.f32.mxu0 0.0
    %213 = vmatmul.mubr.f32.gmra.mxu0 %v125
    %v214 = vpop.f32.mrf.mxu0
    %v215 = vadd.f32 %v121, %v214
    %v216 = vpop.f32.mrf.mxu0
    %217 = vmatprep.mubr.f32.mxu0 0.0
    %218 = vmatmul.mubr.f32.gmra.mxu0 %v128
    %v219 = vpop.f32.mrf.mxu0
    %v220 = vadd.f32 %v121, %v219
    %v221 = vpop.f32.mrf.mxu0
    %222 = vmatprep.mubr.f32.mxu0 0.0
    %223 = vmatmul.mubr.f32.gmra.mxu0 %v131
    %v224 = vpop.f32.mrf.mxu0
    %v225 = vadd.f32 %v121, %v224
    %v226 = vpop.f32.mrf.mxu0
    %227 = vmatprep.mubr.f32.mxu0 0.0
    %228 = vmatmul.mubr.f32.gmra.mxu0 %v134
    %v229 = vpop.f32.mrf.mxu0
    %v230 = vadd.f32 %v121, %v229
    %v231 = vpop.f32.mrf.mxu0
    %232 = vmatprep.mubr.f32.mxu0 0.0
    %233 = vmatmul.mubr.f32.gmra.mxu0 %v137
    %v234 = vpop.f32.mrf.mxu0
    %v235 = vadd.f32 %v121, %v234
    %v236 = vpop.f32.mrf.mxu0
    %237 = vmatprep.mubr.f32.mxu0 0.0
    %238 = vmatmul.mubr.f32.gmra.mxu0 %v140
    %v239 = vpop.f32.mrf.mxu0
    %v240 = vadd.f32 %v121, %v239
    %v241 = vpop.f32.mrf.mxu0
    %242 = vmatprep.mubr.f32.mxu0 0.0
    %243 = vmatmul.mubr.f32.gmra.mxu0 %v143
    %v244 = vpop.f32.mrf.mxu0
    %v245 = vadd.f32 %v121, %v244
    %v246 = vpop.f32.mrf.mxu0
    %247 = vmatprep.mubr.f32.mxu0 0.0
    %248 = vmatmul.mubr.f32.gmra.mxu0 %v146
    %v249 = vpop.f32.mrf.mxu0
    %v250 = vadd.f32 %v121, %v249
    %v251 = vpop.f32.mrf.mxu0
    %252 = vdwg.mxu0
    %253 = vst [vmem:[#allocation6] sm:$0xff] %v215
    %254 = vst [vmem:[#allocation6 + $0x8] sm:$0xff] %v220
    %255 = vst [vmem:[#allocation6 + $0x10] sm:$0xff] %v225
    %256 = vst [vmem:[#allocation6 + $0x18] sm:$0xff] %v230
    %257 = vst [vmem:[#allocation6 + $0x20] sm:$0xff] %v235
    %258 = vst [vmem:[#allocation6 + $0x28] sm:$0xff] %v240
    %259 = vst [vmem:[#allocation6 + $0x30] sm:$0xff] %v245
    %260 = vst [vmem:[#allocation6 + $0x38] sm:$0xff] %v250
    %v261 = vld [vmem:[%s2] sm:$0xff]
    %v262 = vld [vmem:[%s2 + $0x8] sm:$0xff]
    %v263 = vld [vmem:[%s2 + $0x10] sm:$0xff]
    %v264 = vld [vmem:[%s2 + $0x18] sm:$0xff]
    %v265 = vld [vmem:[#allocation6] sm:$0xff]
    %v267 = vsel %vm123, 0.0, 0
    %269 = vmatprep.subr.mxu0 0.0
    %270 = vmatpush1.msra.mxu0 0.0
    %271 = vmatprep.subr.mxu0 0.0
    %272 = vmatpush1.msra.mxu0 0.0
    %273 = vmatprep.subr.mxu0 0.0
    %274 = vmatpush1.msra.mxu0 0.0
    %275 = vmatprep.subr.mxu0 0.0
    %276 = vmatpush1.msra.mxu0 0.0
    %277 = vmatprep.subr.mxu0 0.0
    %278 = vmatpush1.msra.mxu0 0.0
    %279 = vmatprep.subr.mxu0 0.0
    %280 = vmatpush1.msra.mxu0 0.0
    %281 = vmatprep.subr.mxu0 0.0
    %282 = vmatpush1.msra.mxu0 0.0
    %283 = vmatprep.subr.mxu0 0.0
    %284 = vmatpush1.msra.mxu0 0.0
    %285 = vmatprep.subr.mxu0 0.0
    %286 = vmatpush1.msra.mxu0 0.0
    %287 = vmatprep.subr.mxu0 0.0
    %288 = vmatpush1.msra.mxu0 0.0
    %289 = vmatprep.subr.mxu0 0.0
    %290 = vmatpush1.msra.mxu0 0.0
    %291 = vmatprep.subr.mxu0 0.0
    %292 = vmatpush1.msra.mxu0 0.0
    %293 = vmatprep.subr.mxu0 0.0
    %294 = vmatpush1.msra.mxu0 %v264
    %295 = vmatprep.subr.mxu0 0.0
    %296 = vmatpush1.msra.mxu0 %v263
    %297 = vmatprep.subr.mxu0 0.0
    %298 = vmatpush1.msra.mxu0 %v262
    %299 = vmatprep.subr.mxu0 0.0
    %300 = vmatpush1.msra.mxu0 %v261
    %301 = vmatprep.subr.mxu0 0.0
    %302 = vmatpush2.msra.mxu0 0.0
    %303 = vmatprep.subr.mxu0 0.0
    %304 = vmatpush2.msra.mxu0 0.0
    %305 = vmatprep.subr.mxu0 0.0
    %306 = vmatpush2.msra.mxu0 0.0
    %307 = vmatprep.subr.mxu0 0.0
    %308 = vmatpush2.msra.mxu0 0.0
    %309 = vmatprep.subr.mxu0 0.0
    %310 = vmatpush2.msra.mxu0 0.0
    %311 = vmatprep.subr.mxu0 0.0
    %312 = vmatpush2.msra.mxu0 0.0
    %313 = vmatprep.subr.mxu0 0.0
    %314 = vmatpush2.msra.mxu0 0.0
    %315 = vmatprep.subr.mxu0 0.0
    %316 = vmatpush2.msra.mxu0 0.0
    %317 = vmatprep.subr.mxu0 0.0
    %318 = vmatpush2.msra.mxu0 0.0
    %319 = vmatprep.subr.mxu0 0.0
    %320 = vmatpush2.msra.mxu0 0.0
    %321 = vmatprep.subr.mxu0 0.0
    %322 = vmatpush2.msra.mxu0 0.0
    %323 = vmatprep.subr.mxu0 0.0
    %324 = vmatpush2.msra.mxu0 0.0
    %325 = vmatprep.subr.mxu0 0.0
    %326 = vmatpush2.msra.mxu0 0.0
    %327 = vmatprep.subr.mxu0 0.0
    %328 = vmatpush2.msra.mxu0 0.0
    %329 = vmatprep.subr.mxu0 0.0
    %330 = vmatpush2.msra.mxu0 0.0
    %331 = vmatprep.subr.mxu0 0.0
    %332 = vmatpush2.msra.mxu0 0.0
    %333 = vmatprep.mubr.f32.mxu0 0.0
    %334 = vmatmul.mubr.f32.gmra.mxu0 %v267
    %v335 = vpop.f32.mrf.mxu0
    %v336 = vadd.f32 0.0, %v335
    %v337 = vpop.f32.mrf.mxu0
    %338 = vdwg.mxu0
    %v339 = vadd.f32 %v265, %v336
    %v340 = vxor.u32 %v339, 2147483648
    %v341 = vmul.f32 %v340, 1.442695
    %v342 = vpow.pop %v341
    %v343 = vadd.f32 %v342, 1.0
    %v344 = vrcp.pop %v343
    %v345 = vmul.f32 1.0, %v344
    %v346 = vtanh.pop %v339
    %v347 = vmul.f32 %v345, 0.0
    %349 = vrot.lane.b32.xlu0 %v346, 64
    %v350 = vpop.permute.xlu0 %349
    %v352 = vmul.f32 %v345, %v350
    %354 = vrot.lane.b32.xlu0 %v352, 32
    %v355 = vpop.permute.xlu0 %354
    %v357 = vadd.f32 %v347, %v355
    %v358 = vtanh.pop %v357
    %360 = vrot.lane.b32.xlu0 %v358, 64
    %v361 = vpop.permute.xlu0 %360
    %v363 = vmul.f32 %v345, %v361
    %365 = vrot.lane.b32.xlu0 %v363, 32
    %v366 = vpop.permute.xlu0 %365
    %368 = vst.msk [vmem:[#allocation2] sm:$0xff] %vm123, %v366
    %s369 = scalar_lea.vmem [#allocation6], 8
    %v370 = vld [vmem:[%s369] sm:$0xff]
    %v371 = vsel %vm123, %v366, 0
    %373 = vmatprep.subr.mxu0 0.0
    %374 = vmatpush1.msra.mxu0 0.0
    %375 = vmatprep.subr.mxu0 0.0
    %376 = vmatpush1.msra.mxu0 0.0
    %377 = vmatprep.subr.mxu0 0.0
    %378 = vmatpush1.msra.mxu0 0.0
    %379 = vmatprep.subr.mxu0 0.0
    %380 = vmatpush1.msra.mxu0 0.0
    %381 = vmatprep.subr.mxu0 0.0
    %382 = vmatpush1.msra.mxu0 0.0
    %383 = vmatprep.subr.mxu0 0.0
    %384 = vmatpush1.msra.mxu0 0.0
    %385 = vmatprep.subr.mxu0 0.0
    %386 = vmatpush1.msra.mxu0 0.0
    %387 = vmatprep.subr.mxu0 0.0
    %388 = vmatpush1.msra.mxu0 0.0
    %389 = vmatprep.subr.mxu0 0.0
    %390 = vmatpush1.msra.mxu0 0.0
    %391 = vmatprep.subr.mxu0 0.0
    %392 = vmatpush1.msra.mxu0 0.0
    %393 = vmatprep.subr.mxu0 0.0
    %394 = vmatpush1.msra.mxu0 0.0
    %395 = vmatprep.subr.mxu0 0.0
    %396 = vmatpush1.msra.mxu0 0.0
    %397 = vmatprep.subr.mxu0 0.0
    %398 = vmatpush1.msra.mxu0 %v264
    %399 = vmatprep.subr.mxu0 0.0
    %400 = vmatpush1.msra.mxu0 %v263
    %401 = vmatprep.subr.mxu0 0.0
    %402 = vmatpush1.msra.mxu0 %v262
    %403 = vmatprep.subr.mxu0 0.0
    %404 = vmatpush1.msra.mxu0 %v261
    %405 = vmatprep.subr.mxu0 0.0
    %406 = vmatpush2.msra.mxu0 0.0
    %407 = vmatprep.subr.mxu0 0.0
    %408 = vmatpush2.msra.mxu0 0.0
    %409 = vmatprep.subr.mxu0 0.0
    %410 = vmatpush2.msra.mxu0 0.0
    %411 = vmatprep.subr.mxu0 0.0
    %412 = vmatpush2.msra.mxu0 0.0
    %413 = vmatprep.subr.mxu0 0.0
    %414 = vmatpush2.msra.mxu0 0.0
    %415 = vmatprep.subr.mxu0 0.0
    %416 = vmatpush2.msra.mxu0 0.0
    %417 = vmatprep.subr.mxu0 0.0
    %418 = vmatpush2.msra.mxu0 0.0
    %419 = vmatprep.subr.mxu0 0.0
    %420 = vmatpush2.msra.mxu0 0.0
    %421 = vmatprep.subr.mxu0 0.0
    %422 = vmatpush2.msra.mxu0 0.0
    %423 = vmatprep.subr.mxu0 0.0
    %424 = vmatpush2.msra.mxu0 0.0
    %425 = vmatprep.subr.mxu0 0.0
    %426 = vmatpush2.msra.mxu0 0.0
    %427 = vmatprep.subr.mxu0 0.0
    %428 = vmatpush2.msra.mxu0 0.0
    %429 = vmatprep.subr.mxu0 0.0
    %430 = vmatpush2.msra.mxu0 0.0
    %431 = vmatprep.subr.mxu0 0.0
    %432 = vmatpush2.msra.mxu0 0.0
    %433 = vmatprep.subr.mxu0 0.0
    %434 = vmatpush2.msra.mxu0 0.0
    %435 = vmatprep.subr.mxu0 0.0
    %436 = vmatpush2.msra.mxu0 0.0
    %437 = vmatprep.mubr.f32.mxu0 0.0
    %438 = vmatmul.mubr.f32.gmra.mxu0 %v371
    %v439 = vpop.f32.mrf.mxu0
    %v440 = vadd.f32 0.0, %v439
    %v441 = vpop.f32.mrf.mxu0
    %442 = vdwg.mxu0
    %v443 = vadd.f32 %v370, %v440
    %v444 = vxor.u32 %v443, 2147483648
    %v445 = vmul.f32 %v444, 1.442695
    %v446 = vpow.pop %v445
    %v447 = vadd.f32 %v446, 1.0
    %v448 = vrcp.pop %v447
    %v449 = vmul.f32 1.0, %v448
    %v450 = vtanh.pop %v443
    %v451 = vmul.f32 %v449, %v357
    %453 = vrot.lane.b32.xlu0 %v450, 64
    %v454 = vpop.permute.xlu0 %453
    %v456 = vmul.f32 %v449, %v454
    %458 = vrot.lane.b32.xlu0 %v456, 32
    %v459 = vpop.permute.xlu0 %458
    %v461 = vadd.f32 %v451, %v459
    %v462 = vtanh.pop %v461
    %464 = vrot.lane.b32.xlu0 %v462, 64
    %v465 = vpop.permute.xlu0 %464
    %v467 = vmul.f32 %v449, %v465
    %469 = vrot.lane.b32.xlu0 %v467, 32
    %v470 = vpop.permute.xlu0 %469
    %s472 = scalar_lea.vmem [#allocation2], 8
    %473 = vst.msk [vmem:[%s472] sm:$0xff] %vm123, %v470
    %s474 = scalar_lea.vmem [#allocation6], 16
    %v475 = vld [vmem:[%s474] sm:$0xff]
    %v476 = vsel %vm123, %v470, 0
    %478 = vmatprep.subr.mxu0 0.0
    %479 = vmatpush1.msra.mxu0 0.0
    %480 = vmatprep.subr.mxu0 0.0
    %481 = vmatpush1.msra.mxu0 0.0
    %482 = vmatprep.subr.mxu0 0.0
    %483 = vmatpush1.msra.mxu0 0.0
    %484 = vmatprep.subr.mxu0 0.0
    %485 = vmatpush1.msra.mxu0 0.0
    %486 = vmatprep.subr.mxu0 0.0
    %487 = vmatpush1.msra.mxu0 0.0
    %488 = vmatprep.subr.mxu0 0.0
    %489 = vmatpush1.msra.mxu0 0.0
    %490 = vmatprep.subr.mxu0 0.0
    %491 = vmatpush1.msra.mxu0 0.0
    %492 = vmatprep.subr.mxu0 0.0
    %493 = vmatpush1.msra.mxu0 0.0
    %494 = vmatprep.subr.mxu0 0.0
    %495 = vmatpush1.msra.mxu0 0.0
    %496 = vmatprep.subr.mxu0 0.0
    %497 = vmatpush1.msra.mxu0 0.0
    %498 = vmatprep.subr.mxu0 0.0
    %499 = vmatpush1.msra.mxu0 0.0
    %500 = vmatprep.subr.mxu0 0.0
    %501 = vmatpush1.msra.mxu0 0.0
    %502 = vmatprep.subr.mxu0 0.0
    %503 = vmatpush1.msra.mxu0 %v264
    %504 = vmatprep.subr.mxu0 0.0
    %505 = vmatpush1.msra.mxu0 %v263
    %506 = vmatprep.subr.mxu0 0.0
    %507 = vmatpush1.msra.mxu0 %v262
    %508 = vmatprep.subr.mxu0 0.0
    %509 = vmatpush1.msra.mxu0 %v261
    %510 = vmatprep.subr.mxu0 0.0
    %511 = vmatpush2.msra.mxu0 0.0
    %512 = vmatprep.subr.mxu0 0.0
    %513 = vmatpush2.msra.mxu0 0.0
    %514 = vmatprep.subr.mxu0 0.0
    %515 = vmatpush2.msra.mxu0 0.0
    %516 = vmatprep.subr.mxu0 0.0
    %517 = vmatpush2.msra.mxu0 0.0
    %518 = vmatprep.subr.mxu0 0.0
    %519 = vmatpush2.msra.mxu0 0.0
    %520 = vmatprep.subr.mxu0 0.0
    %521 = vmatpush2.msra.mxu0 0.0
    %522 = vmatprep.subr.mxu0 0.0
    %523 = vmatpush2.msra.mxu0 0.0
    %524 = vmatprep.subr.mxu0 0.0
    %525 = vmatpush2.msra.mxu0 0.0
    %526 = vmatprep.subr.mxu0 0.0
    %527 = vmatpush2.msra.mxu0 0.0
    %528 = vmatprep.subr.mxu0 0.0
    %529 = vmatpush2.msra.mxu0 0.0
    %530 = vmatprep.subr.mxu0 0.0
    %531 = vmatpush2.msra.mxu0 0.0
    %532 = vmatprep.subr.mxu0 0.0
    %533 = vmatpush2.msra.mxu0 0.0
    %534 = vmatprep.subr.mxu0 0.0
    %535 = vmatpush2.msra.mxu0 0.0
    %536 = vmatprep.subr.mxu0 0.0
    %537 = vmatpush2.msra.mxu0 0.0
    %538 = vmatprep.subr.mxu0 0.0
    %539 = vmatpush2.msra.mxu0 0.0
    %540 = vmatprep.subr.mxu0 0.0
    %541 = vmatpush2.msra.mxu0 0.0
    %542 = vmatprep.mubr.f32.mxu0 0.0
    %543 = vmatmul.mubr.f32.gmra.mxu0 %v476
    %v544 = vpop.f32.mrf.mxu0
    %v545 = vadd.f32 0.0, %v544
    %v546 = vpop.f32.mrf.mxu0
    %547 = vdwg.mxu0
    %v548 = vadd.f32 %v475, %v545
    %v549 = vxor.u32 %v548, 2147483648
    %v550 = vmul.f32 %v549, 1.442695
    %v551 = vpow.pop %v550
    %v552 = vadd.f32 %v551, 1.0
    %v553 = vrcp.pop %v552
    %v554 = vmul.f32 1.0, %v553
    %v555 = vtanh.pop %v548
    %v556 = vmul.f32 %v554, %v461
    %558 = vrot.lane.b32.xlu0 %v555, 64
    %v559 = vpop.permute.xlu0 %558
    %v561 = vmul.f32 %v554, %v559
    %563 = vrot.lane.b32.xlu0 %v561, 32
    %v564 = vpop.permute.xlu0 %563
    %v566 = vadd.f32 %v556, %v564
    %v567 = vtanh.pop %v566
    %569 = vrot.lane.b32.xlu0 %v567, 64
    %v570 = vpop.permute.xlu0 %569
    %v572 = vmul.f32 %v554, %v570
    %574 = vrot.lane.b32.xlu0 %v572, 32
    %v575 = vpop.permute.xlu0 %574
    %s577 = scalar_lea.vmem [#allocation2], 16
    %578 = vst.msk [vmem:[%s577] sm:$0xff] %vm123, %v575
    %s579 = scalar_lea.vmem [#allocation6], 24
    %v580 = vld [vmem:[%s579] sm:$0xff]
    %v581 = vsel %vm123, %v575, 0
    %583 = vmatprep.subr.mxu0 0.0
    %584 = vmatpush1.msra.mxu0 0.0
    %585 = vmatprep.subr.mxu0 0.0
    %586 = vmatpush1.msra.mxu0 0.0
    %587 = vmatprep.subr.mxu0 0.0
    %588 = vmatpush1.msra.mxu0 0.0
    %589 = vmatprep.subr.mxu0 0.0
    %590 = vmatpush1.msra.mxu0 0.0
    %591 = vmatprep.subr.mxu0 0.0
    %592 = vmatpush1.msra.mxu0 0.0
    %593 = vmatprep.subr.mxu0 0.0
    %594 = vmatpush1.msra.mxu0 0.0
    %595 = vmatprep.subr.mxu0 0.0
    %596 = vmatpush1.msra.mxu0 0.0
    %597 = vmatprep.subr.mxu0 0.0
    %598 = vmatpush1.msra.mxu0 0.0
    %599 = vmatprep.subr.mxu0 0.0
    %600 = vmatpush1.msra.mxu0 0.0
    %601 = vmatprep.subr.mxu0 0.0
    %602 = vmatpush1.msra.mxu0 0.0
    %603 = vmatprep.subr.mxu0 0.0
    %604 = vmatpush1.msra.mxu0 0.0
    %605 = vmatprep.subr.mxu0 0.0
    %606 = vmatpush1.msra.mxu0 0.0
    %607 = vmatprep.subr.mxu0 0.0
    %608 = vmatpush1.msra.mxu0 %v264
    %609 = vmatprep.subr.mxu0 0.0
    %610 = vmatpush1.msra.mxu0 %v263
    %611 = vmatprep.subr.mxu0 0.0
    %612 = vmatpush1.msra.mxu0 %v262
    %613 = vmatprep.subr.mxu0 0.0
    %614 = vmatpush1.msra.mxu0 %v261
    %615 = vmatprep.subr.mxu0 0.0
    %616 = vmatpush2.msra.mxu0 0.0
    %617 = vmatprep.subr.mxu0 0.0
    %618 = vmatpush2.msra.mxu0 0.0
    %619 = vmatprep.subr.mxu0 0.0
    %620 = vmatpush2.msra.mxu0 0.0
    %621 = vmatprep.subr.mxu0 0.0
    %622 = vmatpush2.msra.mxu0 0.0
    %623 = vmatprep.subr.mxu0 0.0
    %624 = vmatpush2.msra.mxu0 0.0
    %625 = vmatprep.subr.mxu0 0.0
    %626 = vmatpush2.msra.mxu0 0.0
    %627 = vmatprep.subr.mxu0 0.0
    %628 = vmatpush2.msra.mxu0 0.0
    %629 = vmatprep.subr.mxu0 0.0
    %630 = vmatpush2.msra.mxu0 0.0
    %631 = vmatprep.subr.mxu0 0.0
    %632 = vmatpush2.msra.mxu0 0.0
    %633 = vmatprep.subr.mxu0 0.0
    %634 = vmatpush2.msra.mxu0 0.0
    %635 = vmatprep.subr.mxu0 0.0
    %636 = vmatpush2.msra.mxu0 0.0
    %637 = vmatprep.subr.mxu0 0.0
    %638 = vmatpush2.msra.mxu0 0.0
    %639 = vmatprep.subr.mxu0 0.0
    %640 = vmatpush2.msra.mxu0 0.0
    %641 = vmatprep.subr.mxu0 0.0
    %642 = vmatpush2.msra.mxu0 0.0
    %643 = vmatprep.subr.mxu0 0.0
    %644 = vmatpush2.msra.mxu0 0.0
    %645 = vmatprep.subr.mxu0 0.0
    %646 = vmatpush2.msra.mxu0 0.0
    %647 = vmatprep.mubr.f32.mxu0 0.0
    %648 = vmatmul.mubr.f32.gmra.mxu0 %v581
    %v649 = vpop.f32.mrf.mxu0
    %v650 = vadd.f32 0.0, %v649
    %v651 = vpop.f32.mrf.mxu0
    %652 = vdwg.mxu0
    %v653 = vadd.f32 %v580, %v650
    %v654 = vxor.u32 %v653, 2147483648
    %v655 = vmul.f32 %v654, 1.442695
    %v656 = vpow.pop %v655
    %v657 = vadd.f32 %v656, 1.0
    %v658 = vrcp.pop %v657
    %v659 = vmul.f32 1.0, %v658
    %v660 = vtanh.pop %v653
    %v661 = vmul.f32 %v659, %v566
    %663 = vrot.lane.b32.xlu0 %v660, 64
    %v664 = vpop.permute.xlu0 %663
    %v666 = vmul.f32 %v659, %v664
    %668 = vrot.lane.b32.xlu0 %v666, 32
    %v669 = vpop.permute.xlu0 %668
    %v671 = vadd.f32 %v661, %v669
    %v672 = vtanh.pop %v671
    %674 = vrot.lane.b32.xlu0 %v672, 64
    %v675 = vpop.permute.xlu0 %674
    %v677 = vmul.f32 %v659, %v675
    %679 = vrot.lane.b32.xlu0 %v677, 32
    %v680 = vpop.permute.xlu0 %679
    %s682 = scalar_lea.vmem [#allocation2], 24
    %683 = vst.msk [vmem:[%s682] sm:$0xff] %vm123, %v680
    %s684 = scalar_lea.vmem [#allocation6], 32
    %v685 = vld [vmem:[%s684] sm:$0xff]
    %v686 = vsel %vm123, %v680, 0
    %688 = vmatprep.subr.mxu0 0.0
    %689 = vmatpush1.msra.mxu0 0.0
    %690 = vmatprep.subr.mxu0 0.0
    %691 = vmatpush1.msra.mxu0 0.0
    %692 = vmatprep.subr.mxu0 0.0
    %693 = vmatpush1.msra.mxu0 0.0
    %694 = vmatprep.subr.mxu0 0.0
    %695 = vmatpush1.msra.mxu0 0.0
    %696 = vmatprep.subr.mxu0 0.0
    %697 = vmatpush1.msra.mxu0 0.0
    %698 = vmatprep.subr.mxu0 0.0
    %699 = vmatpush1.msra.mxu0 0.0
    %700 = vmatprep.subr.mxu0 0.0
    %701 = vmatpush1.msra.mxu0 0.0
    %702 = vmatprep.subr.mxu0 0.0
    %703 = vmatpush1.msra.mxu0 0.0
    %704 = vmatprep.subr.mxu0 0.0
    %705 = vmatpush1.msra.mxu0 0.0
    %706 = vmatprep.subr.mxu0 0.0
    %707 = vmatpush1.msra.mxu0 0.0
    %708 = vmatprep.subr.mxu0 0.0
    %709 = vmatpush1.msra.mxu0 0.0
    %710 = vmatprep.subr.mxu0 0.0
    %711 = vmatpush1.msra.mxu0 0.0
    %712 = vmatprep.subr.mxu0 0.0
    %713 = vmatpush1.msra.mxu0 %v264
    %714 = vmatprep.subr.mxu0 0.0
    %715 = vmatpush1.msra.mxu0 %v263
    %716 = vmatprep.subr.mxu0 0.0
    %717 = vmatpush1.msra.mxu0 %v262
    %718 = vmatprep.subr.mxu0 0.0
    %719 = vmatpush1.msra.mxu0 %v261
    %720 = vmatprep.subr.mxu0 0.0
    %721 = vmatpush2.msra.mxu0 0.0
    %722 = vmatprep.subr.mxu0 0.0
    %723 = vmatpush2.msra.mxu0 0.0
    %724 = vmatprep.subr.mxu0 0.0
    %725 = vmatpush2.msra.mxu0 0.0
    %726 = vmatprep.subr.mxu0 0.0
    %727 = vmatpush2.msra.mxu0 0.0
    %728 = vmatprep.subr.mxu0 0.0
    %729 = vmatpush2.msra.mxu0 0.0
    %730 = vmatprep.subr.mxu0 0.0
    %731 = vmatpush2.msra.mxu0 0.0
    %732 = vmatprep.subr.mxu0 0.0
    %733 = vmatpush2.msra.mxu0 0.0
    %734 = vmatprep.subr.mxu0 0.0
    %735 = vmatpush2.msra.mxu0 0.0
    %736 = vmatprep.subr.mxu0 0.0
    %737 = vmatpush2.msra.mxu0 0.0
    %738 = vmatprep.subr.mxu0 0.0
    %739 = vmatpush2.msra.mxu0 0.0
    %740 = vmatprep.subr.mxu0 0.0
    %741 = vmatpush2.msra.mxu0 0.0
    %742 = vmatprep.subr.mxu0 0.0
    %743 = vmatpush2.msra.mxu0 0.0
    %744 = vmatprep.subr.mxu0 0.0
    %745 = vmatpush2.msra.mxu0 0.0
    %746 = vmatprep.subr.mxu0 0.0
    %747 = vmatpush2.msra.mxu0 0.0
    %748 = vmatprep.subr.mxu0 0.0
    %749 = vmatpush2.msra.mxu0 0.0
    %750 = vmatprep.subr.mxu0 0.0
    %751 = vmatpush2.msra.mxu0 0.0
    %752 = vmatprep.mubr.f32.mxu0 0.0
    %753 = vmatmul.mubr.f32.gmra.mxu0 %v686
    %v754 = vpop.f32.mrf.mxu0
    %v755 = vadd.f32 0.0, %v754
    %v756 = vpop.f32.mrf.mxu0
    %757 = vdwg.mxu0
    %v758 = vadd.f32 %v685, %v755
    %v759 = vxor.u32 %v758, 2147483648
    %v760 = vmul.f32 %v759, 1.442695
    %v761 = vpow.pop %v760
    %v762 = vadd.f32 %v761, 1.0
    %v763 = vrcp.pop %v762
    %v764 = vmul.f32 1.0, %v763
    %v765 = vtanh.pop %v758
    %v766 = vmul.f32 %v764, %v671
    %768 = vrot.lane.b32.xlu0 %v765, 64
    %v769 = vpop.permute.xlu0 %768
    %v771 = vmul.f32 %v764, %v769
    %773 = vrot.lane.b32.xlu0 %v771, 32
    %v774 = vpop.permute.xlu0 %773
    %v776 = vadd.f32 %v766, %v774
    %v777 = vtanh.pop %v776
    %779 = vrot.lane.b32.xlu0 %v777, 64
    %v780 = vpop.permute.xlu0 %779
    %v782 = vmul.f32 %v764, %v780
    %784 = vrot.lane.b32.xlu0 %v782, 32
    %v785 = vpop.permute.xlu0 %784
    %s787 = scalar_lea.vmem [#allocation2], 32
    %788 = vst.msk [vmem:[%s787] sm:$0xff] %vm123, %v785
    %s789 = scalar_lea.vmem [#allocation6], 40
    %v790 = vld [vmem:[%s789] sm:$0xff]
    %v791 = vsel %vm123, %v785, 0
    %793 = vmatprep.subr.mxu0 0.0
    %794 = vmatpush1.msra.mxu0 0.0
    %795 = vmatprep.subr.mxu0 0.0
    %796 = vmatpush1.msra.mxu0 0.0
    %797 = vmatprep.subr.mxu0 0.0
    %798 = vmatpush1.msra.mxu0 0.0
    %799 = vmatprep.subr.mxu0 0.0
    %800 = vmatpush1.msra.mxu0 0.0
    %801 = vmatprep.subr.mxu0 0.0
    %802 = vmatpush1.msra.mxu0 0.0
    %803 = vmatprep.subr.mxu0 0.0
    %804 = vmatpush1.msra.mxu0 0.0
    %805 = vmatprep.subr.mxu0 0.0
    %806 = vmatpush1.msra.mxu0 0.0
    %807 = vmatprep.subr.mxu0 0.0
    %808 = vmatpush1.msra.mxu0 0.0
    %809 = vmatprep.subr.mxu0 0.0
    %810 = vmatpush1.msra.mxu0 0.0
    %811 = vmatprep.subr.mxu0 0.0
    %812 = vmatpush1.msra.mxu0 0.0
    %813 = vmatprep.subr.mxu0 0.0
    %814 = vmatpush1.msra.mxu0 0.0
    %815 = vmatprep.subr.mxu0 0.0
    %816 = vmatpush1.msra.mxu0 0.0
    %817 = vmatprep.subr.mxu0 0.0
    %818 = vmatpush1.msra.mxu0 %v264
    %819 = vmatprep.subr.mxu0 0.0
    %820 = vmatpush1.msra.mxu0 %v263
    %821 = vmatprep.subr.mxu0 0.0
    %822 = vmatpush1.msra.mxu0 %v262
    %823 = vmatprep.subr.mxu0 0.0
    %824 = vmatpush1.msra.mxu0 %v261
    %825 = vmatprep.subr.mxu0 0.0
    %826 = vmatpush2.msra.mxu0 0.0
    %827 = vmatprep.subr.mxu0 0.0
    %828 = vmatpush2.msra.mxu0 0.0
    %829 = vmatprep.subr.mxu0 0.0
    %830 = vmatpush2.msra.mxu0 0.0
    %831 = vmatprep.subr.mxu0 0.0
    %832 = vmatpush2.msra.mxu0 0.0
    %833 = vmatprep.subr.mxu0 0.0
    %834 = vmatpush2.msra.mxu0 0.0
    %835 = vmatprep.subr.mxu0 0.0
    %836 = vmatpush2.msra.mxu0 0.0
    %837 = vmatprep.subr.mxu0 0.0
    %838 = vmatpush2.msra.mxu0 0.0
    %839 = vmatprep.subr.mxu0 0.0
    %840 = vmatpush2.msra.mxu0 0.0
    %841 = vmatprep.subr.mxu0 0.0
    %842 = vmatpush2.msra.mxu0 0.0
    %843 = vmatprep.subr.mxu0 0.0
    %844 = vmatpush2.msra.mxu0 0.0
    %845 = vmatprep.subr.mxu0 0.0
    %846 = vmatpush2.msra.mxu0 0.0
    %847 = vmatprep.subr.mxu0 0.0
    %848 = vmatpush2.msra.mxu0 0.0
    %849 = vmatprep.subr.mxu0 0.0
    %850 = vmatpush2.msra.mxu0 0.0
    %851 = vmatprep.subr.mxu0 0.0
    %852 = vmatpush2.msra.mxu0 0.0
    %853 = vmatprep.subr.mxu0 0.0
    %854 = vmatpush2.msra.mxu0 0.0
    %855 = vmatprep.subr.mxu0 0.0
    %856 = vmatpush2.msra.mxu0 0.0
    %857 = vmatprep.mubr.f32.mxu0 0.0
    %858 = vmatmul.mubr.f32.gmra.mxu0 %v791
    %v859 = vpop.f32.mrf.mxu0
    %v860 = vadd.f32 0.0, %v859
    %v861 = vpop.f32.mrf.mxu0
    %862 = vdwg.mxu0
    %v863 = vadd.f32 %v790, %v860
    %v864 = vxor.u32 %v863, 2147483648
    %v865 = vmul.f32 %v864, 1.442695
    %v866 = vpow.pop %v865
    %v867 = vadd.f32 %v866, 1.0
    %v868 = vrcp.pop %v867
    %v869 = vmul.f32 1.0, %v868
    %v870 = vtanh.pop %v863
    %v871 = vmul.f32 %v869, %v776
    %873 = vrot.lane.b32.xlu0 %v870, 64
    %v874 = vpop.permute.xlu0 %873
    %v876 = vmul.f32 %v869, %v874
    %878 = vrot.lane.b32.xlu0 %v876, 32
    %v879 = vpop.permute.xlu0 %878
    %v881 = vadd.f32 %v871, %v879
    %v882 = vtanh.pop %v881
    %884 = vrot.lane.b32.xlu0 %v882, 64
    %v885 = vpop.permute.xlu0 %884
    %v887 = vmul.f32 %v869, %v885
    %889 = vrot.lane.b32.xlu0 %v887, 32
    %v890 = vpop.permute.xlu0 %889
    %s892 = scalar_lea.vmem [#allocation2], 40
    %893 = vst.msk [vmem:[%s892] sm:$0xff] %vm123, %v890
    %s894 = scalar_lea.vmem [#allocation6], 48
    %v895 = vld [vmem:[%s894] sm:$0xff]
    %v896 = vsel %vm123, %v890, 0
    %898 = vmatprep.subr.mxu0 0.0
    %899 = vmatpush1.msra.mxu0 0.0
    %900 = vmatprep.subr.mxu0 0.0
    %901 = vmatpush1.msra.mxu0 0.0
    %902 = vmatprep.subr.mxu0 0.0
    %903 = vmatpush1.msra.mxu0 0.0
    %904 = vmatprep.subr.mxu0 0.0
    %905 = vmatpush1.msra.mxu0 0.0
    %906 = vmatprep.subr.mxu0 0.0
    %907 = vmatpush1.msra.mxu0 0.0
    %908 = vmatprep.subr.mxu0 0.0
    %909 = vmatpush1.msra.mxu0 0.0
    %910 = vmatprep.subr.mxu0 0.0
    %911 = vmatpush1.msra.mxu0 0.0
    %912 = vmatprep.subr.mxu0 0.0
    %913 = vmatpush1.msra.mxu0 0.0
    %914 = vmatprep.subr.mxu0 0.0
    %915 = vmatpush1.msra.mxu0 0.0
    %916 = vmatprep.subr.mxu0 0.0
    %917 = vmatpush1.msra.mxu0 0.0
    %918 = vmatprep.subr.mxu0 0.0
    %919 = vmatpush1.msra.mxu0 0.0
    %920 = vmatprep.subr.mxu0 0.0
    %921 = vmatpush1.msra.mxu0 0.0
    %922 = vmatprep.subr.mxu0 0.0
    %923 = vmatpush1.msra.mxu0 %v264
    %924 = vmatprep.subr.mxu0 0.0
    %925 = vmatpush1.msra.mxu0 %v263
    %926 = vmatprep.subr.mxu0 0.0
    %927 = vmatpush1.msra.mxu0 %v262
    %928 = vmatprep.subr.mxu0 0.0
    %929 = vmatpush1.msra.mxu0 %v261
    %930 = vmatprep.subr.mxu0 0.0
    %931 = vmatpush2.msra.mxu0 0.0
    %932 = vmatprep.subr.mxu0 0.0
    %933 = vmatpush2.msra.mxu0 0.0
    %934 = vmatprep.subr.mxu0 0.0
    %935 = vmatpush2.msra.mxu0 0.0
    %936 = vmatprep.subr.mxu0 0.0
    %937 = vmatpush2.msra.mxu0 0.0
    %938 = vmatprep.subr.mxu0 0.0
    %939 = vmatpush2.msra.mxu0 0.0
    %940 = vmatprep.subr.mxu0 0.0
    %941 = vmatpush2.msra.mxu0 0.0
    %942 = vmatprep.subr.mxu0 0.0
    %943 = vmatpush2.msra.mxu0 0.0
    %944 = vmatprep.subr.mxu0 0.0
    %945 = vmatpush2.msra.mxu0 0.0
    %946 = vmatprep.subr.mxu0 0.0
    %947 = vmatpush2.msra.mxu0 0.0
    %948 = vmatprep.subr.mxu0 0.0
    %949 = vmatpush2.msra.mxu0 0.0
    %950 = vmatprep.subr.mxu0 0.0
    %951 = vmatpush2.msra.mxu0 0.0
    %952 = vmatprep.subr.mxu0 0.0
    %953 = vmatpush2.msra.mxu0 0.0
    %954 = vmatprep.subr.mxu0 0.0
    %955 = vmatpush2.msra.mxu0 0.0
    %956 = vmatprep.subr.mxu0 0.0
    %957 = vmatpush2.msra.mxu0 0.0
    %958 = vmatprep.subr.mxu0 0.0
    %959 = vmatpush2.msra.mxu0 0.0
    %960 = vmatprep.subr.mxu0 0.0
    %961 = vmatpush2.msra.mxu0 0.0
    %962 = vmatprep.mubr.f32.mxu0 0.0
    %963 = vmatmul.mubr.f32.gmra.mxu0 %v896
    %v964 = vpop.f32.mrf.mxu0
    %v965 = vadd.f32 0.0, %v964
    %v966 = vpop.f32.mrf.mxu0
    %967 = vdwg.mxu0
    %v968 = vadd.f32 %v895, %v965
    %v969 = vxor.u32 %v968, 2147483648
    %v970 = vmul.f32 %v969, 1.442695
    %v971 = vpow.pop %v970
    %v972 = vadd.f32 %v971, 1.0
    %v973 = vrcp.pop %v972
    %v974 = vmul.f32 1.0, %v973
    %v975 = vtanh.pop %v968
    %v976 = vmul.f32 %v974, %v881
    %978 = vrot.lane.b32.xlu0 %v975, 64
    %v979 = vpop.permute.xlu0 %978
    %v981 = vmul.f32 %v974, %v979
    %983 = vrot.lane.b32.xlu0 %v981, 32
    %v984 = vpop.permute.xlu0 %983
    %v986 = vadd.f32 %v976, %v984
    %v987 = vtanh.pop %v986
    %989 = vrot.lane.b32.xlu0 %v987, 64
    %v990 = vpop.permute.xlu0 %989
    %v992 = vmul.f32 %v974, %v990
    %994 = vrot.lane.b32.xlu0 %v992, 32
    %v995 = vpop.permute.xlu0 %994
    %s997 = scalar_lea.vmem [#allocation2], 48
    %998 = vst.msk [vmem:[%s997] sm:$0xff] %vm123, %v995
    %s999 = scalar_lea.vmem [#allocation6], 56
    %v1000 = vld [vmem:[%s999] sm:$0xff]
    %v1001 = vsel %vm123, %v995, 0
    %1003 = vmatprep.subr.mxu0 0.0
    %1004 = vmatpush1.msra.mxu0 0.0
    %1005 = vmatprep.subr.mxu0 0.0
    %1006 = vmatpush1.msra.mxu0 0.0
    %1007 = vmatprep.subr.mxu0 0.0
    %1008 = vmatpush1.msra.mxu0 0.0
    %1009 = vmatprep.subr.mxu0 0.0
    %1010 = vmatpush1.msra.mxu0 0.0
    %1011 = vmatprep.subr.mxu0 0.0
    %1012 = vmatpush1.msra.mxu0 0.0
    %1013 = vmatprep.subr.mxu0 0.0
    %1014 = vmatpush1.msra.mxu0 0.0
    %1015 = vmatprep.subr.mxu0 0.0
    %1016 = vmatpush1.msra.mxu0 0.0
    %1017 = vmatprep.subr.mxu0 0.0
    %1018 = vmatpush1.msra.mxu0 0.0
    %1019 = vmatprep.subr.mxu0 0.0
    %1020 = vmatpush1.msra.mxu0 0.0
    %1021 = vmatprep.subr.mxu0 0.0
    %1022 = vmatpush1.msra.mxu0 0.0
    %1023 = vmatprep.subr.mxu0 0.0
    %1024 = vmatpush1.msra.mxu0 0.0
    %1025 = vmatprep.subr.mxu0 0.0
    %1026 = vmatpush1.msra.mxu0 0.0
    %1027 = vmatprep.subr.mxu0 0.0
    %1028 = vmatpush1.msra.mxu0 %v264
    %1029 = vmatprep.subr.mxu0 0.0
    %1030 = vmatpush1.msra.mxu0 %v263
    %1031 = vmatprep.subr.mxu0 0.0
    %1032 = vmatpush1.msra.mxu0 %v262
    %1033 = vmatprep.subr.mxu0 0.0
    %1034 = vmatpush1.msra.mxu0 %v261
    %1035 = vmatprep.subr.mxu0 0.0
    %1036 = vmatpush2.msra.mxu0 0.0
    %1037 = vmatprep.subr.mxu0 0.0
    %1038 = vmatpush2.msra.mxu0 0.0
    %1039 = vmatprep.subr.mxu0 0.0
    %1040 = vmatpush2.msra.mxu0 0.0
    %1041 = vmatprep.subr.mxu0 0.0
    %1042 = vmatpush2.msra.mxu0 0.0
    %1043 = vmatprep.subr.mxu0 0.0
    %1044 = vmatpush2.msra.mxu0 0.0
    %1045 = vmatprep.subr.mxu0 0.0
    %1046 = vmatpush2.msra.mxu0 0.0
    %1047 = vmatprep.subr.mxu0 0.0
    %1048 = vmatpush2.msra.mxu0 0.0
    %1049 = vmatprep.subr.mxu0 0.0
    %1050 = vmatpush2.msra.mxu0 0.0
    %1051 = vmatprep.subr.mxu0 0.0
    %1052 = vmatpush2.msra.mxu0 0.0
    %1053 = vmatprep.subr.mxu0 0.0
    %1054 = vmatpush2.msra.mxu0 0.0
    %1055 = vmatprep.subr.mxu0 0.0
    %1056 = vmatpush2.msra.mxu0 0.0
    %1057 = vmatprep.subr.mxu0 0.0
    %1058 = vmatpush2.msra.mxu0 0.0
    %1059 = vmatprep.subr.mxu0 0.0
    %1060 = vmatpush2.msra.mxu0 0.0
    %1061 = vmatprep.subr.mxu0 0.0
    %1062 = vmatpush2.msra.mxu0 0.0
    %1063 = vmatprep.subr.mxu0 0.0
    %1064 = vmatpush2.msra.mxu0 0.0
    %1065 = vmatprep.subr.mxu0 0.0
    %1066 = vmatpush2.msra.mxu0 0.0
    %1067 = vmatprep.mubr.f32.mxu0 0.0
    %1068 = vmatmul.mubr.f32.gmra.mxu0 %v1001
    %v1069 = vpop.f32.mrf.mxu0
    %v1070 = vadd.f32 0.0, %v1069
    %v1071 = vpop.f32.mrf.mxu0
    %1072 = vdwg.mxu0
    %v1073 = vadd.f32 %v1000, %v1070
    %v1074 = vxor.u32 %v1073, 2147483648
    %v1075 = vmul.f32 %v1074, 1.442695
    %v1076 = vpow.pop %v1075
    %v1077 = vadd.f32 %v1076, 1.0
    %v1078 = vrcp.pop %v1077
    %v1079 = vmul.f32 1.0, %v1078
    %v1080 = vtanh.pop %v1073
    %v1081 = vmul.f32 %v1079, %v986
    %1083 = vrot.lane.b32.xlu0 %v1080, 64
    %v1084 = vpop.permute.xlu0 %1083
    %v1086 = vmul.f32 %v1079, %v1084
    %1088 = vrot.lane.b32.xlu0 %v1086, 32
    %v1089 = vpop.permute.xlu0 %1088
    %v1091 = vadd.f32 %v1081, %v1089
    %v1092 = vtanh.pop %v1091
    %1094 = vrot.lane.b32.xlu0 %v1092, 64
    %v1095 = vpop.permute.xlu0 %1094
    %v1097 = vmul.f32 %v1079, %v1095
    %1099 = vrot.lane.b32.xlu0 %v1097, 32
    %v1100 = vpop.permute.xlu0 %1099
    %s1102 = scalar_lea.vmem [#allocation2], 56
    %1103 = vst.msk [vmem:[%s1102] sm:$0xff] %vm123, %v1100
    %v1104 = vld [vmem:[%s4] sm:$0xff]
    %v1105 = vld [vmem:[%s4 + $0x8] sm:$0xff]
    %v1106 = vld [vmem:[%s4 + $0x10] sm:$0xff]
    %v1107 = vld [vmem:[%s4 + $0x18] sm:$0xff]
    %v1108 = vld [vmem:[%s0] sm:$0xff]
    %v1109 = vld [vmem:[%s0 + $0x8] sm:$0xff]
    %v1110 = vld [vmem:[%s0 + $0x10] sm:$0xff]
    %v1111 = vld [vmem:[%s0 + $0x18] sm:$0xff]
    %v1112 = vld [vmem:[%s0 + $0x20] sm:$0xff]
    %v1113 = vld [vmem:[%s0 + $0x28] sm:$0xff]
    %v1114 = vld [vmem:[%s0 + $0x30] sm:$0xff]
    %v1115 = vld [vmem:[%s0 + $0x38] sm:$0xff]
    %v1116 = vld [vmem:[%s6] sm:$0x1]
    %v1118 = vlaneseq
    %v1119 = vshrl.u32 %v1118, 7
    %v1120 = vsub.s32 0, %v1119
    %v1121 = vrot.slane %v1116, %v1120
    %v1124 = vsel %vm123, %v1108, 0
    %v1127 = vsel %vm123, %v1109, 0
    %v1130 = vsel %vm123, %v1110, 0
    %v1133 = vsel %vm123, %v1111, 0
    %v1136 = vsel %vm123, %v1112, 0
    %v1139 = vsel %vm123, %v1113, 0
    %v1142 = vsel %vm123, %v1114, 0
    %v1145 = vsel %vm123, %v1115, 0
    %1147 = vmatprep.subr.mxu0 0.0
    %1148 = vmatpush1.msra.mxu0 0.0
    %1149 = vmatprep.subr.mxu0 0.0
    %1150 = vmatpush1.msra.mxu0 0.0
    %1151 = vmatprep.subr.mxu0 0.0
    %1152 = vmatpush1.msra.mxu0 0.0
    %1153 = vmatprep.subr.mxu0 0.0
    %1154 = vmatpush1.msra.mxu0 0.0
    %1155 = vmatprep.subr.mxu0 0.0
    %1156 = vmatpush1.msra.mxu0 0.0
    %1157 = vmatprep.subr.mxu0 0.0
    %1158 = vmatpush1.msra.mxu0 0.0
    %1159 = vmatprep.subr.mxu0 0.0
    %1160 = vmatpush1.msra.mxu0 0.0
    %1161 = vmatprep.subr.mxu0 0.0
    %1162 = vmatpush1.msra.mxu0 0.0
    %1163 = vmatprep.subr.mxu0 0.0
    %1164 = vmatpush1.msra.mxu0 0.0
    %1165 = vmatprep.subr.mxu0 0.0
    %1166 = vmatpush1.msra.mxu0 0.0
    %1167 = vmatprep.subr.mxu0 0.0
    %1168 = vmatpush1.msra.mxu0 0.0
    %1169 = vmatprep.subr.mxu0 0.0
    %1170 = vmatpush1.msra.mxu0 0.0
    %1171 = vmatprep.subr.mxu0 0.0
    %1172 = vmatpush1.msra.mxu0 %v1107
    %1173 = vmatprep.subr.mxu0 0.0
    %1174 = vmatpush1.msra.mxu0 %v1106
    %1175 = vmatprep.subr.mxu0 0.0
    %1176 = vmatpush1.msra.mxu0 %v1105
    %1177 = vmatprep.subr.mxu0 0.0
    %1178 = vmatpush1.msra.mxu0 %v1104
    %1179 = vmatprep.subr.mxu0 0.0
    %1180 = vmatpush2.msra.mxu0 0.0
    %1181 = vmatprep.subr.mxu0 0.0
    %1182 = vmatpush2.msra.mxu0 0.0
    %1183 = vmatprep.subr.mxu0 0.0
    %1184 = vmatpush2.msra.mxu0 0.0
    %1185 = vmatprep.subr.mxu0 0.0
    %1186 = vmatpush2.msra.mxu0 0.0
    %1187 = vmatprep.subr.mxu0 0.0
    %1188 = vmatpush2.msra.mxu0 0.0
    %1189 = vmatprep.subr.mxu0 0.0
    %1190 = vmatpush2.msra.mxu0 0.0
    %1191 = vmatprep.subr.mxu0 0.0
    %1192 = vmatpush2.msra.mxu0 0.0
    %1193 = vmatprep.subr.mxu0 0.0
    %1194 = vmatpush2.msra.mxu0 0.0
    %1195 = vmatprep.subr.mxu0 0.0
    %1196 = vmatpush2.msra.mxu0 0.0
    %1197 = vmatprep.subr.mxu0 0.0
    %1198 = vmatpush2.msra.mxu0 0.0
    %1199 = vmatprep.subr.mxu0 0.0
    %1200 = vmatpush2.msra.mxu0 0.0
    %1201 = vmatprep.subr.mxu0 0.0
    %1202 = vmatpush2.msra.mxu0 0.0
    %1203 = vmatprep.subr.mxu0 0.0
    %1204 = vmatpush2.msra.mxu0 0.0
    %1205 = vmatprep.subr.mxu0 0.0
    %1206 = vmatpush2.msra.mxu0 0.0
    %1207 = vmatprep.subr.mxu0 0.0
    %1208 = vmatpush2.msra.mxu0 0.0
    %1209 = vmatprep.subr.mxu0 0.0
    %1210 = vmatpush2.msra.mxu0 0.0
    %1211 = vmatprep.mubr.f32.mxu0 0.0
    %1212 = vmatmul.mubr.f32.gmra.mxu0 %v1124
    %v1213 = vpop.f32.mrf.mxu0
    %v1214 = vadd.f32 %v1121, %v1213
    %v1215 = vpop.f32.mrf.mxu0
    %1216 = vmatprep.mubr.f32.mxu0 0.0
    %1217 = vmatmul.mubr.f32.gmra.mxu0 %v1127
    %v1218 = vpop.f32.mrf.mxu0
    %v1219 = vadd.f32 %v1121, %v1218
    %v1220 = vpop.f32.mrf.mxu0
    %1221 = vmatprep.mubr.f32.mxu0 0.0
    %1222 = vmatmul.mubr.f32.gmra.mxu0 %v1130
    %v1223 = vpop.f32.mrf.mxu0
    %v1224 = vadd.f32 %v1121, %v1223
    %v1225 = vpop.f32.mrf.mxu0
    %1226 = vmatprep.mubr.f32.mxu0 0.0
    %1227 = vmatmul.mubr.f32.gmra.mxu0 %v1133
    %v1228 = vpop.f32.mrf.mxu0
    %v1229 = vadd.f32 %v1121, %v1228
    %v1230 = vpop.f32.mrf.mxu0
    %1231 = vmatprep.mubr.f32.mxu0 0.0
    %1232 = vmatmul.mubr.f32.gmra.mxu0 %v1136
    %v1233 = vpop.f32.mrf.mxu0
    %v1234 = vadd.f32 %v1121, %v1233
    %v1235 = vpop.f32.mrf.mxu0
    %1236 = vmatprep.mubr.f32.mxu0 0.0
    %1237 = vmatmul.mubr.f32.gmra.mxu0 %v1139
    %v1238 = vpop.f32.mrf.mxu0
    %v1239 = vadd.f32 %v1121, %v1238
    %v1240 = vpop.f32.mrf.mxu0
    %1241 = vmatprep.mubr.f32.mxu0 0.0
    %1242 = vmatmul.mubr.f32.gmra.mxu0 %v1142
    %v1243 = vpop.f32.mrf.mxu0
    %v1244 = vadd.f32 %v1121, %v1243
    %v1245 = vpop.f32.mrf.mxu0
    %1246 = vmatprep.mubr.f32.mxu0 0.0
    %1247 = vmatmul.mubr.f32.gmra.mxu0 %v1145
    %v1248 = vpop.f32.mrf.mxu0
    %v1249 = vadd.f32 %v1121, %v1248
    %v1250 = vpop.f32.mrf.mxu0
    %1251 = vdwg.mxu0
    %1252 = vst [vmem:[#allocation6] sm:$0xff] %v1214
    %1253 = vst [vmem:[#allocation6 + $0x8] sm:$0xff] %v1219
    %1254 = vst [vmem:[#allocation6 + $0x10] sm:$0xff] %v1224
    %1255 = vst [vmem:[#allocation6 + $0x18] sm:$0xff] %v1229
    %1256 = vst [vmem:[#allocation6 + $0x20] sm:$0xff] %v1234
    %1257 = vst [vmem:[#allocation6 + $0x28] sm:$0xff] %v1239
    %1258 = vst [vmem:[#allocation6 + $0x30] sm:$0xff] %v1244
    %1259 = vst [vmem:[#allocation6 + $0x38] sm:$0xff] %v1249
    %v1260 = vld [vmem:[%s5] sm:$0xff]
    %v1261 = vld [vmem:[%s5 + $0x8] sm:$0xff]
    %v1262 = vld [vmem:[%s5 + $0x10] sm:$0xff]
    %v1263 = vld [vmem:[%s5 + $0x18] sm:$0xff]
    %v1264 = vld [vmem:[%s999] sm:$0xff]
    %1265 = vmatprep.subr.mxu0 0.0
    %1266 = vmatpush1.msra.mxu0 0.0
    %1267 = vmatprep.subr.mxu0 0.0
    %1268 = vmatpush1.msra.mxu0 0.0
    %1269 = vmatprep.subr.mxu0 0.0
    %1270 = vmatpush1.msra.mxu0 0.0
    %1271 = vmatprep.subr.mxu0 0.0
    %1272 = vmatpush1.msra.mxu0 0.0
    %1273 = vmatprep.subr.mxu0 0.0
    %1274 = vmatpush1.msra.mxu0 0.0
    %1275 = vmatprep.subr.mxu0 0.0
    %1276 = vmatpush1.msra.mxu0 0.0
    %1277 = vmatprep.subr.mxu0 0.0
    %1278 = vmatpush1.msra.mxu0 0.0
    %1279 = vmatprep.subr.mxu0 0.0
    %1280 = vmatpush1.msra.mxu0 0.0
    %1281 = vmatprep.subr.mxu0 0.0
    %1282 = vmatpush1.msra.mxu0 0.0
    %1283 = vmatprep.subr.mxu0 0.0
    %1284 = vmatpush1.msra.mxu0 0.0
    %1285 = vmatprep.subr.mxu0 0.0
    %1286 = vmatpush1.msra.mxu0 0.0
    %1287 = vmatprep.subr.mxu0 0.0
    %1288 = vmatpush1.msra.mxu0 0.0
    %1289 = vmatprep.subr.mxu0 0.0
    %1290 = vmatpush1.msra.mxu0 %v1263
    %1291 = vmatprep.subr.mxu0 0.0
    %1292 = vmatpush1.msra.mxu0 %v1262
    %1293 = vmatprep.subr.mxu0 0.0
    %1294 = vmatpush1.msra.mxu0 %v1261
    %1295 = vmatprep.subr.mxu0 0.0
    %1296 = vmatpush1.msra.mxu0 %v1260
    %1297 = vmatprep.subr.mxu0 0.0
    %1298 = vmatpush2.msra.mxu0 0.0
    %1299 = vmatprep.subr.mxu0 0.0
    %1300 = vmatpush2.msra.mxu0 0.0
    %1301 = vmatprep.subr.mxu0 0.0
    %1302 = vmatpush2.msra.mxu0 0.0
    %1303 = vmatprep.subr.mxu0 0.0
    %1304 = vmatpush2.msra.mxu0 0.0
    %1305 = vmatprep.subr.mxu0 0.0
    %1306 = vmatpush2.msra.mxu0 0.0
    %1307 = vmatprep.subr.mxu0 0.0
    %1308 = vmatpush2.msra.mxu0 0.0
    %1309 = vmatprep.subr.mxu0 0.0
    %1310 = vmatpush2.msra.mxu0 0.0
    %1311 = vmatprep.subr.mxu0 0.0
    %1312 = vmatpush2.msra.mxu0 0.0
    %1313 = vmatprep.subr.mxu0 0.0
    %1314 = vmatpush2.msra.mxu0 0.0
    %1315 = vmatprep.subr.mxu0 0.0
    %1316 = vmatpush2.msra.mxu0 0.0
    %1317 = vmatprep.subr.mxu0 0.0
    %1318 = vmatpush2.msra.mxu0 0.0
    %1319 = vmatprep.subr.mxu0 0.0
    %1320 = vmatpush2.msra.mxu0 0.0
    %1321 = vmatprep.subr.mxu0 0.0
    %1322 = vmatpush2.msra.mxu0 0.0
    %1323 = vmatprep.subr.mxu0 0.0
    %1324 = vmatpush2.msra.mxu0 0.0
    %1325 = vmatprep.subr.mxu0 0.0
    %1326 = vmatpush2.msra.mxu0 0.0
    %1327 = vmatprep.subr.mxu0 0.0
    %1328 = vmatpush2.msra.mxu0 0.0
    %1329 = vmatprep.mubr.f32.mxu0 0.0
    %1330 = vmatmul.mubr.f32.gmra.mxu0 %v267
    %v1331 = vpop.f32.mrf.mxu0
    %v1332 = vadd.f32 0.0, %v1331
    %v1333 = vpop.f32.mrf.mxu0
    %1334 = vdwg.mxu0
    %v1335 = vadd.f32 %v1264, %v1332
    %v1336 = vxor.u32 %v1335, 2147483648
    %v1337 = vmul.f32 %v1336, 1.442695
    %v1338 = vpow.pop %v1337
    %v1339 = vadd.f32 %v1338, 1.0
    %v1340 = vrcp.pop %v1339
    %v1341 = vmul.f32 1.0, %v1340
    %v1342 = vtanh.pop %v1335
    %v1343 = vmul.f32 %v1341, 0.0
    %1345 = vrot.lane.b32.xlu0 %v1342, 64
    %v1346 = vpop.permute.xlu0 %1345
    %v1348 = vmul.f32 %v1341, %v1346
    %1350 = vrot.lane.b32.xlu0 %v1348, 32
    %v1351 = vpop.permute.xlu0 %1350
    %v1353 = vadd.f32 %v1343, %v1351
    %v1354 = vtanh.pop %v1353
    %1356 = vrot.lane.b32.xlu0 %v1354, 64
    %v1357 = vpop.permute.xlu0 %1356
    %v1359 = vmul.f32 %v1341, %v1357
    %1361 = vrot.lane.b32.xlu0 %v1359, 32
    %v1362 = vpop.permute.xlu0 %1361
    %s1364 = scalar_lea.vmem [#allocation3], 56
    %1365 = vst.msk [vmem:[%s1364] sm:$0xff] %vm123, %v1362
    %v1366 = vld [vmem:[%s894] sm:$0xff]
    %v1367 = vsel %vm123, %v1362, 0
    %1369 = vmatprep.subr.mxu0 0.0
    %1370 = vmatpush1.msra.mxu0 0.0
    %1371 = vmatprep.subr.mxu0 0.0
    %1372 = vmatpush1.msra.mxu0 0.0
    %1373 = vmatprep.subr.mxu0 0.0
    %1374 = vmatpush1.msra.mxu0 0.0
    %1375 = vmatprep.subr.mxu0 0.0
    %1376 = vmatpush1.msra.mxu0 0.0
    %1377 = vmatprep.subr.mxu0 0.0
    %1378 = vmatpush1.msra.mxu0 0.0
    %1379 = vmatprep.subr.mxu0 0.0
    %1380 = vmatpush1.msra.mxu0 0.0
    %1381 = vmatprep.subr.mxu0 0.0
    %1382 = vmatpush1.msra.mxu0 0.0
    %1383 = vmatprep.subr.mxu0 0.0
    %1384 = vmatpush1.msra.mxu0 0.0
    %1385 = vmatprep.subr.mxu0 0.0
    %1386 = vmatpush1.msra.mxu0 0.0
    %1387 = vmatprep.subr.mxu0 0.0
    %1388 = vmatpush1.msra.mxu0 0.0
    %1389 = vmatprep.subr.mxu0 0.0
    %1390 = vmatpush1.msra.mxu0 0.0
    %1391 = vmatprep.subr.mxu0 0.0
    %1392 = vmatpush1.msra.mxu0 0.0
    %1393 = vmatprep.subr.mxu0 0.0
    %1394 = vmatpush1.msra.mxu0 %v1263
    %1395 = vmatprep.subr.mxu0 0.0
    %1396 = vmatpush1.msra.mxu0 %v1262
    %1397 = vmatprep.subr.mxu0 0.0
    %1398 = vmatpush1.msra.mxu0 %v1261
    %1399 = vmatprep.subr.mxu0 0.0
    %1400 = vmatpush1.msra.mxu0 %v1260
    %1401 = vmatprep.subr.mxu0 0.0
    %1402 = vmatpush2.msra.mxu0 0.0
    %1403 = vmatprep.subr.mxu0 0.0
    %1404 = vmatpush2.msra.mxu0 0.0
    %1405 = vmatprep.subr.mxu0 0.0
    %1406 = vmatpush2.msra.mxu0 0.0
    %1407 = vmatprep.subr.mxu0 0.0
    %1408 = vmatpush2.msra.mxu0 0.0
    %1409 = vmatprep.subr.mxu0 0.0
    %1410 = vmatpush2.msra.mxu0 0.0
    %1411 = vmatprep.subr.mxu0 0.0
    %1412 = vmatpush2.msra.mxu0 0.0
    %1413 = vmatprep.subr.mxu0 0.0
    %1414 = vmatpush2.msra.mxu0 0.0
    %1415 = vmatprep.subr.mxu0 0.0
    %1416 = vmatpush2.msra.mxu0 0.0
    %1417 = vmatprep.subr.mxu0 0.0
    %1418 = vmatpush2.msra.mxu0 0.0
    %1419 = vmatprep.subr.mxu0 0.0
    %1420 = vmatpush2.msra.mxu0 0.0
    %1421 = vmatprep.subr.mxu0 0.0
    %1422 = vmatpush2.msra.mxu0 0.0
    %1423 = vmatprep.subr.mxu0 0.0
    %1424 = vmatpush2.msra.mxu0 0.0
    %1425 = vmatprep.subr.mxu0 0.0
    %1426 = vmatpush2.msra.mxu0 0.0
    %1427 = vmatprep.subr.mxu0 0.0
    %1428 = vmatpush2.msra.mxu0 0.0
    %1429 = vmatprep.subr.mxu0 0.0
    %1430 = vmatpush2.msra.mxu0 0.0
    %1431 = vmatprep.subr.mxu0 0.0
    %1432 = vmatpush2.msra.mxu0 0.0
    %1433 = vmatprep.mubr.f32.mxu0 0.0
    %1434 = vmatmul.mubr.f32.gmra.mxu0 %v1367
    %v1435 = vpop.f32.mrf.mxu0
    %v1436 = vadd.f32 0.0, %v1435
    %v1437 = vpop.f32.mrf.mxu0
    %1438 = vdwg.mxu0
    %v1439 = vadd.f32 %v1366, %v1436
    %v1440 = vxor.u32 %v1439, 2147483648
    %v1441 = vmul.f32 %v1440, 1.442695
    %v1442 = vpow.pop %v1441
    %v1443 = vadd.f32 %v1442, 1.0
    %v1444 = vrcp.pop %v1443
    %v1445 = vmul.f32 1.0, %v1444
    %v1446 = vtanh.pop %v1439
    %v1447 = vmul.f32 %v1445, %v1353
    %1449 = vrot.lane.b32.xlu0 %v1446, 64
    %v1450 = vpop.permute.xlu0 %1449
    %v1452 = vmul.f32 %v1445, %v1450
    %1454 = vrot.lane.b32.xlu0 %v1452, 32
    %v1455 = vpop.permute.xlu0 %1454
    %v1457 = vadd.f32 %v1447, %v1455
    %v1458 = vtanh.pop %v1457
    %1460 = vrot.lane.b32.xlu0 %v1458, 64
    %v1461 = vpop.permute.xlu0 %1460
    %v1463 = vmul.f32 %v1445, %v1461
    %1465 = vrot.lane.b32.xlu0 %v1463, 32
    %v1466 = vpop.permute.xlu0 %1465
    %s1468 = scalar_lea.vmem [#allocation3], 48
    %1469 = vst.msk [vmem:[%s1468] sm:$0xff] %vm123, %v1466
    %v1470 = vld [vmem:[%s789] sm:$0xff]
    %v1471 = vsel %vm123, %v1466, 0
    %1473 = vmatprep.subr.mxu0 0.0
    %1474 = vmatpush1.msra.mxu0 0.0
    %1475 = vmatprep.subr.mxu0 0.0
    %1476 = vmatpush1.msra.mxu0 0.0
    %1477 = vmatprep.subr.mxu0 0.0
    %1478 = vmatpush1.msra.mxu0 0.0
    %1479 = vmatprep.subr.mxu0 0.0
    %1480 = vmatpush1.msra.mxu0 0.0
    %1481 = vmatprep.subr.mxu0 0.0
    %1482 = vmatpush1.msra.mxu0 0.0
    %1483 = vmatprep.subr.mxu0 0.0
    %1484 = vmatpush1.msra.mxu0 0.0
    %1485 = vmatprep.subr.mxu0 0.0
    %1486 = vmatpush1.msra.mxu0 0.0
    %1487 = vmatprep.subr.mxu0 0.0
    %1488 = vmatpush1.msra.mxu0 0.0
    %1489 = vmatprep.subr.mxu0 0.0
    %1490 = vmatpush1.msra.mxu0 0.0
    %1491 = vmatprep.subr.mxu0 0.0
    %1492 = vmatpush1.msra.mxu0 0.0
    %1493 = vmatprep.subr.mxu0 0.0
    %1494 = vmatpush1.msra.mxu0 0.0
    %1495 = vmatprep.subr.mxu0 0.0
    %1496 = vmatpush1.msra.mxu0 0.0
    %1497 = vmatprep.subr.mxu0 0.0
    %1498 = vmatpush1.msra.mxu0 %v1263
    %1499 = vmatprep.subr.mxu0 0.0
    %1500 = vmatpush1.msra.mxu0 %v1262
    %1501 = vmatprep.subr.mxu0 0.0
    %1502 = vmatpush1.msra.mxu0 %v1261
    %1503 = vmatprep.subr.mxu0 0.0
    %1504 = vmatpush1.msra.mxu0 %v1260
    %1505 = vmatprep.subr.mxu0 0.0
    %1506 = vmatpush2.msra.mxu0 0.0
    %1507 = vmatprep.subr.mxu0 0.0
    %1508 = vmatpush2.msra.mxu0 0.0
    %1509 = vmatprep.subr.mxu0 0.0
    %1510 = vmatpush2.msra.mxu0 0.0
    %1511 = vmatprep.subr.mxu0 0.0
    %1512 = vmatpush2.msra.mxu0 0.0
    %1513 = vmatprep.subr.mxu0 0.0
    %1514 = vmatpush2.msra.mxu0 0.0
    %1515 = vmatprep.subr.mxu0 0.0
    %1516 = vmatpush2.msra.mxu0 0.0
    %1517 = vmatprep.subr.mxu0 0.0
    %1518 = vmatpush2.msra.mxu0 0.0
    %1519 = vmatprep.subr.mxu0 0.0
    %1520 = vmatpush2.msra.mxu0 0.0
    %1521 = vmatprep.subr.mxu0 0.0
    %1522 = vmatpush2.msra.mxu0 0.0
    %1523 = vmatprep.subr.mxu0 0.0
    %1524 = vmatpush2.msra.mxu0 0.0
    %1525 = vmatprep.subr.mxu0 0.0
    %1526 = vmatpush2.msra.mxu0 0.0
    %1527 = vmatprep.subr.mxu0 0.0
    %1528 = vmatpush2.msra.mxu0 0.0
    %1529 = vmatprep.subr.mxu0 0.0
    %1530 = vmatpush2.msra.mxu0 0.0
    %1531 = vmatprep.subr.mxu0 0.0
    %1532 = vmatpush2.msra.mxu0 0.0
    %1533 = vmatprep.subr.mxu0 0.0
    %1534 = vmatpush2.msra.mxu0 0.0
    %1535 = vmatprep.subr.mxu0 0.0
    %1536 = vmatpush2.msra.mxu0 0.0
    %1537 = vmatprep.mubr.f32.mxu0 0.0
    %1538 = vmatmul.mubr.f32.gmra.mxu0 %v1471
    %v1539 = vpop.f32.mrf.mxu0
    %v1540 = vadd.f32 0.0, %v1539
    %v1541 = vpop.f32.mrf.mxu0
    %1542 = vdwg.mxu0
    %v1543 = vadd.f32 %v1470, %v1540
    %v1544 = vxor.u32 %v1543, 2147483648
    %v1545 = vmul.f32 %v1544, 1.442695
    %v1546 = vpow.pop %v1545
    %v1547 = vadd.f32 %v1546, 1.0
    %v1548 = vrcp.pop %v1547
    %v1549 = vmul.f32 1.0, %v1548
    %v1550 = vtanh.pop %v1543
    %v1551 = vmul.f32 %v1549, %v1457
    %1553 = vrot.lane.b32.xlu0 %v1550, 64
    %v1554 = vpop.permute.xlu0 %1553
    %v1556 = vmul.f32 %v1549, %v1554
    %1558 = vrot.lane.b32.xlu0 %v1556, 32
    %v1559 = vpop.permute.xlu0 %1558
    %v1561 = vadd.f32 %v1551, %v1559
    %v1562 = vtanh.pop %v1561
    %1564 = vrot.lane.b32.xlu0 %v1562, 64
    %v1565 = vpop.permute.xlu0 %1564
    %v1567 = vmul.f32 %v1549, %v1565
    %1569 = vrot.lane.b32.xlu0 %v1567, 32
    %v1570 = vpop.permute.xlu0 %1569
    %s1572 = scalar_lea.vmem [#allocation3], 40
    %1573 = vst.msk [vmem:[%s1572] sm:$0xff] %vm123, %v1570
    %v1574 = vld [vmem:[%s684] sm:$0xff]
    %v1575 = vsel %vm123, %v1570, 0
    %1577 = vmatprep.subr.mxu0 0.0
    %1578 = vmatpush1.msra.mxu0 0.0
    %1579 = vmatprep.subr.mxu0 0.0
    %1580 = vmatpush1.msra.mxu0 0.0
    %1581 = vmatprep.subr.mxu0 0.0
    %1582 = vmatpush1.msra.mxu0 0.0
    %1583 = vmatprep.subr.mxu0 0.0
    %1584 = vmatpush1.msra.mxu0 0.0
    %1585 = vmatprep.subr.mxu0 0.0
    %1586 = vmatpush1.msra.mxu0 0.0
    %1587 = vmatprep.subr.mxu0 0.0
    %1588 = vmatpush1.msra.mxu0 0.0
    %1589 = vmatprep.subr.mxu0 0.0
    %1590 = vmatpush1.msra.mxu0 0.0
    %1591 = vmatprep.subr.mxu0 0.0
    %1592 = vmatpush1.msra.mxu0 0.0
    %1593 = vmatprep.subr.mxu0 0.0
    %1594 = vmatpush1.msra.mxu0 0.0
    %1595 = vmatprep.subr.mxu0 0.0
    %1596 = vmatpush1.msra.mxu0 0.0
    %1597 = vmatprep.subr.mxu0 0.0
    %1598 = vmatpush1.msra.mxu0 0.0
    %1599 = vmatprep.subr.mxu0 0.0
    %1600 = vmatpush1.msra.mxu0 0.0
    %1601 = vmatprep.subr.mxu0 0.0
    %1602 = vmatpush1.msra.mxu0 %v1263
    %1603 = vmatprep.subr.mxu0 0.0
    %1604 = vmatpush1.msra.mxu0 %v1262
    %1605 = vmatprep.subr.mxu0 0.0
    %1606 = vmatpush1.msra.mxu0 %v1261
    %1607 = vmatprep.subr.mxu0 0.0
    %1608 = vmatpush1.msra.mxu0 %v1260
    %1609 = vmatprep.subr.mxu0 0.0
    %1610 = vmatpush2.msra.mxu0 0.0
    %1611 = vmatprep.subr.mxu0 0.0
    %1612 = vmatpush2.msra.mxu0 0.0
    %1613 = vmatprep.subr.mxu0 0.0
    %1614 = vmatpush2.msra.mxu0 0.0
    %1615 = vmatprep.subr.mxu0 0.0
    %1616 = vmatpush2.msra.mxu0 0.0
    %1617 = vmatprep.subr.mxu0 0.0
    %1618 = vmatpush2.msra.mxu0 0.0
    %1619 = vmatprep.subr.mxu0 0.0
    %1620 = vmatpush2.msra.mxu0 0.0
    %1621 = vmatprep.subr.mxu0 0.0
    %1622 = vmatpush2.msra.mxu0 0.0
    %1623 = vmatprep.subr.mxu0 0.0
    %1624 = vmatpush2.msra.mxu0 0.0
    %1625 = vmatprep.subr.mxu0 0.0
    %1626 = vmatpush2.msra.mxu0 0.0
    %1627 = vmatprep.subr.mxu0 0.0
    %1628 = vmatpush2.msra.mxu0 0.0
    %1629 = vmatprep.subr.mxu0 0.0
    %1630 = vmatpush2.msra.mxu0 0.0
    %1631 = vmatprep.subr.mxu0 0.0
    %1632 = vmatpush2.msra.mxu0 0.0
    %1633 = vmatprep.subr.mxu0 0.0
    %1634 = vmatpush2.msra.mxu0 0.0
    %1635 = vmatprep.subr.mxu0 0.0
    %1636 = vmatpush2.msra.mxu0 0.0
    %1637 = vmatprep.subr.mxu0 0.0
    %1638 = vmatpush2.msra.mxu0 0.0
    %1639 = vmatprep.subr.mxu0 0.0
    %1640 = vmatpush2.msra.mxu0 0.0
    %1641 = vmatprep.mubr.f32.mxu0 0.0
    %1642 = vmatmul.mubr.f32.gmra.mxu0 %v1575
    %v1643 = vpop.f32.mrf.mxu0
    %v1644 = vadd.f32 0.0, %v1643
    %v1645 = vpop.f32.mrf.mxu0
    %1646 = vdwg.mxu0
    %v1647 = vadd.f32 %v1574, %v1644
    %v1648 = vxor.u32 %v1647, 2147483648
    %v1649 = vmul.f32 %v1648, 1.442695
    %v1650 = vpow.pop %v1649
    %v1651 = vadd.f32 %v1650, 1.0
    %v1652 = vrcp.pop %v1651
    %v1653 = vmul.f32 1.0, %v1652
    %v1654 = vtanh.pop %v1647
    %v1655 = vmul.f32 %v1653, %v1561
    %1657 = vrot.lane.b32.xlu0 %v1654, 64
    %v1658 = vpop.permute.xlu0 %1657
    %v1660 = vmul.f32 %v1653, %v1658
    %1662 = vrot.lane.b32.xlu0 %v1660, 32
    %v1663 = vpop.permute.xlu0 %1662
    %v1665 = vadd.f32 %v1655, %v1663
    %v1666 = vtanh.pop %v1665
    %1668 = vrot.lane.b32.xlu0 %v1666, 64
    %v1669 = vpop.permute.xlu0 %1668
    %v1671 = vmul.f32 %v1653, %v1669
    %1673 = vrot.lane.b32.xlu0 %v1671, 32
    %v1674 = vpop.permute.xlu0 %1673
    %s1676 = scalar_lea.vmem [#allocation3], 32
    %1677 = vst.msk [vmem:[%s1676] sm:$0xff] %vm123, %v1674
    %v1678 = vld [vmem:[%s579] sm:$0xff]
    %v1679 = vsel %vm123, %v1674, 0
    %1681 = vmatprep.subr.mxu0 0.0
    %1682 = vmatpush1.msra.mxu0 0.0
    %1683 = vmatprep.subr.mxu0 0.0
    %1684 = vmatpush1.msra.mxu0 0.0
    %1685 = vmatprep.subr.mxu0 0.0
    %1686 = vmatpush1.msra.mxu0 0.0
    %1687 = vmatprep.subr.mxu0 0.0
    %1688 = vmatpush1.msra.mxu0 0.0
    %1689 = vmatprep.subr.mxu0 0.0
    %1690 = vmatpush1.msra.mxu0 0.0
    %1691 = vmatprep.subr.mxu0 0.0
    %1692 = vmatpush1.msra.mxu0 0.0
    %1693 = vmatprep.subr.mxu0 0.0
    %1694 = vmatpush1.msra.mxu0 0.0
    %1695 = vmatprep.subr.mxu0 0.0
    %1696 = vmatpush1.msra.mxu0 0.0
    %1697 = vmatprep.subr.mxu0 0.0
    %1698 = vmatpush1.msra.mxu0 0.0
    %1699 = vmatprep.subr.mxu0 0.0
    %1700 = vmatpush1.msra.mxu0 0.0
    %1701 = vmatprep.subr.mxu0 0.0
    %1702 = vmatpush1.msra.mxu0 0.0
    %1703 = vmatprep.subr.mxu0 0.0
    %1704 = vmatpush1.msra.mxu0 0.0
    %1705 = vmatprep.subr.mxu0 0.0
    %1706 = vmatpush1.msra.mxu0 %v1263
    %1707 = vmatprep.subr.mxu0 0.0
    %1708 = vmatpush1.msra.mxu0 %v1262
    %1709 = vmatprep.subr.mxu0 0.0
    %1710 = vmatpush1.msra.mxu0 %v1261
    %1711 = vmatprep.subr.mxu0 0.0
    %1712 = vmatpush1.msra.mxu0 %v1260
    %1713 = vmatprep.subr.mxu0 0.0
    %1714 = vmatpush2.msra.mxu0 0.0
    %1715 = vmatprep.subr.mxu0 0.0
    %1716 = vmatpush2.msra.mxu0 0.0
    %1717 = vmatprep.subr.mxu0 0.0
    %1718 = vmatpush2.msra.mxu0 0.0
    %1719 = vmatprep.subr.mxu0 0.0
    %1720 = vmatpush2.msra.mxu0 0.0
    %1721 = vmatprep.subr.mxu0 0.0
    %1722 = vmatpush2.msra.mxu0 0.0
    %1723 = vmatprep.subr.mxu0 0.0
    %1724 = vmatpush2.msra.mxu0 0.0
    %1725 = vmatprep.subr.mxu0 0.0
    %1726 = vmatpush2.msra.mxu0 0.0
    %1727 = vmatprep.subr.mxu0 0.0
    %1728 = vmatpush2.msra.mxu0 0.0
    %1729 = vmatprep.subr.mxu0 0.0
    %1730 = vmatpush2.msra.mxu0 0.0
    %1731 = vmatprep.subr.mxu0 0.0
    %1732 = vmatpush2.msra.mxu0 0.0
    %1733 = vmatprep.subr.mxu0 0.0
    %1734 = vmatpush2.msra.mxu0 0.0
    %1735 = vmatprep.subr.mxu0 0.0
    %1736 = vmatpush2.msra.mxu0 0.0
    %1737 = vmatprep.subr.mxu0 0.0
    %1738 = vmatpush2.msra.mxu0 0.0
    %1739 = vmatprep.subr.mxu0 0.0
    %1740 = vmatpush2.msra.mxu0 0.0
    %1741 = vmatprep.subr.mxu0 0.0
    %1742 = vmatpush2.msra.mxu0 0.0
    %1743 = vmatprep.subr.mxu0 0.0
    %1744 = vmatpush2.msra.mxu0 0.0
    %1745 = vmatprep.mubr.f32.mxu0 0.0
    %1746 = vmatmul.mubr.f32.gmra.mxu0 %v1679
    %v1747 = vpop.f32.mrf.mxu0
    %v1748 = vadd.f32 0.0, %v1747
    %v1749 = vpop.f32.mrf.mxu0
    %1750 = vdwg.mxu0
    %v1751 = vadd.f32 %v1678, %v1748
    %v1752 = vxor.u32 %v1751, 2147483648
    %v1753 = vmul.f32 %v1752, 1.442695
    %v1754 = vpow.pop %v1753
    %v1755 = vadd.f32 %v1754, 1.0
    %v1756 = vrcp.pop %v1755
    %v1757 = vmul.f32 1.0, %v1756
    %v1758 = vtanh.pop %v1751
    %v1759 = vmul.f32 %v1757, %v1665
    %1761 = vrot.lane.b32.xlu0 %v1758, 64
    %v1762 = vpop.permute.xlu0 %1761
    %v1764 = vmul.f32 %v1757, %v1762
    %1766 = vrot.lane.b32.xlu0 %v1764, 32
    %v1767 = vpop.permute.xlu0 %1766
    %v1769 = vadd.f32 %v1759, %v1767
    %v1770 = vtanh.pop %v1769
    %1772 = vrot.lane.b32.xlu0 %v1770, 64
    %v1773 = vpop.permute.xlu0 %1772
    %v1775 = vmul.f32 %v1757, %v1773
    %1777 = vrot.lane.b32.xlu0 %v1775, 32
    %v1778 = vpop.permute.xlu0 %1777
    %s1780 = scalar_lea.vmem [#allocation3], 24
    %1781 = vst.msk [vmem:[%s1780] sm:$0xff] %vm123, %v1778
    %v1782 = vld [vmem:[%s474] sm:$0xff]
    %v1783 = vsel %vm123, %v1778, 0
    %1785 = vmatprep.subr.mxu0 0.0
    %1786 = vmatpush1.msra.mxu0 0.0
    %1787 = vmatprep.subr.mxu0 0.0
    %1788 = vmatpush1.msra.mxu0 0.0
    %1789 = vmatprep.subr.mxu0 0.0
    %1790 = vmatpush1.msra.mxu0 0.0
    %1791 = vmatprep.subr.mxu0 0.0
    %1792 = vmatpush1.msra.mxu0 0.0
    %1793 = vmatprep.subr.mxu0 0.0
    %1794 = vmatpush1.msra.mxu0 0.0
    %1795 = vmatprep.subr.mxu0 0.0
    %1796 = vmatpush1.msra.mxu0 0.0
    %1797 = vmatprep.subr.mxu0 0.0
    %1798 = vmatpush1.msra.mxu0 0.0
    %1799 = vmatprep.subr.mxu0 0.0
    %1800 = vmatpush1.msra.mxu0 0.0
    %1801 = vmatprep.subr.mxu0 0.0
    %1802 = vmatpush1.msra.mxu0 0.0
    %1803 = vmatprep.subr.mxu0 0.0
    %1804 = vmatpush1.msra.mxu0 0.0
    %1805 = vmatprep.subr.mxu0 0.0
    %1806 = vmatpush1.msra.mxu0 0.0
    %1807 = vmatprep.subr.mxu0 0.0
    %1808 = vmatpush1.msra.mxu0 0.0
    %1809 = vmatprep.subr.mxu0 0.0
    %1810 = vmatpush1.msra.mxu0 %v1263
    %1811 = vmatprep.subr.mxu0 0.0
    %1812 = vmatpush1.msra.mxu0 %v1262
    %1813 = vmatprep.subr.mxu0 0.0
    %1814 = vmatpush1.msra.mxu0 %v1261
    %1815 = vmatprep.subr.mxu0 0.0
    %1816 = vmatpush1.msra.mxu0 %v1260
    %1817 = vmatprep.subr.mxu0 0.0
    %1818 = vmatpush2.msra.mxu0 0.0
    %1819 = vmatprep.subr.mxu0 0.0
    %1820 = vmatpush2.msra.mxu0 0.0
    %1821 = vmatprep.subr.mxu0 0.0
    %1822 = vmatpush2.msra.mxu0 0.0
    %1823 = vmatprep.subr.mxu0 0.0
    %1824 = vmatpush2.msra.mxu0 0.0
    %1825 = vmatprep.subr.mxu0 0.0
    %1826 = vmatpush2.msra.mxu0 0.0
    %1827 = vmatprep.subr.mxu0 0.0
    %1828 = vmatpush2.msra.mxu0 0.0
    %1829 = vmatprep.subr.mxu0 0.0
    %1830 = vmatpush2.msra.mxu0 0.0
    %1831 = vmatprep.subr.mxu0 0.0
    %1832 = vmatpush2.msra.mxu0 0.0
    %1833 = vmatprep.subr.mxu0 0.0
    %1834 = vmatpush2.msra.mxu0 0.0
    %1835 = vmatprep.subr.mxu0 0.0
    %1836 = vmatpush2.msra.mxu0 0.0
    %1837 = vmatprep.subr.mxu0 0.0
    %1838 = vmatpush2.msra.mxu0 0.0
    %1839 = vmatprep.subr.mxu0 0.0
    %1840 = vmatpush2.msra.mxu0 0.0
    %1841 = vmatprep.subr.mxu0 0.0
    %1842 = vmatpush2.msra.mxu0 0.0
    %1843 = vmatprep.subr.mxu0 0.0
    %1844 = vmatpush2.msra.mxu0 0.0
    %1845 = vmatprep.subr.mxu0 0.0
    %1846 = vmatpush2.msra.mxu0 0.0
    %1847 = vmatprep.subr.mxu0 0.0
    %1848 = vmatpush2.msra.mxu0 0.0
    %1849 = vmatprep.mubr.f32.mxu0 0.0
    %1850 = vmatmul.mubr.f32.gmra.mxu0 %v1783
    %v1851 = vpop.f32.mrf.mxu0
    %v1852 = vadd.f32 0.0, %v1851
    %v1853 = vpop.f32.mrf.mxu0
    %1854 = vdwg.mxu0
    %v1855 = vadd.f32 %v1782, %v1852
    %v1856 = vxor.u32 %v1855, 2147483648
    %v1857 = vmul.f32 %v1856, 1.442695
    %v1858 = vpow.pop %v1857
    %v1859 = vadd.f32 %v1858, 1.0
    %v1860 = vrcp.pop %v1859
    %v1861 = vmul.f32 1.0, %v1860
    %v1862 = vtanh.pop %v1855
    %v1863 = vmul.f32 %v1861, %v1769
    %1865 = vrot.lane.b32.xlu0 %v1862, 64
    %v1866 = vpop.permute.xlu0 %1865
    %v1868 = vmul.f32 %v1861, %v1866
    %1870 = vrot.lane.b32.xlu0 %v1868, 32
    %v1871 = vpop.permute.xlu0 %1870
    %v1873 = vadd.f32 %v1863, %v1871
    %v1874 = vtanh.pop %v1873
    %1876 = vrot.lane.b32.xlu0 %v1874, 64
    %v1877 = vpop.permute.xlu0 %1876
    %v1879 = vmul.f32 %v1861, %v1877
    %1881 = vrot.lane.b32.xlu0 %v1879, 32
    %v1882 = vpop.permute.xlu0 %1881
    %s1884 = scalar_lea.vmem [#allocation3], 16
    %1885 = vst.msk [vmem:[%s1884] sm:$0xff] %vm123, %v1882
    %v1886 = vld [vmem:[%s369] sm:$0xff]
    %v1887 = vsel %vm123, %v1882, 0
    %1889 = vmatprep.subr.mxu0 0.0
    %1890 = vmatpush1.msra.mxu0 0.0
    %1891 = vmatprep.subr.mxu0 0.0
    %1892 = vmatpush1.msra.mxu0 0.0
    %1893 = vmatprep.subr.mxu0 0.0
    %1894 = vmatpush1.msra.mxu0 0.0
    %1895 = vmatprep.subr.mxu0 0.0
    %1896 = vmatpush1.msra.mxu0 0.0
    %1897 = vmatprep.subr.mxu0 0.0
    %1898 = vmatpush1.msra.mxu0 0.0
    %1899 = vmatprep.subr.mxu0 0.0
    %1900 = vmatpush1.msra.mxu0 0.0
    %1901 = vmatprep.subr.mxu0 0.0
    %1902 = vmatpush1.msra.mxu0 0.0
    %1903 = vmatprep.subr.mxu0 0.0
    %1904 = vmatpush1.msra.mxu0 0.0
    %1905 = vmatprep.subr.mxu0 0.0
    %1906 = vmatpush1.msra.mxu0 0.0
    %1907 = vmatprep.subr.mxu0 0.0
    %1908 = vmatpush1.msra.mxu0 0.0
    %1909 = vmatprep.subr.mxu0 0.0
    %1910 = vmatpush1.msra.mxu0 0.0
    %1911 = vmatprep.subr.mxu0 0.0
    %1912 = vmatpush1.msra.mxu0 0.0
    %1913 = vmatprep.subr.mxu0 0.0
    %1914 = vmatpush1.msra.mxu0 %v1263
    %1915 = vmatprep.subr.mxu0 0.0
    %1916 = vmatpush1.msra.mxu0 %v1262
    %1917 = vmatprep.subr.mxu0 0.0
    %1918 = vmatpush1.msra.mxu0 %v1261
    %1919 = vmatprep.subr.mxu0 0.0
    %1920 = vmatpush1.msra.mxu0 %v1260
    %1921 = vmatprep.subr.mxu0 0.0
    %1922 = vmatpush2.msra.mxu0 0.0
    %1923 = vmatprep.subr.mxu0 0.0
    %1924 = vmatpush2.msra.mxu0 0.0
    %1925 = vmatprep.subr.mxu0 0.0
    %1926 = vmatpush2.msra.mxu0 0.0
    %1927 = vmatprep.subr.mxu0 0.0
    %1928 = vmatpush2.msra.mxu0 0.0
    %1929 = vmatprep.subr.mxu0 0.0
    %1930 = vmatpush2.msra.mxu0 0.0
    %1931 = vmatprep.subr.mxu0 0.0
    %1932 = vmatpush2.msra.mxu0 0.0
    %1933 = vmatprep.subr.mxu0 0.0
    %1934 = vmatpush2.msra.mxu0 0.0
    %1935 = vmatprep.subr.mxu0 0.0
    %1936 = vmatpush2.msra.mxu0 0.0
    %1937 = vmatprep.subr.mxu0 0.0
    %1938 = vmatpush2.msra.mxu0 0.0
    %1939 = vmatprep.subr.mxu0 0.0
    %1940 = vmatpush2.msra.mxu0 0.0
    %1941 = vmatprep.subr.mxu0 0.0
    %1942 = vmatpush2.msra.mxu0 0.0
    %1943 = vmatprep.subr.mxu0 0.0
    %1944 = vmatpush2.msra.mxu0 0.0
    %1945 = vmatprep.subr.mxu0 0.0
    %1946 = vmatpush2.msra.mxu0 0.0
    %1947 = vmatprep.subr.mxu0 0.0
    %1948 = vmatpush2.msra.mxu0 0.0
    %1949 = vmatprep.subr.mxu0 0.0
    %1950 = vmatpush2.msra.mxu0 0.0
    %1951 = vmatprep.subr.mxu0 0.0
    %1952 = vmatpush2.msra.mxu0 0.0
    %1953 = vmatprep.mubr.f32.mxu0 0.0
    %1954 = vmatmul.mubr.f32.gmra.mxu0 %v1887
    %v1955 = vpop.f32.mrf.mxu0
    %v1956 = vadd.f32 0.0, %v1955
    %v1957 = vpop.f32.mrf.mxu0
    %1958 = vdwg.mxu0
    %v1959 = vadd.f32 %v1886, %v1956
    %v1960 = vxor.u32 %v1959, 2147483648
    %v1961 = vmul.f32 %v1960, 1.442695
    %v1962 = vpow.pop %v1961
    %v1963 = vadd.f32 %v1962, 1.0
    %v1964 = vrcp.pop %v1963
    %v1965 = vmul.f32 1.0, %v1964
    %v1966 = vtanh.pop %v1959
    %v1967 = vmul.f32 %v1965, %v1873
    %1969 = vrot.lane.b32.xlu0 %v1966, 64
    %v1970 = vpop.permute.xlu0 %1969
    %v1972 = vmul.f32 %v1965, %v1970
    %1974 = vrot.lane.b32.xlu0 %v1972, 32
    %v1975 = vpop.permute.xlu0 %1974
    %v1977 = vadd.f32 %v1967, %v1975
    %v1978 = vtanh.pop %v1977
    %1980 = vrot.lane.b32.xlu0 %v1978, 64
    %v1981 = vpop.permute.xlu0 %1980
    %v1983 = vmul.f32 %v1965, %v1981
    %1985 = vrot.lane.b32.xlu0 %v1983, 32
    %v1986 = vpop.permute.xlu0 %1985
    %s1988 = scalar_lea.vmem [#allocation3], 8
    %1989 = vst.msk [vmem:[%s1988] sm:$0xff] %vm123, %v1986
    %v1990 = vld [vmem:[#allocation6] sm:$0xff]
    %v1991 = vsel %vm123, %v1986, 0
    %1993 = vmatprep.subr.mxu0 0.0
    %1994 = vmatpush1.msra.mxu0 0.0
    %1995 = vmatprep.subr.mxu0 0.0
    %1996 = vmatpush1.msra.mxu0 0.0
    %1997 = vmatprep.subr.mxu0 0.0
    %1998 = vmatpush1.msra.mxu0 0.0
    %1999 = vmatprep.subr.mxu0 0.0
    %2000 = vmatpush1.msra.mxu0 0.0
    %2001 = vmatprep.subr.mxu0 0.0
    %2002 = vmatpush1.msra.mxu0 0.0
    %2003 = vmatprep.subr.mxu0 0.0
    %2004 = vmatpush1.msra.mxu0 0.0
    %2005 = vmatprep.subr.mxu0 0.0
    %2006 = vmatpush1.msra.mxu0 0.0
    %2007 = vmatprep.subr.mxu0 0.0
    %2008 = vmatpush1.msra.mxu0 0.0
    %2009 = vmatprep.subr.mxu0 0.0
    %2010 = vmatpush1.msra.mxu0 0.0
    %2011 = vmatprep.subr.mxu0 0.0
    %2012 = vmatpush1.msra.mxu0 0.0
    %2013 = vmatprep.subr.mxu0 0.0
    %2014 = vmatpush1.msra.mxu0 0.0
    %2015 = vmatprep.subr.mxu0 0.0
    %2016 = vmatpush1.msra.mxu0 0.0
    %2017 = vmatprep.subr.mxu0 0.0
    %2018 = vmatpush1.msra.mxu0 %v1263
    %2019 = vmatprep.subr.mxu0 0.0
    %2020 = vmatpush1.msra.mxu0 %v1262
    %2021 = vmatprep.subr.mxu0 0.0
    %2022 = vmatpush1.msra.mxu0 %v1261
    %2023 = vmatprep.subr.mxu0 0.0
    %2024 = vmatpush1.msra.mxu0 %v1260
    %2025 = vmatprep.subr.mxu0 0.0
    %2026 = vmatpush2.msra.mxu0 0.0
    %2027 = vmatprep.subr.mxu0 0.0
    %2028 = vmatpush2.msra.mxu0 0.0
    %2029 = vmatprep.subr.mxu0 0.0
    %2030 = vmatpush2.msra.mxu0 0.0
    %2031 = vmatprep.subr.mxu0 0.0
    %2032 = vmatpush2.msra.mxu0 0.0
    %2033 = vmatprep.subr.mxu0 0.0
    %2034 = vmatpush2.msra.mxu0 0.0
    %2035 = vmatprep.subr.mxu0 0.0
    %2036 = vmatpush2.msra.mxu0 0.0
    %2037 = vmatprep.subr.mxu0 0.0
    %2038 = vmatpush2.msra.mxu0 0.0
    %2039 = vmatprep.subr.mxu0 0.0
    %2040 = vmatpush2.msra.mxu0 0.0
    %2041 = vmatprep.subr.mxu0 0.0
    %2042 = vmatpush2.msra.mxu0 0.0
    %2043 = vmatprep.subr.mxu0 0.0
    %2044 = vmatpush2.msra.mxu0 0.0
    %2045 = vmatprep.subr.mxu0 0.0
    %2046 = vmatpush2.msra.mxu0 0.0
    %2047 = vmatprep.subr.mxu0 0.0
    %2048 = vmatpush2.msra.mxu0 0.0
    %2049 = vmatprep.subr.mxu0 0.0
    %2050 = vmatpush2.msra.mxu0 0.0
    %2051 = vmatprep.subr.mxu0 0.0
    %2052 = vmatpush2.msra.mxu0 0.0
    %2053 = vmatprep.subr.mxu0 0.0
    %2054 = vmatpush2.msra.mxu0 0.0
    %2055 = vmatprep.subr.mxu0 0.0
    %2056 = vmatpush2.msra.mxu0 0.0
    %2057 = vmatprep.mubr.f32.mxu0 0.0
    %2058 = vmatmul.mubr.f32.gmra.mxu0 %v1991
    %v2059 = vpop.f32.mrf.mxu0
    %v2060 = vadd.f32 0.0, %v2059
    %v2061 = vpop.f32.mrf.mxu0
    %2062 = vdwg.mxu0
    %v2063 = vadd.f32 %v1990, %v2060
    %v2064 = vxor.u32 %v2063, 2147483648
    %v2065 = vmul.f32 %v2064, 1.442695
    %v2066 = vpow.pop %v2065
    %v2067 = vadd.f32 %v2066, 1.0
    %v2068 = vrcp.pop %v2067
    %v2069 = vmul.f32 1.0, %v2068
    %v2070 = vtanh.pop %v2063
    %v2071 = vmul.f32 %v2069, %v1977
    %2073 = vrot.lane.b32.xlu0 %v2070, 64
    %v2074 = vpop.permute.xlu0 %2073
    %v2076 = vmul.f32 %v2069, %v2074
    %2078 = vrot.lane.b32.xlu0 %v2076, 32
    %v2079 = vpop.permute.xlu0 %2078
    %v2081 = vadd.f32 %v2071, %v2079
    %v2082 = vtanh.pop %v2081
    %2084 = vrot.lane.b32.xlu0 %v2082, 64
    %v2085 = vpop.permute.xlu0 %2084
    %v2087 = vmul.f32 %v2069, %v2085
    %2089 = vrot.lane.b32.xlu0 %v2087, 32
    %v2090 = vpop.permute.xlu0 %2089
    %2092 = vst.msk [vmem:[#allocation3] sm:$0xff] %vm123, %v2090
    %v2093 = vld [vmem:[%s7] sm:$0xff]
    %v2094 = vld [vmem:[%s7 + $0x8] sm:$0xff]
    %v2095 = vld [vmem:[%s7 + $0x10] sm:$0xff]
    %v2096 = vld [vmem:[%s7 + $0x18] sm:$0xff]
    %v2097 = vld [vmem:[%s7 + $0x20] sm:$0xff]
    %v2098 = vld [vmem:[%s7 + $0x28] sm:$0xff]
    %v2099 = vld [vmem:[%s7 + $0x30] sm:$0xff]
    %v2100 = vld [vmem:[%s7 + $0x38] sm:$0xff]
    %v2101 = vld [vmem:[#allocation2] sm:$0xff]
    %v2102 = vld [vmem:[#allocation2 + $0x8] sm:$0xff]
    %v2103 = vld [vmem:[#allocation2 + $0x10] sm:$0xff]
    %v2104 = vld [vmem:[#allocation2 + $0x18] sm:$0xff]
    %v2105 = vld [vmem:[#allocation2 + $0x20] sm:$0xff]
    %v2106 = vld [vmem:[#allocation2 + $0x28] sm:$0xff]
    %v2107 = vld [vmem:[#allocation2 + $0x30] sm:$0xff]
    %v2108 = vld [vmem:[#allocation2 + $0x38] sm:$0xff]
    %v2109 = vld [vmem:[#allocation3] sm:$0xff]
    %v2110 = vld [vmem:[#allocation3 + $0x8] sm:$0xff]
    %v2111 = vld [vmem:[#allocation3 + $0x10] sm:$0xff]
    %v2112 = vld [vmem:[#allocation3 + $0x18] sm:$0xff]
    %v2113 = vld [vmem:[#allocation3 + $0x20] sm:$0xff]
    %v2114 = vld [vmem:[#allocation3 + $0x28] sm:$0xff]
    %v2115 = vld [vmem:[#allocation3 + $0x30] sm:$0xff]
    %v2116 = vld [vmem:[#allocation3 + $0x38] sm:$0xff]
    %v2118 = vsel %vm123, %v2109, 0
    %v2121 = vsel %vm123, %v2110, 0
    %v2124 = vsel %vm123, %v2111, 0
    %v2127 = vsel %vm123, %v2112, 0
    %v2130 = vsel %vm123, %v2113, 0
    %v2133 = vsel %vm123, %v2114, 0
    %v2136 = vsel %vm123, %v2115, 0
    %v2139 = vsel %vm123, %v2116, 0
    %2141 = vmatprep.subr.mxu0 0.0
    %2142 = vmatpush1.msra.mxu0 0.0
    %2143 = vmatprep.subr.mxu0 0.0
    %2144 = vmatpush1.msra.mxu0 0.0
    %2145 = vmatprep.subr.mxu0 0.0
    %2146 = vmatpush1.msra.mxu0 0.0
    %2147 = vmatprep.subr.mxu0 0.0
    %2148 = vmatpush1.msra.mxu0 0.0
    %2149 = vmatprep.subr.mxu0 0.0
    %2150 = vmatpush1.msra.mxu0 0.0
    %2151 = vmatprep.subr.mxu0 0.0
    %2152 = vmatpush1.msra.mxu0 0.0
    %2153 = vmatprep.subr.mxu0 0.0
    %2154 = vmatpush1.msra.mxu0 0.0
    %2155 = vmatprep.subr.mxu0 0.0
    %2156 = vmatpush1.msra.mxu0 0.0
    %2157 = vmatprep.subr.mxu0 0.0
    %2158 = vmatpush1.msra.mxu0 0.0
    %2159 = vmatprep.subr.mxu0 0.0
    %2160 = vmatpush1.msra.mxu0 0.0
    %2161 = vmatprep.subr.mxu0 0.0
    %2162 = vmatpush1.msra.mxu0 0.0
    %2163 = vmatprep.subr.mxu0 0.0
    %2164 = vmatpush1.msra.mxu0 0.0
    %2165 = vmatprep.subr.mxu0 0.0
    %2166 = vmatpush1.msra.mxu0 %v2100
    %2167 = vmatprep.subr.mxu0 0.0
    %2168 = vmatpush1.msra.mxu0 %v2099
    %2169 = vmatprep.subr.mxu0 0.0
    %2170 = vmatpush1.msra.mxu0 %v2098
    %2171 = vmatprep.subr.mxu0 0.0
    %2172 = vmatpush1.msra.mxu0 %v2097
    %2173 = vmatprep.subr.mxu0 0.0
    %2174 = vmatpush2.msra.mxu0 0.0
    %2175 = vmatprep.subr.mxu0 0.0
    %2176 = vmatpush2.msra.mxu0 0.0
    %2177 = vmatprep.subr.mxu0 0.0
    %2178 = vmatpush2.msra.mxu0 0.0
    %2179 = vmatprep.subr.mxu0 0.0
    %2180 = vmatpush2.msra.mxu0 0.0
    %2181 = vmatprep.subr.mxu0 0.0
    %2182 = vmatpush2.msra.mxu0 0.0
    %2183 = vmatprep.subr.mxu0 0.0
    %2184 = vmatpush2.msra.mxu0 0.0
    %2185 = vmatprep.subr.mxu0 0.0
    %2186 = vmatpush2.msra.mxu0 0.0
    %2187 = vmatprep.subr.mxu0 0.0
    %2188 = vmatpush2.msra.mxu0 0.0
    %2189 = vmatprep.subr.mxu0 0.0
    %2190 = vmatpush2.msra.mxu0 0.0
    %2191 = vmatprep.subr.mxu0 0.0
    %2192 = vmatpush2.msra.mxu0 0.0
    %2193 = vmatprep.subr.mxu0 0.0
    %2194 = vmatpush2.msra.mxu0 0.0
    %2195 = vmatprep.subr.mxu0 0.0
    %2196 = vmatpush2.msra.mxu0 0.0
    %2197 = vmatprep.subr.mxu0 0.0
    %2198 = vmatpush2.msra.mxu0 0.0
    %2199 = vmatprep.subr.mxu0 0.0
    %2200 = vmatpush2.msra.mxu0 0.0
    %2201 = vmatprep.subr.mxu0 0.0
    %2202 = vmatpush2.msra.mxu0 0.0
    %2203 = vmatprep.subr.mxu0 0.0
    %2204 = vmatpush2.msra.mxu0 0.0
    %2205 = vmatprep.mubr.f32.mxu0 0.0
    %2206 = vmatmul.mubr.f32.gmra.mxu0 %v2118
    %v2207 = vpop.f32.mrf.mxu0
    %v2208 = vadd.f32 0.0, %v2207
    %v2209 = vpop.f32.mrf.mxu0
    %2210 = vmatprep.mubr.f32.mxu0 0.0
    %2211 = vmatmul.mubr.f32.gmra.mxu0 %v2121
    %v2212 = vpop.f32.mrf.mxu0
    %v2213 = vadd.f32 0.0, %v2212
    %v2214 = vpop.f32.mrf.mxu0
    %2215 = vmatprep.mubr.f32.mxu0 0.0
    %2216 = vmatmul.mubr.f32.gmra.mxu0 %v2124
    %v2217 = vpop.f32.mrf.mxu0
    %v2218 = vadd.f32 0.0, %v2217
    %v2219 = vpop.f32.mrf.mxu0
    %2220 = vmatprep.mubr.f32.mxu0 0.0
    %2221 = vmatmul.mubr.f32.gmra.mxu0 %v2127
    %v2222 = vpop.f32.mrf.mxu0
    %v2223 = vadd.f32 0.0, %v2222
    %v2224 = vpop.f32.mrf.mxu0
    %2225 = vmatprep.mubr.f32.mxu0 0.0
    %2226 = vmatmul.mubr.f32.gmra.mxu0 %v2130
    %v2227 = vpop.f32.mrf.mxu0
    %v2228 = vadd.f32 0.0, %v2227
    %v2229 = vpop.f32.mrf.mxu0
    %2230 = vmatprep.mubr.f32.mxu0 0.0
    %2231 = vmatmul.mubr.f32.gmra.mxu0 %v2133
    %v2232 = vpop.f32.mrf.mxu0
    %v2233 = vadd.f32 0.0, %v2232
    %v2234 = vpop.f32.mrf.mxu0
    %2235 = vmatprep.mubr.f32.mxu0 0.0
    %2236 = vmatmul.mubr.f32.gmra.mxu0 %v2136
    %v2237 = vpop.f32.mrf.mxu0
    %v2238 = vadd.f32 0.0, %v2237
    %v2239 = vpop.f32.mrf.mxu0
    %2240 = vmatprep.mubr.f32.mxu0 0.0
    %2241 = vmatmul.mubr.f32.gmra.mxu0 %v2139
    %v2242 = vpop.f32.mrf.mxu0
    %v2243 = vadd.f32 0.0, %v2242
    %v2244 = vpop.f32.mrf.mxu0
    %2245 = vdwg.mxu0
    %v2247 = vsel %vm123, %v2101, 0
    %v2250 = vsel %vm123, %v2102, 0
    %v2253 = vsel %vm123, %v2103, 0
    %v2256 = vsel %vm123, %v2104, 0
    %v2259 = vsel %vm123, %v2105, 0
    %v2262 = vsel %vm123, %v2106, 0
    %v2265 = vsel %vm123, %v2107, 0
    %v2268 = vsel %vm123, %v2108, 0
    %2270 = vmatprep.subr.mxu0 0.0
    %2271 = vmatpush1.msra.mxu0 0.0
    %2272 = vmatprep.subr.mxu0 0.0
    %2273 = vmatpush1.msra.mxu0 0.0
    %2274 = vmatprep.subr.mxu0 0.0
    %2275 = vmatpush1.msra.mxu0 0.0
    %2276 = vmatprep.subr.mxu0 0.0
    %2277 = vmatpush1.msra.mxu0 0.0
    %2278 = vmatprep.subr.mxu0 0.0
    %2279 = vmatpush1.msra.mxu0 0.0
    %2280 = vmatprep.subr.mxu0 0.0
    %2281 = vmatpush1.msra.mxu0 0.0
    %2282 = vmatprep.subr.mxu0 0.0
    %2283 = vmatpush1.msra.mxu0 0.0
    %2284 = vmatprep.subr.mxu0 0.0
    %2285 = vmatpush1.msra.mxu0 0.0
    %2286 = vmatprep.subr.mxu0 0.0
    %2287 = vmatpush1.msra.mxu0 0.0
    %2288 = vmatprep.subr.mxu0 0.0
    %2289 = vmatpush1.msra.mxu0 0.0
    %2290 = vmatprep.subr.mxu0 0.0
    %2291 = vmatpush1.msra.mxu0 0.0
    %2292 = vmatprep.subr.mxu0 0.0
    %2293 = vmatpush1.msra.mxu0 0.0
    %2294 = vmatprep.subr.mxu0 0.0
    %2295 = vmatpush1.msra.mxu0 %v2096
    %2296 = vmatprep.subr.mxu0 0.0
    %2297 = vmatpush1.msra.mxu0 %v2095
    %2298 = vmatprep.subr.mxu0 0.0
    %2299 = vmatpush1.msra.mxu0 %v2094
    %2300 = vmatprep.subr.mxu0 0.0
    %2301 = vmatpush1.msra.mxu0 %v2093
    %2302 = vmatprep.subr.mxu0 0.0
    %2303 = vmatpush2.msra.mxu0 0.0
    %2304 = vmatprep.subr.mxu0 0.0
    %2305 = vmatpush2.msra.mxu0 0.0
    %2306 = vmatprep.subr.mxu0 0.0
    %2307 = vmatpush2.msra.mxu0 0.0
    %2308 = vmatprep.subr.mxu0 0.0
    %2309 = vmatpush2.msra.mxu0 0.0
    %2310 = vmatprep.subr.mxu0 0.0
    %2311 = vmatpush2.msra.mxu0 0.0
    %2312 = vmatprep.subr.mxu0 0.0
    %2313 = vmatpush2.msra.mxu0 0.0
    %2314 = vmatprep.subr.mxu0 0.0
    %2315 = vmatpush2.msra.mxu0 0.0
    %2316 = vmatprep.subr.mxu0 0.0
    %2317 = vmatpush2.msra.mxu0 0.0
    %2318 = vmatprep.subr.mxu0 0.0
    %2319 = vmatpush2.msra.mxu0 0.0
    %2320 = vmatprep.subr.mxu0 0.0
    %2321 = vmatpush2.msra.mxu0 0.0
    %2322 = vmatprep.subr.mxu0 0.0
    %2323 = vmatpush2.msra.mxu0 0.0
    %2324 = vmatprep.subr.mxu0 0.0
    %2325 = vmatpush2.msra.mxu0 0.0
    %2326 = vmatprep.subr.mxu0 0.0
    %2327 = vmatpush2.msra.mxu0 0.0
    %2328 = vmatprep.subr.mxu0 0.0
    %2329 = vmatpush2.msra.mxu0 0.0
    %2330 = vmatprep.subr.mxu0 0.0
    %2331 = vmatpush2.msra.mxu0 0.0
    %2332 = vmatprep.subr.mxu0 0.0
    %2333 = vmatpush2.msra.mxu0 0.0
    %2334 = vmatprep.mubr.f32.mxu0 0.0
    %2335 = vmatmul.mubr.f32.gmra.mxu0 %v2247
    %v2336 = vpop.f32.mrf.mxu0
    %v2337 = vadd.f32 %v2208, %v2336
    %v2338 = vpop.f32.mrf.mxu0
    %2339 = vmatprep.mubr.f32.mxu0 0.0
    %2340 = vmatmul.mubr.f32.gmra.mxu0 %v2250
    %v2341 = vpop.f32.mrf.mxu0
    %v2342 = vadd.f32 %v2213, %v2341
    %v2343 = vpop.f32.mrf.mxu0
    %2344 = vmatprep.mubr.f32.mxu0 0.0
    %2345 = vmatmul.mubr.f32.gmra.mxu0 %v2253
    %v2346 = vpop.f32.mrf.mxu0
    %v2347 = vadd.f32 %v2218, %v2346
    %v2348 = vpop.f32.mrf.mxu0
    %2349 = vmatprep.mubr.f32.mxu0 0.0
    %2350 = vmatmul.mubr.f32.gmra.mxu0 %v2256
    %v2351 = vpop.f32.mrf.mxu0
    %v2352 = vadd.f32 %v2223, %v2351
    %v2353 = vpop.f32.mrf.mxu0
    %2354 = vmatprep.mubr.f32.mxu0 0.0
    %2355 = vmatmul.mubr.f32.gmra.mxu0 %v2259
    %v2356 = vpop.f32.mrf.mxu0
    %v2357 = vadd.f32 %v2228, %v2356
    %v2358 = vpop.f32.mrf.mxu0
    %2359 = vmatprep.mubr.f32.mxu0 0.0
    %2360 = vmatmul.mubr.f32.gmra.mxu0 %v2262
    %v2361 = vpop.f32.mrf.mxu0
    %v2362 = vadd.f32 %v2233, %v2361
    %v2363 = vpop.f32.mrf.mxu0
    %2364 = vmatprep.mubr.f32.mxu0 0.0
    %2365 = vmatmul.mubr.f32.gmra.mxu0 %v2265
    %v2366 = vpop.f32.mrf.mxu0
    %v2367 = vadd.f32 %v2238, %v2366
    %v2368 = vpop.f32.mrf.mxu0
    %2369 = vmatprep.mubr.f32.mxu0 0.0
    %2370 = vmatmul.mubr.f32.gmra.mxu0 %v2268
    %v2371 = vpop.f32.mrf.mxu0
    %v2372 = vadd.f32 %v2243, %v2371
    %v2373 = vpop.f32.mrf.mxu0
    %2374 = vdwg.mxu0
    %v2375 = vld [vmem:[#allocation8] sm:$0x1]
    %v2377 = vlaneseq
    %v2378 = vshrl.u32 %v2377, 7
    %v2379 = vsub.s32 0, %v2378
    %v2380 = vrot.slane %v2375, %v2379
    %v2382 = vadd.f32 %v2337, %v2380
    %v2383 = vadd.f32 %v2342, %v2380
    %v2384 = vadd.f32 %v2347, %v2380
    %v2385 = vadd.f32 %v2352, %v2380
    %v2386 = vadd.f32 %v2357, %v2380
    %v2387 = vadd.f32 %v2362, %v2380
    %v2388 = vadd.f32 %v2367, %v2380
    %v2389 = vadd.f32 %v2372, %v2380
    %2390 = vst [vmem:[#allocation6] sm:$0xff] %v2382
    %2391 = vst [vmem:[#allocation6 + $0x8] sm:$0xff] %v2383
    %2392 = vst [vmem:[#allocation6 + $0x10] sm:$0xff] %v2384
    %2393 = vst [vmem:[#allocation6 + $0x18] sm:$0xff] %v2385
    %2394 = vst [vmem:[#allocation6 + $0x20] sm:$0xff] %v2386
    %2395 = vst [vmem:[#allocation6 + $0x28] sm:$0xff] %v2387
    %2396 = vst [vmem:[#allocation6 + $0x30] sm:$0xff] %v2388
    %2397 = vst [vmem:[#allocation6 + $0x38] sm:$0xff] %v2389
    %v2398 = vld [vmem:[%s8] sm:$0xff]
    %v2399 = vld [vmem:[%s8 + $0x8] sm:$0xff]
    %v2400 = vld [vmem:[%s8 + $0x10] sm:$0xff]
    %v2401 = vld [vmem:[%s8 + $0x18] sm:$0xff]
    %v2402 = vld [vmem:[#allocation6] sm:$0xff]
    %2403 = vmatprep.subr.mxu0 0.0
    %2404 = vmatpush1.msra.mxu0 0.0
    %2405 = vmatprep.subr.mxu0 0.0
    %2406 = vmatpush1.msra.mxu0 0.0
    %2407 = vmatprep.subr.mxu0 0.0
    %2408 = vmatpush1.msra.mxu0 0.0
    %2409 = vmatprep.subr.mxu0 0.0
    %2410 = vmatpush1.msra.mxu0 0.0
    %2411 = vmatprep.subr.mxu0 0.0
    %2412 = vmatpush1.msra.mxu0 0.0
    %2413 = vmatprep.subr.mxu0 0.0
    %2414 = vmatpush1.msra.mxu0 0.0
    %2415 = vmatprep.subr.mxu0 0.0
    %2416 = vmatpush1.msra.mxu0 0.0
    %2417 = vmatprep.subr.mxu0 0.0
    %2418 = vmatpush1.msra.mxu0 0.0
    %2419 = vmatprep.subr.mxu0 0.0
    %2420 = vmatpush1.msra.mxu0 0.0
    %2421 = vmatprep.subr.mxu0 0.0
    %2422 = vmatpush1.msra.mxu0 0.0
    %2423 = vmatprep.subr.mxu0 0.0
    %2424 = vmatpush1.msra.mxu0 0.0
    %2425 = vmatprep.subr.mxu0 0.0
    %2426 = vmatpush1.msra.mxu0 0.0
    %2427 = vmatprep.subr.mxu0 0.0
    %2428 = vmatpush1.msra.mxu0 %v2401
    %2429 = vmatprep.subr.mxu0 0.0
    %2430 = vmatpush1.msra.mxu0 %v2400
    %2431 = vmatprep.subr.mxu0 0.0
    %2432 = vmatpush1.msra.mxu0 %v2399
    %2433 = vmatprep.subr.mxu0 0.0
    %2434 = vmatpush1.msra.mxu0 %v2398
    %2435 = vmatprep.subr.mxu0 0.0
    %2436 = vmatpush2.msra.mxu0 0.0
    %2437 = vmatprep.subr.mxu0 0.0
    %2438 = vmatpush2.msra.mxu0 0.0
    %2439 = vmatprep.subr.mxu0 0.0
    %2440 = vmatpush2.msra.mxu0 0.0
    %2441 = vmatprep.subr.mxu0 0.0
    %2442 = vmatpush2.msra.mxu0 0.0
    %2443 = vmatprep.subr.mxu0 0.0
    %2444 = vmatpush2.msra.mxu0 0.0
    %2445 = vmatprep.subr.mxu0 0.0
    %2446 = vmatpush2.msra.mxu0 0.0
    %2447 = vmatprep.subr.mxu0 0.0
    %2448 = vmatpush2.msra.mxu0 0.0
    %2449 = vmatprep.subr.mxu0 0.0
    %2450 = vmatpush2.msra.mxu0 0.0
    %2451 = vmatprep.subr.mxu0 0.0
    %2452 = vmatpush2.msra.mxu0 0.0
    %2453 = vmatprep.subr.mxu0 0.0
    %2454 = vmatpush2.msra.mxu0 0.0
    %2455 = vmatprep.subr.mxu0 0.0
    %2456 = vmatpush2.msra.mxu0 0.0
    %2457 = vmatprep.subr.mxu0 0.0
    %2458 = vmatpush2.msra.mxu0 0.0
    %2459 = vmatprep.subr.mxu0 0.0
    %2460 = vmatpush2.msra.mxu0 0.0
    %2461 = vmatprep.subr.mxu0 0.0
    %2462 = vmatpush2.msra.mxu0 0.0
    %2463 = vmatprep.subr.mxu0 0.0
    %2464 = vmatpush2.msra.mxu0 0.0
    %2465 = vmatprep.subr.mxu0 0.0
    %2466 = vmatpush2.msra.mxu0 0.0
    %2467 = vmatprep.mubr.f32.mxu0 0.0
    %2468 = vmatmul.mubr.f32.gmra.mxu0 %v267
    %v2469 = vpop.f32.mrf.mxu0
    %v2470 = vadd.f32 0.0, %v2469
    %v2471 = vpop.f32.mrf.mxu0
    %2472 = vdwg.mxu0
    %v2473 = vadd.f32 %v2402, %v2470
    %v2474 = vxor.u32 %v2473, 2147483648
    %v2475 = vmul.f32 %v2474, 1.442695
    %v2476 = vpow.pop %v2475
    %v2477 = vadd.f32 %v2476, 1.0
    %v2478 = vrcp.pop %v2477
    %v2479 = vmul.f32 1.0, %v2478
    %v2480 = vtanh.pop %v2473
    %v2481 = vmul.f32 %v2479, 0.0
    %2483 = vrot.lane.b32.xlu0 %v2480, 64
    %v2484 = vpop.permute.xlu0 %2483
    %v2486 = vmul.f32 %v2479, %v2484
    %2488 = vrot.lane.b32.xlu0 %v2486, 32
    %v2489 = vpop.permute.xlu0 %2488
    %v2491 = vadd.f32 %v2481, %v2489
    %v2492 = vtanh.pop %v2491
    %2494 = vrot.lane.b32.xlu0 %v2492, 64
    %v2495 = vpop.permute.xlu0 %2494
    %v2497 = vmul.f32 %v2479, %v2495
    %2499 = vrot.lane.b32.xlu0 %v2497, 32
    %v2500 = vpop.permute.xlu0 %2499
    %2502 = vst.msk [vmem:[#allocation4] sm:$0xff] %vm123, %v2500
    %v2503 = vld [vmem:[%s369] sm:$0xff]
    %v2504 = vsel %vm123, %v2500, 0
    %2506 = vmatprep.subr.mxu0 0.0
    %2507 = vmatpush1.msra.mxu0 0.0
    %2508 = vmatprep.subr.mxu0 0.0
    %2509 = vmatpush1.msra.mxu0 0.0
    %2510 = vmatprep.subr.mxu0 0.0
    %2511 = vmatpush1.msra.mxu0 0.0
    %2512 = vmatprep.subr.mxu0 0.0
    %2513 = vmatpush1.msra.mxu0 0.0
    %2514 = vmatprep.subr.mxu0 0.0
    %2515 = vmatpush1.msra.mxu0 0.0
    %2516 = vmatprep.subr.mxu0 0.0
    %2517 = vmatpush1.msra.mxu0 0.0
    %2518 = vmatprep.subr.mxu0 0.0
    %2519 = vmatpush1.msra.mxu0 0.0
    %2520 = vmatprep.subr.mxu0 0.0
    %2521 = vmatpush1.msra.mxu0 0.0
    %2522 = vmatprep.subr.mxu0 0.0
    %2523 = vmatpush1.msra.mxu0 0.0
    %2524 = vmatprep.subr.mxu0 0.0
    %2525 = vmatpush1.msra.mxu0 0.0
    %2526 = vmatprep.subr.mxu0 0.0
    %2527 = vmatpush1.msra.mxu0 0.0
    %2528 = vmatprep.subr.mxu0 0.0
    %2529 = vmatpush1.msra.mxu0 0.0
    %2530 = vmatprep.subr.mxu0 0.0
    %2531 = vmatpush1.msra.mxu0 %v2401
    %2532 = vmatprep.subr.mxu0 0.0
    %2533 = vmatpush1.msra.mxu0 %v2400
    %2534 = vmatprep.subr.mxu0 0.0
    %2535 = vmatpush1.msra.mxu0 %v2399
    %2536 = vmatprep.subr.mxu0 0.0
    %2537 = vmatpush1.msra.mxu0 %v2398
    %2538 = vmatprep.subr.mxu0 0.0
    %2539 = vmatpush2.msra.mxu0 0.0
    %2540 = vmatprep.subr.mxu0 0.0
    %2541 = vmatpush2.msra.mxu0 0.0
    %2542 = vmatprep.subr.mxu0 0.0
    %2543 = vmatpush2.msra.mxu0 0.0
    %2544 = vmatprep.subr.mxu0 0.0
    %2545 = vmatpush2.msra.mxu0 0.0
    %2546 = vmatprep.subr.mxu0 0.0
    %2547 = vmatpush2.msra.mxu0 0.0
    %2548 = vmatprep.subr.mxu0 0.0
    %2549 = vmatpush2.msra.mxu0 0.0
    %2550 = vmatprep.subr.mxu0 0.0
    %2551 = vmatpush2.msra.mxu0 0.0
    %2552 = vmatprep.subr.mxu0 0.0
    %2553 = vmatpush2.msra.mxu0 0.0
    %2554 = vmatprep.subr.mxu0 0.0
    %2555 = vmatpush2.msra.mxu0 0.0
    %2556 = vmatprep.subr.mxu0 0.0
    %2557 = vmatpush2.msra.mxu0 0.0
    %2558 = vmatprep.subr.mxu0 0.0
    %2559 = vmatpush2.msra.mxu0 0.0
    %2560 = vmatprep.subr.mxu0 0.0
    %2561 = vmatpush2.msra.mxu0 0.0
    %2562 = vmatprep.subr.mxu0 0.0
    %2563 = vmatpush2.msra.mxu0 0.0
    %2564 = vmatprep.subr.mxu0 0.0
    %2565 = vmatpush2.msra.mxu0 0.0
    %2566 = vmatprep.subr.mxu0 0.0
    %2567 = vmatpush2.msra.mxu0 0.0
    %2568 = vmatprep.subr.mxu0 0.0
    %2569 = vmatpush2.msra.mxu0 0.0
    %2570 = vmatprep.mubr.f32.mxu0 0.0
    %2571 = vmatmul.mubr.f32.gmra.mxu0 %v2504
    %v2572 = vpop.f32.mrf.mxu0
    %v2573 = vadd.f32 0.0, %v2572
    %v2574 = vpop.f32.mrf.mxu0
    %2575 = vdwg.mxu0
    %v2576 = vadd.f32 %v2503, %v2573
    %v2577 = vxor.u32 %v2576, 2147483648
    %v2578 = vmul.f32 %v2577, 1.442695
    %v2579 = vpow.pop %v2578
    %v2580 = vadd.f32 %v2579, 1.0
    %v2581 = vrcp.pop %v2580
    %v2582 = vmul.f32 1.0, %v2581
    %v2583 = vtanh.pop %v2576
    %v2584 = vmul.f32 %v2582, %v2491
    %2586 = vrot.lane.b32.xlu0 %v2583, 64
    %v2587 = vpop.permute.xlu0 %2586
    %v2589 = vmul.f32 %v2582, %v2587
    %2591 = vrot.lane.b32.xlu0 %v2589, 32
    %v2592 = vpop.permute.xlu0 %2591
    %v2594 = vadd.f32 %v2584, %v2592
    %v2595 = vtanh.pop %v2594
    %2597 = vrot.lane.b32.xlu0 %v2595, 64
    %v2598 = vpop.permute.xlu0 %2597
    %v2600 = vmul.f32 %v2582, %v2598
    %2602 = vrot.lane.b32.xlu0 %v2600, 32
    %v2603 = vpop.permute.xlu0 %2602
    %s2605 = scalar_lea.vmem [#allocation4], 8
    %2606 = vst.msk [vmem:[%s2605] sm:$0xff] %vm123, %v2603
    %v2607 = vld [vmem:[%s474] sm:$0xff]
    %v2608 = vsel %vm123, %v2603, 0
    %2610 = vmatprep.subr.mxu0 0.0
    %2611 = vmatpush1.msra.mxu0 0.0
    %2612 = vmatprep.subr.mxu0 0.0
    %2613 = vmatpush1.msra.mxu0 0.0
    %2614 = vmatprep.subr.mxu0 0.0
    %2615 = vmatpush1.msra.mxu0 0.0
    %2616 = vmatprep.subr.mxu0 0.0
    %2617 = vmatpush1.msra.mxu0 0.0
    %2618 = vmatprep.subr.mxu0 0.0
    %2619 = vmatpush1.msra.mxu0 0.0
    %2620 = vmatprep.subr.mxu0 0.0
    %2621 = vmatpush1.msra.mxu0 0.0
    %2622 = vmatprep.subr.mxu0 0.0
    %2623 = vmatpush1.msra.mxu0 0.0
    %2624 = vmatprep.subr.mxu0 0.0
    %2625 = vmatpush1.msra.mxu0 0.0
    %2626 = vmatprep.subr.mxu0 0.0
    %2627 = vmatpush1.msra.mxu0 0.0
    %2628 = vmatprep.subr.mxu0 0.0
    %2629 = vmatpush1.msra.mxu0 0.0
    %2630 = vmatprep.subr.mxu0 0.0
    %2631 = vmatpush1.msra.mxu0 0.0
    %2632 = vmatprep.subr.mxu0 0.0
    %2633 = vmatpush1.msra.mxu0 0.0
    %2634 = vmatprep.subr.mxu0 0.0
    %2635 = vmatpush1.msra.mxu0 %v2401
    %2636 = vmatprep.subr.mxu0 0.0
    %2637 = vmatpush1.msra.mxu0 %v2400
    %2638 = vmatprep.subr.mxu0 0.0
    %2639 = vmatpush1.msra.mxu0 %v2399
    %2640 = vmatprep.subr.mxu0 0.0
    %2641 = vmatpush1.msra.mxu0 %v2398
    %2642 = vmatprep.subr.mxu0 0.0
    %2643 = vmatpush2.msra.mxu0 0.0
    %2644 = vmatprep.subr.mxu0 0.0
    %2645 = vmatpush2.msra.mxu0 0.0
    %2646 = vmatprep.subr.mxu0 0.0
    %2647 = vmatpush2.msra.mxu0 0.0
    %2648 = vmatprep.subr.mxu0 0.0
    %2649 = vmatpush2.msra.mxu0 0.0
    %2650 = vmatprep.subr.mxu0 0.0
    %2651 = vmatpush2.msra.mxu0 0.0
    %2652 = vmatprep.subr.mxu0 0.0
    %2653 = vmatpush2.msra.mxu0 0.0
    %2654 = vmatprep.subr.mxu0 0.0
    %2655 = vmatpush2.msra.mxu0 0.0
    %2656 = vmatprep.subr.mxu0 0.0
    %2657 = vmatpush2.msra.mxu0 0.0
    %2658 = vmatprep.subr.mxu0 0.0
    %2659 = vmatpush2.msra.mxu0 0.0
    %2660 = vmatprep.subr.mxu0 0.0
    %2661 = vmatpush2.msra.mxu0 0.0
    %2662 = vmatprep.subr.mxu0 0.0
    %2663 = vmatpush2.msra.mxu0 0.0
    %2664 = vmatprep.subr.mxu0 0.0
    %2665 = vmatpush2.msra.mxu0 0.0
    %2666 = vmatprep.subr.mxu0 0.0
    %2667 = vmatpush2.msra.mxu0 0.0
    %2668 = vmatprep.subr.mxu0 0.0
    %2669 = vmatpush2.msra.mxu0 0.0
    %2670 = vmatprep.subr.mxu0 0.0
    %2671 = vmatpush2.msra.mxu0 0.0
    %2672 = vmatprep.subr.mxu0 0.0
    %2673 = vmatpush2.msra.mxu0 0.0
    %2674 = vmatprep.mubr.f32.mxu0 0.0
    %2675 = vmatmul.mubr.f32.gmra.mxu0 %v2608
    %v2676 = vpop.f32.mrf.mxu0
    %v2677 = vadd.f32 0.0, %v2676
    %v2678 = vpop.f32.mrf.mxu0
    %2679 = vdwg.mxu0
    %v2680 = vadd.f32 %v2607, %v2677
    %v2681 = vxor.u32 %v2680, 2147483648
    %v2682 = vmul.f32 %v2681, 1.442695
    %v2683 = vpow.pop %v2682
    %v2684 = vadd.f32 %v2683, 1.0
    %v2685 = vrcp.pop %v2684
    %v2686 = vmul.f32 1.0, %v2685
    %v2687 = vtanh.pop %v2680
    %v2688 = vmul.f32 %v2686, %v2594
    %2690 = vrot.lane.b32.xlu0 %v2687, 64
    %v2691 = vpop.permute.xlu0 %2690
    %v2693 = vmul.f32 %v2686, %v2691
    %2695 = vrot.lane.b32.xlu0 %v2693, 32
    %v2696 = vpop.permute.xlu0 %2695
    %v2698 = vadd.f32 %v2688, %v2696
    %v2699 = vtanh.pop %v2698
    %2701 = vrot.lane.b32.xlu0 %v2699, 64
    %v2702 = vpop.permute.xlu0 %2701
    %v2704 = vmul.f32 %v2686, %v2702
    %2706 = vrot.lane.b32.xlu0 %v2704, 32
    %v2707 = vpop.permute.xlu0 %2706
    %s2709 = scalar_lea.vmem [#allocation4], 16
    %2710 = vst.msk [vmem:[%s2709] sm:$0xff] %vm123, %v2707
    %v2711 = vld [vmem:[%s579] sm:$0xff]
    %v2712 = vsel %vm123, %v2707, 0
    %2714 = vmatprep.subr.mxu0 0.0
    %2715 = vmatpush1.msra.mxu0 0.0
    %2716 = vmatprep.subr.mxu0 0.0
    %2717 = vmatpush1.msra.mxu0 0.0
    %2718 = vmatprep.subr.mxu0 0.0
    %2719 = vmatpush1.msra.mxu0 0.0
    %2720 = vmatprep.subr.mxu0 0.0
    %2721 = vmatpush1.msra.mxu0 0.0
    %2722 = vmatprep.subr.mxu0 0.0
    %2723 = vmatpush1.msra.mxu0 0.0
    %2724 = vmatprep.subr.mxu0 0.0
    %2725 = vmatpush1.msra.mxu0 0.0
    %2726 = vmatprep.subr.mxu0 0.0
    %2727 = vmatpush1.msra.mxu0 0.0
    %2728 = vmatprep.subr.mxu0 0.0
    %2729 = vmatpush1.msra.mxu0 0.0
    %2730 = vmatprep.subr.mxu0 0.0
    %2731 = vmatpush1.msra.mxu0 0.0
    %2732 = vmatprep.subr.mxu0 0.0
    %2733 = vmatpush1.msra.mxu0 0.0
    %2734 = vmatprep.subr.mxu0 0.0
    %2735 = vmatpush1.msra.mxu0 0.0
    %2736 = vmatprep.subr.mxu0 0.0
    %2737 = vmatpush1.msra.mxu0 0.0
    %2738 = vmatprep.subr.mxu0 0.0
    %2739 = vmatpush1.msra.mxu0 %v2401
    %2740 = vmatprep.subr.mxu0 0.0
    %2741 = vmatpush1.msra.mxu0 %v2400
    %2742 = vmatprep.subr.mxu0 0.0
    %2743 = vmatpush1.msra.mxu0 %v2399
    %2744 = vmatprep.subr.mxu0 0.0
    %2745 = vmatpush1.msra.mxu0 %v2398
    %2746 = vmatprep.subr.mxu0 0.0
    %2747 = vmatpush2.msra.mxu0 0.0
    %2748 = vmatprep.subr.mxu0 0.0
    %2749 = vmatpush2.msra.mxu0 0.0
    %2750 = vmatprep.subr.mxu0 0.0
    %2751 = vmatpush2.msra.mxu0 0.0
    %2752 = vmatprep.subr.mxu0 0.0
    %2753 = vmatpush2.msra.mxu0 0.0
    %2754 = vmatprep.subr.mxu0 0.0
    %2755 = vmatpush2.msra.mxu0 0.0
    %2756 = vmatprep.subr.mxu0 0.0
    %2757 = vmatpush2.msra.mxu0 0.0
    %2758 = vmatprep.subr.mxu0 0.0
    %2759 = vmatpush2.msra.mxu0 0.0
    %2760 = vmatprep.subr.mxu0 0.0
    %2761 = vmatpush2.msra.mxu0 0.0
    %2762 = vmatprep.subr.mxu0 0.0
    %2763 = vmatpush2.msra.mxu0 0.0
    %2764 = vmatprep.subr.mxu0 0.0
    %2765 = vmatpush2.msra.mxu0 0.0
    %2766 = vmatprep.subr.mxu0 0.0
    %2767 = vmatpush2.msra.mxu0 0.0
    %2768 = vmatprep.subr.mxu0 0.0
    %2769 = vmatpush2.msra.mxu0 0.0
    %2770 = vmatprep.subr.mxu0 0.0
    %2771 = vmatpush2.msra.mxu0 0.0
    %2772 = vmatprep.subr.mxu0 0.0
    %2773 = vmatpush2.msra.mxu0 0.0
    %2774 = vmatprep.subr.mxu0 0.0
    %2775 = vmatpush2.msra.mxu0 0.0
    %2776 = vmatprep.subr.mxu0 0.0
    %2777 = vmatpush2.msra.mxu0 0.0
    %2778 = vmatprep.mubr.f32.mxu0 0.0
    %2779 = vmatmul.mubr.f32.gmra.mxu0 %v2712
    %v2780 = vpop.f32.mrf.mxu0
    %v2781 = vadd.f32 0.0, %v2780
    %v2782 = vpop.f32.mrf.mxu0
    %2783 = vdwg.mxu0
    %v2784 = vadd.f32 %v2711, %v2781
    %v2785 = vxor.u32 %v2784, 2147483648
    %v2786 = vmul.f32 %v2785, 1.442695
    %v2787 = vpow.pop %v2786
    %v2788 = vadd.f32 %v2787, 1.0
    %v2789 = vrcp.pop %v2788
    %v2790 = vmul.f32 1.0, %v2789
    %v2791 = vtanh.pop %v2784
    %v2792 = vmul.f32 %v2790, %v2698
    %2794 = vrot.lane.b32.xlu0 %v2791, 64
    %v2795 = vpop.permute.xlu0 %2794
    %v2797 = vmul.f32 %v2790, %v2795
    %2799 = vrot.lane.b32.xlu0 %v2797, 32
    %v2800 = vpop.permute.xlu0 %2799
    %v2802 = vadd.f32 %v2792, %v2800
    %v2803 = vtanh.pop %v2802
    %2805 = vrot.lane.b32.xlu0 %v2803, 64
    %v2806 = vpop.permute.xlu0 %2805
    %v2808 = vmul.f32 %v2790, %v2806
    %2810 = vrot.lane.b32.xlu0 %v2808, 32
    %v2811 = vpop.permute.xlu0 %2810
    %s2813 = scalar_lea.vmem [#allocation4], 24
    %2814 = vst.msk [vmem:[%s2813] sm:$0xff] %vm123, %v2811
    %v2815 = vld [vmem:[%s684] sm:$0xff]
    %v2816 = vsel %vm123, %v2811, 0
    %2818 = vmatprep.subr.mxu0 0.0
    %2819 = vmatpush1.msra.mxu0 0.0
    %2820 = vmatprep.subr.mxu0 0.0
    %2821 = vmatpush1.msra.mxu0 0.0
    %2822 = vmatprep.subr.mxu0 0.0
    %2823 = vmatpush1.msra.mxu0 0.0
    %2824 = vmatprep.subr.mxu0 0.0
    %2825 = vmatpush1.msra.mxu0 0.0
    %2826 = vmatprep.subr.mxu0 0.0
    %2827 = vmatpush1.msra.mxu0 0.0
    %2828 = vmatprep.subr.mxu0 0.0
    %2829 = vmatpush1.msra.mxu0 0.0
    %2830 = vmatprep.subr.mxu0 0.0
    %2831 = vmatpush1.msra.mxu0 0.0
    %2832 = vmatprep.subr.mxu0 0.0
    %2833 = vmatpush1.msra.mxu0 0.0
    %2834 = vmatprep.subr.mxu0 0.0
    %2835 = vmatpush1.msra.mxu0 0.0
    %2836 = vmatprep.subr.mxu0 0.0
    %2837 = vmatpush1.msra.mxu0 0.0
    %2838 = vmatprep.subr.mxu0 0.0
    %2839 = vmatpush1.msra.mxu0 0.0
    %2840 = vmatprep.subr.mxu0 0.0
    %2841 = vmatpush1.msra.mxu0 0.0
    %2842 = vmatprep.subr.mxu0 0.0
    %2843 = vmatpush1.msra.mxu0 %v2401
    %2844 = vmatprep.subr.mxu0 0.0
    %2845 = vmatpush1.msra.mxu0 %v2400
    %2846 = vmatprep.subr.mxu0 0.0
    %2847 = vmatpush1.msra.mxu0 %v2399
    %2848 = vmatprep.subr.mxu0 0.0
    %2849 = vmatpush1.msra.mxu0 %v2398
    %2850 = vmatprep.subr.mxu0 0.0
    %2851 = vmatpush2.msra.mxu0 0.0
    %2852 = vmatprep.subr.mxu0 0.0
    %2853 = vmatpush2.msra.mxu0 0.0
    %2854 = vmatprep.subr.mxu0 0.0
    %2855 = vmatpush2.msra.mxu0 0.0
    %2856 = vmatprep.subr.mxu0 0.0
    %2857 = vmatpush2.msra.mxu0 0.0
    %2858 = vmatprep.subr.mxu0 0.0
    %2859 = vmatpush2.msra.mxu0 0.0
    %2860 = vmatprep.subr.mxu0 0.0
    %2861 = vmatpush2.msra.mxu0 0.0
    %2862 = vmatprep.subr.mxu0 0.0
    %2863 = vmatpush2.msra.mxu0 0.0
    %2864 = vmatprep.subr.mxu0 0.0
    %2865 = vmatpush2.msra.mxu0 0.0
    %2866 = vmatprep.subr.mxu0 0.0
    %2867 = vmatpush2.msra.mxu0 0.0
    %2868 = vmatprep.subr.mxu0 0.0
    %2869 = vmatpush2.msra.mxu0 0.0
    %2870 = vmatprep.subr.mxu0 0.0
    %2871 = vmatpush2.msra.mxu0 0.0
    %2872 = vmatprep.subr.mxu0 0.0
    %2873 = vmatpush2.msra.mxu0 0.0
    %2874 = vmatprep.subr.mxu0 0.0
    %2875 = vmatpush2.msra.mxu0 0.0
    %2876 = vmatprep.subr.mxu0 0.0
    %2877 = vmatpush2.msra.mxu0 0.0
    %2878 = vmatprep.subr.mxu0 0.0
    %2879 = vmatpush2.msra.mxu0 0.0
    %2880 = vmatprep.subr.mxu0 0.0
    %2881 = vmatpush2.msra.mxu0 0.0
    %2882 = vmatprep.mubr.f32.mxu0 0.0
    %2883 = vmatmul.mubr.f32.gmra.mxu0 %v2816
    %v2884 = vpop.f32.mrf.mxu0
    %v2885 = vadd.f32 0.0, %v2884
    %v2886 = vpop.f32.mrf.mxu0
    %2887 = vdwg.mxu0
    %v2888 = vadd.f32 %v2815, %v2885
    %v2889 = vxor.u32 %v2888, 2147483648
    %v2890 = vmul.f32 %v2889, 1.442695
    %v2891 = vpow.pop %v2890
    %v2892 = vadd.f32 %v2891, 1.0
    %v2893 = vrcp.pop %v2892
    %v2894 = vmul.f32 1.0, %v2893
    %v2895 = vtanh.pop %v2888
    %v2896 = vmul.f32 %v2894, %v2802
    %2898 = vrot.lane.b32.xlu0 %v2895, 64
    %v2899 = vpop.permute.xlu0 %2898
    %v2901 = vmul.f32 %v2894, %v2899
    %2903 = vrot.lane.b32.xlu0 %v2901, 32
    %v2904 = vpop.permute.xlu0 %2903
    %v2906 = vadd.f32 %v2896, %v2904
    %v2907 = vtanh.pop %v2906
    %2909 = vrot.lane.b32.xlu0 %v2907, 64
    %v2910 = vpop.permute.xlu0 %2909
    %v2912 = vmul.f32 %v2894, %v2910
    %2914 = vrot.lane.b32.xlu0 %v2912, 32
    %v2915 = vpop.permute.xlu0 %2914
    %s2917 = scalar_lea.vmem [#allocation4], 32
    %2918 = vst.msk [vmem:[%s2917] sm:$0xff] %vm123, %v2915
    %v2919 = vld [vmem:[%s789] sm:$0xff]
    %v2920 = vsel %vm123, %v2915, 0
    %2922 = vmatprep.subr.mxu0 0.0
    %2923 = vmatpush1.msra.mxu0 0.0
    %2924 = vmatprep.subr.mxu0 0.0
    %2925 = vmatpush1.msra.mxu0 0.0
    %2926 = vmatprep.subr.mxu0 0.0
    %2927 = vmatpush1.msra.mxu0 0.0
    %2928 = vmatprep.subr.mxu0 0.0
    %2929 = vmatpush1.msra.mxu0 0.0
    %2930 = vmatprep.subr.mxu0 0.0
    %2931 = vmatpush1.msra.mxu0 0.0
    %2932 = vmatprep.subr.mxu0 0.0
    %2933 = vmatpush1.msra.mxu0 0.0
    %2934 = vmatprep.subr.mxu0 0.0
    %2935 = vmatpush1.msra.mxu0 0.0
    %2936 = vmatprep.subr.mxu0 0.0
    %2937 = vmatpush1.msra.mxu0 0.0
    %2938 = vmatprep.subr.mxu0 0.0
    %2939 = vmatpush1.msra.mxu0 0.0
    %2940 = vmatprep.subr.mxu0 0.0
    %2941 = vmatpush1.msra.mxu0 0.0
    %2942 = vmatprep.subr.mxu0 0.0
    %2943 = vmatpush1.msra.mxu0 0.0
    %2944 = vmatprep.subr.mxu0 0.0
    %2945 = vmatpush1.msra.mxu0 0.0
    %2946 = vmatprep.subr.mxu0 0.0
    %2947 = vmatpush1.msra.mxu0 %v2401
    %2948 = vmatprep.subr.mxu0 0.0
    %2949 = vmatpush1.msra.mxu0 %v2400
    %2950 = vmatprep.subr.mxu0 0.0
    %2951 = vmatpush1.msra.mxu0 %v2399
    %2952 = vmatprep.subr.mxu0 0.0
    %2953 = vmatpush1.msra.mxu0 %v2398
    %2954 = vmatprep.subr.mxu0 0.0
    %2955 = vmatpush2.msra.mxu0 0.0
    %2956 = vmatprep.subr.mxu0 0.0
    %2957 = vmatpush2.msra.mxu0 0.0
    %2958 = vmatprep.subr.mxu0 0.0
    %2959 = vmatpush2.msra.mxu0 0.0
    %2960 = vmatprep.subr.mxu0 0.0
    %2961 = vmatpush2.msra.mxu0 0.0
    %2962 = vmatprep.subr.mxu0 0.0
    %2963 = vmatpush2.msra.mxu0 0.0
    %2964 = vmatprep.subr.mxu0 0.0
    %2965 = vmatpush2.msra.mxu0 0.0
    %2966 = vmatprep.subr.mxu0 0.0
    %2967 = vmatpush2.msra.mxu0 0.0
    %2968 = vmatprep.subr.mxu0 0.0
    %2969 = vmatpush2.msra.mxu0 0.0
    %2970 = vmatprep.subr.mxu0 0.0
    %2971 = vmatpush2.msra.mxu0 0.0
    %2972 = vmatprep.subr.mxu0 0.0
    %2973 = vmatpush2.msra.mxu0 0.0
    %2974 = vmatprep.subr.mxu0 0.0
    %2975 = vmatpush2.msra.mxu0 0.0
    %2976 = vmatprep.subr.mxu0 0.0
    %2977 = vmatpush2.msra.mxu0 0.0
    %2978 = vmatprep.subr.mxu0 0.0
    %2979 = vmatpush2.msra.mxu0 0.0
    %2980 = vmatprep.subr.mxu0 0.0
    %2981 = vmatpush2.msra.mxu0 0.0
    %2982 = vmatprep.subr.mxu0 0.0
    %2983 = vmatpush2.msra.mxu0 0.0
    %2984 = vmatprep.subr.mxu0 0.0
    %2985 = vmatpush2.msra.mxu0 0.0
    %2986 = vmatprep.mubr.f32.mxu0 0.0
    %2987 = vmatmul.mubr.f32.gmra.mxu0 %v2920
    %v2988 = vpop.f32.mrf.mxu0
    %v2989 = vadd.f32 0.0, %v2988
    %v2990 = vpop.f32.mrf.mxu0
    %2991 = vdwg.mxu0
    %v2992 = vadd.f32 %v2919, %v2989
    %v2993 = vxor.u32 %v2992, 2147483648
    %v2994 = vmul.f32 %v2993, 1.442695
    %v2995 = vpow.pop %v2994
    %v2996 = vadd.f32 %v2995, 1.0
    %v2997 = vrcp.pop %v2996
    %v2998 = vmul.f32 1.0, %v2997
    %v2999 = vtanh.pop %v2992
    %v3000 = vmul.f32 %v2998, %v2906
    %3002 = vrot.lane.b32.xlu0 %v2999, 64
    %v3003 = vpop.permute.xlu0 %3002
    %v3005 = vmul.f32 %v2998, %v3003
    %3007 = vrot.lane.b32.xlu0 %v3005, 32
    %v3008 = vpop.permute.xlu0 %3007
    %v3010 = vadd.f32 %v3000, %v3008
    %v3011 = vtanh.pop %v3010
    %3013 = vrot.lane.b32.xlu0 %v3011, 64
    %v3014 = vpop.permute.xlu0 %3013
    %v3016 = vmul.f32 %v2998, %v3014
    %3018 = vrot.lane.b32.xlu0 %v3016, 32
    %v3019 = vpop.permute.xlu0 %3018
    %s3021 = scalar_lea.vmem [#allocation4], 40
    %3022 = vst.msk [vmem:[%s3021] sm:$0xff] %vm123, %v3019
    %v3023 = vld [vmem:[%s894] sm:$0xff]
    %v3024 = vsel %vm123, %v3019, 0
    %3026 = vmatprep.subr.mxu0 0.0
    %3027 = vmatpush1.msra.mxu0 0.0
    %3028 = vmatprep.subr.mxu0 0.0
    %3029 = vmatpush1.msra.mxu0 0.0
    %3030 = vmatprep.subr.mxu0 0.0
    %3031 = vmatpush1.msra.mxu0 0.0
    %3032 = vmatprep.subr.mxu0 0.0
    %3033 = vmatpush1.msra.mxu0 0.0
    %3034 = vmatprep.subr.mxu0 0.0
    %3035 = vmatpush1.msra.mxu0 0.0
    %3036 = vmatprep.subr.mxu0 0.0
    %3037 = vmatpush1.msra.mxu0 0.0
    %3038 = vmatprep.subr.mxu0 0.0
    %3039 = vmatpush1.msra.mxu0 0.0
    %3040 = vmatprep.subr.mxu0 0.0
    %3041 = vmatpush1.msra.mxu0 0.0
    %3042 = vmatprep.subr.mxu0 0.0
    %3043 = vmatpush1.msra.mxu0 0.0
    %3044 = vmatprep.subr.mxu0 0.0
    %3045 = vmatpush1.msra.mxu0 0.0
    %3046 = vmatprep.subr.mxu0 0.0
    %3047 = vmatpush1.msra.mxu0 0.0
    %3048 = vmatprep.subr.mxu0 0.0
    %3049 = vmatpush1.msra.mxu0 0.0
    %3050 = vmatprep.subr.mxu0 0.0
    %3051 = vmatpush1.msra.mxu0 %v2401
    %3052 = vmatprep.subr.mxu0 0.0
    %3053 = vmatpush1.msra.mxu0 %v2400
    %3054 = vmatprep.subr.mxu0 0.0
    %3055 = vmatpush1.msra.mxu0 %v2399
    %3056 = vmatprep.subr.mxu0 0.0
    %3057 = vmatpush1.msra.mxu0 %v2398
    %3058 = vmatprep.subr.mxu0 0.0
    %3059 = vmatpush2.msra.mxu0 0.0
    %3060 = vmatprep.subr.mxu0 0.0
    %3061 = vmatpush2.msra.mxu0 0.0
    %3062 = vmatprep.subr.mxu0 0.0
    %3063 = vmatpush2.msra.mxu0 0.0
    %3064 = vmatprep.subr.mxu0 0.0
    %3065 = vmatpush2.msra.mxu0 0.0
    %3066 = vmatprep.subr.mxu0 0.0
    %3067 = vmatpush2.msra.mxu0 0.0
    %3068 = vmatprep.subr.mxu0 0.0
    %3069 = vmatpush2.msra.mxu0 0.0
    %3070 = vmatprep.subr.mxu0 0.0
    %3071 = vmatpush2.msra.mxu0 0.0
    %3072 = vmatprep.subr.mxu0 0.0
    %3073 = vmatpush2.msra.mxu0 0.0
    %3074 = vmatprep.subr.mxu0 0.0
    %3075 = vmatpush2.msra.mxu0 0.0
    %3076 = vmatprep.subr.mxu0 0.0
    %3077 = vmatpush2.msra.mxu0 0.0
    %3078 = vmatprep.subr.mxu0 0.0
    %3079 = vmatpush2.msra.mxu0 0.0
    %3080 = vmatprep.subr.mxu0 0.0
    %3081 = vmatpush2.msra.mxu0 0.0
    %3082 = vmatprep.subr.mxu0 0.0
    %3083 = vmatpush2.msra.mxu0 0.0
    %3084 = vmatprep.subr.mxu0 0.0
    %3085 = vmatpush2.msra.mxu0 0.0
    %3086 = vmatprep.subr.mxu0 0.0
    %3087 = vmatpush2.msra.mxu0 0.0
    %3088 = vmatprep.subr.mxu0 0.0
    %3089 = vmatpush2.msra.mxu0 0.0
    %3090 = vmatprep.mubr.f32.mxu0 0.0
    %3091 = vmatmul.mubr.f32.gmra.mxu0 %v3024
    %v3092 = vpop.f32.mrf.mxu0
    %v3093 = vadd.f32 0.0, %v3092
    %v3094 = vpop.f32.mrf.mxu0
    %3095 = vdwg.mxu0
    %v3096 = vadd.f32 %v3023, %v3093
    %v3097 = vxor.u32 %v3096, 2147483648
    %v3098 = vmul.f32 %v3097, 1.442695
    %v3099 = vpow.pop %v3098
    %v3100 = vadd.f32 %v3099, 1.0
    %v3101 = vrcp.pop %v3100
    %v3102 = vmul.f32 1.0, %v3101
    %v3103 = vtanh.pop %v3096
    %v3104 = vmul.f32 %v3102, %v3010
    %3106 = vrot.lane.b32.xlu0 %v3103, 64
    %v3107 = vpop.permute.xlu0 %3106
    %v3109 = vmul.f32 %v3102, %v3107
    %3111 = vrot.lane.b32.xlu0 %v3109, 32
    %v3112 = vpop.permute.xlu0 %3111
    %v3114 = vadd.f32 %v3104, %v3112
    %v3115 = vtanh.pop %v3114
    %3117 = vrot.lane.b32.xlu0 %v3115, 64
    %v3118 = vpop.permute.xlu0 %3117
    %v3120 = vmul.f32 %v3102, %v3118
    %3122 = vrot.lane.b32.xlu0 %v3120, 32
    %v3123 = vpop.permute.xlu0 %3122
    %s3125 = scalar_lea.vmem [#allocation4], 48
    %3126 = vst.msk [vmem:[%s3125] sm:$0xff] %vm123, %v3123
    %v3127 = vld [vmem:[%s999] sm:$0xff]
    %v3128 = vsel %vm123, %v3123, 0
    %3130 = vmatprep.subr.mxu0 0.0
    %3131 = vmatpush1.msra.mxu0 0.0
    %3132 = vmatprep.subr.mxu0 0.0
    %3133 = vmatpush1.msra.mxu0 0.0
    %3134 = vmatprep.subr.mxu0 0.0
    %3135 = vmatpush1.msra.mxu0 0.0
    %3136 = vmatprep.subr.mxu0 0.0
    %3137 = vmatpush1.msra.mxu0 0.0
    %3138 = vmatprep.subr.mxu0 0.0
    %3139 = vmatpush1.msra.mxu0 0.0
    %3140 = vmatprep.subr.mxu0 0.0
    %3141 = vmatpush1.msra.mxu0 0.0
    %3142 = vmatprep.subr.mxu0 0.0
    %3143 = vmatpush1.msra.mxu0 0.0
    %3144 = vmatprep.subr.mxu0 0.0
    %3145 = vmatpush1.msra.mxu0 0.0
    %3146 = vmatprep.subr.mxu0 0.0
    %3147 = vmatpush1.msra.mxu0 0.0
    %3148 = vmatprep.subr.mxu0 0.0
    %3149 = vmatpush1.msra.mxu0 0.0
    %3150 = vmatprep.subr.mxu0 0.0
    %3151 = vmatpush1.msra.mxu0 0.0
    %3152 = vmatprep.subr.mxu0 0.0
    %3153 = vmatpush1.msra.mxu0 0.0
    %3154 = vmatprep.subr.mxu0 0.0
    %3155 = vmatpush1.msra.mxu0 %v2401
    %3156 = vmatprep.subr.mxu0 0.0
    %3157 = vmatpush1.msra.mxu0 %v2400
    %3158 = vmatprep.subr.mxu0 0.0
    %3159 = vmatpush1.msra.mxu0 %v2399
    %3160 = vmatprep.subr.mxu0 0.0
    %3161 = vmatpush1.msra.mxu0 %v2398
    %3162 = vmatprep.subr.mxu0 0.0
    %3163 = vmatpush2.msra.mxu0 0.0
    %3164 = vmatprep.subr.mxu0 0.0
    %3165 = vmatpush2.msra.mxu0 0.0
    %3166 = vmatprep.subr.mxu0 0.0
    %3167 = vmatpush2.msra.mxu0 0.0
    %3168 = vmatprep.subr.mxu0 0.0
    %3169 = vmatpush2.msra.mxu0 0.0
    %3170 = vmatprep.subr.mxu0 0.0
    %3171 = vmatpush2.msra.mxu0 0.0
    %3172 = vmatprep.subr.mxu0 0.0
    %3173 = vmatpush2.msra.mxu0 0.0
    %3174 = vmatprep.subr.mxu0 0.0
    %3175 = vmatpush2.msra.mxu0 0.0
    %3176 = vmatprep.subr.mxu0 0.0
    %3177 = vmatpush2.msra.mxu0 0.0
    %3178 = vmatprep.subr.mxu0 0.0
    %3179 = vmatpush2.msra.mxu0 0.0
    %3180 = vmatprep.subr.mxu0 0.0
    %3181 = vmatpush2.msra.mxu0 0.0
    %3182 = vmatprep.subr.mxu0 0.0
    %3183 = vmatpush2.msra.mxu0 0.0
    %3184 = vmatprep.subr.mxu0 0.0
    %3185 = vmatpush2.msra.mxu0 0.0
    %3186 = vmatprep.subr.mxu0 0.0
    %3187 = vmatpush2.msra.mxu0 0.0
    %3188 = vmatprep.subr.mxu0 0.0
    %3189 = vmatpush2.msra.mxu0 0.0
    %3190 = vmatprep.subr.mxu0 0.0
    %3191 = vmatpush2.msra.mxu0 0.0
    %3192 = vmatprep.subr.mxu0 0.0
    %3193 = vmatpush2.msra.mxu0 0.0
    %3194 = vmatprep.mubr.f32.mxu0 0.0
    %3195 = vmatmul.mubr.f32.gmra.mxu0 %v3128
    %v3196 = vpop.f32.mrf.mxu0
    %v3197 = vadd.f32 0.0, %v3196
    %v3198 = vpop.f32.mrf.mxu0
    %3199 = vdwg.mxu0
    %v3200 = vadd.f32 %v3127, %v3197
    %v3201 = vxor.u32 %v3200, 2147483648
    %v3202 = vmul.f32 %v3201, 1.442695
    %v3203 = vpow.pop %v3202
    %v3204 = vadd.f32 %v3203, 1.0
    %v3205 = vrcp.pop %v3204
    %v3206 = vmul.f32 1.0, %v3205
    %v3207 = vtanh.pop %v3200
    %v3208 = vmul.f32 %v3206, %v3114
    %3210 = vrot.lane.b32.xlu0 %v3207, 64
    %v3211 = vpop.permute.xlu0 %3210
    %v3213 = vmul.f32 %v3206, %v3211
    %3215 = vrot.lane.b32.xlu0 %v3213, 32
    %v3216 = vpop.permute.xlu0 %3215
    %v3218 = vadd.f32 %v3208, %v3216
    %v3219 = vtanh.pop %v3218
    %3221 = vrot.lane.b32.xlu0 %v3219, 64
    %v3222 = vpop.permute.xlu0 %3221
    %v3224 = vmul.f32 %v3206, %v3222
    %3226 = vrot.lane.b32.xlu0 %v3224, 32
    %v3227 = vpop.permute.xlu0 %3226
    %s3229 = scalar_lea.vmem [#allocation4], 56
    %3230 = vst.msk [vmem:[%s3229] sm:$0xff] %vm123, %v3227
    %v3231 = vld [vmem:[%s10] sm:$0xff]
    %v3232 = vld [vmem:[%s10 + $0x8] sm:$0xff]
    %v3233 = vld [vmem:[%s10 + $0x10] sm:$0xff]
    %v3234 = vld [vmem:[%s10 + $0x18] sm:$0xff]
    %v3235 = vld [vmem:[%s10 + $0x20] sm:$0xff]
    %v3236 = vld [vmem:[%s10 + $0x28] sm:$0xff]
    %v3237 = vld [vmem:[%s10 + $0x30] sm:$0xff]
    %v3238 = vld [vmem:[%s10 + $0x38] sm:$0xff]
    %v3239 = vld [vmem:[#allocation2] sm:$0xff]
    %v3240 = vld [vmem:[#allocation2 + $0x8] sm:$0xff]
    %v3241 = vld [vmem:[#allocation2 + $0x10] sm:$0xff]
    %v3242 = vld [vmem:[#allocation2 + $0x18] sm:$0xff]
    %v3243 = vld [vmem:[#allocation2 + $0x20] sm:$0xff]
    %v3244 = vld [vmem:[#allocation2 + $0x28] sm:$0xff]
    %v3245 = vld [vmem:[#allocation2 + $0x30] sm:$0xff]
    %v3246 = vld [vmem:[#allocation2 + $0x38] sm:$0xff]
    %v3247 = vld [vmem:[#allocation3] sm:$0xff]
    %v3248 = vld [vmem:[#allocation3 + $0x8] sm:$0xff]
    %v3249 = vld [vmem:[#allocation3 + $0x10] sm:$0xff]
    %v3250 = vld [vmem:[#allocation3 + $0x18] sm:$0xff]
    %v3251 = vld [vmem:[#allocation3 + $0x20] sm:$0xff]
    %v3252 = vld [vmem:[#allocation3 + $0x28] sm:$0xff]
    %v3253 = vld [vmem:[#allocation3 + $0x30] sm:$0xff]
    %v3254 = vld [vmem:[#allocation3 + $0x38] sm:$0xff]
    %v3256 = vsel %vm123, %v3247, 0
    %v3259 = vsel %vm123, %v3248, 0
    %v3262 = vsel %vm123, %v3249, 0
    %v3265 = vsel %vm123, %v3250, 0
    %v3268 = vsel %vm123, %v3251, 0
    %v3271 = vsel %vm123, %v3252, 0
    %v3274 = vsel %vm123, %v3253, 0
    %v3277 = vsel %vm123, %v3254, 0
    %3279 = vmatprep.subr.mxu0 0.0
    %3280 = vmatpush1.msra.mxu0 0.0
    %3281 = vmatprep.subr.mxu0 0.0
    %3282 = vmatpush1.msra.mxu0 0.0
    %3283 = vmatprep.subr.mxu0 0.0
    %3284 = vmatpush1.msra.mxu0 0.0
    %3285 = vmatprep.subr.mxu0 0.0
    %3286 = vmatpush1.msra.mxu0 0.0
    %3287 = vmatprep.subr.mxu0 0.0
    %3288 = vmatpush1.msra.mxu0 0.0
    %3289 = vmatprep.subr.mxu0 0.0
    %3290 = vmatpush1.msra.mxu0 0.0
    %3291 = vmatprep.subr.mxu0 0.0
    %3292 = vmatpush1.msra.mxu0 0.0
    %3293 = vmatprep.subr.mxu0 0.0
    %3294 = vmatpush1.msra.mxu0 0.0
    %3295 = vmatprep.subr.mxu0 0.0
    %3296 = vmatpush1.msra.mxu0 0.0
    %3297 = vmatprep.subr.mxu0 0.0
    %3298 = vmatpush1.msra.mxu0 0.0
    %3299 = vmatprep.subr.mxu0 0.0
    %3300 = vmatpush1.msra.mxu0 0.0
    %3301 = vmatprep.subr.mxu0 0.0
    %3302 = vmatpush1.msra.mxu0 0.0
    %3303 = vmatprep.subr.mxu0 0.0
    %3304 = vmatpush1.msra.mxu0 %v3238
    %3305 = vmatprep.subr.mxu0 0.0
    %3306 = vmatpush1.msra.mxu0 %v3237
    %3307 = vmatprep.subr.mxu0 0.0
    %3308 = vmatpush1.msra.mxu0 %v3236
    %3309 = vmatprep.subr.mxu0 0.0
    %3310 = vmatpush1.msra.mxu0 %v3235
    %3311 = vmatprep.subr.mxu0 0.0
    %3312 = vmatpush2.msra.mxu0 0.0
    %3313 = vmatprep.subr.mxu0 0.0
    %3314 = vmatpush2.msra.mxu0 0.0
    %3315 = vmatprep.subr.mxu0 0.0
    %3316 = vmatpush2.msra.mxu0 0.0
    %3317 = vmatprep.subr.mxu0 0.0
    %3318 = vmatpush2.msra.mxu0 0.0
    %3319 = vmatprep.subr.mxu0 0.0
    %3320 = vmatpush2.msra.mxu0 0.0
    %3321 = vmatprep.subr.mxu0 0.0
    %3322 = vmatpush2.msra.mxu0 0.0
    %3323 = vmatprep.subr.mxu0 0.0
    %3324 = vmatpush2.msra.mxu0 0.0
    %3325 = vmatprep.subr.mxu0 0.0
    %3326 = vmatpush2.msra.mxu0 0.0
    %3327 = vmatprep.subr.mxu0 0.0
    %3328 = vmatpush2.msra.mxu0 0.0
    %3329 = vmatprep.subr.mxu0 0.0
    %3330 = vmatpush2.msra.mxu0 0.0
    %3331 = vmatprep.subr.mxu0 0.0
    %3332 = vmatpush2.msra.mxu0 0.0
    %3333 = vmatprep.subr.mxu0 0.0
    %3334 = vmatpush2.msra.mxu0 0.0
    %3335 = vmatprep.subr.mxu0 0.0
    %3336 = vmatpush2.msra.mxu0 0.0
    %3337 = vmatprep.subr.mxu0 0.0
    %3338 = vmatpush2.msra.mxu0 0.0
    %3339 = vmatprep.subr.mxu0 0.0
    %3340 = vmatpush2.msra.mxu0 0.0
    %3341 = vmatprep.subr.mxu0 0.0
    %3342 = vmatpush2.msra.mxu0 0.0
    %3343 = vmatprep.mubr.f32.mxu0 0.0
    %3344 = vmatmul.mubr.f32.gmra.mxu0 %v3256
    %v3345 = vpop.f32.mrf.mxu0
    %v3346 = vadd.f32 0.0, %v3345
    %v3347 = vpop.f32.mrf.mxu0
    %3348 = vmatprep.mubr.f32.mxu0 0.0
    %3349 = vmatmul.mubr.f32.gmra.mxu0 %v3259
    %v3350 = vpop.f32.mrf.mxu0
    %v3351 = vadd.f32 0.0, %v3350
    %v3352 = vpop.f32.mrf.mxu0
    %3353 = vmatprep.mubr.f32.mxu0 0.0
    %3354 = vmatmul.mubr.f32.gmra.mxu0 %v3262
    %v3355 = vpop.f32.mrf.mxu0
    %v3356 = vadd.f32 0.0, %v3355
    %v3357 = vpop.f32.mrf.mxu0
    %3358 = vmatprep.mubr.f32.mxu0 0.0
    %3359 = vmatmul.mubr.f32.gmra.mxu0 %v3265
    %v3360 = vpop.f32.mrf.mxu0
    %v3361 = vadd.f32 0.0, %v3360
    %v3362 = vpop.f32.mrf.mxu0
    %3363 = vmatprep.mubr.f32.mxu0 0.0
    %3364 = vmatmul.mubr.f32.gmra.mxu0 %v3268
    %v3365 = vpop.f32.mrf.mxu0
    %v3366 = vadd.f32 0.0, %v3365
    %v3367 = vpop.f32.mrf.mxu0
    %3368 = vmatprep.mubr.f32.mxu0 0.0
    %3369 = vmatmul.mubr.f32.gmra.mxu0 %v3271
    %v3370 = vpop.f32.mrf.mxu0
    %v3371 = vadd.f32 0.0, %v3370
    %v3372 = vpop.f32.mrf.mxu0
    %3373 = vmatprep.mubr.f32.mxu0 0.0
    %3374 = vmatmul.mubr.f32.gmra.mxu0 %v3274
    %v3375 = vpop.f32.mrf.mxu0
    %v3376 = vadd.f32 0.0, %v3375
    %v3377 = vpop.f32.mrf.mxu0
    %3378 = vmatprep.mubr.f32.mxu0 0.0
    %3379 = vmatmul.mubr.f32.gmra.mxu0 %v3277
    %v3380 = vpop.f32.mrf.mxu0
    %v3381 = vadd.f32 0.0, %v3380
    %v3382 = vpop.f32.mrf.mxu0
    %3383 = vdwg.mxu0
    %v3385 = vsel %vm123, %v3239, 0
    %v3388 = vsel %vm123, %v3240, 0
    %v3391 = vsel %vm123, %v3241, 0
    %v3394 = vsel %vm123, %v3242, 0
    %v3397 = vsel %vm123, %v3243, 0
    %v3400 = vsel %vm123, %v3244, 0
    %v3403 = vsel %vm123, %v3245, 0
    %v3406 = vsel %vm123, %v3246, 0
    %3408 = vmatprep.subr.mxu0 0.0
    %3409 = vmatpush1.msra.mxu0 0.0
    %3410 = vmatprep.subr.mxu0 0.0
    %3411 = vmatpush1.msra.mxu0 0.0
    %3412 = vmatprep.subr.mxu0 0.0
    %3413 = vmatpush1.msra.mxu0 0.0
    %3414 = vmatprep.subr.mxu0 0.0
    %3415 = vmatpush1.msra.mxu0 0.0
    %3416 = vmatprep.subr.mxu0 0.0
    %3417 = vmatpush1.msra.mxu0 0.0
    %3418 = vmatprep.subr.mxu0 0.0
    %3419 = vmatpush1.msra.mxu0 0.0
    %3420 = vmatprep.subr.mxu0 0.0
    %3421 = vmatpush1.msra.mxu0 0.0
    %3422 = vmatprep.subr.mxu0 0.0
    %3423 = vmatpush1.msra.mxu0 0.0
    %3424 = vmatprep.subr.mxu0 0.0
    %3425 = vmatpush1.msra.mxu0 0.0
    %3426 = vmatprep.subr.mxu0 0.0
    %3427 = vmatpush1.msra.mxu0 0.0
    %3428 = vmatprep.subr.mxu0 0.0
    %3429 = vmatpush1.msra.mxu0 0.0
    %3430 = vmatprep.subr.mxu0 0.0
    %3431 = vmatpush1.msra.mxu0 0.0
    %3432 = vmatprep.subr.mxu0 0.0
    %3433 = vmatpush1.msra.mxu0 %v3234
    %3434 = vmatprep.subr.mxu0 0.0
    %3435 = vmatpush1.msra.mxu0 %v3233
    %3436 = vmatprep.subr.mxu0 0.0
    %3437 = vmatpush1.msra.mxu0 %v3232
    %3438 = vmatprep.subr.mxu0 0.0
    %3439 = vmatpush1.msra.mxu0 %v3231
    %3440 = vmatprep.subr.mxu0 0.0
    %3441 = vmatpush2.msra.mxu0 0.0
    %3442 = vmatprep.subr.mxu0 0.0
    %3443 = vmatpush2.msra.mxu0 0.0
    %3444 = vmatprep.subr.mxu0 0.0
    %3445 = vmatpush2.msra.mxu0 0.0
    %3446 = vmatprep.subr.mxu0 0.0
    %3447 = vmatpush2.msra.mxu0 0.0
    %3448 = vmatprep.subr.mxu0 0.0
    %3449 = vmatpush2.msra.mxu0 0.0
    %3450 = vmatprep.subr.mxu0 0.0
    %3451 = vmatpush2.msra.mxu0 0.0
    %3452 = vmatprep.subr.mxu0 0.0
    %3453 = vmatpush2.msra.mxu0 0.0
    %3454 = vmatprep.subr.mxu0 0.0
    %3455 = vmatpush2.msra.mxu0 0.0
    %3456 = vmatprep.subr.mxu0 0.0
    %3457 = vmatpush2.msra.mxu0 0.0
    %3458 = vmatprep.subr.mxu0 0.0
    %3459 = vmatpush2.msra.mxu0 0.0
    %3460 = vmatprep.subr.mxu0 0.0
    %3461 = vmatpush2.msra.mxu0 0.0
    %3462 = vmatprep.subr.mxu0 0.0
    %3463 = vmatpush2.msra.mxu0 0.0
    %3464 = vmatprep.subr.mxu0 0.0
    %3465 = vmatpush2.msra.mxu0 0.0
    %3466 = vmatprep.subr.mxu0 0.0
    %3467 = vmatpush2.msra.mxu0 0.0
    %3468 = vmatprep.subr.mxu0 0.0
    %3469 = vmatpush2.msra.mxu0 0.0
    %3470 = vmatprep.subr.mxu0 0.0
    %3471 = vmatpush2.msra.mxu0 0.0
    %3472 = vmatprep.mubr.f32.mxu0 0.0
    %3473 = vmatmul.mubr.f32.gmra.mxu0 %v3385
    %v3474 = vpop.f32.mrf.mxu0
    %v3475 = vadd.f32 %v3346, %v3474
    %v3476 = vpop.f32.mrf.mxu0
    %3477 = vmatprep.mubr.f32.mxu0 0.0
    %3478 = vmatmul.mubr.f32.gmra.mxu0 %v3388
    %v3479 = vpop.f32.mrf.mxu0
    %v3480 = vadd.f32 %v3351, %v3479
    %v3481 = vpop.f32.mrf.mxu0
    %3482 = vmatprep.mubr.f32.mxu0 0.0
    %3483 = vmatmul.mubr.f32.gmra.mxu0 %v3391
    %v3484 = vpop.f32.mrf.mxu0
    %v3485 = vadd.f32 %v3356, %v3484
    %v3486 = vpop.f32.mrf.mxu0
    %3487 = vmatprep.mubr.f32.mxu0 0.0
    %3488 = vmatmul.mubr.f32.gmra.mxu0 %v3394
    %v3489 = vpop.f32.mrf.mxu0
    %v3490 = vadd.f32 %v3361, %v3489
    %v3491 = vpop.f32.mrf.mxu0
    %3492 = vmatprep.mubr.f32.mxu0 0.0
    %3493 = vmatmul.mubr.f32.gmra.mxu0 %v3397
    %v3494 = vpop.f32.mrf.mxu0
    %v3495 = vadd.f32 %v3366, %v3494
    %v3496 = vpop.f32.mrf.mxu0
    %3497 = vmatprep.mubr.f32.mxu0 0.0
    %3498 = vmatmul.mubr.f32.gmra.mxu0 %v3400
    %v3499 = vpop.f32.mrf.mxu0
    %v3500 = vadd.f32 %v3371, %v3499
    %v3501 = vpop.f32.mrf.mxu0
    %3502 = vmatprep.mubr.f32.mxu0 0.0
    %3503 = vmatmul.mubr.f32.gmra.mxu0 %v3403
    %v3504 = vpop.f32.mrf.mxu0
    %v3505 = vadd.f32 %v3376, %v3504
    %v3506 = vpop.f32.mrf.mxu0
    %3507 = vmatprep.mubr.f32.mxu0 0.0
    %3508 = vmatmul.mubr.f32.gmra.mxu0 %v3406
    %v3509 = vpop.f32.mrf.mxu0
    %v3510 = vadd.f32 %v3381, %v3509
    %v3511 = vpop.f32.mrf.mxu0
    %3512 = vdwg.mxu0
    %v3513 = vld [vmem:[#allocation12] sm:$0x1]
    %v3515 = vlaneseq
    %v3516 = vshrl.u32 %v3515, 7
    %v3517 = vsub.s32 0, %v3516
    %v3518 = vrot.slane %v3513, %v3517
    %v3520 = vadd.f32 %v3475, %v3518
    %v3521 = vadd.f32 %v3480, %v3518
    %v3522 = vadd.f32 %v3485, %v3518
    %v3523 = vadd.f32 %v3490, %v3518
    %v3524 = vadd.f32 %v3495, %v3518
    %v3525 = vadd.f32 %v3500, %v3518
    %v3526 = vadd.f32 %v3505, %v3518
    %v3527 = vadd.f32 %v3510, %v3518
    %3528 = vst [vmem:[#allocation6] sm:$0xff] %v3520
    %3529 = vst [vmem:[#allocation6 + $0x8] sm:$0xff] %v3521
    %3530 = vst [vmem:[#allocation6 + $0x10] sm:$0xff] %v3522
    %3531 = vst [vmem:[#allocation6 + $0x18] sm:$0xff] %v3523
    %3532 = vst [vmem:[#allocation6 + $0x20] sm:$0xff] %v3524
    %3533 = vst [vmem:[#allocation6 + $0x28] sm:$0xff] %v3525
    %3534 = vst [vmem:[#allocation6 + $0x30] sm:$0xff] %v3526
    %3535 = vst [vmem:[#allocation6 + $0x38] sm:$0xff] %v3527
    %v3536 = vld [vmem:[#allocation10] sm:$0xff]
    %v3537 = vld [vmem:[#allocation10 + $0x8] sm:$0xff]
    %v3538 = vld [vmem:[#allocation10 + $0x10] sm:$0xff]
    %v3539 = vld [vmem:[#allocation10 + $0x18] sm:$0xff]
    %v3540 = vld [vmem:[%s999] sm:$0xff]
    %3541 = vmatprep.subr.mxu0 0.0
    %3542 = vmatpush1.msra.mxu0 0.0
    %3543 = vmatprep.subr.mxu0 0.0
    %3544 = vmatpush1.msra.mxu0 0.0
    %3545 = vmatprep.subr.mxu0 0.0
    %3546 = vmatpush1.msra.mxu0 0.0
    %3547 = vmatprep.subr.mxu0 0.0
    %3548 = vmatpush1.msra.mxu0 0.0
    %3549 = vmatprep.subr.mxu0 0.0
    %3550 = vmatpush1.msra.mxu0 0.0
    %3551 = vmatprep.subr.mxu0 0.0
    %3552 = vmatpush1.msra.mxu0 0.0
    %3553 = vmatprep.subr.mxu0 0.0
    %3554 = vmatpush1.msra.mxu0 0.0
    %3555 = vmatprep.subr.mxu0 0.0
    %3556 = vmatpush1.msra.mxu0 0.0
    %3557 = vmatprep.subr.mxu0 0.0
    %3558 = vmatpush1.msra.mxu0 0.0
    %3559 = vmatprep.subr.mxu0 0.0
    %3560 = vmatpush1.msra.mxu0 0.0
    %3561 = vmatprep.subr.mxu0 0.0
    %3562 = vmatpush1.msra.mxu0 0.0
    %3563 = vmatprep.subr.mxu0 0.0
    %3564 = vmatpush1.msra.mxu0 0.0
    %3565 = vmatprep.subr.mxu0 0.0
    %3566 = vmatpush1.msra.mxu0 %v3539
    %3567 = vmatprep.subr.mxu0 0.0
    %3568 = vmatpush1.msra.mxu0 %v3538
    %3569 = vmatprep.subr.mxu0 0.0
    %3570 = vmatpush1.msra.mxu0 %v3537
    %3571 = vmatprep.subr.mxu0 0.0
    %3572 = vmatpush1.msra.mxu0 %v3536
    %3573 = vmatprep.subr.mxu0 0.0
    %3574 = vmatpush2.msra.mxu0 0.0
    %3575 = vmatprep.subr.mxu0 0.0
    %3576 = vmatpush2.msra.mxu0 0.0
    %3577 = vmatprep.subr.mxu0 0.0
    %3578 = vmatpush2.msra.mxu0 0.0
    %3579 = vmatprep.subr.mxu0 0.0
    %3580 = vmatpush2.msra.mxu0 0.0
    %3581 = vmatprep.subr.mxu0 0.0
    %3582 = vmatpush2.msra.mxu0 0.0
    %3583 = vmatprep.subr.mxu0 0.0
    %3584 = vmatpush2.msra.mxu0 0.0
    %3585 = vmatprep.subr.mxu0 0.0
    %3586 = vmatpush2.msra.mxu0 0.0
    %3587 = vmatprep.subr.mxu0 0.0
    %3588 = vmatpush2.msra.mxu0 0.0
    %3589 = vmatprep.subr.mxu0 0.0
    %3590 = vmatpush2.msra.mxu0 0.0
    %3591 = vmatprep.subr.mxu0 0.0
    %3592 = vmatpush2.msra.mxu0 0.0
    %3593 = vmatprep.subr.mxu0 0.0
    %3594 = vmatpush2.msra.mxu0 0.0
    %3595 = vmatprep.subr.mxu0 0.0
    %3596 = vmatpush2.msra.mxu0 0.0
    %3597 = vmatprep.subr.mxu0 0.0
    %3598 = vmatpush2.msra.mxu0 0.0
    %3599 = vmatprep.subr.mxu0 0.0
    %3600 = vmatpush2.msra.mxu0 0.0
    %3601 = vmatprep.subr.mxu0 0.0
    %3602 = vmatpush2.msra.mxu0 0.0
    %3603 = vmatprep.subr.mxu0 0.0
    %3604 = vmatpush2.msra.mxu0 0.0
    %3605 = vmatprep.mubr.f32.mxu0 0.0
    %3606 = vmatmul.mubr.f32.gmra.mxu0 %v267
    %v3607 = vpop.f32.mrf.mxu0
    %v3608 = vadd.f32 0.0, %v3607
    %v3609 = vpop.f32.mrf.mxu0
    %3610 = vdwg.mxu0
    %v3611 = vadd.f32 %v3540, %v3608
    %v3612 = vxor.u32 %v3611, 2147483648
    %v3613 = vmul.f32 %v3612, 1.442695
    %v3614 = vpow.pop %v3613
    %v3615 = vadd.f32 %v3614, 1.0
    %v3616 = vrcp.pop %v3615
    %v3617 = vmul.f32 1.0, %v3616
    %v3618 = vtanh.pop %v3611
    %v3619 = vmul.f32 %v3617, 0.0
    %3621 = vrot.lane.b32.xlu0 %v3618, 64
    %v3622 = vpop.permute.xlu0 %3621
    %v3624 = vmul.f32 %v3617, %v3622
    %3626 = vrot.lane.b32.xlu0 %v3624, 32
    %v3627 = vpop.permute.xlu0 %3626
    %v3629 = vadd.f32 %v3619, %v3627
    %v3630 = vtanh.pop %v3629
    %3632 = vrot.lane.b32.xlu0 %v3630, 64
    %v3633 = vpop.permute.xlu0 %3632
    %v3635 = vmul.f32 %v3617, %v3633
    %3637 = vrot.lane.b32.xlu0 %v3635, 32
    %v3638 = vpop.permute.xlu0 %3637
    %s3640 = scalar_lea.vmem [#allocation5], 56
    %3641 = vst.msk [vmem:[%s3640] sm:$0xff] %vm123, %v3638
    %v3642 = vld [vmem:[%s894] sm:$0xff]
    %v3643 = vsel %vm123, %v3638, 0
    %3645 = vmatprep.subr.mxu0 0.0
    %3646 = vmatpush1.msra.mxu0 0.0
    %3647 = vmatprep.subr.mxu0 0.0
    %3648 = vmatpush1.msra.mxu0 0.0
    %3649 = vmatprep.subr.mxu0 0.0
    %3650 = vmatpush1.msra.mxu0 0.0
    %3651 = vmatprep.subr.mxu0 0.0
    %3652 = vmatpush1.msra.mxu0 0.0
    %3653 = vmatprep.subr.mxu0 0.0
    %3654 = vmatpush1.msra.mxu0 0.0
    %3655 = vmatprep.subr.mxu0 0.0
    %3656 = vmatpush1.msra.mxu0 0.0
    %3657 = vmatprep.subr.mxu0 0.0
    %3658 = vmatpush1.msra.mxu0 0.0
    %3659 = vmatprep.subr.mxu0 0.0
    %3660 = vmatpush1.msra.mxu0 0.0
    %3661 = vmatprep.subr.mxu0 0.0
    %3662 = vmatpush1.msra.mxu0 0.0
    %3663 = vmatprep.subr.mxu0 0.0
    %3664 = vmatpush1.msra.mxu0 0.0
    %3665 = vmatprep.subr.mxu0 0.0
    %3666 = vmatpush1.msra.mxu0 0.0
    %3667 = vmatprep.subr.mxu0 0.0
    %3668 = vmatpush1.msra.mxu0 0.0
    %3669 = vmatprep.subr.mxu0 0.0
    %3670 = vmatpush1.msra.mxu0 %v3539
    %3671 = vmatprep.subr.mxu0 0.0
    %3672 = vmatpush1.msra.mxu0 %v3538
    %3673 = vmatprep.subr.mxu0 0.0
    %3674 = vmatpush1.msra.mxu0 %v3537
    %3675 = vmatprep.subr.mxu0 0.0
    %3676 = vmatpush1.msra.mxu0 %v3536
    %3677 = vmatprep.subr.mxu0 0.0
    %3678 = vmatpush2.msra.mxu0 0.0
    %3679 = vmatprep.subr.mxu0 0.0
    %3680 = vmatpush2.msra.mxu0 0.0
    %3681 = vmatprep.subr.mxu0 0.0
    %3682 = vmatpush2.msra.mxu0 0.0
    %3683 = vmatprep.subr.mxu0 0.0
    %3684 = vmatpush2.msra.mxu0 0.0
    %3685 = vmatprep.subr.mxu0 0.0
    %3686 = vmatpush2.msra.mxu0 0.0
    %3687 = vmatprep.subr.mxu0 0.0
    %3688 = vmatpush2.msra.mxu0 0.0
    %3689 = vmatprep.subr.mxu0 0.0
    %3690 = vmatpush2.msra.mxu0 0.0
    %3691 = vmatprep.subr.mxu0 0.0
    %3692 = vmatpush2.msra.mxu0 0.0
    %3693 = vmatprep.subr.mxu0 0.0
    %3694 = vmatpush2.msra.mxu0 0.0
    %3695 = vmatprep.subr.mxu0 0.0
    %3696 = vmatpush2.msra.mxu0 0.0
    %3697 = vmatprep.subr.mxu0 0.0
    %3698 = vmatpush2.msra.mxu0 0.0
    %3699 = vmatprep.subr.mxu0 0.0
    %3700 = vmatpush2.msra.mxu0 0.0
    %3701 = vmatprep.subr.mxu0 0.0
    %3702 = vmatpush2.msra.mxu0 0.0
    %3703 = vmatprep.subr.mxu0 0.0
    %3704 = vmatpush2.msra.mxu0 0.0
    %3705 = vmatprep.subr.mxu0 0.0
    %3706 = vmatpush2.msra.mxu0 0.0
    %3707 = vmatprep.subr.mxu0 0.0
    %3708 = vmatpush2.msra.mxu0 0.0
    %3709 = vmatprep.mubr.f32.mxu0 0.0
    %3710 = vmatmul.mubr.f32.gmra.mxu0 %v3643
    %v3711 = vpop.f32.mrf.mxu0
    %v3712 = vadd.f32 0.0, %v3711
    %v3713 = vpop.f32.mrf.mxu0
    %3714 = vdwg.mxu0
    %v3715 = vadd.f32 %v3642, %v3712
    %v3716 = vxor.u32 %v3715, 2147483648
    %v3717 = vmul.f32 %v3716, 1.442695
    %v3718 = vpow.pop %v3717
    %v3719 = vadd.f32 %v3718, 1.0
    %v3720 = vrcp.pop %v3719
    %v3721 = vmul.f32 1.0, %v3720
    %v3722 = vtanh.pop %v3715
    %v3723 = vmul.f32 %v3721, %v3629
    %3725 = vrot.lane.b32.xlu0 %v3722, 64
    %v3726 = vpop.permute.xlu0 %3725
    %v3728 = vmul.f32 %v3721, %v3726
    %3730 = vrot.lane.b32.xlu0 %v3728, 32
    %v3731 = vpop.permute.xlu0 %3730
    %v3733 = vadd.f32 %v3723, %v3731
    %v3734 = vtanh.pop %v3733
    %3736 = vrot.lane.b32.xlu0 %v3734, 64
    %v3737 = vpop.permute.xlu0 %3736
    %v3739 = vmul.f32 %v3721, %v3737
    %3741 = vrot.lane.b32.xlu0 %v3739, 32
    %v3742 = vpop.permute.xlu0 %3741
    %s3744 = scalar_lea.vmem [#allocation5], 48
    %3745 = vst.msk [vmem:[%s3744] sm:$0xff] %vm123, %v3742
    %v3746 = vld [vmem:[%s789] sm:$0xff]
    %v3747 = vsel %vm123, %v3742, 0
    %3749 = vmatprep.subr.mxu0 0.0
    %3750 = vmatpush1.msra.mxu0 0.0
    %3751 = vmatprep.subr.mxu0 0.0
    %3752 = vmatpush1.msra.mxu0 0.0
    %3753 = vmatprep.subr.mxu0 0.0
    %3754 = vmatpush1.msra.mxu0 0.0
    %3755 = vmatprep.subr.mxu0 0.0
    %3756 = vmatpush1.msra.mxu0 0.0
    %3757 = vmatprep.subr.mxu0 0.0
    %3758 = vmatpush1.msra.mxu0 0.0
    %3759 = vmatprep.subr.mxu0 0.0
    %3760 = vmatpush1.msra.mxu0 0.0
    %3761 = vmatprep.subr.mxu0 0.0
    %3762 = vmatpush1.msra.mxu0 0.0
    %3763 = vmatprep.subr.mxu0 0.0
    %3764 = vmatpush1.msra.mxu0 0.0
    %3765 = vmatprep.subr.mxu0 0.0
    %3766 = vmatpush1.msra.mxu0 0.0
    %3767 = vmatprep.subr.mxu0 0.0
    %3768 = vmatpush1.msra.mxu0 0.0
    %3769 = vmatprep.subr.mxu0 0.0
    %3770 = vmatpush1.msra.mxu0 0.0
    %3771 = vmatprep.subr.mxu0 0.0
    %3772 = vmatpush1.msra.mxu0 0.0
    %3773 = vmatprep.subr.mxu0 0.0
    %3774 = vmatpush1.msra.mxu0 %v3539
    %3775 = vmatprep.subr.mxu0 0.0
    %3776 = vmatpush1.msra.mxu0 %v3538
    %3777 = vmatprep.subr.mxu0 0.0
    %3778 = vmatpush1.msra.mxu0 %v3537
    %3779 = vmatprep.subr.mxu0 0.0
    %3780 = vmatpush1.msra.mxu0 %v3536
    %3781 = vmatprep.subr.mxu0 0.0
    %3782 = vmatpush2.msra.mxu0 0.0
    %3783 = vmatprep.subr.mxu0 0.0
    %3784 = vmatpush2.msra.mxu0 0.0
    %3785 = vmatprep.subr.mxu0 0.0
    %3786 = vmatpush2.msra.mxu0 0.0
    %3787 = vmatprep.subr.mxu0 0.0
    %3788 = vmatpush2.msra.mxu0 0.0
    %3789 = vmatprep.subr.mxu0 0.0
    %3790 = vmatpush2.msra.mxu0 0.0
    %3791 = vmatprep.subr.mxu0 0.0
    %3792 = vmatpush2.msra.mxu0 0.0
    %3793 = vmatprep.subr.mxu0 0.0
    %3794 = vmatpush2.msra.mxu0 0.0
    %3795 = vmatprep.subr.mxu0 0.0
    %3796 = vmatpush2.msra.mxu0 0.0
    %3797 = vmatprep.subr.mxu0 0.0
    %3798 = vmatpush2.msra.mxu0 0.0
    %3799 = vmatprep.subr.mxu0 0.0
    %3800 = vmatpush2.msra.mxu0 0.0
    %3801 = vmatprep.subr.mxu0 0.0
    %3802 = vmatpush2.msra.mxu0 0.0
    %3803 = vmatprep.subr.mxu0 0.0
    %3804 = vmatpush2.msra.mxu0 0.0
    %3805 = vmatprep.subr.mxu0 0.0
    %3806 = vmatpush2.msra.mxu0 0.0
    %3807 = vmatprep.subr.mxu0 0.0
    %3808 = vmatpush2.msra.mxu0 0.0
    %3809 = vmatprep.subr.mxu0 0.0
    %3810 = vmatpush2.msra.mxu0 0.0
    %3811 = vmatprep.subr.mxu0 0.0
    %3812 = vmatpush2.msra.mxu0 0.0
    %3813 = vmatprep.mubr.f32.mxu0 0.0
    %3814 = vmatmul.mubr.f32.gmra.mxu0 %v3747
    %v3815 = vpop.f32.mrf.mxu0
    %v3816 = vadd.f32 0.0, %v3815
    %v3817 = vpop.f32.mrf.mxu0
    %3818 = vdwg.mxu0
    %v3819 = vadd.f32 %v3746, %v3816
    %v3820 = vxor.u32 %v3819, 2147483648
    %v3821 = vmul.f32 %v3820, 1.442695
    %v3822 = vpow.pop %v3821
    %v3823 = vadd.f32 %v3822, 1.0
    %v3824 = vrcp.pop %v3823
    %v3825 = vmul.f32 1.0, %v3824
    %v3826 = vtanh.pop %v3819
    %v3827 = vmul.f32 %v3825, %v3733
    %3829 = vrot.lane.b32.xlu0 %v3826, 64
    %v3830 = vpop.permute.xlu0 %3829
    %v3832 = vmul.f32 %v3825, %v3830
    %3834 = vrot.lane.b32.xlu0 %v3832, 32
    %v3835 = vpop.permute.xlu0 %3834
    %v3837 = vadd.f32 %v3827, %v3835
    %v3838 = vtanh.pop %v3837
    %3840 = vrot.lane.b32.xlu0 %v3838, 64
    %v3841 = vpop.permute.xlu0 %3840
    %v3843 = vmul.f32 %v3825, %v3841
    %3845 = vrot.lane.b32.xlu0 %v3843, 32
    %v3846 = vpop.permute.xlu0 %3845
    %s3848 = scalar_lea.vmem [#allocation5], 40
    %3849 = vst.msk [vmem:[%s3848] sm:$0xff] %vm123, %v3846
    %v3850 = vld [vmem:[%s684] sm:$0xff]
    %v3851 = vsel %vm123, %v3846, 0
    %3853 = vmatprep.subr.mxu0 0.0
    %3854 = vmatpush1.msra.mxu0 0.0
    %3855 = vmatprep.subr.mxu0 0.0
    %3856 = vmatpush1.msra.mxu0 0.0
    %3857 = vmatprep.subr.mxu0 0.0
    %3858 = vmatpush1.msra.mxu0 0.0
    %3859 = vmatprep.subr.mxu0 0.0
    %3860 = vmatpush1.msra.mxu0 0.0
    %3861 = vmatprep.subr.mxu0 0.0
    %3862 = vmatpush1.msra.mxu0 0.0
    %3863 = vmatprep.subr.mxu0 0.0
    %3864 = vmatpush1.msra.mxu0 0.0
    %3865 = vmatprep.subr.mxu0 0.0
    %3866 = vmatpush1.msra.mxu0 0.0
    %3867 = vmatprep.subr.mxu0 0.0
    %3868 = vmatpush1.msra.mxu0 0.0
    %3869 = vmatprep.subr.mxu0 0.0
    %3870 = vmatpush1.msra.mxu0 0.0
    %3871 = vmatprep.subr.mxu0 0.0
    %3872 = vmatpush1.msra.mxu0 0.0
    %3873 = vmatprep.subr.mxu0 0.0
    %3874 = vmatpush1.msra.mxu0 0.0
    %3875 = vmatprep.subr.mxu0 0.0
    %3876 = vmatpush1.msra.mxu0 0.0
    %3877 = vmatprep.subr.mxu0 0.0
    %3878 = vmatpush1.msra.mxu0 %v3539
    %3879 = vmatprep.subr.mxu0 0.0
    %3880 = vmatpush1.msra.mxu0 %v3538
    %3881 = vmatprep.subr.mxu0 0.0
    %3882 = vmatpush1.msra.mxu0 %v3537
    %3883 = vmatprep.subr.mxu0 0.0
    %3884 = vmatpush1.msra.mxu0 %v3536
    %3885 = vmatprep.subr.mxu0 0.0
    %3886 = vmatpush2.msra.mxu0 0.0
    %3887 = vmatprep.subr.mxu0 0.0
    %3888 = vmatpush2.msra.mxu0 0.0
    %3889 = vmatprep.subr.mxu0 0.0
    %3890 = vmatpush2.msra.mxu0 0.0
    %3891 = vmatprep.subr.mxu0 0.0
    %3892 = vmatpush2.msra.mxu0 0.0
    %3893 = vmatprep.subr.mxu0 0.0
    %3894 = vmatpush2.msra.mxu0 0.0
    %3895 = vmatprep.subr.mxu0 0.0
    %3896 = vmatpush2.msra.mxu0 0.0
    %3897 = vmatprep.subr.mxu0 0.0
    %3898 = vmatpush2.msra.mxu0 0.0
    %3899 = vmatprep.subr.mxu0 0.0
    %3900 = vmatpush2.msra.mxu0 0.0
    %3901 = vmatprep.subr.mxu0 0.0
    %3902 = vmatpush2.msra.mxu0 0.0
    %3903 = vmatprep.subr.mxu0 0.0
    %3904 = vmatpush2.msra.mxu0 0.0
    %3905 = vmatprep.subr.mxu0 0.0
    %3906 = vmatpush2.msra.mxu0 0.0
    %3907 = vmatprep.subr.mxu0 0.0
    %3908 = vmatpush2.msra.mxu0 0.0
    %3909 = vmatprep.subr.mxu0 0.0
    %3910 = vmatpush2.msra.mxu0 0.0
    %3911 = vmatprep.subr.mxu0 0.0
    %3912 = vmatpush2.msra.mxu0 0.0
    %3913 = vmatprep.subr.mxu0 0.0
    %3914 = vmatpush2.msra.mxu0 0.0
    %3915 = vmatprep.subr.mxu0 0.0
    %3916 = vmatpush2.msra.mxu0 0.0
    %3917 = vmatprep.mubr.f32.mxu0 0.0
    %3918 = vmatmul.mubr.f32.gmra.mxu0 %v3851
    %v3919 = vpop.f32.mrf.mxu0
    %v3920 = vadd.f32 0.0, %v3919
    %v3921 = vpop.f32.mrf.mxu0
    %3922 = vdwg.mxu0
    %v3923 = vadd.f32 %v3850, %v3920
    %v3924 = vxor.u32 %v3923, 2147483648
    %v3925 = vmul.f32 %v3924, 1.442695
    %v3926 = vpow.pop %v3925
    %v3927 = vadd.f32 %v3926, 1.0
    %v3928 = vrcp.pop %v3927
    %v3929 = vmul.f32 1.0, %v3928
    %v3930 = vtanh.pop %v3923
    %v3931 = vmul.f32 %v3929, %v3837
    %3933 = vrot.lane.b32.xlu0 %v3930, 64
    %v3934 = vpop.permute.xlu0 %3933
    %v3936 = vmul.f32 %v3929, %v3934
    %3938 = vrot.lane.b32.xlu0 %v3936, 32
    %v3939 = vpop.permute.xlu0 %3938
    %v3941 = vadd.f32 %v3931, %v3939
    %v3942 = vtanh.pop %v3941
    %3944 = vrot.lane.b32.xlu0 %v3942, 64
    %v3945 = vpop.permute.xlu0 %3944
    %v3947 = vmul.f32 %v3929, %v3945
    %3949 = vrot.lane.b32.xlu0 %v3947, 32
    %v3950 = vpop.permute.xlu0 %3949
    %s3952 = scalar_lea.vmem [#allocation5], 32
    %3953 = vst.msk [vmem:[%s3952] sm:$0xff] %vm123, %v3950
    %v3954 = vld [vmem:[%s579] sm:$0xff]
    %v3955 = vsel %vm123, %v3950, 0
    %3957 = vmatprep.subr.mxu0 0.0
    %3958 = vmatpush1.msra.mxu0 0.0
    %3959 = vmatprep.subr.mxu0 0.0
    %3960 = vmatpush1.msra.mxu0 0.0
    %3961 = vmatprep.subr.mxu0 0.0
    %3962 = vmatpush1.msra.mxu0 0.0
    %3963 = vmatprep.subr.mxu0 0.0
    %3964 = vmatpush1.msra.mxu0 0.0
    %3965 = vmatprep.subr.mxu0 0.0
    %3966 = vmatpush1.msra.mxu0 0.0
    %3967 = vmatprep.subr.mxu0 0.0
    %3968 = vmatpush1.msra.mxu0 0.0
    %3969 = vmatprep.subr.mxu0 0.0
    %3970 = vmatpush1.msra.mxu0 0.0
    %3971 = vmatprep.subr.mxu0 0.0
    %3972 = vmatpush1.msra.mxu0 0.0
    %3973 = vmatprep.subr.mxu0 0.0
    %3974 = vmatpush1.msra.mxu0 0.0
    %3975 = vmatprep.subr.mxu0 0.0
    %3976 = vmatpush1.msra.mxu0 0.0
    %3977 = vmatprep.subr.mxu0 0.0
    %3978 = vmatpush1.msra.mxu0 0.0
    %3979 = vmatprep.subr.mxu0 0.0
    %3980 = vmatpush1.msra.mxu0 0.0
    %3981 = vmatprep.subr.mxu0 0.0
    %3982 = vmatpush1.msra.mxu0 %v3539
    %3983 = vmatprep.subr.mxu0 0.0
    %3984 = vmatpush1.msra.mxu0 %v3538
    %3985 = vmatprep.subr.mxu0 0.0
    %3986 = vmatpush1.msra.mxu0 %v3537
    %3987 = vmatprep.subr.mxu0 0.0
    %3988 = vmatpush1.msra.mxu0 %v3536
    %3989 = vmatprep.subr.mxu0 0.0
    %3990 = vmatpush2.msra.mxu0 0.0
    %3991 = vmatprep.subr.mxu0 0.0
    %3992 = vmatpush2.msra.mxu0 0.0
    %3993 = vmatprep.subr.mxu0 0.0
    %3994 = vmatpush2.msra.mxu0 0.0
    %3995 = vmatprep.subr.mxu0 0.0
    %3996 = vmatpush2.msra.mxu0 0.0
    %3997 = vmatprep.subr.mxu0 0.0
    %3998 = vmatpush2.msra.mxu0 0.0
    %3999 = vmatprep.subr.mxu0 0.0
    %4000 = vmatpush2.msra.mxu0 0.0
    %4001 = vmatprep.subr.mxu0 0.0
    %4002 = vmatpush2.msra.mxu0 0.0
    %4003 = vmatprep.subr.mxu0 0.0
    %4004 = vmatpush2.msra.mxu0 0.0
    %4005 = vmatprep.subr.mxu0 0.0
    %4006 = vmatpush2.msra.mxu0 0.0
    %4007 = vmatprep.subr.mxu0 0.0
    %4008 = vmatpush2.msra.mxu0 0.0
    %4009 = vmatprep.subr.mxu0 0.0
    %4010 = vmatpush2.msra.mxu0 0.0
    %4011 = vmatprep.subr.mxu0 0.0
    %4012 = vmatpush2.msra.mxu0 0.0
    %4013 = vmatprep.subr.mxu0 0.0
    %4014 = vmatpush2.msra.mxu0 0.0
    %4015 = vmatprep.subr.mxu0 0.0
    %4016 = vmatpush2.msra.mxu0 0.0
    %4017 = vmatprep.subr.mxu0 0.0
    %4018 = vmatpush2.msra.mxu0 0.0
    %4019 = vmatprep.subr.mxu0 0.0
    %4020 = vmatpush2.msra.mxu0 0.0
    %4021 = vmatprep.mubr.f32.mxu0 0.0
    %4022 = vmatmul.mubr.f32.gmra.mxu0 %v3955
    %v4023 = vpop.f32.mrf.mxu0
    %v4024 = vadd.f32 0.0, %v4023
    %v4025 = vpop.f32.mrf.mxu0
    %4026 = vdwg.mxu0
    %v4027 = vadd.f32 %v3954, %v4024
    %v4028 = vxor.u32 %v4027, 2147483648
    %v4029 = vmul.f32 %v4028, 1.442695
    %v4030 = vpow.pop %v4029
    %v4031 = vadd.f32 %v4030, 1.0
    %v4032 = vrcp.pop %v4031
    %v4033 = vmul.f32 1.0, %v4032
    %v4034 = vtanh.pop %v4027
    %v4035 = vmul.f32 %v4033, %v3941
    %4037 = vrot.lane.b32.xlu0 %v4034, 64
    %v4038 = vpop.permute.xlu0 %4037
    %v4040 = vmul.f32 %v4033, %v4038
    %4042 = vrot.lane.b32.xlu0 %v4040, 32
    %v4043 = vpop.permute.xlu0 %4042
    %v4045 = vadd.f32 %v4035, %v4043
    %v4046 = vtanh.pop %v4045
    %4048 = vrot.lane.b32.xlu0 %v4046, 64
    %v4049 = vpop.permute.xlu0 %4048
    %v4051 = vmul.f32 %v4033, %v4049
    %4053 = vrot.lane.b32.xlu0 %v4051, 32
    %v4054 = vpop.permute.xlu0 %4053
    %s4056 = scalar_lea.vmem [#allocation5], 24
    %4057 = vst.msk [vmem:[%s4056] sm:$0xff] %vm123, %v4054
    %v4058 = vld [vmem:[%s474] sm:$0xff]
    %v4059 = vsel %vm123, %v4054, 0
    %4061 = vmatprep.subr.mxu0 0.0
    %4062 = vmatpush1.msra.mxu0 0.0
    %4063 = vmatprep.subr.mxu0 0.0
    %4064 = vmatpush1.msra.mxu0 0.0
    %4065 = vmatprep.subr.mxu0 0.0
    %4066 = vmatpush1.msra.mxu0 0.0
    %4067 = vmatprep.subr.mxu0 0.0
    %4068 = vmatpush1.msra.mxu0 0.0
    %4069 = vmatprep.subr.mxu0 0.0
    %4070 = vmatpush1.msra.mxu0 0.0
    %4071 = vmatprep.subr.mxu0 0.0
    %4072 = vmatpush1.msra.mxu0 0.0
    %4073 = vmatprep.subr.mxu0 0.0
    %4074 = vmatpush1.msra.mxu0 0.0
    %4075 = vmatprep.subr.mxu0 0.0
    %4076 = vmatpush1.msra.mxu0 0.0
    %4077 = vmatprep.subr.mxu0 0.0
    %4078 = vmatpush1.msra.mxu0 0.0
    %4079 = vmatprep.subr.mxu0 0.0
    %4080 = vmatpush1.msra.mxu0 0.0
    %4081 = vmatprep.subr.mxu0 0.0
    %4082 = vmatpush1.msra.mxu0 0.0
    %4083 = vmatprep.subr.mxu0 0.0
    %4084 = vmatpush1.msra.mxu0 0.0
    %4085 = vmatprep.subr.mxu0 0.0
    %4086 = vmatpush1.msra.mxu0 %v3539
    %4087 = vmatprep.subr.mxu0 0.0
    %4088 = vmatpush1.msra.mxu0 %v3538
    %4089 = vmatprep.subr.mxu0 0.0
    %4090 = vmatpush1.msra.mxu0 %v3537
    %4091 = vmatprep.subr.mxu0 0.0
    %4092 = vmatpush1.msra.mxu0 %v3536
    %4093 = vmatprep.subr.mxu0 0.0
    %4094 = vmatpush2.msra.mxu0 0.0
    %4095 = vmatprep.subr.mxu0 0.0
    %4096 = vmatpush2.msra.mxu0 0.0
    %4097 = vmatprep.subr.mxu0 0.0
    %4098 = vmatpush2.msra.mxu0 0.0
    %4099 = vmatprep.subr.mxu0 0.0
    %4100 = vmatpush2.msra.mxu0 0.0
    %4101 = vmatprep.subr.mxu0 0.0
    %4102 = vmatpush2.msra.mxu0 0.0
    %4103 = vmatprep.subr.mxu0 0.0
    %4104 = vmatpush2.msra.mxu0 0.0
    %4105 = vmatprep.subr.mxu0 0.0
    %4106 = vmatpush2.msra.mxu0 0.0
    %4107 = vmatprep.subr.mxu0 0.0
    %4108 = vmatpush2.msra.mxu0 0.0
    %4109 = vmatprep.subr.mxu0 0.0
    %4110 = vmatpush2.msra.mxu0 0.0
    %4111 = vmatprep.subr.mxu0 0.0
    %4112 = vmatpush2.msra.mxu0 0.0
    %4113 = vmatprep.subr.mxu0 0.0
    %4114 = vmatpush2.msra.mxu0 0.0
    %4115 = vmatprep.subr.mxu0 0.0
    %4116 = vmatpush2.msra.mxu0 0.0
    %4117 = vmatprep.subr.mxu0 0.0
    %4118 = vmatpush2.msra.mxu0 0.0
    %4119 = vmatprep.subr.mxu0 0.0
    %4120 = vmatpush2.msra.mxu0 0.0
    %4121 = vmatprep.subr.mxu0 0.0
    %4122 = vmatpush2.msra.mxu0 0.0
    %4123 = vmatprep.subr.mxu0 0.0
    %4124 = vmatpush2.msra.mxu0 0.0
    %4125 = vmatprep.mubr.f32.mxu0 0.0
    %4126 = vmatmul.mubr.f32.gmra.mxu0 %v4059
    %v4127 = vpop.f32.mrf.mxu0
    %v4128 = vadd.f32 0.0, %v4127
    %v4129 = vpop.f32.mrf.mxu0
    %4130 = vdwg.mxu0
    %v4131 = vadd.f32 %v4058, %v4128
    %v4132 = vxor.u32 %v4131, 2147483648
    %v4133 = vmul.f32 %v4132, 1.442695
    %v4134 = vpow.pop %v4133
    %v4135 = vadd.f32 %v4134, 1.0
    %v4136 = vrcp.pop %v4135
    %v4137 = vmul.f32 1.0, %v4136
    %v4138 = vtanh.pop %v4131
    %v4139 = vmul.f32 %v4137, %v4045
    %4141 = vrot.lane.b32.xlu0 %v4138, 64
    %v4142 = vpop.permute.xlu0 %4141
    %v4144 = vmul.f32 %v4137, %v4142
    %4146 = vrot.lane.b32.xlu0 %v4144, 32
    %v4147 = vpop.permute.xlu0 %4146
    %v4149 = vadd.f32 %v4139, %v4147
    %v4150 = vtanh.pop %v4149
    %4152 = vrot.lane.b32.xlu0 %v4150, 64
    %v4153 = vpop.permute.xlu0 %4152
    %v4155 = vmul.f32 %v4137, %v4153
    %4157 = vrot.lane.b32.xlu0 %v4155, 32
    %v4158 = vpop.permute.xlu0 %4157
    %s4160 = scalar_lea.vmem [#allocation5], 16
    %4161 = vst.msk [vmem:[%s4160] sm:$0xff] %vm123, %v4158
    %v4162 = vld [vmem:[%s369] sm:$0xff]
    %v4163 = vsel %vm123, %v4158, 0
    %4165 = vmatprep.subr.mxu0 0.0
    %4166 = vmatpush1.msra.mxu0 0.0
    %4167 = vmatprep.subr.mxu0 0.0
    %4168 = vmatpush1.msra.mxu0 0.0
    %4169 = vmatprep.subr.mxu0 0.0
    %4170 = vmatpush1.msra.mxu0 0.0
    %4171 = vmatprep.subr.mxu0 0.0
    %4172 = vmatpush1.msra.mxu0 0.0
    %4173 = vmatprep.subr.mxu0 0.0
    %4174 = vmatpush1.msra.mxu0 0.0
    %4175 = vmatprep.subr.mxu0 0.0
    %4176 = vmatpush1.msra.mxu0 0.0
    %4177 = vmatprep.subr.mxu0 0.0
    %4178 = vmatpush1.msra.mxu0 0.0
    %4179 = vmatprep.subr.mxu0 0.0
    %4180 = vmatpush1.msra.mxu0 0.0
    %4181 = vmatprep.subr.mxu0 0.0
    %4182 = vmatpush1.msra.mxu0 0.0
    %4183 = vmatprep.subr.mxu0 0.0
    %4184 = vmatpush1.msra.mxu0 0.0
    %4185 = vmatprep.subr.mxu0 0.0
    %4186 = vmatpush1.msra.mxu0 0.0
    %4187 = vmatprep.subr.mxu0 0.0
    %4188 = vmatpush1.msra.mxu0 0.0
    %4189 = vmatprep.subr.mxu0 0.0
    %4190 = vmatpush1.msra.mxu0 %v3539
    %4191 = vmatprep.subr.mxu0 0.0
    %4192 = vmatpush1.msra.mxu0 %v3538
    %4193 = vmatprep.subr.mxu0 0.0
    %4194 = vmatpush1.msra.mxu0 %v3537
    %4195 = vmatprep.subr.mxu0 0.0
    %4196 = vmatpush1.msra.mxu0 %v3536
    %4197 = vmatprep.subr.mxu0 0.0
    %4198 = vmatpush2.msra.mxu0 0.0
    %4199 = vmatprep.subr.mxu0 0.0
    %4200 = vmatpush2.msra.mxu0 0.0
    %4201 = vmatprep.subr.mxu0 0.0
    %4202 = vmatpush2.msra.mxu0 0.0
    %4203 = vmatprep.subr.mxu0 0.0
    %4204 = vmatpush2.msra.mxu0 0.0
    %4205 = vmatprep.subr.mxu0 0.0
    %4206 = vmatpush2.msra.mxu0 0.0
    %4207 = vmatprep.subr.mxu0 0.0
    %4208 = vmatpush2.msra.mxu0 0.0
    %4209 = vmatprep.subr.mxu0 0.0
    %4210 = vmatpush2.msra.mxu0 0.0
    %4211 = vmatprep.subr.mxu0 0.0
    %4212 = vmatpush2.msra.mxu0 0.0
    %4213 = vmatprep.subr.mxu0 0.0
    %4214 = vmatpush2.msra.mxu0 0.0
    %4215 = vmatprep.subr.mxu0 0.0
    %4216 = vmatpush2.msra.mxu0 0.0
    %4217 = vmatprep.subr.mxu0 0.0
    %4218 = vmatpush2.msra.mxu0 0.0
    %4219 = vmatprep.subr.mxu0 0.0
    %4220 = vmatpush2.msra.mxu0 0.0
    %4221 = vmatprep.subr.mxu0 0.0
    %4222 = vmatpush2.msra.mxu0 0.0
    %4223 = vmatprep.subr.mxu0 0.0
    %4224 = vmatpush2.msra.mxu0 0.0
    %4225 = vmatprep.subr.mxu0 0.0
    %4226 = vmatpush2.msra.mxu0 0.0
    %4227 = vmatprep.subr.mxu0 0.0
    %4228 = vmatpush2.msra.mxu0 0.0
    %4229 = vmatprep.mubr.f32.mxu0 0.0
    %4230 = vmatmul.mubr.f32.gmra.mxu0 %v4163
    %v4231 = vpop.f32.mrf.mxu0
    %v4232 = vadd.f32 0.0, %v4231
    %v4233 = vpop.f32.mrf.mxu0
    %4234 = vdwg.mxu0
    %v4235 = vadd.f32 %v4162, %v4232
    %v4236 = vxor.u32 %v4235, 2147483648
    %v4237 = vmul.f32 %v4236, 1.442695
    %v4238 = vpow.pop %v4237
    %v4239 = vadd.f32 %v4238, 1.0
    %v4240 = vrcp.pop %v4239
    %v4241 = vmul.f32 1.0, %v4240
    %v4242 = vtanh.pop %v4235
    %v4243 = vmul.f32 %v4241, %v4149
    %4245 = vrot.lane.b32.xlu0 %v4242, 64
    %v4246 = vpop.permute.xlu0 %4245
    %v4248 = vmul.f32 %v4241, %v4246
    %4250 = vrot.lane.b32.xlu0 %v4248, 32
    %v4251 = vpop.permute.xlu0 %4250
    %v4253 = vadd.f32 %v4243, %v4251
    %v4254 = vtanh.pop %v4253
    %4256 = vrot.lane.b32.xlu0 %v4254, 64
    %v4257 = vpop.permute.xlu0 %4256
    %v4259 = vmul.f32 %v4241, %v4257
    %4261 = vrot.lane.b32.xlu0 %v4259, 32
    %v4262 = vpop.permute.xlu0 %4261
    %s4264 = scalar_lea.vmem [#allocation5], 8
    %4265 = vst.msk [vmem:[%s4264] sm:$0xff] %vm123, %v4262
    %v4266 = vld [vmem:[#allocation6] sm:$0xff]
    %v4267 = vsel %vm123, %v4262, 0
    %4269 = vmatprep.subr.mxu0 0.0
    %4270 = vmatpush1.msra.mxu0 0.0
    %4271 = vmatprep.subr.mxu0 0.0
    %4272 = vmatpush1.msra.mxu0 0.0
    %4273 = vmatprep.subr.mxu0 0.0
    %4274 = vmatpush1.msra.mxu0 0.0
    %4275 = vmatprep.subr.mxu0 0.0
    %4276 = vmatpush1.msra.mxu0 0.0
    %4277 = vmatprep.subr.mxu0 0.0
    %4278 = vmatpush1.msra.mxu0 0.0
    %4279 = vmatprep.subr.mxu0 0.0
    %4280 = vmatpush1.msra.mxu0 0.0
    %4281 = vmatprep.subr.mxu0 0.0
    %4282 = vmatpush1.msra.mxu0 0.0
    %4283 = vmatprep.subr.mxu0 0.0
    %4284 = vmatpush1.msra.mxu0 0.0
    %4285 = vmatprep.subr.mxu0 0.0
    %4286 = vmatpush1.msra.mxu0 0.0
    %4287 = vmatprep.subr.mxu0 0.0
    %4288 = vmatpush1.msra.mxu0 0.0
    %4289 = vmatprep.subr.mxu0 0.0
    %4290 = vmatpush1.msra.mxu0 0.0
    %4291 = vmatprep.subr.mxu0 0.0
    %4292 = vmatpush1.msra.mxu0 0.0
    %4293 = vmatprep.subr.mxu0 0.0
    %4294 = vmatpush1.msra.mxu0 %v3539
    %4295 = vmatprep.subr.mxu0 0.0
    %4296 = vmatpush1.msra.mxu0 %v3538
    %4297 = vmatprep.subr.mxu0 0.0
    %4298 = vmatpush1.msra.mxu0 %v3537
    %4299 = vmatprep.subr.mxu0 0.0
    %4300 = vmatpush1.msra.mxu0 %v3536
    %4301 = vmatprep.subr.mxu0 0.0
    %4302 = vmatpush2.msra.mxu0 0.0
    %4303 = vmatprep.subr.mxu0 0.0
    %4304 = vmatpush2.msra.mxu0 0.0
    %4305 = vmatprep.subr.mxu0 0.0
    %4306 = vmatpush2.msra.mxu0 0.0
    %4307 = vmatprep.subr.mxu0 0.0
    %4308 = vmatpush2.msra.mxu0 0.0
    %4309 = vmatprep.subr.mxu0 0.0
    %4310 = vmatpush2.msra.mxu0 0.0
    %4311 = vmatprep.subr.mxu0 0.0
    %4312 = vmatpush2.msra.mxu0 0.0
    %4313 = vmatprep.subr.mxu0 0.0
    %4314 = vmatpush2.msra.mxu0 0.0
    %4315 = vmatprep.subr.mxu0 0.0
    %4316 = vmatpush2.msra.mxu0 0.0
    %4317 = vmatprep.subr.mxu0 0.0
    %4318 = vmatpush2.msra.mxu0 0.0
    %4319 = vmatprep.subr.mxu0 0.0
    %4320 = vmatpush2.msra.mxu0 0.0
    %4321 = vmatprep.subr.mxu0 0.0
    %4322 = vmatpush2.msra.mxu0 0.0
    %4323 = vmatprep.subr.mxu0 0.0
    %4324 = vmatpush2.msra.mxu0 0.0
    %4325 = vmatprep.subr.mxu0 0.0
    %4326 = vmatpush2.msra.mxu0 0.0
    %4327 = vmatprep.subr.mxu0 0.0
    %4328 = vmatpush2.msra.mxu0 0.0
    %4329 = vmatprep.subr.mxu0 0.0
    %4330 = vmatpush2.msra.mxu0 0.0
    %4331 = vmatprep.subr.mxu0 0.0
    %4332 = vmatpush2.msra.mxu0 0.0
    %4333 = vmatprep.mubr.f32.mxu0 0.0
    %4334 = vmatmul.mubr.f32.gmra.mxu0 %v4267
    %v4335 = vpop.f32.mrf.mxu0
    %v4336 = vadd.f32 0.0, %v4335
    %v4337 = vpop.f32.mrf.mxu0
    %4338 = vdwg.mxu0
    %v4339 = vadd.f32 %v4266, %v4336
    %v4340 = vxor.u32 %v4339, 2147483648
    %v4341 = vmul.f32 %v4340, 1.442695
    %v4342 = vpow.pop %v4341
    %v4343 = vadd.f32 %v4342, 1.0
    %v4344 = vrcp.pop %v4343
    %v4345 = vmul.f32 1.0, %v4344
    %v4346 = vtanh.pop %v4339
    %v4347 = vmul.f32 %v4345, %v4253
    %4349 = vrot.lane.b32.xlu0 %v4346, 64
    %v4350 = vpop.permute.xlu0 %4349
    %v4352 = vmul.f32 %v4345, %v4350
    %4354 = vrot.lane.b32.xlu0 %v4352, 32
    %v4355 = vpop.permute.xlu0 %4354
    %v4357 = vadd.f32 %v4347, %v4355
    %v4358 = vtanh.pop %v4357
    %4360 = vrot.lane.b32.xlu0 %v4358, 64
    %v4361 = vpop.permute.xlu0 %4360
    %v4363 = vmul.f32 %v4345, %v4361
    %4365 = vrot.lane.b32.xlu0 %v4363, 32
    %v4366 = vpop.permute.xlu0 %4365
    %4368 = vst.msk [vmem:[#allocation5] sm:$0xff] %vm123, %v4366
    %v4369 = vld [vmem:[%s13] sm:$0xff]
    %v4370 = vld [vmem:[%s13 + $0x8] sm:$0xff]
    %v4371 = vld [vmem:[%s13 + $0x10] sm:$0xff]
    %v4372 = vld [vmem:[%s13 + $0x18] sm:$0xff]
    %v4373 = vld [vmem:[%s13 + $0x20] sm:$0xff]
    %v4374 = vld [vmem:[%s13 + $0x28] sm:$0xff]
    %v4375 = vld [vmem:[%s13 + $0x30] sm:$0xff]
    %v4376 = vld [vmem:[%s13 + $0x38] sm:$0xff]
    %v4377 = vld [vmem:[#allocation4] sm:$0xff]
    %v4378 = vld [vmem:[#allocation4 + $0x8] sm:$0xff]
    %v4379 = vld [vmem:[#allocation4 + $0x10] sm:$0xff]
    %v4380 = vld [vmem:[#allocation4 + $0x18] sm:$0xff]
    %v4381 = vld [vmem:[#allocation4 + $0x20] sm:$0xff]
    %v4382 = vld [vmem:[#allocation4 + $0x28] sm:$0xff]
    %v4383 = vld [vmem:[#allocation4 + $0x30] sm:$0xff]
    %v4384 = vld [vmem:[#allocation4 + $0x38] sm:$0xff]
    %v4385 = vld [vmem:[#allocation5] sm:$0xff]
    %v4386 = vld [vmem:[#allocation5 + $0x8] sm:$0xff]
    %v4387 = vld [vmem:[#allocation5 + $0x10] sm:$0xff]
    %v4388 = vld [vmem:[#allocation5 + $0x18] sm:$0xff]
    %v4389 = vld [vmem:[#allocation5 + $0x20] sm:$0xff]
    %v4390 = vld [vmem:[#allocation5 + $0x28] sm:$0xff]
    %v4391 = vld [vmem:[#allocation5 + $0x30] sm:$0xff]
    %v4392 = vld [vmem:[#allocation5 + $0x38] sm:$0xff]
    %v4394 = vsel %vm123, %v4385, 0
    %v4397 = vsel %vm123, %v4386, 0
    %v4400 = vsel %vm123, %v4387, 0
    %v4403 = vsel %vm123, %v4388, 0
    %v4406 = vsel %vm123, %v4389, 0
    %v4409 = vsel %vm123, %v4390, 0
    %v4412 = vsel %vm123, %v4391, 0
    %v4415 = vsel %vm123, %v4392, 0
    %4417 = vmatprep.subr.mxu0 0.0
    %4418 = vmatpush1.msra.mxu0 0.0
    %4419 = vmatprep.subr.mxu0 0.0
    %4420 = vmatpush1.msra.mxu0 0.0
    %4421 = vmatprep.subr.mxu0 0.0
    %4422 = vmatpush1.msra.mxu0 0.0
    %4423 = vmatprep.subr.mxu0 0.0
    %4424 = vmatpush1.msra.mxu0 0.0
    %4425 = vmatprep.subr.mxu0 0.0
    %4426 = vmatpush1.msra.mxu0 0.0
    %4427 = vmatprep.subr.mxu0 0.0
    %4428 = vmatpush1.msra.mxu0 0.0
    %4429 = vmatprep.subr.mxu0 0.0
    %4430 = vmatpush1.msra.mxu0 0.0
    %4431 = vmatprep.subr.mxu0 0.0
    %4432 = vmatpush1.msra.mxu0 0.0
    %4433 = vmatprep.subr.mxu0 0.0
    %4434 = vmatpush1.msra.mxu0 0.0
    %4435 = vmatprep.subr.mxu0 0.0
    %4436 = vmatpush1.msra.mxu0 0.0
    %4437 = vmatprep.subr.mxu0 0.0
    %4438 = vmatpush1.msra.mxu0 0.0
    %4439 = vmatprep.subr.mxu0 0.0
    %4440 = vmatpush1.msra.mxu0 0.0
    %4441 = vmatprep.subr.mxu0 0.0
    %4442 = vmatpush1.msra.mxu0 %v4376
    %4443 = vmatprep.subr.mxu0 0.0
    %4444 = vmatpush1.msra.mxu0 %v4375
    %4445 = vmatprep.subr.mxu0 0.0
    %4446 = vmatpush1.msra.mxu0 %v4374
    %4447 = vmatprep.subr.mxu0 0.0
    %4448 = vmatpush1.msra.mxu0 %v4373
    %4449 = vmatprep.subr.mxu0 0.0
    %4450 = vmatpush2.msra.mxu0 0.0
    %4451 = vmatprep.subr.mxu0 0.0
    %4452 = vmatpush2.msra.mxu0 0.0
    %4453 = vmatprep.subr.mxu0 0.0
    %4454 = vmatpush2.msra.mxu0 0.0
    %4455 = vmatprep.subr.mxu0 0.0
    %4456 = vmatpush2.msra.mxu0 0.0
    %4457 = vmatprep.subr.mxu0 0.0
    %4458 = vmatpush2.msra.mxu0 0.0
    %4459 = vmatprep.subr.mxu0 0.0
    %4460 = vmatpush2.msra.mxu0 0.0
    %4461 = vmatprep.subr.mxu0 0.0
    %4462 = vmatpush2.msra.mxu0 0.0
    %4463 = vmatprep.subr.mxu0 0.0
    %4464 = vmatpush2.msra.mxu0 0.0
    %4465 = vmatprep.subr.mxu0 0.0
    %4466 = vmatpush2.msra.mxu0 0.0
    %4467 = vmatprep.subr.mxu0 0.0
    %4468 = vmatpush2.msra.mxu0 0.0
    %4469 = vmatprep.subr.mxu0 0.0
    %4470 = vmatpush2.msra.mxu0 0.0
    %4471 = vmatprep.subr.mxu0 0.0
    %4472 = vmatpush2.msra.mxu0 0.0
    %4473 = vmatprep.subr.mxu0 0.0
    %4474 = vmatpush2.msra.mxu0 0.0
    %4475 = vmatprep.subr.mxu0 0.0
    %4476 = vmatpush2.msra.mxu0 0.0
    %4477 = vmatprep.subr.mxu0 0.0
    %4478 = vmatpush2.msra.mxu0 0.0
    %4479 = vmatprep.subr.mxu0 0.0
    %4480 = vmatpush2.msra.mxu0 0.0
    %4481 = vmatprep.mubr.f32.mxu0 0.0
    %4482 = vmatmul.mubr.f32.gmra.mxu0 %v4394
    %v4483 = vpop.f32.mrf.mxu0
    %v4484 = vadd.f32 0.0, %v4483
    %v4485 = vpop.f32.mrf.mxu0
    %4486 = vmatprep.mubr.f32.mxu0 0.0
    %4487 = vmatmul.mubr.f32.gmra.mxu0 %v4397
    %v4488 = vpop.f32.mrf.mxu0
    %v4489 = vadd.f32 0.0, %v4488
    %v4490 = vpop.f32.mrf.mxu0
    %4491 = vmatprep.mubr.f32.mxu0 0.0
    %4492 = vmatmul.mubr.f32.gmra.mxu0 %v4400
    %v4493 = vpop.f32.mrf.mxu0
    %v4494 = vadd.f32 0.0, %v4493
    %v4495 = vpop.f32.mrf.mxu0
    %4496 = vmatprep.mubr.f32.mxu0 0.0
    %4497 = vmatmul.mubr.f32.gmra.mxu0 %v4403
    %v4498 = vpop.f32.mrf.mxu0
    %v4499 = vadd.f32 0.0, %v4498
    %v4500 = vpop.f32.mrf.mxu0
    %4501 = vmatprep.mubr.f32.mxu0 0.0
    %4502 = vmatmul.mubr.f32.gmra.mxu0 %v4406
    %v4503 = vpop.f32.mrf.mxu0
    %v4504 = vadd.f32 0.0, %v4503
    %v4505 = vpop.f32.mrf.mxu0
    %4506 = vmatprep.mubr.f32.mxu0 0.0
    %4507 = vmatmul.mubr.f32.gmra.mxu0 %v4409
    %v4508 = vpop.f32.mrf.mxu0
    %v4509 = vadd.f32 0.0, %v4508
    %v4510 = vpop.f32.mrf.mxu0
    %4511 = vmatprep.mubr.f32.mxu0 0.0
    %4512 = vmatmul.mubr.f32.gmra.mxu0 %v4412
    %v4513 = vpop.f32.mrf.mxu0
    %v4514 = vadd.f32 0.0, %v4513
    %v4515 = vpop.f32.mrf.mxu0
    %4516 = vmatprep.mubr.f32.mxu0 0.0
    %4517 = vmatmul.mubr.f32.gmra.mxu0 %v4415
    %v4518 = vpop.f32.mrf.mxu0
    %v4519 = vadd.f32 0.0, %v4518
    %v4520 = vpop.f32.mrf.mxu0
    %4521 = vdwg.mxu0
    %v4523 = vsel %vm123, %v4377, 0
    %v4526 = vsel %vm123, %v4378, 0
    %v4529 = vsel %vm123, %v4379, 0
    %v4532 = vsel %vm123, %v4380, 0
    %v4535 = vsel %vm123, %v4381, 0
    %v4538 = vsel %vm123, %v4382, 0
    %v4541 = vsel %vm123, %v4383, 0
    %v4544 = vsel %vm123, %v4384, 0
    %4546 = vmatprep.subr.mxu0 0.0
    %4547 = vmatpush1.msra.mxu0 0.0
    %4548 = vmatprep.subr.mxu0 0.0
    %4549 = vmatpush1.msra.mxu0 0.0
    %4550 = vmatprep.subr.mxu0 0.0
    %4551 = vmatpush1.msra.mxu0 0.0
    %4552 = vmatprep.subr.mxu0 0.0
    %4553 = vmatpush1.msra.mxu0 0.0
    %4554 = vmatprep.subr.mxu0 0.0
    %4555 = vmatpush1.msra.mxu0 0.0
    %4556 = vmatprep.subr.mxu0 0.0
    %4557 = vmatpush1.msra.mxu0 0.0
    %4558 = vmatprep.subr.mxu0 0.0
    %4559 = vmatpush1.msra.mxu0 0.0
    %4560 = vmatprep.subr.mxu0 0.0
    %4561 = vmatpush1.msra.mxu0 0.0
    %4562 = vmatprep.subr.mxu0 0.0
    %4563 = vmatpush1.msra.mxu0 0.0
    %4564 = vmatprep.subr.mxu0 0.0
    %4565 = vmatpush1.msra.mxu0 0.0
    %4566 = vmatprep.subr.mxu0 0.0
    %4567 = vmatpush1.msra.mxu0 0.0
    %4568 = vmatprep.subr.mxu0 0.0
    %4569 = vmatpush1.msra.mxu0 0.0
    %4570 = vmatprep.subr.mxu0 0.0
    %4571 = vmatpush1.msra.mxu0 %v4372
    %4572 = vmatprep.subr.mxu0 0.0
    %4573 = vmatpush1.msra.mxu0 %v4371
    %4574 = vmatprep.subr.mxu0 0.0
    %4575 = vmatpush1.msra.mxu0 %v4370
    %4576 = vmatprep.subr.mxu0 0.0
    %4577 = vmatpush1.msra.mxu0 %v4369
    %4578 = vmatprep.subr.mxu0 0.0
    %4579 = vmatpush2.msra.mxu0 0.0
    %4580 = vmatprep.subr.mxu0 0.0
    %4581 = vmatpush2.msra.mxu0 0.0
    %4582 = vmatprep.subr.mxu0 0.0
    %4583 = vmatpush2.msra.mxu0 0.0
    %4584 = vmatprep.subr.mxu0 0.0
    %4585 = vmatpush2.msra.mxu0 0.0
    %4586 = vmatprep.subr.mxu0 0.0
    %4587 = vmatpush2.msra.mxu0 0.0
    %4588 = vmatprep.subr.mxu0 0.0
    %4589 = vmatpush2.msra.mxu0 0.0
    %4590 = vmatprep.subr.mxu0 0.0
    %4591 = vmatpush2.msra.mxu0 0.0
    %4592 = vmatprep.subr.mxu0 0.0
    %4593 = vmatpush2.msra.mxu0 0.0
    %4594 = vmatprep.subr.mxu0 0.0
    %4595 = vmatpush2.msra.mxu0 0.0
    %4596 = vmatprep.subr.mxu0 0.0
    %4597 = vmatpush2.msra.mxu0 0.0
    %4598 = vmatprep.subr.mxu0 0.0
    %4599 = vmatpush2.msra.mxu0 0.0
    %4600 = vmatprep.subr.mxu0 0.0
    %4601 = vmatpush2.msra.mxu0 0.0
    %4602 = vmatprep.subr.mxu0 0.0
    %4603 = vmatpush2.msra.mxu0 0.0
    %4604 = vmatprep.subr.mxu0 0.0
    %4605 = vmatpush2.msra.mxu0 0.0
    %4606 = vmatprep.subr.mxu0 0.0
    %4607 = vmatpush2.msra.mxu0 0.0
    %4608 = vmatprep.subr.mxu0 0.0
    %4609 = vmatpush2.msra.mxu0 0.0
    %4610 = vmatprep.mubr.f32.mxu0 0.0
    %4611 = vmatmul.mubr.f32.gmra.mxu0 %v4523
    %v4612 = vpop.f32.mrf.mxu0
    %v4613 = vadd.f32 %v4484, %v4612
    %v4614 = vpop.f32.mrf.mxu0
    %4615 = vmatprep.mubr.f32.mxu0 0.0
    %4616 = vmatmul.mubr.f32.gmra.mxu0 %v4526
    %v4617 = vpop.f32.mrf.mxu0
    %v4618 = vadd.f32 %v4489, %v4617
    %v4619 = vpop.f32.mrf.mxu0
    %4620 = vmatprep.mubr.f32.mxu0 0.0
    %4621 = vmatmul.mubr.f32.gmra.mxu0 %v4529
    %v4622 = vpop.f32.mrf.mxu0
    %v4623 = vadd.f32 %v4494, %v4622
    %v4624 = vpop.f32.mrf.mxu0
    %4625 = vmatprep.mubr.f32.mxu0 0.0
    %4626 = vmatmul.mubr.f32.gmra.mxu0 %v4532
    %v4627 = vpop.f32.mrf.mxu0
    %v4628 = vadd.f32 %v4499, %v4627
    %v4629 = vpop.f32.mrf.mxu0
    %4630 = vmatprep.mubr.f32.mxu0 0.0
    %4631 = vmatmul.mubr.f32.gmra.mxu0 %v4535
    %v4632 = vpop.f32.mrf.mxu0
    %v4633 = vadd.f32 %v4504, %v4632
    %v4634 = vpop.f32.mrf.mxu0
    %4635 = vmatprep.mubr.f32.mxu0 0.0
    %4636 = vmatmul.mubr.f32.gmra.mxu0 %v4538
    %v4637 = vpop.f32.mrf.mxu0
    %v4638 = vadd.f32 %v4509, %v4637
    %v4639 = vpop.f32.mrf.mxu0
    %4640 = vmatprep.mubr.f32.mxu0 0.0
    %4641 = vmatmul.mubr.f32.gmra.mxu0 %v4541
    %v4642 = vpop.f32.mrf.mxu0
    %v4643 = vadd.f32 %v4514, %v4642
    %v4644 = vpop.f32.mrf.mxu0
    %4645 = vmatprep.mubr.f32.mxu0 0.0
    %4646 = vmatmul.mubr.f32.gmra.mxu0 %v4544
    %v4647 = vpop.f32.mrf.mxu0
    %v4648 = vadd.f32 %v4519, %v4647
    %v4649 = vpop.f32.mrf.mxu0
    %4650 = vdwg.mxu0
    %v4651 = vld [vmem:[#allocation13] sm:$0x1]
    %v4653 = vlaneseq
    %v4654 = vshrl.u32 %v4653, 7
    %v4655 = vsub.s32 0, %v4654
    %v4656 = vrot.slane %v4651, %v4655
    %v4658 = vadd.f32 %v4613, %v4656
    %v4659 = vadd.f32 %v4618, %v4656
    %v4660 = vadd.f32 %v4623, %v4656
    %v4661 = vadd.f32 %v4628, %v4656
    %v4662 = vadd.f32 %v4633, %v4656
    %v4663 = vadd.f32 %v4638, %v4656
    %v4664 = vadd.f32 %v4643, %v4656
    %v4665 = vadd.f32 %v4648, %v4656
    %v4666 = vld [vmem:[#allocation7] sm:$0x1]
    %s4667 = vtos %v4666
    %vm4668 = vcmp.gt.f32.partialorder %v4658, 0.0
    %vm4669 = vcmp.gt.f32.partialorder %v4659, 0.0
    %vm4670 = vcmp.gt.f32.partialorder %v4660, 0.0
    %vm4671 = vcmp.gt.f32.partialorder %v4661, 0.0
    %vm4672 = vcmp.gt.f32.partialorder %v4662, 0.0
    %vm4673 = vcmp.gt.f32.partialorder %v4663, 0.0
    %vm4674 = vcmp.gt.f32.partialorder %v4664, 0.0
    %vm4675 = vcmp.gt.f32.partialorder %v4665, 0.0
    %v4676 = vstv %s4667
    %v4677 = vmul.f32 %v4676, %v4658
    %v4678 = vmul.f32 %v4676, %v4659
    %v4679 = vmul.f32 %v4676, %v4660
    %v4680 = vmul.f32 %v4676, %v4661
    %v4681 = vmul.f32 %v4676, %v4662
    %v4682 = vmul.f32 %v4676, %v4663
    %v4683 = vmul.f32 %v4676, %v4664
    %v4684 = vmul.f32 %v4676, %v4665
    %v4685 = vsel %vm4668, %v4658, %v4677
    %v4686 = vsel %vm4669, %v4659, %v4678
    %v4687 = vsel %vm4670, %v4660, %v4679
    %v4688 = vsel %vm4671, %v4661, %v4680
    %v4689 = vsel %vm4672, %v4662, %v4681
    %v4690 = vsel %vm4673, %v4663, %v4682
    %v4691 = vsel %vm4674, %v4664, %v4683
    %v4692 = vsel %vm4675, %v4665, %v4684
    %4693 = vst.msk [vmem:[%s16] sm:$0xff] %vm123, %v4685
    %4694 = vst.msk [vmem:[%s16 + $0x8] sm:$0xff] %vm123, %v4686
    %4695 = vst.msk [vmem:[%s16 + $0x10] sm:$0xff] %vm123, %v4687
    %4696 = vst.msk [vmem:[%s16 + $0x18] sm:$0xff] %vm123, %v4688
    %4697 = vst.msk [vmem:[%s16 + $0x20] sm:$0xff] %vm123, %v4689
    %4698 = vst.msk [vmem:[%s16 + $0x28] sm:$0xff] %vm123, %v4690
    %4699 = vst.msk [vmem:[%s16 + $0x30] sm:$0xff] %vm123, %v4691
    %4700 = vst.msk [vmem:[%s16 + $0x38] sm:$0xff] %vm123, %v4692
    // Predicated region
    $region82: #{bilstm_forward.1} parent=1 // pred_check
      _
    $region83: #{bilstm_forward.1} parent=1 // pred_check_branch
      %4702 = sbr.rel (0) target = $region85
    $region84: #{bilstm_forward.1} parent=1 // pred_region
      _
    $region85: #{bilstm_forward.1} parent=1 // pred_fallthru
      _
    // Predicated region
    $region86: #{bilstm_forward.1} parent=1 // pred_check
      _
    $region87: #{bilstm_forward.1} parent=1 // pred_check_branch
      %4704 = sbr.rel (0) target = $region89
    $region88: #{bilstm_forward.1} parent=1 // pred_region
      _
    $region89: #{bilstm_forward.1} parent=1 // pred_fallthru
      _
    %4705 = vsyncpa [#allocation9], 1
    %4706 = vsyncpa [#allocation11], 1
    %4707 = vsyncpa [#allocation14], 1

</llo_original>
